<compile_context>
chip_gen: v7x
topology: tpu7x:2x2x1
jax: 0.10.0
libtpu: 0.0.40
codegen_flags: <defaults>
</compile_context>

<pallas_src>
import numpy as np

import jax
import jax.numpy as jnp
from jax.experimental import pallas as pl
from jax.experimental.pallas import tpu as pltpu

EPS = 1e-5
LANE = 128
SUBLANE = 8


def _default_vmem_limit():
    """Generation-aware scoped-VMEM limit (v5e/v6e -> 96 MiB, v7x -> 48 MiB)."""
    try:
        cap = getattr(pltpu.get_tpu_info(), "vmem_capacity_bytes", None)
        if cap:
            return int(min(cap * 3 // 4, 100 * 1024 * 1024))
    except Exception:
        pass
    return 48 * 1024 * 1024


VMEM_LIMIT = _default_vmem_limit()


# ----------------------------- small helpers --------------------------------
def _round_up(x, m):
    return (x + m - 1) // m * m


def _pick_row_tile(m, cap=1024):
    """Largest multiple-of-8 divisor of m that is <= cap (falls back to m,
    which is still a legal full-extent block)."""
    best = None
    t = SUBLANE
    while t <= min(m, cap):
        if m % t == 0:
            best = t
        t += SUBLANE
    return best if best is not None else m


def _pad2d(w, rows, cols):
    return jnp.pad(w, ((0, rows - w.shape[0]), (0, cols - w.shape[1])))


def _stats_rows(y):
    """(rows, C) f32 -> (8, C) partial-moment block: [sum, sumsq, 0, ...]."""
    c = y.shape[-1]
    s = jnp.sum(y, axis=0, keepdims=True)
    ss = jnp.sum(y * y, axis=0, keepdims=True)
    return jnp.concatenate([s, ss, jnp.zeros((6, c), jnp.float32)], axis=0)


# ------------------------------- kernels -------------------------------------
def _conv1x1_stats_kernel(x_ref, w_ref, y_ref, st_ref):
    # conv1 (1x1): lane-dense matmul over channels + partial BN moments.
    x = x_ref[0].astype(jnp.bfloat16)
    y = jnp.dot(x, w_ref[...], preferred_element_type=jnp.float32)
    yb = y.astype(jnp.bfloat16)
    y_ref[0] = yb
    st_ref[0, 0] = _stats_rows(yb.astype(jnp.float32))


def _make_conv3x3_kernel(H, W):
    HW = H * W

    def kernel(y1_ref, sc_ref, sh_ref, w_ref, m_ref, y2_ref, st_ref):
        C = y1_ref.shape[-1]
        # BN1 (pre-folded batch-stat scale/shift) + ReLU, in f32.
        a = jnp.maximum(
            y1_ref[0].astype(jnp.float32) * sc_ref[...] + sh_ref[...], 0.0)

        # 3x3 conv as 9 shifted-view matmuls accumulated in f32.  The (kh,kw)
        # tap is a sublane rotation of the flat activation (XLU roll, no
        # materialized im2col scratch) masked by a precomputed halo mask.
        acc = jnp.zeros((HW, C), jnp.float32)
        for kh in range(3):
            dh = kh - 1
            for kw in range(3):
                dw = kw - 1
                k = kh * 3 + kw
                s = dh * W + dw
                shifted = a if s == 0 else pltpu.roll(a, shift=(-s) % HW,
                                                      axis=0)
                tap = (shifted * m_ref[k]).astype(jnp.bfloat16)
                acc = acc + jnp.dot(tap, w_ref[k],
                                    preferred_element_type=jnp.float32)

        yb = acc.astype(jnp.bfloat16)
        y2_ref[0] = yb
        st_ref[0, 0] = _stats_rows(yb.astype(jnp.float32))

    return kernel


def _bn_relu_conv1x1_kernel(y_ref, sc_ref, sh_ref, w_ref, o_ref, st_ref):
    # BN2 (pre-folded) + ReLU + conv3 (1x1) + partial BN moments.
    a = jnp.maximum(
        y_ref[0].astype(jnp.float32) * sc_ref[...] + sh_ref[...], 0.0)
    y = jnp.dot(a.astype(jnp.bfloat16), w_ref[...],
                preferred_element_type=jnp.float32)
    yb = y.astype(jnp.bfloat16)
    o_ref[0] = yb
    st_ref[0, 0] = _stats_rows(yb.astype(jnp.float32))


def _bn_add_relu_kernel(y_ref, sc_ref, sh_ref, x_ref, o_ref):
    # BN3 (pre-folded) + residual add + ReLU, all in f32.
    o_ref[0] = jnp.maximum(
        y_ref[0].astype(jnp.float32) * sc_ref[...] + sh_ref[...] + x_ref[0],
        0.0)


# ------------------------------- wrapper --------------------------------------
@jax.jit
def residual_block(x_nchw, w1, w2, w3, g1, b1, g2, b2, g3, b3):
    """x_nchw: (N, Cin, H, W); conv weights in PyTorch OIHW layout."""
    N, Cin, H, W = x_nchw.shape
    Cmid = w1.shape[0]
    Cout = w3.shape[0]
    assert Cout == Cin, "residual add requires output_channels[1] == input_channels"

    f32, bf16 = jnp.float32, jnp.bfloat16
    Cpi = _round_up(Cin, LANE)
    Cpm = _round_up(Cmid, LANE)
    Cpo = _round_up(Cout, LANE)

    HW = H * W
    M = N * HW
    THW = _pick_row_tile(HW, cap=1024)
    T = HW // THW
    inv_m = 1.0 / float(M)

    # ---- layout glue: NCHW/OIHW -> lane-dense (N, H*W, Cpad) ----------------
    x = jnp.transpose(x_nchw, (0, 2, 3, 1)).astype(f32).reshape(N, HW, Cin)
    x = jnp.pad(x, ((0, 0), (0, 0), (0, Cpi - Cin)))

    # Padded weight rows/cols and padded gamma/beta are ZERO -> padded lanes
    # stay exactly zero through every stage (incl. the residual path).
    w1m = _pad2d(jnp.transpose(w1[:, :, 0, 0], (1, 0)).astype(f32),
                 Cpi, Cpm).astype(bf16)
    w3m = _pad2d(jnp.transpose(w3[:, :, 0, 0], (1, 0)).astype(f32),
                 Cpm, Cpo).astype(bf16)
    w2m = jnp.transpose(w2, (2, 3, 1, 0)).astype(f32)              # (3,3,Ci,Co)
    w2m = jnp.pad(w2m, ((0, 0), (0, 0), (0, Cpm - Cmid), (0, Cpm - Cmid)))
    w2m = w2m.reshape(9, Cpm, Cpm).astype(bf16)

    # Static halo masks for the nine 3x3 taps (computed at trace time).
    hh, ww = np.divmod(np.arange(HW), W)
    masks = []
    for kh in range(3):
        for kw in range(3):
            dh, dw = kh - 1, kw - 1
            masks.append((hh + dh >= 0) & (hh + dh < H) &
                         (ww + dw >= 0) & (ww + dw < W))
    tap_mask = jnp.asarray(
        np.stack(masks).astype(np.float32).reshape(9, HW, 1))

    def _fold_bn(st, gamma, beta, cp):
        """Reduce per-tile partial moments once and fold BN into scale/shift."""
        s = jnp.sum(st[..., 0, :], axis=(0, 1))
        ss = jnp.sum(st[..., 1, :], axis=(0, 1))
        mean = s * inv_m
        # NOTE: single-pass variance (E[y^2] - mean^2); adequate for
        # BN-scale activations in f32.  Switch to centered partial sums
        # (Welford merge) if activation means become large at real scale.
        var = ss * inv_m - mean * mean
        inv_std = jax.lax.rsqrt(var + EPS)
        g = jnp.pad(gamma.astype(f32), (0, cp - gamma.shape[0]))
        b = jnp.pad(beta.astype(f32), (0, cp - beta.shape[0]))
        scale = g * inv_std
        shift = b - mean * scale
        return scale.reshape(1, cp), shift.reshape(1, cp)

    cp1 = pltpu.CompilerParams(dimension_semantics=("parallel",),
                               vmem_limit_bytes=VMEM_LIMIT)
    cp2 = pltpu.CompilerParams(dimension_semantics=("parallel", "parallel"),
                               vmem_limit_bytes=VMEM_LIMIT)

    vec = lambda c: pl.BlockSpec((1, c), lambda *_: (0, 0))

    # ---- stage 1: conv1 (1x1) + partial BN moments --------------------------
    y1, st1 = pl.pallas_call(
        _conv1x1_stats_kernel,
        out_shape=(jax.ShapeDtypeStruct((N, HW, Cpm), bf16),
                   jax.ShapeDtypeStruct((N, T, 8, Cpm), f32)),
        grid=(N, T),
        in_specs=[pl.BlockSpec((1, THW, Cpi), lambda n, t: (n, t, 0)),
                  pl.BlockSpec((Cpi, Cpm), lambda n, t: (0, 0))],
        out_specs=[pl.BlockSpec((1, THW, Cpm), lambda n, t: (n, t, 0)),
                   pl.BlockSpec((1, 1, 8, Cpm), lambda n, t: (n, t, 0, 0))],
        compiler_params=cp2,
    )(x, w1m)
    sc1, sh1 = _fold_bn(st1, g1, b1, Cpm)

    # ---- stage 2: bn1+relu + conv2 (3x3, pad=1), one image per grid step ----
    y2, st2 = pl.pallas_call(
        _make_conv3x3_kernel(H, W),
        out_shape=(jax.ShapeDtypeStruct((N, HW, Cpm), bf16),
                   jax.ShapeDtypeStruct((N, 1, 8, Cpm), f32)),
        grid=(N,),
        in_specs=[pl.BlockSpec((1, HW, Cpm), lambda n: (n, 0, 0)),
                  vec(Cpm), vec(Cpm),
                  pl.BlockSpec((9, Cpm, Cpm), lambda n: (0, 0, 0)),
                  pl.BlockSpec((9, HW, 1), lambda n: (0, 0, 0))],
        out_specs=[pl.BlockSpec((1, HW, Cpm), lambda n: (n, 0, 0)),
                   pl.BlockSpec((1, 1, 8, Cpm), lambda n: (n, 0, 0, 0))],
        compiler_params=cp1,
    )(y1, sc1, sh1, w2m, tap_mask)
    sc2, sh2 = _fold_bn(st2, g2, b2, Cpm)

    # ---- stage 3: bn2+relu + conv3 (1x1) + partial moments -------------------
    y3, st3 = pl.pallas_call(
        _bn_relu_conv1x1_kernel,
        out_shape=(jax.ShapeDtypeStruct((N, HW, Cpo), bf16),
                   jax.ShapeDtypeStruct((N, T, 8, Cpo), f32)),
        grid=(N, T),
        in_specs=[pl.BlockSpec((1, THW, Cpm), lambda n, t: (n, t, 0)),
                  vec(Cpm), vec(Cpm),
                  pl.BlockSpec((Cpm, Cpo), lambda n, t: (0, 0))],
        out_specs=[pl.BlockSpec((1, THW, Cpo), lambda n, t: (n, t, 0)),
                   pl.BlockSpec((1, 1, 8, Cpo), lambda n, t: (n, t, 0, 0))],
        compiler_params=cp2,
    )(y2, sc2, sh2, w3m)
    sc3, sh3 = _fold_bn(st3, g3, b3, Cpo)

    # ---- stage 4: bn3 + residual add + relu ----------------------------------
    out = pl.pallas_call(
        _bn_add_relu_kernel,
        out_shape=jax.ShapeDtypeStruct((N, HW, Cpo), f32),
        grid=(N, T),
        in_specs=[pl.BlockSpec((1, THW, Cpo), lambda n, t: (n, t, 0)),
                  vec(Cpo), vec(Cpo),
                  pl.BlockSpec((1, THW, Cpi), lambda n, t: (n, t, 0))],
        out_specs=pl.BlockSpec((1, THW, Cpo), lambda n, t: (n, t, 0)),
        compiler_params=cp2,
    )(y3, sc3, sh3, x)

    out = out[..., :Cout].reshape(N, H, W, Cout).astype(x_nchw.dtype)
    return jnp.transpose(out, (0, 3, 1, 2))                        # NCHW


# ---------------------------- pure-JAX reference -----------------------------
def reference_block(x, w1, w2, w3, g1, b1, g2, b2, g3, b3):
    def conv(x, w, pad):
        return jax.lax.conv_general_dilated(
            x, w, window_strides=(1, 1), padding=[(pad, pad), (pad, pad)],
            dimension_numbers=("NCHW", "OIHW", "NCHW"))

    def bn(y, g, b):
        m = jnp.mean(y, axis=(0, 2, 3), keepdims=True)
        v = jnp.mean((y - m) ** 2, axis=(0, 2, 3), keepdims=True)
        return (y - m) / jnp.sqrt(v + EPS) * g.reshape(1, -1, 1, 1) \
            + b.reshape(1, -1, 1, 1)

    y = jax.nn.relu(bn(conv(x, w1, 0), g1, b1))
    y = jax.nn.relu(bn(conv(y, w2, 1), g2, b2))
    y = bn(conv(y, w3, 0), g3, b3)
    return jax.nn.relu(y + x)


if __name__ == "__main__":
    # Small ResNet-style shapes: input_channels=4, output_channels=(8, 4)
    N, Cin, H, W = 2, 4, 16, 16
    Cmid, Cout = 8, 4

    key = jax.random.PRNGKey(0)
    ks = jax.random.split(key, 10)
    w1 = 0.1 * jax.random.normal(ks[0], (Cmid, Cin, 1, 1), jnp.float32)
    w2 = 0.1 * jax.random.normal(ks[1], (Cmid, Cmid, 3, 3), jnp.float32)
    w3 = 0.1 * jax.random.normal(ks[2], (Cout, Cmid, 1, 1), jnp.float32)
    g1 = 1.0 + 0.1 * jax.random.normal(ks[3], (Cmid,), jnp.float32)
    b1 = 0.1 * jax.random.normal(ks[4], (Cmid,), jnp.float32)
    g2 = 1.0 + 0.1 * jax.random.normal(ks[5], (Cmid,), jnp.float32)
    b2 = 0.1 * jax.random.normal(ks[6], (Cmid,), jnp.float32)
    g3 = 1.0 + 0.1 * jax.random.normal(ks[7], (Cout,), jnp.float32)
    b3 = 0.1 * jax.random.normal(ks[8], (Cout,), jnp.float32)
    x = jax.random.normal(ks[9], (N, Cin, H, W), jnp.float32)

    params = (w1, w2, w3, g1, b1, g2, b2, g3, b3)

    out = jax.block_until_ready(residual_block(x, *params))
    ref = jax.block_until_ready(reference_block(x, *params))

    assert out.shape == (N, Cin, H, W)
    max_err = float(jnp.max(jnp.abs(out - ref)))
    assert max_err < 5e-2, f"mismatch vs reference: max abs err {max_err}"

    print("KERNEL_OK")
</pallas_src>

<mosaic_0001>
module attributes {stable_mosaic.version = 11 : i64} {
  func.func @_conv1x1_stats_kernel(%arg0: i32, %arg1: i32, %arg2: memref<1x256x128xf32, #tpu.memory_space<vmem>>, %arg3: memref<128x128xbf16, #tpu.memory_space<vmem>>, %arg4: memref<1x256x128xbf16, #tpu.memory_space<vmem>>, %arg5: memref<1x1x8x128xf32, #tpu.memory_space<vmem>>) attributes {dimension_semantics = [#tpu.dimension_semantics<parallel>, #tpu.dimension_semantics<parallel>], iteration_bounds = array<i64: 2, 1>, scalar_prefetch = 0 : i64, scratch_operands = 0 : i64, tpu.core_type = #tpu.core_type<tc>, window_params = [{transform_indices = @transform_0, window_bounds = array<i64: 1, 256, 128>}, {pipeline_mode = #tpu.pipeline_mode<synchronous>, transform_indices = @transform_1, window_bounds = array<i64: 128, 128>}, {transform_indices = @transform_2, window_bounds = array<i64: 1, 256, 128>}, {transform_indices = @transform_3, window_bounds = array<i64: 1, 1, 8, 128>}]} {
    %c0 = arith.constant 0 : index
    %c0_0 = arith.constant 0 : index
    %c0_1 = arith.constant 0 : index
    %0 = vector.load %arg2[%c0, %c0_0, %c0_1] : memref<1x256x128xf32, #tpu.memory_space<vmem>>, vector<1x256x128xf32>
    %1 = vector.shape_cast %0 : vector<1x256x128xf32> to vector<256x128xf32>
    %2 = arith.truncf %1 : vector<256x128xf32> to vector<256x128xbf16>
    %c0_2 = arith.constant 0 : index
    %c0_3 = arith.constant 0 : index
    %3 = vector.load %arg3[%c0_2, %c0_3] : memref<128x128xbf16, #tpu.memory_space<vmem>>, vector<128x128xbf16>
    %cst = arith.constant dense<0.000000e+00> : vector<256x128xf32>
    %4 = tpu.matmul %2, %3, %cst {dimension_numbers = #tpu.dot_dimension_numbers<[1], [0], [0], [1], [0, 0, 1, 1], [], []>} : vector<256x128xbf16>, vector<128x128xbf16>, vector<256x128xf32> -> vector<256x128xf32>
    %5 = arith.truncf %4 : vector<256x128xf32> to vector<256x128xbf16>
    %c0_4 = arith.constant 0 : index
    %c0_5 = arith.constant 0 : index
    %c0_6 = arith.constant 0 : index
    %6 = vector.load %arg4[%c0_4, %c0_5, %c0_6] : memref<1x256x128xbf16, #tpu.memory_space<vmem>>, vector<1x256x128xbf16>
    %7 = vector.shape_cast %6 : vector<1x256x128xbf16> to vector<256x128xbf16>
    %8 = vector.shape_cast %5 : vector<256x128xbf16> to vector<1x256x128xbf16>
    tpu.vector_store %arg4[%c0_4, %c0_5, %c0_6], %8 {strides = array<i32>} : memref<1x256x128xbf16, #tpu.memory_space<vmem>>, vector<1x256x128xbf16>,
    %9 = arith.extf %5 : vector<256x128xbf16> to vector<256x128xf32>
    %cst_7 = arith.constant dense<0.000000e+00> : vector<128xf32>
    %10 = vector.multi_reduction <add>, %9, %cst_7 [0] : vector<256x128xf32> to vector<128xf32>
    %11 = vector.shape_cast %10 : vector<128xf32> to vector<1x128xf32>
    %12 = arith.mulf %9, %9 : vector<256x128xf32>
    %cst_8 = arith.constant dense<0.000000e+00> : vector<128xf32>
    %13 = vector.multi_reduction <add>, %12, %cst_8 [0] : vector<256x128xf32> to vector<128xf32>
    %14 = vector.shape_cast %13 : vector<128xf32> to vector<1x128xf32>
    %cst_9 = arith.constant 0.000000e+00 : f32
    %15 = vector.broadcast %cst_9 : f32 to vector<6x128xf32>
    %16 = tpu.concatenate %11, %14, %15 in 0 : vector<1x128xf32>, vector<1x128xf32>, vector<6x128xf32> -> vector<8x128xf32>
    %c0_10 = arith.constant 0 : index
    %c0_11 = arith.constant 0 : index
    %c0_12 = arith.constant 0 : index
    %c0_13 = arith.constant 0 : index
    %17 = vector.load %arg5[%c0_10, %c0_11, %c0_12, %c0_13] : memref<1x1x8x128xf32, #tpu.memory_space<vmem>>, vector<1x1x8x128xf32>
    %18 = vector.shape_cast %17 : vector<1x1x8x128xf32> to vector<8x128xf32>
    %19 = vector.shape_cast %16 : vector<8x128xf32> to vector<1x1x8x128xf32>
    tpu.vector_store %arg5[%c0_10, %c0_11, %c0_12, %c0_13], %19 {strides = array<i32>} : memref<1x1x8x128xf32, #tpu.memory_space<vmem>>, vector<1x1x8x128xf32>,
    return
  }
  func.func @transform_0(%arg0: i32, %arg1: i32) -> (i32, i32, i32) {
    %c0_i32 = arith.constant 0 : i32
    %c0_i32_0 = arith.constant 0 : i32
    return %arg0, %arg1, %c0_i32 : i32, i32, i32
  }
  func.func @transform_1(%arg0: i32, %arg1: i32) -> (i32, i32) {
    %c0_i32 = arith.constant 0 : i32
    %c0_i32_0 = arith.constant 0 : i32
    %c0_i32_1 = arith.constant 0 : i32
    return %c0_i32, %c0_i32_0 : i32, i32
  }
  func.func @transform_2(%arg0: i32, %arg1: i32) -> (i32, i32, i32) {
    %c0_i32 = arith.constant 0 : i32
    %c0_i32_0 = arith.constant 0 : i32
    return %arg0, %arg1, %c0_i32 : i32, i32, i32
  }
  func.func @transform_3(%arg0: i32, %arg1: i32) -> (i32, i32, i32, i32) {
    %c0_i32 = arith.constant 0 : i32
    %c0_i32_0 = arith.constant 0 : i32
    %c0_i32_1 = arith.constant 0 : i32
    return %arg0, %arg1, %c0_i32, %c0_i32_0 : i32, i32, i32, i32
  }
}

module attributes {stable_mosaic.version = 11 : i64} {
  func.func @kernel(%arg0: i32, %arg1: memref<1x256x128xbf16, #tpu.memory_space<vmem>>, %arg2: memref<1x128xf32, #tpu.memory_space<vmem>>, %arg3: memref<1x128xf32, #tpu.memory_space<vmem>>, %arg4: memref<9x128x128xbf16, #tpu.memory_space<vmem>>, %arg5: memref<9x256x1xf32, #tpu.memory_space<vmem>>, %arg6: memref<1x256x128xbf16, #tpu.memory_space<vmem>>, %arg7: memref<1x1x8x128xf32, #tpu.memory_space<vmem>>) attributes {dimension_semantics = [#tpu.dimension_semantics<parallel>], iteration_bounds = array<i64: 2>, scalar_prefetch = 0 : i64, scratch_operands = 0 : i64, tpu.core_type = #tpu.core_type<tc>, window_params = [{transform_indices = @transform_0, window_bounds = array<i64: 1, 256, 128>}, {pipeline_mode = #tpu.pipeline_mode<synchronous>, transform_indices = @transform_1, window_bounds = array<i64: 1, 128>}, {pipeline_mode = #tpu.pipeline_mode<synchronous>, transform_indices = @transform_2, window_bounds = array<i64: 1, 128>}, {pipeline_mode = #tpu.pipeline_mode<synchronous>, transform_indices = @transform_3, window_bounds = array<i64: 9, 128, 128>}, {pipeline_mode = #tpu.pipeline_mode<synchronous>, transform_indices = @transform_4, window_bounds = array<i64: 9, 256, 1>}, {transform_indices = @transform_5, window_bounds = array<i64: 1, 256, 128>}, {transform_indices = @transform_6, window_bounds = array<i64: 1, 1, 8, 128>}]} {
    %c0 = arith.constant 0 : index
    %c0_0 = arith.constant 0 : index
    %c0_1 = arith.constant 0 : index
    %0 = vector.load %arg1[%c0, %c0_0, %c0_1] : memref<1x256x128xbf16, #tpu.memory_space<vmem>>, vector<1x256x128xbf16>
    %1 = vector.shape_cast %0 : vector<1x256x128xbf16> to vector<256x128xbf16>
    %2 = arith.extf %1 : vector<256x128xbf16> to vector<256x128xf32>
    %c0_2 = arith.constant 0 : index
    %c0_3 = arith.constant 0 : index
    %3 = vector.load %arg2[%c0_2, %c0_3] : memref<1x128xf32, #tpu.memory_space<vmem>>, vector<1x128xf32>
    %4 = vector.broadcast %3 : vector<1x128xf32> to vector<256x128xf32>
    %5 = arith.mulf %2, %4 : vector<256x128xf32>
    %c0_4 = arith.constant 0 : index
    %c0_5 = arith.constant 0 : index
    %6 = vector.load %arg3[%c0_4, %c0_5] : memref<1x128xf32, #tpu.memory_space<vmem>>, vector<1x128xf32>
    %7 = vector.broadcast %6 : vector<1x128xf32> to vector<256x128xf32>
    %8 = arith.addf %5, %7 : vector<256x128xf32>
    %cst = arith.constant 0.000000e+00 : f32
    %9 = vector.broadcast %cst : f32 to vector<256x128xf32>
    %10 = arith.maximumf %8, %9 : vector<256x128xf32>
    %cst_6 = arith.constant 0.000000e+00 : f32
    %11 = vector.broadcast %cst_6 : f32 to vector<256x128xf32>
    %c17_i32 = arith.constant 17 : i32
    %12 = tpu.dynamic_rotate %10 by %c17_i32 dim 0 : vector<256x128xf32>, i32 -> vector<256x128xf32>
    %c0_7 = arith.constant 0 : index
    %c0_8 = arith.constant 0 : index
    %c0_9 = arith.constant 0 : index
    %13 = vector.load %arg5[%c0_7, %c0_8, %c0_9] : memref<9x256x1xf32, #tpu.memory_space<vmem>>, vector<1x256x1xf32>
    %14 = vector.shape_cast %13 : vector<1x256x1xf32> to vector<256x1xf32>
    %15 = vector.broadcast %14 : vector<256x1xf32> to vector<256x128xf32>
    %16 = arith.mulf %12, %15 : vector<256x128xf32>
    %17 = arith.truncf %16 : vector<256x128xf32> to vector<256x128xbf16>
    %c0_10 = arith.constant 0 : index
    %c0_11 = arith.constant 0 : index
    %c0_12 = arith.constant 0 : index
    %18 = vector.load %arg4[%c0_10, %c0_11, %c0_12] : memref<9x128x128xbf16, #tpu.memory_space<vmem>>, vector<1x128x128xbf16>
    %19 = vector.shape_cast %18 : vector<1x128x128xbf16> to vector<128x128xbf16>
    %cst_13 = arith.constant dense<0.000000e+00> : vector<256x128xf32>
    %20 = tpu.matmul %17, %19, %cst_13 {dimension_numbers = #tpu.dot_dimension_numbers<[1], [0], [0], [1], [0, 0, 1, 1], [], []>} : vector<256x128xbf16>, vector<128x128xbf16>, vector<256x128xf32> -> vector<256x128xf32>
    %21 = arith.addf %11, %20 : vector<256x128xf32>
    %c16_i32 = arith.constant 16 : i32
    %22 = tpu.dynamic_rotate %10 by %c16_i32 dim 0 : vector<256x128xf32>, i32 -> vector<256x128xf32>
    %c1 = arith.constant 1 : index
    %c0_14 = arith.constant 0 : index
    %c0_15 = arith.constant 0 : index
    %23 = vector.load %arg5[%c1, %c0_14, %c0_15] : memref<9x256x1xf32, #tpu.memory_space<vmem>>, vector<1x256x1xf32>
    %24 = vector.shape_cast %23 : vector<1x256x1xf32> to vector<256x1xf32>
    %25 = vector.broadcast %24 : vector<256x1xf32> to vector<256x128xf32>
    %26 = arith.mulf %22, %25 : vector<256x128xf32>
    %27 = arith.truncf %26 : vector<256x128xf32> to vector<256x128xbf16>
    %c1_16 = arith.constant 1 : index
    %c0_17 = arith.constant 0 : index
    %c0_18 = arith.constant 0 : index
    %28 = vector.load %arg4[%c1_16, %c0_17, %c0_18] : memref<9x128x128xbf16, #tpu.memory_space<vmem>>, vector<1x128x128xbf16>
    %29 = vector.shape_cast %28 : vector<1x128x128xbf16> to vector<128x128xbf16>
    %cst_19 = arith.constant dense<0.000000e+00> : vector<256x128xf32>
    %30 = tpu.matmul %27, %29, %cst_19 {dimension_numbers = #tpu.dot_dimension_numbers<[1], [0], [0], [1], [0, 0, 1, 1], [], []>} : vector<256x128xbf16>, vector<128x128xbf16>, vector<256x128xf32> -> vector<256x128xf32>
    %31 = arith.addf %21, %30 : vector<256x128xf32>
    %c15_i32 = arith.constant 15 : i32
    %32 = tpu.dynamic_rotate %10 by %c15_i32 dim 0 : vector<256x128xf32>, i32 -> vector<256x128xf32>
    %c2 = arith.constant 2 : index
    %c0_20 = arith.constant 0 : index
    %c0_21 = arith.constant 0 : index
    %33 = vector.load %arg5[%c2, %c0_20, %c0_21] : memref<9x256x1xf32, #tpu.memory_space<vmem>>, vector<1x256x1xf32>
    %34 = vector.shape_cast %33 : vector<1x256x1xf32> to vector<256x1xf32>
    %35 = vector.broadcast %34 : vector<256x1xf32> to vector<256x128xf32>
    %36 = arith.mulf %32, %35 : vector<256x128xf32>
    %37 = arith.truncf %36 : vector<256x128xf32> to vector<256x128xbf16>
    %c2_22 = arith.constant 2 : index
    %c0_23 = arith.constant 0 : index
    %c0_24 = arith.constant 0 : index
    %38 = vector.load %arg4[%c2_22, %c0_23, %c0_24] : memref<9x128x128xbf16, #tpu.memory_space<vmem>>, vector<1x128x128xbf16>
    %39 = vector.shape_cast %38 : vector<1x128x128xbf16> to vector<128x128xbf16>
    %cst_25 = arith.constant dense<0.000000e+00> : vector<256x128xf32>
    %40 = tpu.matmul %37, %39, %cst_25 {dimension_numbers = #tpu.dot_dimension_numbers<[1], [0], [0], [1], [0, 0, 1, 1], [], []>} : vector<256x128xbf16>, vector<128x128xbf16>, vector<256x128xf32> -> vector<256x128xf32>
    %41 = arith.addf %31, %40 : vector<256x128xf32>
    %c1_i32 = arith.constant 1 : i32
    %42 = tpu.dynamic_rotate %10 by %c1_i32 dim 0 : vector<256x128xf32>, i32 -> vector<256x128xf32>
    %c3 = arith.constant 3 : index
    %c0_26 = arith.constant 0 : index
    %c0_27 = arith.constant 0 : index
    %43 = vector.load %arg5[%c3, %c0_26, %c0_27] : memref<9x256x1xf32, #tpu.memory_space<vmem>>, vector<1x256x1xf32>
    %44 = vector.shape_cast %43 : vector<1x256x1xf32> to vector<256x1xf32>
    %45 = vector.broadcast %44 : vector<256x1xf32> to vector<256x128xf32>
    %46 = arith.mulf %42, %45 : vector<256x128xf32>
    %47 = arith.truncf %46 : vector<256x128xf32> to vector<256x128xbf16>
    %c3_28 = arith.constant 3 : index
    %c0_29 = arith.constant 0 : index
    %c0_30 = arith.constant 0 : index
    %48 = vector.load %arg4[%c3_28, %c0_29, %c0_30] : memref<9x128x128xbf16, #tpu.memory_space<vmem>>, vector<1x128x128xbf16>
    %49 = vector.shape_cast %48 : vector<1x128x128xbf16> to vector<128x128xbf16>
    %cst_31 = arith.constant dense<0.000000e+00> : vector<256x128xf32>
    %50 = tpu.matmul %47, %49, %cst_31 {dimension_numbers = #tpu.dot_dimension_numbers<[1], [0], [0], [1], [0, 0, 1, 1], [], []>} : vector<256x128xbf16>, vector<128x128xbf16>, vector<256x128xf32> -> vector<256x128xf32>
    %51 = arith.addf %41, %50 : vector<256x128xf32>
    %c4 = arith.constant 4 : index
    %c0_32 = arith.constant 0 : index
    %c0_33 = arith.constant 0 : index
    %52 = vector.load %arg5[%c4, %c0_32, %c0_33] : memref<9x256x1xf32, #tpu.memory_space<vmem>>, vector<1x256x1xf32>
    %53 = vector.shape_cast %52 : vector<1x256x1xf32> to vector<256x1xf32>
    %54 = vector.broadcast %53 : vector<256x1xf32> to vector<256x128xf32>
    %55 = arith.mulf %10, %54 : vector<256x128xf32>
    %56 = arith.truncf %55 : vector<256x128xf32> to vector<256x128xbf16>
    %c4_34 = arith.constant 4 : index
    %c0_35 = arith.constant 0 : index
    %c0_36 = arith.constant 0 : index
    %57 = vector.load %arg4[%c4_34, %c0_35, %c0_36] : memref<9x128x128xbf16, #tpu.memory_space<vmem>>, vector<1x128x128xbf16>
    %58 = vector.shape_cast %57 : vector<1x128x128xbf16> to vector<128x128xbf16>
    %cst_37 = arith.constant dense<0.000000e+00> : vector<256x128xf32>
    %59 = tpu.matmul %56, %58, %cst_37 {dimension_numbers = #tpu.dot_dimension_numbers<[1], [0], [0], [1], [0, 0, 1, 1], [], []>} : vector<256x128xbf16>, vector<128x128xbf16>, vector<256x128xf32> -> vector<256x128xf32>
    %60 = arith.addf %51, %59 : vector<256x128xf32>
    %c255_i32 = arith.constant 255 : i32
    %61 = tpu.dynamic_rotate %10 by %c255_i32 dim 0 : vector<256x128xf32>, i32 -> vector<256x128xf32>
    %c5 = arith.constant 5 : index
    %c0_38 = arith.constant 0 : index
    %c0_39 = arith.constant 0 : index
    %62 = vector.load %arg5[%c5, %c0_38, %c0_39] : memref<9x256x1xf32, #tpu.memory_space<vmem>>, vector<1x256x1xf32>
    %63 = vector.shape_cast %62 : vector<1x256x1xf32> to vector<256x1xf32>
    %64 = vector.broadcast %63 : vector<256x1xf32> to vector<256x128xf32>
    %65 = arith.mulf %61, %64 : vector<256x128xf32>
    %66 = arith.truncf %65 : vector<256x128xf32> to vector<256x128xbf16>
    %c5_40 = arith.constant 5 : index
    %c0_41 = arith.constant 0 : index
    %c0_42 = arith.constant 0 : index
    %67 = vector.load %arg4[%c5_40, %c0_41, %c0_42] : memref<9x128x128xbf16, #tpu.memory_space<vmem>>, vector<1x128x128xbf16>
    %68 = vector.shape_cast %67 : vector<1x128x128xbf16> to vector<128x128xbf16>
    %cst_43 = arith.constant dense<0.000000e+00> : vector<256x128xf32>
    %69 = tpu.matmul %66, %68, %cst_43 {dimension_numbers = #tpu.dot_dimension_numbers<[1], [0], [0], [1], [0, 0, 1, 1], [], []>} : vector<256x128xbf16>, vector<128x128xbf16>, vector<256x128xf32> -> vector<256x128xf32>
    %70 = arith.addf %60, %69 : vector<256x128xf32>
    %c241_i32 = arith.constant 241 : i32
    %71 = tpu.dynamic_rotate %10 by %c241_i32 dim 0 : vector<256x128xf32>, i32 -> vector<256x128xf32>
    %c6 = arith.constant 6 : index
    %c0_44 = arith.constant 0 : index
    %c0_45 = arith.constant 0 : index
    %72 = vector.load %arg5[%c6, %c0_44, %c0_45] : memref<9x256x1xf32, #tpu.memory_space<vmem>>, vector<1x256x1xf32>
    %73 = vector.shape_cast %72 : vector<1x256x1xf32> to vector<256x1xf32>
    %74 = vector.broadcast %73 : vector<256x1xf32> to vector<256x128xf32>
    %75 = arith.mulf %71, %74 : vector<256x128xf32>
    %76 = arith.truncf %75 : vector<256x128xf32> to vector<256x128xbf16>
    %c6_46 = arith.constant 6 : index
    %c0_47 = arith.constant 0 : index
    %c0_48 = arith.constant 0 : index
    %77 = vector.load %arg4[%c6_46, %c0_47, %c0_48] : memref<9x128x128xbf16, #tpu.memory_space<vmem>>, vector<1x128x128xbf16>
    %78 = vector.shape_cast %77 : vector<1x128x128xbf16> to vector<128x128xbf16>
    %cst_49 = arith.constant dense<0.000000e+00> : vector<256x128xf32>
    %79 = tpu.matmul %76, %78, %cst_49 {dimension_numbers = #tpu.dot_dimension_numbers<[1], [0], [0], [1], [0, 0, 1, 1], [], []>} : vector<256x128xbf16>, vector<128x128xbf16>, vector<256x128xf32> -> vector<256x128xf32>
    %80 = arith.addf %70, %79 : vector<256x128xf32>
    %c240_i32 = arith.constant 240 : i32
    %81 = tpu.dynamic_rotate %10 by %c240_i32 dim 0 : vector<256x128xf32>, i32 -> vector<256x128xf32>
    %c7 = arith.constant 7 : index
    %c0_50 = arith.constant 0 : index
    %c0_51 = arith.constant 0 : index
    %82 = vector.load %arg5[%c7, %c0_50, %c0_51] : memref<9x256x1xf32, #tpu.memory_space<vmem>>, vector<1x256x1xf32>
    %83 = vector.shape_cast %82 : vector<1x256x1xf32> to vector<256x1xf32>
    %84 = vector.broadcast %83 : vector<256x1xf32> to vector<256x128xf32>
    %85 = arith.mulf %81, %84 : vector<256x128xf32>
    %86 = arith.truncf %85 : vector<256x128xf32> to vector<256x128xbf16>
    %c7_52 = arith.constant 7 : index
    %c0_53 = arith.constant 0 : index
    %c0_54 = arith.constant 0 : index
    %87 = vector.load %arg4[%c7_52, %c0_53, %c0_54] : memref<9x128x128xbf16, #tpu.memory_space<vmem>>, vector<1x128x128xbf16>
    %88 = vector.shape_cast %87 : vector<1x128x128xbf16> to vector<128x128xbf16>
    %cst_55 = arith.constant dense<0.000000e+00> : vector<256x128xf32>
    %89 = tpu.matmul %86, %88, %cst_55 {dimension_numbers = #tpu.dot_dimension_numbers<[1], [0], [0], [1], [0, 0, 1, 1], [], []>} : vector<256x128xbf16>, vector<128x128xbf16>, vector<256x128xf32> -> vector<256x128xf32>
    %90 = arith.addf %80, %89 : vector<256x128xf32>
    %c239_i32 = arith.constant 239 : i32
    %91 = tpu.dynamic_rotate %10 by %c239_i32 dim 0 : vector<256x128xf32>, i32 -> vector<256x128xf32>
    %c8 = arith.constant 8 : index
    %c0_56 = arith.constant 0 : index
    %c0_57 = arith.constant 0 : index
    %92 = vector.load %arg5[%c8, %c0_56, %c0_57] : memref<9x256x1xf32, #tpu.memory_space<vmem>>, vector<1x256x1xf32>
    %93 = vector.shape_cast %92 : vector<1x256x1xf32> to vector<256x1xf32>
    %94 = vector.broadcast %93 : vector<256x1xf32> to vector<256x128xf32>
    %95 = arith.mulf %91, %94 : vector<256x128xf32>
    %96 = arith.truncf %95 : vector<256x128xf32> to vector<256x128xbf16>
    %c8_58 = arith.constant 8 : index
    %c0_59 = arith.constant 0 : index
    %c0_60 = arith.constant 0 : index
    %97 = vector.load %arg4[%c8_58, %c0_59, %c0_60] : memref<9x128x128xbf16, #tpu.memory_space<vmem>>, vector<1x128x128xbf16>
    %98 = vector.shape_cast %97 : vector<1x128x128xbf16> to vector<128x128xbf16>
    %cst_61 = arith.constant dense<0.000000e+00> : vector<256x128xf32>
    %99 = tpu.matmul %96, %98, %cst_61 {dimension_numbers = #tpu.dot_dimension_numbers<[1], [0], [0], [1], [0, 0, 1, 1], [], []>} : vector<256x128xbf16>, vector<128x128xbf16>, vector<256x128xf32> -> vector<256x128xf32>
    %100 = arith.addf %90, %99 : vector<256x128xf32>
    %101 = arith.truncf %100 : vector<256x128xf32> to vector<256x128xbf16>
    %c0_62 = arith.constant 0 : index
    %c0_63 = arith.constant 0 : index
    %c0_64 = arith.constant 0 : index
    %102 = vector.load %arg6[%c0_62, %c0_63, %c0_64] : memref<1x256x128xbf16, #tpu.memory_space<vmem>>, vector<1x256x128xbf16>
    %103 = vector.shape_cast %102 : vector<1x256x128xbf16> to vector<256x128xbf16>
    %104 = vector.shape_cast %101 : vector<256x128xbf16> to vector<1x256x128xbf16>
    tpu.vector_store %arg6[%c0_62, %c0_63, %c0_64], %104 {strides = array<i32>} : memref<1x256x128xbf16, #tpu.memory_space<vmem>>, vector<1x256x128xbf16>,
    %105 = arith.extf %101 : vector<256x128xbf16> to vector<256x128xf32>
    %cst_65 = arith.constant dense<0.000000e+00> : vector<128xf32>
    %106 = vector.multi_reduction <add>, %105, %cst_65 [0] : vector<256x128xf32> to vector<128xf32>
    %107 = vector.shape_cast %106 : vector<128xf32> to vector<1x128xf32>
    %108 = arith.mulf %105, %105 : vector<256x128xf32>
    %cst_66 = arith.constant dense<0.000000e+00> : vector<128xf32>
    %109 = vector.multi_reduction <add>, %108, %cst_66 [0] : vector<256x128xf32> to vector<128xf32>
    %110 = vector.shape_cast %109 : vector<128xf32> to vector<1x128xf32>
    %cst_67 = arith.constant 0.000000e+00 : f32
    %111 = vector.broadcast %cst_67 : f32 to vector<6x128xf32>
    %112 = tpu.concatenate %107, %110, %111 in 0 : vector<1x128xf32>, vector<1x128xf32>, vector<6x128xf32> -> vector<8x128xf32>
    %c0_68 = arith.constant 0 : index
    %c0_69 = arith.constant 0 : index
    %c0_70 = arith.constant 0 : index
    %c0_71 = arith.constant 0 : index
    %113 = vector.load %arg7[%c0_68, %c0_69, %c0_70, %c0_71] : memref<1x1x8x128xf32, #tpu.memory_space<vmem>>, vector<1x1x8x128xf32>
    %114 = vector.shape_cast %113 : vector<1x1x8x128xf32> to vector<8x128xf32>
    %115 = vector.shape_cast %112 : vector<8x128xf32> to vector<1x1x8x128xf32>
    tpu.vector_store %arg7[%c0_68, %c0_69, %c0_70, %c0_71], %115 {strides = array<i32>} : memref<1x1x8x128xf32, #tpu.memory_space<vmem>>, vector<1x1x8x128xf32>,
    return
  }
  func.func @transform_0(%arg0: i32) -> (i32, i32, i32) {
    %c0_i32 = arith.constant 0 : i32
    %c0_i32_0 = arith.constant 0 : i32
    %c0_i32_1 = arith.constant 0 : i32
    return %arg0, %c0_i32, %c0_i32_0 : i32, i32, i32
  }
  func.func @transform_1(%arg0: i32) -> (i32, i32) {
    %c0_i32 = arith.constant 0 : i32
    %c0_i32_0 = arith.constant 0 : i32
    %c0_i32_1 = arith.constant 0 : i32
    return %c0_i32, %c0_i32_0 : i32, i32
  }
  func.func @transform_2(%arg0: i32) -> (i32, i32) {
    %c0_i32 = arith.constant 0 : i32
    %c0_i32_0 = arith.constant 0 : i32
    %c0_i32_1 = arith.constant 0 : i32
    return %c0_i32, %c0_i32_0 : i32, i32
  }
  func.func @transform_3(%arg0: i32) -> (i32, i32, i32) {
    %c0_i32 = arith.constant 0 : i32
    %c0_i32_0 = arith.constant 0 : i32
    %c0_i32_1 = arith.constant 0 : i32
    %c0_i32_2 = arith.constant 0 : i32
    return %c0_i32, %c0_i32_0, %c0_i32_1 : i32, i32, i32
  }
  func.func @transform_4(%arg0: i32) -> (i32, i32, i32) {
    %c0_i32 = arith.constant 0 : i32
    %c0_i32_0 = arith.constant 0 : i32
    %c0_i32_1 = arith.constant 0 : i32
    %c0_i32_2 = arith.constant 0 : i32
    return %c0_i32, %c0_i32_0, %c0_i32_1 : i32, i32, i32
  }
  func.func @transform_5(%arg0: i32) -> (i32, i32, i32) {
    %c0_i32 = arith.constant 0 : i32
    %c0_i32_0 = arith.constant 0 : i32
    %c0_i32_1 = arith.constant 0 : i32
    return %arg0, %c0_i32, %c0_i32_0 : i32, i32, i32
  }
  func.func @transform_6(%arg0: i32) -> (i32, i32, i32, i32) {
    %c0_i32 = arith.constant 0 : i32
    %c0_i32_0 = arith.constant 0 : i32
    %c0_i32_1 = arith.constant 0 : i32
    %c0_i32_2 = arith.constant 0 : i32
    return %arg0, %c0_i32, %c0_i32_0, %c0_i32_1 : i32, i32, i32, i32
  }
}

module attributes {stable_mosaic.version = 11 : i64} {
  func.func @_bn_relu_conv1x1_kernel(%arg0: i32, %arg1: i32, %arg2: memref<1x256x128xbf16, #tpu.memory_space<vmem>>, %arg3: memref<1x128xf32, #tpu.memory_space<vmem>>, %arg4: memref<1x128xf32, #tpu.memory_space<vmem>>, %arg5: memref<128x128xbf16, #tpu.memory_space<vmem>>, %arg6: memref<1x256x128xbf16, #tpu.memory_space<vmem>>, %arg7: memref<1x1x8x128xf32, #tpu.memory_space<vmem>>) attributes {dimension_semantics = [#tpu.dimension_semantics<parallel>, #tpu.dimension_semantics<parallel>], iteration_bounds = array<i64: 2, 1>, scalar_prefetch = 0 : i64, scratch_operands = 0 : i64, tpu.core_type = #tpu.core_type<tc>, window_params = [{transform_indices = @transform_0, window_bounds = array<i64: 1, 256, 128>}, {pipeline_mode = #tpu.pipeline_mode<synchronous>, transform_indices = @transform_1, window_bounds = array<i64: 1, 128>}, {pipeline_mode = #tpu.pipeline_mode<synchronous>, transform_indices = @transform_2, window_bounds = array<i64: 1, 128>}, {pipeline_mode = #tpu.pipeline_mode<synchronous>, transform_indices = @transform_3, window_bounds = array<i64: 128, 128>}, {transform_indices = @transform_4, window_bounds = array<i64: 1, 256, 128>}, {transform_indices = @transform_5, window_bounds = array<i64: 1, 1, 8, 128>}]} {
    %c0 = arith.constant 0 : index
    %c0_0 = arith.constant 0 : index
    %c0_1 = arith.constant 0 : index
    %0 = vector.load %arg2[%c0, %c0_0, %c0_1] : memref<1x256x128xbf16, #tpu.memory_space<vmem>>, vector<1x256x128xbf16>
    %1 = vector.shape_cast %0 : vector<1x256x128xbf16> to vector<256x128xbf16>
    %2 = arith.extf %1 : vector<256x128xbf16> to vector<256x128xf32>
    %c0_2 = arith.constant 0 : index
    %c0_3 = arith.constant 0 : index
    %3 = vector.load %arg3[%c0_2, %c0_3] : memref<1x128xf32, #tpu.memory_space<vmem>>, vector<1x128xf32>
    %4 = vector.broadcast %3 : vector<1x128xf32> to vector<256x128xf32>
    %5 = arith.mulf %2, %4 : vector<256x128xf32>
    %c0_4 = arith.constant 0 : index
    %c0_5 = arith.constant 0 : index
    %6 = vector.load %arg4[%c0_4, %c0_5] : memref<1x128xf32, #tpu.memory_space<vmem>>, vector<1x128xf32>
    %7 = vector.broadcast %6 : vector<1x128xf32> to vector<256x128xf32>
    %8 = arith.addf %5, %7 : vector<256x128xf32>
    %cst = arith.constant 0.000000e+00 : f32
    %9 = vector.broadcast %cst : f32 to vector<256x128xf32>
    %10 = arith.maximumf %8, %9 : vector<256x128xf32>
    %11 = arith.truncf %10 : vector<256x128xf32> to vector<256x128xbf16>
    %c0_6 = arith.constant 0 : index
    %c0_7 = arith.constant 0 : index
    %12 = vector.load %arg5[%c0_6, %c0_7] : memref<128x128xbf16, #tpu.memory_space<vmem>>, vector<128x128xbf16>
    %cst_8 = arith.constant dense<0.000000e+00> : vector<256x128xf32>
    %13 = tpu.matmul %11, %12, %cst_8 {dimension_numbers = #tpu.dot_dimension_numbers<[1], [0], [0], [1], [0, 0, 1, 1], [], []>} : vector<256x128xbf16>, vector<128x128xbf16>, vector<256x128xf32> -> vector<256x128xf32>
    %14 = arith.truncf %13 : vector<256x128xf32> to vector<256x128xbf16>
    %c0_9 = arith.constant 0 : index
    %c0_10 = arith.constant 0 : index
    %c0_11 = arith.constant 0 : index
    %15 = vector.load %arg6[%c0_9, %c0_10, %c0_11] : memref<1x256x128xbf16, #tpu.memory_space<vmem>>, vector<1x256x128xbf16>
    %16 = vector.shape_cast %15 : vector<1x256x128xbf16> to vector<256x128xbf16>
    %17 = vector.shape_cast %14 : vector<256x128xbf16> to vector<1x256x128xbf16>
    tpu.vector_store %arg6[%c0_9, %c0_10, %c0_11], %17 {strides = array<i32>} : memref<1x256x128xbf16, #tpu.memory_space<vmem>>, vector<1x256x128xbf16>,
    %18 = arith.extf %14 : vector<256x128xbf16> to vector<256x128xf32>
    %cst_12 = arith.constant dense<0.000000e+00> : vector<128xf32>
    %19 = vector.multi_reduction <add>, %18, %cst_12 [0] : vector<256x128xf32> to vector<128xf32>
    %20 = vector.shape_cast %19 : vector<128xf32> to vector<1x128xf32>
    %21 = arith.mulf %18, %18 : vector<256x128xf32>
    %cst_13 = arith.constant dense<0.000000e+00> : vector<128xf32>
    %22 = vector.multi_reduction <add>, %21, %cst_13 [0] : vector<256x128xf32> to vector<128xf32>
    %23 = vector.shape_cast %22 : vector<128xf32> to vector<1x128xf32>
    %cst_14 = arith.constant 0.000000e+00 : f32
    %24 = vector.broadcast %cst_14 : f32 to vector<6x128xf32>
    %25 = tpu.concatenate %20, %23, %24 in 0 : vector<1x128xf32>, vector<1x128xf32>, vector<6x128xf32> -> vector<8x128xf32>
    %c0_15 = arith.constant 0 : index
    %c0_16 = arith.constant 0 : index
    %c0_17 = arith.constant 0 : index
    %c0_18 = arith.constant 0 : index
    %26 = vector.load %arg7[%c0_15, %c0_16, %c0_17, %c0_18] : memref<1x1x8x128xf32, #tpu.memory_space<vmem>>, vector<1x1x8x128xf32>
    %27 = vector.shape_cast %26 : vector<1x1x8x128xf32> to vector<8x128xf32>
    %28 = vector.shape_cast %25 : vector<8x128xf32> to vector<1x1x8x128xf32>
    tpu.vector_store %arg7[%c0_15, %c0_16, %c0_17, %c0_18], %28 {strides = array<i32>} : memref<1x1x8x128xf32, #tpu.memory_space<vmem>>, vector<1x1x8x128xf32>,
    return
  }
  func.func @transform_0(%arg0: i32, %arg1: i32) -> (i32, i32, i32) {
    %c0_i32 = arith.constant 0 : i32
    %c0_i32_0 = arith.constant 0 : i32
    return %arg0, %arg1, %c0_i32 : i32, i32, i32
  }
  func.func @transform_1(%arg0: i32, %arg1: i32) -> (i32, i32) {
    %c0_i32 = arith.constant 0 : i32
    %c0_i32_0 = arith.constant 0 : i32
    %c0_i32_1 = arith.constant 0 : i32
    return %c0_i32, %c0_i32_0 : i32, i32
  }
  func.func @transform_2(%arg0: i32, %arg1: i32) -> (i32, i32) {
    %c0_i32 = arith.constant 0 : i32
    %c0_i32_0 = arith.constant 0 : i32
    %c0_i32_1 = arith.constant 0 : i32
    return %c0_i32, %c0_i32_0 : i32, i32
  }
  func.func @transform_3(%arg0: i32, %arg1: i32) -> (i32, i32) {
    %c0_i32 = arith.constant 0 : i32
    %c0_i32_0 = arith.constant 0 : i32
    %c0_i32_1 = arith.constant 0 : i32
    return %c0_i32, %c0_i32_0 : i32, i32
  }
  func.func @transform_4(%arg0: i32, %arg1: i32) -> (i32, i32, i32) {
    %c0_i32 = arith.constant 0 : i32
    %c0_i32_0 = arith.constant 0 : i32
    return %arg0, %arg1, %c0_i32 : i32, i32, i32
  }
  func.func @transform_5(%arg0: i32, %arg1: i32) -> (i32, i32, i32, i32) {
    %c0_i32 = arith.constant 0 : i32
    %c0_i32_0 = arith.constant 0 : i32
    %c0_i32_1 = arith.constant 0 : i32
    return %arg0, %arg1, %c0_i32, %c0_i32_0 : i32, i32, i32, i32
  }
}

module attributes {stable_mosaic.version = 11 : i64} {
  func.func @_bn_add_relu_kernel(%arg0: i32, %arg1: i32, %arg2: memref<1x256x128xbf16, #tpu.memory_space<vmem>>, %arg3: memref<1x128xf32, #tpu.memory_space<vmem>>, %arg4: memref<1x128xf32, #tpu.memory_space<vmem>>, %arg5: memref<1x256x128xf32, #tpu.memory_space<vmem>>, %arg6: memref<1x256x128xf32, #tpu.memory_space<vmem>>) attributes {dimension_semantics = [#tpu.dimension_semantics<parallel>, #tpu.dimension_semantics<parallel>], iteration_bounds = array<i64: 2, 1>, scalar_prefetch = 0 : i64, scratch_operands = 0 : i64, tpu.core_type = #tpu.core_type<tc>, window_params = [{transform_indices = @transform_0, window_bounds = array<i64: 1, 256, 128>}, {pipeline_mode = #tpu.pipeline_mode<synchronous>, transform_indices = @transform_1, window_bounds = array<i64: 1, 128>}, {pipeline_mode = #tpu.pipeline_mode<synchronous>, transform_indices = @transform_2, window_bounds = array<i64: 1, 128>}, {transform_indices = @transform_3, window_bounds = array<i64: 1, 256, 128>}, {transform_indices = @transform_4, window_bounds = array<i64: 1, 256, 128>}]} {
    %c0 = arith.constant 0 : index
    %c0_0 = arith.constant 0 : index
    %c0_1 = arith.constant 0 : index
    %0 = vector.load %arg2[%c0, %c0_0, %c0_1] : memref<1x256x128xbf16, #tpu.memory_space<vmem>>, vector<1x256x128xbf16>
    %1 = vector.shape_cast %0 : vector<1x256x128xbf16> to vector<256x128xbf16>
    %2 = arith.extf %1 : vector<256x128xbf16> to vector<256x128xf32>
    %c0_2 = arith.constant 0 : index
    %c0_3 = arith.constant 0 : index
    %3 = vector.load %arg3[%c0_2, %c0_3] : memref<1x128xf32, #tpu.memory_space<vmem>>, vector<1x128xf32>
    %4 = vector.broadcast %3 : vector<1x128xf32> to vector<256x128xf32>
    %5 = arith.mulf %2, %4 : vector<256x128xf32>
    %c0_4 = arith.constant 0 : index
    %c0_5 = arith.constant 0 : index
    %6 = vector.load %arg4[%c0_4, %c0_5] : memref<1x128xf32, #tpu.memory_space<vmem>>, vector<1x128xf32>
    %7 = vector.broadcast %6 : vector<1x128xf32> to vector<256x128xf32>
    %8 = arith.addf %5, %7 : vector<256x128xf32>
    %c0_6 = arith.constant 0 : index
    %c0_7 = arith.constant 0 : index
    %c0_8 = arith.constant 0 : index
    %9 = vector.load %arg5[%c0_6, %c0_7, %c0_8] : memref<1x256x128xf32, #tpu.memory_space<vmem>>, vector<1x256x128xf32>
    %10 = vector.shape_cast %9 : vector<1x256x128xf32> to vector<256x128xf32>
    %11 = arith.addf %8, %10 : vector<256x128xf32>
    %cst = arith.constant 0.000000e+00 : f32
    %12 = vector.broadcast %cst : f32 to vector<256x128xf32>
    %13 = arith.maximumf %11, %12 : vector<256x128xf32>
    %c0_9 = arith.constant 0 : index
    %c0_10 = arith.constant 0 : index
    %c0_11 = arith.constant 0 : index
    %14 = vector.load %arg6[%c0_9, %c0_10, %c0_11] : memref<1x256x128xf32, #tpu.memory_space<vmem>>, vector<1x256x128xf32>
    %15 = vector.shape_cast %14 : vector<1x256x128xf32> to vector<256x128xf32>
    %16 = vector.shape_cast %13 : vector<256x128xf32> to vector<1x256x128xf32>
    tpu.vector_store %arg6[%c0_9, %c0_10, %c0_11], %16 {strides = array<i32>} : memref<1x256x128xf32, #tpu.memory_space<vmem>>, vector<1x256x128xf32>,
    return
  }
  func.func @transform_0(%arg0: i32, %arg1: i32) -> (i32, i32, i32) {
    %c0_i32 = arith.constant 0 : i32
    %c0_i32_0 = arith.constant 0 : i32
    return %arg0, %arg1, %c0_i32 : i32, i32, i32
  }
  func.func @transform_1(%arg0: i32, %arg1: i32) -> (i32, i32) {
    %c0_i32 = arith.constant 0 : i32
    %c0_i32_0 = arith.constant 0 : i32
    %c0_i32_1 = arith.constant 0 : i32
    return %c0_i32, %c0_i32_0 : i32, i32
  }
  func.func @transform_2(%arg0: i32, %arg1: i32) -> (i32, i32) {
    %c0_i32 = arith.constant 0 : i32
    %c0_i32_0 = arith.constant 0 : i32
    %c0_i32_1 = arith.constant 0 : i32
    return %c0_i32, %c0_i32_0 : i32, i32
  }
  func.func @transform_3(%arg0: i32, %arg1: i32) -> (i32, i32, i32) {
    %c0_i32 = arith.constant 0 : i32
    %c0_i32_0 = arith.constant 0 : i32
    return %arg0, %arg1, %c0_i32 : i32, i32, i32
  }
  func.func @transform_4(%arg0: i32, %arg1: i32) -> (i32, i32, i32) {
    %c0_i32 = arith.constant 0 : i32
    %c0_i32_0 = arith.constant 0 : i32
    return %arg0, %arg1, %c0_i32 : i32, i32, i32
  }
}

</mosaic_0001>

<llo_original>
// kernel: residual_block.4
$region0: #{residual_block.4}
  #allocation0 [shape = 'u32[]', space=smem, size = 0x4, offset = 0x4, fixed_abs, tag = 'smem constant byte address 0x4 - core index']
  #allocation1 [shape = 'u32[144,128]{1,0:T(1,128)}', space=vmem, size = 0x12000, scoped, tag = 'internal scratch']
  %s0 = inlined_call_operand.vmem [shape: f32[2,256,128], index: 0, kind: input, shape index: {}]
  %s1 = inlined_call_operand.vmem [shape: bf16[128,128], index: 1, kind: input, shape index: {}]
  %s2 = inlined_call_operand.vmem [shape: bf16[2,256,128], index: 2, kind: output, shape index: {0}]
  %s3 = inlined_call_operand.vmem [shape: f32[2,1,8,128], index: 3, kind: output, shape index: {1}]
  %4 = xla_tuple %s2, %s3
  %s5 = sld [smem:[#allocation0]]
  $region49: #{residual_block.4} parent=0
    _
  %s7 = ssub.s32 1, %s5
  %s8 = scalar_select 0, %s7, %s5
  loop: start=0, step=1, limit=4
  $region2: #{residual_block.4} parent=0 // loop_pre_header
    _
  $region3: #{residual_block.4} parent=0 // loop_header
    %s10 = sphi 0, %s14
    %p11 = scmp.ge.s32.totalorder %s10, 4
    %s17 = sphi 0, %s29
    %s18 = sphi 0, %s25
    %s19 = sphi 0, %s17
    %s20 = sphi 0, %s18
    %s21 = sphi 0, %s19
    %s22 = sphi 0, %s20
    %s34 = sphi 0, %s36
    %s37 = sphi 0, %s34
    %s38 = sphi 0, %s37
    %s54 = sphi 0, %s38
    %s58 = sphi 0, %s58
    %s60 = sphi 0, %s58
    %s61 = sphi 0, %s60
    %s75 = sphi 0, %s61
    %s83 = sphi 0, %s85
    %s86 = sphi 0, %s83
    %s87 = sphi 0, %s86
    %s103 = sphi 0, %s87
    %s111 = sphi 0, %s113
    %s114 = sphi 0, %s111
    %s115 = sphi 0, %s114
    %s131 = sphi 0, %s115
  $region4: #{residual_block.4} parent=0 // loop_header_branch
    %13 = sbr.rel (%p11) target = $region8
  $region5: #{residual_block.4} parent=0 // loop_body
    %s15 = ssub.s32 %s10, 1
    %s16 = ssub.s32 %s10, 2
    %s23 = sadd.s32 1, %s18
    %p24 = scmp.ge.s32.totalorder %s23, 1
    %s25 = scalar_select %p24, 0, %s23
    %s26 = sadd.s32 1, %s17
    %s27 = scalar_select %p24, %s26, %s17
    %p28 = scmp.ge.s32.totalorder %s27, 2
    %s29 = scalar_select %p28, 0, %s27
    %s30 = ssub.s32 %s17, %s29
    %s31 = ssub.s32 %s18, %s25
    %s32 = sor.u32 %s30, %s31
    %p33 = scmp.eq.s32.totalorder %s32, 0
    %s35 = sadd.s32 %s34, 1
    %s36 = scalar_select %p33, %s34, %s35
    %p39 = pneg %p33
    %p40 = scmp.eq.s32.totalorder %s10, 1
    %p41 = por %p39, %p40
    %p42 = scmp.ne.s32.totalorder %s34, %s37
    %p43 = scmp.eq.s32.totalorder %s10, 0
    %p44 = por %p42, %p43
    %p45 = scmp.ne.s32.totalorder %s34, %s37
    %p46 = scmp.eq.s32.totalorder %s15, 1
    %p47 = por %p45, %p46
    %p48 = scmp.ne.s32.totalorder %s37, %s38
    %p49 = scmp.eq.s32.totalorder %s15, 0
    %p50 = por %p48, %p49
    %p51 = scmp.ne.s32.totalorder %s37, %s38
    %p52 = scmp.eq.s32.totalorder %s16, 1
    %p53 = por %p51, %p52
    %p55 = scmp.ne.s32.totalorder %s38, %s54
    %p56 = scmp.eq.s32.totalorder %s16, 0
    %p57 = por %p55, %p56
    %s59 = sadd.s32 %s58, 1
    %p62 = scmp.eq.s32.totalorder %s10, 1
    %p63 = scmp.ne.s32.totalorder %s58, %s60
    %p64 = scmp.eq.s32.totalorder %s10, 0
    %p65 = por %p63, %p64
    %p66 = scmp.ne.s32.totalorder %s58, %s60
    %p67 = scmp.eq.s32.totalorder %s15, 1
    %p68 = por %p66, %p67
    %p69 = scmp.ne.s32.totalorder %s60, %s61
    %p70 = scmp.eq.s32.totalorder %s15, 0
    %p71 = por %p69, %p70
    %p72 = scmp.ne.s32.totalorder %s60, %s61
    %p73 = scmp.eq.s32.totalorder %s16, 1
    %p74 = por %p72, %p73
    %p76 = scmp.ne.s32.totalorder %s61, %s75
    %p77 = scmp.eq.s32.totalorder %s16, 0
    %p78 = por %p76, %p77
    %s79 = ssub.s32 %s17, %s29
    %s80 = ssub.s32 %s18, %s25
    %s81 = sor.u32 %s79, %s80
    %p82 = scmp.eq.s32.totalorder %s81, 0
    %s84 = sadd.s32 %s83, 1
    %s85 = scalar_select %p82, %s83, %s84
    %p88 = pneg %p82
    %p89 = scmp.eq.s32.totalorder %s10, 1
    %p90 = por %p88, %p89
    %p91 = scmp.ne.s32.totalorder %s83, %s86
    %p92 = scmp.eq.s32.totalorder %s10, 0
    %p93 = por %p91, %p92
    %p94 = scmp.ne.s32.totalorder %s83, %s86
    %p95 = scmp.eq.s32.totalorder %s15, 1
    %p96 = por %p94, %p95
    %p97 = scmp.ne.s32.totalorder %s86, %s87
    %p98 = scmp.eq.s32.totalorder %s15, 0
    %p99 = por %p97, %p98
    %p100 = scmp.ne.s32.totalorder %s86, %s87
    %p101 = scmp.eq.s32.totalorder %s16, 1
    %p102 = por %p100, %p101
    %p104 = scmp.ne.s32.totalorder %s87, %s103
    %p105 = scmp.eq.s32.totalorder %s16, 0
    %p106 = por %p104, %p105
    %s107 = ssub.s32 %s17, %s29
    %s108 = ssub.s32 %s18, %s25
    %s109 = sor.u32 %s107, %s108
    %p110 = scmp.eq.s32.totalorder %s109, 0
    %s112 = sadd.s32 %s111, 1
    %s113 = scalar_select %p110, %s111, %s112
    %p116 = pneg %p110
    %p117 = scmp.eq.s32.totalorder %s10, 1
    %p118 = por %p116, %p117
    %p119 = scmp.ne.s32.totalorder %s111, %s114
    %p120 = scmp.eq.s32.totalorder %s10, 0
    %p121 = por %p119, %p120
    %p122 = scmp.ne.s32.totalorder %s111, %s114
    %p123 = scmp.eq.s32.totalorder %s15, 1
    %p124 = por %p122, %p123
    %p125 = scmp.ne.s32.totalorder %s114, %s115
    %p126 = scmp.eq.s32.totalorder %s15, 0
    %p127 = por %p125, %p126
    %p128 = scmp.ne.s32.totalorder %s114, %s115
    %p129 = scmp.eq.s32.totalorder %s16, 1
    %p130 = por %p128, %p129
    %p132 = scmp.ne.s32.totalorder %s115, %s131
    %p133 = scmp.eq.s32.totalorder %s16, 0
    %p134 = por %p132, %p133
    %p135 = scmp.le.s32.totalorder 1, %s10
    %p136 = scmp.lt.s32.totalorder %s10, 3
    %p137 = pnand %p135, %p136
    %p138 = pneg %p137
    // Predicated region
    $region9: #{residual_block.4} parent=5 // pred_check
      _
    $region10: #{residual_block.4} parent=5 // pred_check_branch
      %140 = sbr.rel (%p137) target = $region12
    $region11: #{residual_block.4} parent=5 // pred_region
      %s141 = ssub.s32 %s10, 1
      // Predicated region
      $region13: #{residual_block.4} parent=11 // pred_check
        %p142 = pneg %p71
      $region14: #{residual_block.4} parent=11 // pred_check_branch
        %144 = sbr.rel (%p142) target = $region16
      $region15: #{residual_block.4} parent=11 // pred_region
        _
      $region16: #{residual_block.4} parent=11 // pred_fallthru
        _
    $region12: #{residual_block.4} parent=5 // pred_fallthru
      _
    %p145 = scmp.lt.s32.totalorder %s10, 2
    // Predicated region
    $region17: #{residual_block.4} parent=5 // pred_check
      %p146 = pneg %p145
    $region18: #{residual_block.4} parent=5 // pred_check_branch
      %148 = sbr.rel (%p146) target = $region20
    $region19: #{residual_block.4} parent=5 // pred_region
      // Predicated region
      $region21: #{residual_block.4} parent=19 // pred_check
        %p149 = pneg %p44
      $region22: #{residual_block.4} parent=19 // pred_check_branch
        %151 = sbr.rel (%p149) target = $region24
      $region23: #{residual_block.4} parent=19 // pred_region
        %s152 = smul.u32 32, %s18
        %p153 = scmp.lt.s32.totalorder %s17, 1
        %s154 = scalar_select %p153, %s17, 1
        %p155 = scmp.lt.s32.totalorder %s152, 31
        %s156 = scalar_select %p155, %s152, 31
        %s157 = smul.addr %s154, 32
        %s158 = sadd.s32 %s156, %s157
        %s159 = smul.addr %s158, 8
        %s160 = scalar_lea.vmem %s0, %s159
        %s161 = smul.u32 32, %s18
      $region24: #{residual_block.4} parent=19 // pred_fallthru
        _
    $region20: #{residual_block.4} parent=5 // pred_fallthru
      _
    %p162 = scmp.le.s32.totalorder 1, %s10
    %p163 = scmp.lt.s32.totalorder %s10, 3
    %p164 = pnand %p162, %p163
    %p165 = pneg %p164
    // Predicated region
    $region25: #{residual_block.4} parent=5 // pred_check
      _
    $region26: #{residual_block.4} parent=5 // pred_check_branch
      %167 = sbr.rel (%p164) target = $region28
    $region27: #{residual_block.4} parent=5 // pred_region
      %s168 = ssub.s32 %s10, 1
      %s169 = smul.u32 32, %s20
      %p170 = scmp.lt.s32.totalorder %s19, 1
      %s171 = scalar_select %p170, %s19, 1
      %p172 = scmp.lt.s32.totalorder %s169, 31
      %s173 = scalar_select %p172, %s169, 31
      %s174 = smul.addr %s171, 32
      %s175 = sadd.s32 %s173, %s174
      %s176 = smul.addr %s175, 8
      %s177 = scalar_lea.vmem %s0, %s176
      %p178 = pneg %p50
      %p179 = pneg %p47
      %p180 = pneg %p71
      %p181 = pneg %p68
      %p182 = pneg %p99
      %p183 = pneg %p96
      %s184 = smul.u32 32, %s20
      %p185 = scmp.lt.s32.totalorder %s19, 1
      %s186 = scalar_select %p185, %s19, 1
      %p187 = scmp.lt.s32.totalorder %s184, 31
      %s188 = scalar_select %p187, %s184, 31
      %s189 = smul.addr %s186, 32
      %s190 = sadd.s32 %s188, %s189
      %s191 = smul.addr %s190, 4
      %s192 = scalar_lea.vmem %s2, %s191
      %p193 = pneg %p127
      %p194 = pneg %p124
      %p195 = scmp.lt.s32.totalorder %s19, 1
      %s196 = scalar_select %p195, %s19, 1
      %p197 = scmp.lt.s32.totalorder %s20, 0
      %s198 = scalar_select %p197, %s20, 0
      %s199 = sadd.s32 %s198, %s196
      %s200 = smul.addr %s199, 8
      %s201 = scalar_lea.vmem %s3, %s200
      %s202 = smul.u32 32, %s20
      %p203 = scmp.lt.s32.totalorder %s19, 1
      %s204 = scalar_select %p203, %s19, 1
      %p205 = scmp.lt.s32.totalorder %s202, 31
      %s206 = scalar_select %p205, %s202, 31
      %s207 = smul.addr %s204, 32
      %s208 = sadd.s32 %s206, %s207
      %s209 = smul.addr %s208, 8
      %s210 = scalar_lea.vmem %s0, %s209
      %s211 = smul.u32 32, %s20
      %s212 = smul.u32 32, %s20
      %p213 = scmp.lt.s32.totalorder %s19, 1
      %s214 = scalar_select %p213, %s19, 1
      %p215 = scmp.lt.s32.totalorder %s212, 31
      %s216 = scalar_select %p215, %s212, 31
      %s217 = smul.addr %s214, 32
      %s218 = sadd.s32 %s216, %s217
      %s219 = smul.addr %s218, 4
      %s220 = scalar_lea.vmem %s2, %s219
      %s221 = smul.u32 32, %s20
      %p222 = scmp.lt.s32.totalorder %s19, 1
      %s223 = scalar_select %p222, %s19, 1
      %p224 = scmp.lt.s32.totalorder %s20, 0
      %s225 = scalar_select %p224, %s20, 0
      %s226 = sadd.s32 %s225, %s223
      %s227 = smul.addr %s226, 8
      %s228 = scalar_lea.vmem %s3, %s227
      %v230 = vld [vmem:[%s210] sm:$0xff]
      %v231 = vld [vmem:[%s210 + $0x8] sm:$0xff]
      %v232 = vld [vmem:[%s210 + $0x10] sm:$0xff]
      %v233 = vld [vmem:[%s210 + $0x18] sm:$0xff]
      %v234 = vld [vmem:[%s210 + $0x20] sm:$0xff]
      %v235 = vld [vmem:[%s210 + $0x28] sm:$0xff]
      %v236 = vld [vmem:[%s210 + $0x30] sm:$0xff]
      %v237 = vld [vmem:[%s210 + $0x38] sm:$0xff]
      %v238 = vld [vmem:[%s210 + $0x40] sm:$0xff]
      %v239 = vld [vmem:[%s210 + $0x48] sm:$0xff]
      %v240 = vld [vmem:[%s210 + $0x50] sm:$0xff]
      %v241 = vld [vmem:[%s210 + $0x58] sm:$0xff]
      %v242 = vld [vmem:[%s210 + $0x60] sm:$0xff]
      %v243 = vld [vmem:[%s210 + $0x68] sm:$0xff]
      %v244 = vld [vmem:[%s210 + $0x70] sm:$0xff]
      %v245 = vld [vmem:[%s210 + $0x78] sm:$0xff]
      %v246 = vld [vmem:[%s210 + $0x80] sm:$0xff]
      %v247 = vld [vmem:[%s210 + $0x88] sm:$0xff]
      %v248 = vld [vmem:[%s210 + $0x90] sm:$0xff]
      %v249 = vld [vmem:[%s210 + $0x98] sm:$0xff]
      %v250 = vld [vmem:[%s210 + $0xa0] sm:$0xff]
      %v251 = vld [vmem:[%s210 + $0xa8] sm:$0xff]
      %v252 = vld [vmem:[%s210 + $0xb0] sm:$0xff]
      %v253 = vld [vmem:[%s210 + $0xb8] sm:$0xff]
      %v254 = vld [vmem:[%s210 + $0xc0] sm:$0xff]
      %v255 = vld [vmem:[%s210 + $0xc8] sm:$0xff]
      %v256 = vld [vmem:[%s210 + $0xd0] sm:$0xff]
      %v257 = vld [vmem:[%s210 + $0xd8] sm:$0xff]
      %v258 = vld [vmem:[%s210 + $0xe0] sm:$0xff]
      %v259 = vld [vmem:[%s210 + $0xe8] sm:$0xff]
      %v260 = vld [vmem:[%s210 + $0xf0] sm:$0xff]
      %v261 = vld [vmem:[%s210 + $0xf8] sm:$0xff]
      %v262 = vpack.c.bf16 %v231, %v230
      %v263 = vpack.c.bf16 %v233, %v232
      %v264 = vpack.c.bf16 %v235, %v234
      %v265 = vpack.c.bf16 %v237, %v236
      %v266 = vpack.c.bf16 %v239, %v238
      %v267 = vpack.c.bf16 %v241, %v240
      %v268 = vpack.c.bf16 %v243, %v242
      %v269 = vpack.c.bf16 %v245, %v244
      %v270 = vpack.c.bf16 %v247, %v246
      %v271 = vpack.c.bf16 %v249, %v248
      %v272 = vpack.c.bf16 %v251, %v250
      %v273 = vpack.c.bf16 %v253, %v252
      %v274 = vpack.c.bf16 %v255, %v254
      %v275 = vpack.c.bf16 %v257, %v256
      %v276 = vpack.c.bf16 %v259, %v258
      %v277 = vpack.c.bf16 %v261, %v260
      %v278 = vld [vmem:[%s1] sm:$0xf]
      %v279 = vld [vmem:[%s1 + $0x4] sm:$0xf]
      %v280 = vld [vmem:[%s1 + $0x8] sm:$0xf]
      %v281 = vld [vmem:[%s1 + $0xc] sm:$0xf]
      %v282 = vld [vmem:[%s1 + $0x10] sm:$0xf]
      %v283 = vld [vmem:[%s1 + $0x14] sm:$0xf]
      %v284 = vld [vmem:[%s1 + $0x18] sm:$0xf]
      %v285 = vld [vmem:[%s1 + $0x1c] sm:$0xf]
      %v286 = vld [vmem:[%s1 + $0x20] sm:$0xf]
      %v287 = vld [vmem:[%s1 + $0x24] sm:$0xf]
      %v288 = vld [vmem:[%s1 + $0x28] sm:$0xf]
      %v289 = vld [vmem:[%s1 + $0x2c] sm:$0xf]
      %v290 = vld [vmem:[%s1 + $0x30] sm:$0xf]
      %v291 = vld [vmem:[%s1 + $0x34] sm:$0xf]
      %v292 = vld [vmem:[%s1 + $0x38] sm:$0xf]
      %v293 = vld [vmem:[%s1 + $0x3c] sm:$0xf]
      %v310 = vunpack.c.l.b16 %v278
      %v311 = vunpack.c.l.b16 %v279
      %v312 = vunpack.c.l.b16 %v280
      %v313 = vunpack.c.l.b16 %v281
      %v314 = vunpack.c.l.b16 %v282
      %v315 = vunpack.c.l.b16 %v283
      %v316 = vunpack.c.l.b16 %v284
      %v317 = vunpack.c.l.b16 %v285
      %v318 = vunpack.c.l.b16 %v286
      %v319 = vunpack.c.l.b16 %v287
      %v320 = vunpack.c.l.b16 %v288
      %v321 = vunpack.c.l.b16 %v289
      %v322 = vunpack.c.l.b16 %v290
      %v323 = vunpack.c.l.b16 %v291
      %v324 = vunpack.c.l.b16 %v292
      %v325 = vunpack.c.l.b16 %v293
      %v326 = vpack.c.b16 %v311, %v310
      %v327 = vpack.c.b16 %v313, %v312
      %v328 = vpack.c.b16 %v315, %v314
      %v329 = vpack.c.b16 %v317, %v316
      %v330 = vpack.c.b16 %v319, %v318
      %v331 = vpack.c.b16 %v321, %v320
      %v332 = vpack.c.b16 %v323, %v322
      %v333 = vpack.c.b16 %v325, %v324
      %342 = vmatprep.subr.bf16.mxu0 0
      %343 = vmatpush1.bf16.msra.mxu0 %v326
      %344 = vmatprep.subr.bf16.mxu0 0
      %345 = vmatpush1.bf16.msra.mxu0 %v327
      %346 = vmatprep.subr.bf16.mxu0 0
      %347 = vmatpush1.bf16.msra.mxu0 %v328
      %348 = vmatprep.subr.bf16.mxu0 0
      %349 = vmatpush1.bf16.msra.mxu0 %v329
      %350 = vmatprep.subr.bf16.mxu0 0
      %351 = vmatpush1.bf16.msra.mxu0 %v330
      %352 = vmatprep.subr.bf16.mxu0 0
      %353 = vmatpush1.bf16.msra.mxu0 %v331
      %354 = vmatprep.subr.bf16.mxu0 0
      %355 = vmatpush1.bf16.msra.mxu0 %v332
      %356 = vmatprep.subr.bf16.mxu0 0
      %357 = vmatpush1.bf16.msra.mxu0 %v333
      %358 = vmatprep.subr.bf16.mxu0 0
      %359 = vmatpush1.bf16.msra.mxu0 0
      %360 = vmatprep.subr.bf16.mxu0 0
      %361 = vmatpush1.bf16.msra.mxu0 0
      %362 = vmatprep.subr.bf16.mxu0 0
      %363 = vmatpush1.bf16.msra.mxu0 0
      %364 = vmatprep.subr.bf16.mxu0 0
      %365 = vmatpush1.bf16.msra.mxu0 0
      %366 = vmatprep.subr.bf16.mxu0 0
      %367 = vmatpush1.bf16.msra.mxu0 0
      %368 = vmatprep.subr.bf16.mxu0 0
      %369 = vmatpush1.bf16.msra.mxu0 0
      %370 = vmatprep.subr.bf16.mxu0 0
      %371 = vmatpush1.bf16.msra.mxu0 0
      %372 = vmatprep.subr.bf16.mxu0 0
      %373 = vmatpush1.bf16.msra.mxu0 0
      %374 = vmatprep.mubr.bf16.mxu0 0
      %375 = vmatmul.mubr.bf16.gmra.mrb[0].mxu0 %v262
      %v376 = vpop.f32.mrb[0].mxu0
      %v377 = vadd.f32 0.0, %v376
      %v378 = vpop.f32.mrb[0].mxu0
      %v379 = vpop.f32.mrb[0].mxu0
      %v380 = vadd.f32 0.0, %v379
      %v381 = vpop.f32.mrb[0].mxu0
      %382 = vmatprep.mubr.bf16.mxu0 0
      %383 = vmatmul.mubr.bf16.gmra.mrb[0].mxu0 %v263
      %v384 = vpop.f32.mrb[0].mxu0
      %v385 = vadd.f32 0.0, %v384
      %v386 = vpop.f32.mrb[0].mxu0
      %v387 = vpop.f32.mrb[0].mxu0
      %v388 = vadd.f32 0.0, %v387
      %v389 = vpop.f32.mrb[0].mxu0
      %390 = vmatprep.mubr.bf16.mxu0 0
      %391 = vmatmul.mubr.bf16.gmra.mrb[0].mxu0 %v264
      %v392 = vpop.f32.mrb[0].mxu0
      %v393 = vadd.f32 0.0, %v392
      %v394 = vpop.f32.mrb[0].mxu0
      %v395 = vpop.f32.mrb[0].mxu0
      %v396 = vadd.f32 0.0, %v395
      %v397 = vpop.f32.mrb[0].mxu0
      %398 = vmatprep.mubr.bf16.mxu0 0
      %399 = vmatmul.mubr.bf16.gmra.mrb[0].mxu0 %v265
      %v400 = vpop.f32.mrb[0].mxu0
      %v401 = vadd.f32 0.0, %v400
      %v402 = vpop.f32.mrb[0].mxu0
      %v403 = vpop.f32.mrb[0].mxu0
      %v404 = vadd.f32 0.0, %v403
      %v405 = vpop.f32.mrb[0].mxu0
      %406 = vmatprep.mubr.bf16.mxu0 0
      %407 = vmatmul.mubr.bf16.gmra.mrb[0].mxu0 %v266
      %v408 = vpop.f32.mrb[0].mxu0
      %v409 = vadd.f32 0.0, %v408
      %v410 = vpop.f32.mrb[0].mxu0
      %v411 = vpop.f32.mrb[0].mxu0
      %v412 = vadd.f32 0.0, %v411
      %v413 = vpop.f32.mrb[0].mxu0
      %414 = vmatprep.mubr.bf16.mxu0 0
      %415 = vmatmul.mubr.bf16.gmra.mrb[0].mxu0 %v267
      %v416 = vpop.f32.mrb[0].mxu0
      %v417 = vadd.f32 0.0, %v416
      %v418 = vpop.f32.mrb[0].mxu0
      %v419 = vpop.f32.mrb[0].mxu0
      %v420 = vadd.f32 0.0, %v419
      %v421 = vpop.f32.mrb[0].mxu0
      %422 = vmatprep.mubr.bf16.mxu0 0
      %423 = vmatmul.mubr.bf16.gmra.mrb[0].mxu0 %v268
      %v424 = vpop.f32.mrb[0].mxu0
      %v425 = vadd.f32 0.0, %v424
      %v426 = vpop.f32.mrb[0].mxu0
      %v427 = vpop.f32.mrb[0].mxu0
      %v428 = vadd.f32 0.0, %v427
      %v429 = vpop.f32.mrb[0].mxu0
      %430 = vmatprep.mubr.bf16.mxu0 0
      %431 = vmatmul.mubr.bf16.gmra.mrb[0].mxu0 %v269
      %v432 = vpop.f32.mrb[0].mxu0
      %v433 = vadd.f32 0.0, %v432
      %v434 = vpop.f32.mrb[0].mxu0
      %v435 = vpop.f32.mrb[0].mxu0
      %v436 = vadd.f32 0.0, %v435
      %v437 = vpop.f32.mrb[0].mxu0
      %438 = vmatprep.mubr.bf16.mxu0 0
      %439 = vmatmul.mubr.bf16.gmra.mrb[0].mxu0 %v270
      %v440 = vpop.f32.mrb[0].mxu0
      %v441 = vadd.f32 0.0, %v440
      %v442 = vpop.f32.mrb[0].mxu0
      %v443 = vpop.f32.mrb[0].mxu0
      %v444 = vadd.f32 0.0, %v443
      %v445 = vpop.f32.mrb[0].mxu0
      %446 = vmatprep.mubr.bf16.mxu0 0
      %447 = vmatmul.mubr.bf16.gmra.mrb[0].mxu0 %v271
      %v448 = vpop.f32.mrb[0].mxu0
      %v449 = vadd.f32 0.0, %v448
      %v450 = vpop.f32.mrb[0].mxu0
      %v451 = vpop.f32.mrb[0].mxu0
      %v452 = vadd.f32 0.0, %v451
      %v453 = vpop.f32.mrb[0].mxu0
      %454 = vmatprep.mubr.bf16.mxu0 0
      %455 = vmatmul.mubr.bf16.gmra.mrb[0].mxu0 %v272
      %v456 = vpop.f32.mrb[0].mxu0
      %v457 = vadd.f32 0.0, %v456
      %v458 = vpop.f32.mrb[0].mxu0
      %v459 = vpop.f32.mrb[0].mxu0
      %v460 = vadd.f32 0.0, %v459
      %v461 = vpop.f32.mrb[0].mxu0
      %462 = vmatprep.mubr.bf16.mxu0 0
      %463 = vmatmul.mubr.bf16.gmra.mrb[0].mxu0 %v273
      %v464 = vpop.f32.mrb[0].mxu0
      %v465 = vadd.f32 0.0, %v464
      %v466 = vpop.f32.mrb[0].mxu0
      %v467 = vpop.f32.mrb[0].mxu0
      %v468 = vadd.f32 0.0, %v467
      %v469 = vpop.f32.mrb[0].mxu0
      %470 = vmatprep.mubr.bf16.mxu0 0
      %471 = vmatmul.mubr.bf16.gmra.mrb[0].mxu0 %v274
      %v472 = vpop.f32.mrb[0].mxu0
      %v473 = vadd.f32 0.0, %v472
      %v474 = vpop.f32.mrb[0].mxu0
      %v475 = vpop.f32.mrb[0].mxu0
      %v476 = vadd.f32 0.0, %v475
      %v477 = vpop.f32.mrb[0].mxu0
      %478 = vmatprep.mubr.bf16.mxu0 0
      %479 = vmatmul.mubr.bf16.gmra.mrb[0].mxu0 %v275
      %v480 = vpop.f32.mrb[0].mxu0
      %v481 = vadd.f32 0.0, %v480
      %v482 = vpop.f32.mrb[0].mxu0
      %v483 = vpop.f32.mrb[0].mxu0
      %v484 = vadd.f32 0.0, %v483
      %v485 = vpop.f32.mrb[0].mxu0
      %486 = vmatprep.mubr.bf16.mxu0 0
      %487 = vmatmul.mubr.bf16.gmra.mrb[0].mxu0 %v276
      %v488 = vpop.f32.mrb[0].mxu0
      %v489 = vadd.f32 0.0, %v488
      %v490 = vpop.f32.mrb[0].mxu0
      %v491 = vpop.f32.mrb[0].mxu0
      %v492 = vadd.f32 0.0, %v491
      %v493 = vpop.f32.mrb[0].mxu0
      %494 = vmatprep.mubr.bf16.mxu0 0
      %495 = vmatmul.mubr.bf16.gmra.mrb[0].mxu0 %v277
      %v496 = vpop.f32.mrb[0].mxu0
      %v497 = vadd.f32 0.0, %v496
      %v498 = vpop.f32.mrb[0].mxu0
      %v499 = vpop.f32.mrb[0].mxu0
      %v500 = vadd.f32 0.0, %v499
      %v501 = vpop.f32.mrb[0].mxu0
      %502 = vdwg.mxu0
      %v503 = vpack.c.bf16 %v380, %v377
      %v504 = vpack.c.bf16 %v388, %v385
      %v505 = vpack.c.bf16 %v396, %v393
      %v506 = vpack.c.bf16 %v404, %v401
      %v507 = vpack.c.bf16 %v412, %v409
      %v508 = vpack.c.bf16 %v420, %v417
      %v509 = vpack.c.bf16 %v428, %v425
      %v510 = vpack.c.bf16 %v436, %v433
      %v511 = vpack.c.bf16 %v444, %v441
      %v512 = vpack.c.bf16 %v452, %v449
      %v513 = vpack.c.bf16 %v460, %v457
      %v514 = vpack.c.bf16 %v468, %v465
      %v515 = vpack.c.bf16 %v476, %v473
      %v516 = vpack.c.bf16 %v484, %v481
      %v517 = vpack.c.bf16 %v492, %v489
      %v518 = vpack.c.bf16 %v500, %v497
      %v535 = vunpack.c.l.b16 %v503
      %v536 = vunpack.c.h.b16 %v503
      %v537 = vunpack.c.l.b16 %v504
      %v538 = vunpack.c.h.b16 %v504
      %v539 = vunpack.c.l.b16 %v505
      %v540 = vunpack.c.h.b16 %v505
      %v541 = vunpack.c.l.b16 %v506
      %v542 = vunpack.c.h.b16 %v506
      %v543 = vunpack.c.l.b16 %v507
      %v544 = vunpack.c.h.b16 %v507
      %v545 = vunpack.c.l.b16 %v508
      %v546 = vunpack.c.h.b16 %v508
      %v547 = vunpack.c.l.b16 %v509
      %v548 = vunpack.c.h.b16 %v509
      %v549 = vunpack.c.l.b16 %v510
      %v550 = vunpack.c.h.b16 %v510
      %v551 = vunpack.c.l.b16 %v511
      %v552 = vunpack.c.h.b16 %v511
      %v553 = vunpack.c.l.b16 %v512
      %v554 = vunpack.c.h.b16 %v512
      %v555 = vunpack.c.l.b16 %v513
      %v556 = vunpack.c.h.b16 %v513
      %v557 = vunpack.c.l.b16 %v514
      %v558 = vunpack.c.h.b16 %v514
      %v559 = vunpack.c.l.b16 %v515
      %v560 = vunpack.c.h.b16 %v515
      %v561 = vunpack.c.l.b16 %v516
      %v562 = vunpack.c.h.b16 %v516
      %v563 = vunpack.c.l.b16 %v517
      %v564 = vunpack.c.h.b16 %v517
      %v565 = vunpack.c.l.b16 %v518
      %v566 = vunpack.c.h.b16 %v518
      %v567 = vpack.c.b16 %v535, %v535
      %v568 = vpack.c.b16 %v536, %v536
      %v569 = vpack.c.b16 %v537, %v537
      %v570 = vpack.c.b16 %v538, %v538
      %v571 = vpack.c.b16 %v539, %v539
      %v572 = vpack.c.b16 %v540, %v540
      %v573 = vpack.c.b16 %v541, %v541
      %v574 = vpack.c.b16 %v542, %v542
      %v575 = vpack.c.b16 %v543, %v543
      %v576 = vpack.c.b16 %v544, %v544
      %v577 = vpack.c.b16 %v545, %v545
      %v578 = vpack.c.b16 %v546, %v546
      %v579 = vpack.c.b16 %v547, %v547
      %v580 = vpack.c.b16 %v548, %v548
      %v581 = vpack.c.b16 %v549, %v549
      %v582 = vpack.c.b16 %v550, %v550
      %v583 = vpack.c.b16 %v551, %v551
      %v584 = vpack.c.b16 %v552, %v552
      %v585 = vpack.c.b16 %v553, %v553
      %v586 = vpack.c.b16 %v554, %v554
      %v587 = vpack.c.b16 %v555, %v555
      %v588 = vpack.c.b16 %v556, %v556
      %v589 = vpack.c.b16 %v557, %v557
      %v590 = vpack.c.b16 %v558, %v558
      %v591 = vpack.c.b16 %v559, %v559
      %v592 = vpack.c.b16 %v560, %v560
      %v593 = vpack.c.b16 %v561, %v561
      %v594 = vpack.c.b16 %v562, %v562
      %v595 = vpack.c.b16 %v563, %v563
      %v596 = vpack.c.b16 %v564, %v564
      %v597 = vpack.c.b16 %v565, %v565
      %v598 = vpack.c.b16 %v566, %v566
      %631 = vst [vmem:[%s220] sm:$0xf] %v567
      %632 = vst [vmem:[%s220 + $0x4] sm:$0xf] %v568
      %633 = vst [vmem:[%s220 + $0x8] sm:$0xf] %v569
      %634 = vst [vmem:[%s220 + $0xc] sm:$0xf] %v570
      %635 = vst [vmem:[%s220 + $0x10] sm:$0xf] %v571
      %636 = vst [vmem:[%s220 + $0x14] sm:$0xf] %v572
      %637 = vst [vmem:[%s220 + $0x18] sm:$0xf] %v573
      %638 = vst [vmem:[%s220 + $0x1c] sm:$0xf] %v574
      %639 = vst [vmem:[%s220 + $0x20] sm:$0xf] %v575
      %640 = vst [vmem:[%s220 + $0x24] sm:$0xf] %v576
      %641 = vst [vmem:[%s220 + $0x28] sm:$0xf] %v577
      %642 = vst [vmem:[%s220 + $0x2c] sm:$0xf] %v578
      %643 = vst [vmem:[%s220 + $0x30] sm:$0xf] %v579
      %644 = vst [vmem:[%s220 + $0x34] sm:$0xf] %v580
      %645 = vst [vmem:[%s220 + $0x38] sm:$0xf] %v581
      %646 = vst [vmem:[%s220 + $0x3c] sm:$0xf] %v582
      %647 = vst [vmem:[%s220 + $0x40] sm:$0xf] %v583
      %648 = vst [vmem:[%s220 + $0x44] sm:$0xf] %v584
      %649 = vst [vmem:[%s220 + $0x48] sm:$0xf] %v585
      %650 = vst [vmem:[%s220 + $0x4c] sm:$0xf] %v586
      %651 = vst [vmem:[%s220 + $0x50] sm:$0xf] %v587
      %652 = vst [vmem:[%s220 + $0x54] sm:$0xf] %v588
      %653 = vst [vmem:[%s220 + $0x58] sm:$0xf] %v589
      %654 = vst [vmem:[%s220 + $0x5c] sm:$0xf] %v590
      %655 = vst [vmem:[%s220 + $0x60] sm:$0xf] %v591
      %656 = vst [vmem:[%s220 + $0x64] sm:$0xf] %v592
      %657 = vst [vmem:[%s220 + $0x68] sm:$0xf] %v593
      %658 = vst [vmem:[%s220 + $0x6c] sm:$0xf] %v594
      %659 = vst [vmem:[%s220 + $0x70] sm:$0xf] %v595
      %660 = vst [vmem:[%s220 + $0x74] sm:$0xf] %v596
      %661 = vst [vmem:[%s220 + $0x78] sm:$0xf] %v597
      %662 = vst [vmem:[%s220 + $0x7c] sm:$0xf] %v598
      %v663 = vunpack.c.l.bf16 %v503
      %v664 = vunpack.c.h.bf16 %v503
      %v665 = vunpack.c.l.bf16 %v504
      %v666 = vunpack.c.h.bf16 %v504
      %v667 = vunpack.c.l.bf16 %v505
      %v668 = vunpack.c.h.bf16 %v505
      %v669 = vunpack.c.l.bf16 %v506
      %v670 = vunpack.c.h.bf16 %v506
      %v671 = vunpack.c.l.bf16 %v507
      %v672 = vunpack.c.h.bf16 %v507
      %v673 = vunpack.c.l.bf16 %v508
      %v674 = vunpack.c.h.bf16 %v508
      %v675 = vunpack.c.l.bf16 %v509
      %v676 = vunpack.c.h.bf16 %v509
      %v677 = vunpack.c.l.bf16 %v510
      %v678 = vunpack.c.h.bf16 %v510
      %v679 = vunpack.c.l.bf16 %v511
      %v680 = vunpack.c.h.bf16 %v511
      %v681 = vunpack.c.l.bf16 %v512
      %v682 = vunpack.c.h.bf16 %v512
      %v683 = vunpack.c.l.bf16 %v513
      %v684 = vunpack.c.h.bf16 %v513
      %v685 = vunpack.c.l.bf16 %v514
      %v686 = vunpack.c.h.bf16 %v514
      %v687 = vunpack.c.l.bf16 %v515
      %v688 = vunpack.c.h.bf16 %v515
      %v689 = vunpack.c.l.bf16 %v516
      %v690 = vunpack.c.h.bf16 %v516
      %v691 = vunpack.c.l.bf16 %v517
      %v692 = vunpack.c.h.bf16 %v517
      %v693 = vunpack.c.l.bf16 %v518
      %v694 = vunpack.c.h.bf16 %v518
      %v695 = vadd.f32 %v663, %v664
      %v696 = vadd.f32 %v695, %v665
      %v697 = vadd.f32 %v696, %v666
      %v698 = vadd.f32 %v697, %v667
      %v699 = vadd.f32 %v698, %v668
      %v700 = vadd.f32 %v699, %v669
      %v701 = vadd.f32 %v700, %v670
      %v702 = vadd.f32 %v701, %v671
      %v703 = vadd.f32 %v702, %v672
      %v704 = vadd.f32 %v703, %v673
      %v705 = vadd.f32 %v704, %v674
      %v706 = vadd.f32 %v705, %v675
      %v707 = vadd.f32 %v706, %v676
      %v708 = vadd.f32 %v707, %v677
      %v709 = vadd.f32 %v708, %v678
      %v710 = vadd.f32 %v709, %v679
      %v711 = vadd.f32 %v710, %v680
      %v712 = vadd.f32 %v711, %v681
      %v713 = vadd.f32 %v712, %v682
      %v714 = vadd.f32 %v713, %v683
      %v715 = vadd.f32 %v714, %v684
      %v716 = vadd.f32 %v715, %v685
      %v717 = vadd.f32 %v716, %v686
      %v718 = vadd.f32 %v717, %v687
      %v719 = vadd.f32 %v718, %v688
      %v720 = vadd.f32 %v719, %v689
      %v721 = vadd.f32 %v720, %v690
      %v722 = vadd.f32 %v721, %v691
      %v723 = vadd.f32 %v722, %v692
      %v724 = vadd.f32 %v723, %v693
      %v725 = vadd.f32 %v724, %v694
      %v726 = vrot.slane %v725, 4
      %v727 = vadd.f32 %v725, %v726
      %v728 = vrot.slane %v727, 2
      %v729 = vadd.f32 %v727, %v728
      %v730 = vrot.slane %v729, 1
      %v731 = vadd.f32 %v729, %v730
      %v732 = vmul.f32 %v663, %v663
      %v733 = vmul.f32 %v664, %v664
      %v734 = vmul.f32 %v665, %v665
      %v735 = vmul.f32 %v666, %v666
      %v736 = vmul.f32 %v667, %v667
      %v737 = vmul.f32 %v668, %v668
      %v738 = vmul.f32 %v669, %v669
      %v739 = vmul.f32 %v670, %v670
      %v740 = vmul.f32 %v671, %v671
      %v741 = vmul.f32 %v672, %v672
      %v742 = vmul.f32 %v673, %v673
      %v743 = vmul.f32 %v674, %v674
      %v744 = vmul.f32 %v675, %v675
      %v745 = vmul.f32 %v676, %v676
      %v746 = vmul.f32 %v677, %v677
      %v747 = vmul.f32 %v678, %v678
      %v748 = vmul.f32 %v679, %v679
      %v749 = vmul.f32 %v680, %v680
      %v750 = vmul.f32 %v681, %v681
      %v751 = vmul.f32 %v682, %v682
      %v752 = vmul.f32 %v683, %v683
      %v753 = vmul.f32 %v684, %v684
      %v754 = vmul.f32 %v685, %v685
      %v755 = vmul.f32 %v686, %v686
      %v756 = vmul.f32 %v687, %v687
      %v757 = vmul.f32 %v688, %v688
      %v758 = vmul.f32 %v689, %v689
      %v759 = vmul.f32 %v690, %v690
      %v760 = vmul.f32 %v691, %v691
      %v761 = vmul.f32 %v692, %v692
      %v762 = vmul.f32 %v693, %v693
      %v763 = vmul.f32 %v694, %v694
      %v764 = vadd.f32 %v732, %v733
      %v765 = vadd.f32 %v764, %v734
      %v766 = vadd.f32 %v765, %v735
      %v767 = vadd.f32 %v766, %v736
      %v768 = vadd.f32 %v767, %v737
      %v769 = vadd.f32 %v768, %v738
      %v770 = vadd.f32 %v769, %v739
      %v771 = vadd.f32 %v770, %v740
      %v772 = vadd.f32 %v771, %v741
      %v773 = vadd.f32 %v772, %v742
      %v774 = vadd.f32 %v773, %v743
      %v775 = vadd.f32 %v774, %v744
      %v776 = vadd.f32 %v775, %v745
      %v777 = vadd.f32 %v776, %v746
      %v778 = vadd.f32 %v777, %v747
      %v779 = vadd.f32 %v778, %v748
      %v780 = vadd.f32 %v779, %v749
      %v781 = vadd.f32 %v780, %v750
      %v782 = vadd.f32 %v781, %v751
      %v783 = vadd.f32 %v782, %v752
      %v784 = vadd.f32 %v783, %v753
      %v785 = vadd.f32 %v784, %v754
      %v786 = vadd.f32 %v785, %v755
      %v787 = vadd.f32 %v786, %v756
      %v788 = vadd.f32 %v787, %v757
      %v789 = vadd.f32 %v788, %v758
      %v790 = vadd.f32 %v789, %v759
      %v791 = vadd.f32 %v790, %v760
      %v792 = vadd.f32 %v791, %v761
      %v793 = vadd.f32 %v792, %v762
      %v794 = vadd.f32 %v793, %v763
      %v795 = vrot.slane %v794, 4
      %v796 = vadd.f32 %v794, %v795
      %v797 = vrot.slane %v796, 2
      %v798 = vadd.f32 %v796, %v797
      %v799 = vrot.slane %v798, 1
      %v800 = vadd.f32 %v798, %v799
      %vm801 = vcmask 1040384
      %v802 = vsel %vm801, %v731, %v800
      %vm803 = vcmask 1041408
      %v804 = vsel %vm803, %v802, 0.0
      %805 = vst [vmem:[%s228] sm:$0xff] %v804
      %s806 = smul.u32 32, %s20
      %p807 = scmp.lt.s32.totalorder %s19, 1
      %s808 = scalar_select %p807, %s19, 1
      %p809 = scmp.lt.s32.totalorder %s806, 31
      %s810 = scalar_select %p809, %s806, 31
      %s811 = smul.addr %s808, 32
      %s812 = sadd.s32 %s810, %s811
      %s813 = smul.addr %s812, 4
      %s814 = scalar_lea.vmem %s2, %s813
      %p815 = scmp.lt.s32.totalorder %s19, 1
      %s816 = scalar_select %p815, %s19, 1
      %p817 = scmp.lt.s32.totalorder %s20, 0
      %s818 = scalar_select %p817, %s20, 0
      %s819 = sadd.s32 %s818, %s816
      %s820 = smul.addr %s819, 8
      %s821 = scalar_lea.vmem %s3, %s820
      // Predicated region
      $region29: #{residual_block.4} parent=27 // pred_check
        %p822 = pneg %p96
      $region30: #{residual_block.4} parent=27 // pred_check_branch
        %824 = sbr.rel (%p822) target = $region32
      $region31: #{residual_block.4} parent=27 // pred_region
        %s825 = smul.u32 32, %s20
      $region32: #{residual_block.4} parent=27 // pred_fallthru
        _
      // Predicated region
      $region33: #{residual_block.4} parent=27 // pred_check
        %p826 = pneg %p124
      $region34: #{residual_block.4} parent=27 // pred_check_branch
        %828 = sbr.rel (%p826) target = $region36
      $region35: #{residual_block.4} parent=27 // pred_region
        _
      $region36: #{residual_block.4} parent=27 // pred_fallthru
        _
    $region28: #{residual_block.4} parent=5 // pred_fallthru
      _
    %p829 = scmp.le.s32.totalorder 2, %s10
    // Predicated region
    $region37: #{residual_block.4} parent=5 // pred_check
      %p830 = pneg %p829
    $region38: #{residual_block.4} parent=5 // pred_check_branch
      %832 = sbr.rel (%p830) target = $region40
    $region39: #{residual_block.4} parent=5 // pred_region
      %s833 = ssub.s32 %s10, 2
      // Predicated region
      $region41: #{residual_block.4} parent=39 // pred_check
        %p834 = pneg %p102
      $region42: #{residual_block.4} parent=39 // pred_check_branch
        %836 = sbr.rel (%p834) target = $region44
      $region43: #{residual_block.4} parent=39 // pred_region
        %s837 = smul.u32 32, %s22
        %p838 = scmp.lt.s32.totalorder %s21, 1
        %s839 = scalar_select %p838, %s21, 1
        %p840 = scmp.lt.s32.totalorder %s837, 31
        %s841 = scalar_select %p840, %s837, 31
        %s842 = smul.addr %s839, 32
        %s843 = sadd.s32 %s841, %s842
        %s844 = smul.addr %s843, 4
        %s845 = scalar_lea.vmem %s2, %s844
      $region44: #{residual_block.4} parent=39 // pred_fallthru
        _
      // Predicated region
      $region45: #{residual_block.4} parent=39 // pred_check
        %p846 = pneg %p130
      $region46: #{residual_block.4} parent=39 // pred_check_branch
        %848 = sbr.rel (%p846) target = $region48
      $region47: #{residual_block.4} parent=39 // pred_region
        %p849 = scmp.lt.s32.totalorder %s21, 1
        %s850 = scalar_select %p849, %s21, 1
        %p851 = scmp.lt.s32.totalorder %s22, 0
        %s852 = scalar_select %p851, %s22, 0
        %s853 = sadd.s32 %s852, %s850
        %s854 = smul.addr %s853, 8
        %s855 = scalar_lea.vmem %s3, %s854
      $region48: #{residual_block.4} parent=39 // pred_fallthru
        _
    $region40: #{residual_block.4} parent=5 // pred_fallthru
      _
  $region6: #{residual_block.4} parent=0 // loop_footer
    %s14 = sadd.s32 1, %s10
  $region7: #{residual_block.4} parent=0 // loop_footer_branch
    %9 = sbr.rel target = $region3
  $region8: #{residual_block.4} parent=0 // loop_exit
    _

// kernel: residual_block.7
$region0: #{residual_block.7}
  #allocation0 [shape = 'u32[]', space=smem, size = 0x4, offset = 0x4, fixed_abs, tag = 'smem constant byte address 0x4 - core index']
  #allocation1 [shape = 'u32[144,128]{1,0:T(1,128)}', space=vmem, size = 0x12000, scoped, tag = 'internal scratch']
  %s0 = inlined_call_operand.vmem [shape: bf16[2,256,128], index: 0, kind: input, shape index: {}]
  %s1 = inlined_call_operand.vmem [shape: f32[1,128], index: 1, kind: input, shape index: {}]
  %s2 = inlined_call_operand.vmem [shape: f32[1,128], index: 2, kind: input, shape index: {}]
  %s3 = inlined_call_operand.vmem [shape: f32[2,256,128], index: 3, kind: input, shape index: {}]
  %s4 = inlined_call_operand.vmem [shape: f32[2,256,128], index: 4, kind: output, shape index: {}]
  %s5 = sld [smem:[#allocation0]]
  $region49: #{residual_block.7} parent=0
    _
  %s7 = ssub.s32 1, %s5
  %s8 = scalar_select 0, %s7, %s5
  loop: start=0, step=1, limit=4
  $region2: #{residual_block.7} parent=0 // loop_pre_header
    _
  $region3: #{residual_block.7} parent=0 // loop_header
    %s10 = sphi 0, %s14
    %p11 = scmp.ge.s32.totalorder %s10, 4
    %s17 = sphi 0, %s29
    %s18 = sphi 0, %s25
    %s19 = sphi 0, %s17
    %s20 = sphi 0, %s18
    %s21 = sphi 0, %s19
    %s22 = sphi 0, %s20
    %s34 = sphi 0, %s36
    %s37 = sphi 0, %s34
    %s38 = sphi 0, %s37
    %s54 = sphi 0, %s38
    %s58 = sphi 0, %s58
    %s60 = sphi 0, %s58
    %s61 = sphi 0, %s60
    %s75 = sphi 0, %s61
    %s79 = sphi 0, %s79
    %s81 = sphi 0, %s79
    %s82 = sphi 0, %s81
    %s96 = sphi 0, %s82
    %s104 = sphi 0, %s106
    %s107 = sphi 0, %s104
    %s108 = sphi 0, %s107
    %s124 = sphi 0, %s108
    %s132 = sphi 0, %s134
    %s135 = sphi 0, %s132
    %s136 = sphi 0, %s135
    %s152 = sphi 0, %s136
  $region4: #{residual_block.7} parent=0 // loop_header_branch
    %13 = sbr.rel (%p11) target = $region8
  $region5: #{residual_block.7} parent=0 // loop_body
    %s15 = ssub.s32 %s10, 1
    %s16 = ssub.s32 %s10, 2
    %s23 = sadd.s32 1, %s18
    %p24 = scmp.ge.s32.totalorder %s23, 1
    %s25 = scalar_select %p24, 0, %s23
    %s26 = sadd.s32 1, %s17
    %s27 = scalar_select %p24, %s26, %s17
    %p28 = scmp.ge.s32.totalorder %s27, 2
    %s29 = scalar_select %p28, 0, %s27
    %s30 = ssub.s32 %s17, %s29
    %s31 = ssub.s32 %s18, %s25
    %s32 = sor.u32 %s30, %s31
    %p33 = scmp.eq.s32.totalorder %s32, 0
    %s35 = sadd.s32 %s34, 1
    %s36 = scalar_select %p33, %s34, %s35
    %p39 = pneg %p33
    %p40 = scmp.eq.s32.totalorder %s10, 1
    %p41 = por %p39, %p40
    %p42 = scmp.ne.s32.totalorder %s34, %s37
    %p43 = scmp.eq.s32.totalorder %s10, 0
    %p44 = por %p42, %p43
    %p45 = scmp.ne.s32.totalorder %s34, %s37
    %p46 = scmp.eq.s32.totalorder %s15, 1
    %p47 = por %p45, %p46
    %p48 = scmp.ne.s32.totalorder %s37, %s38
    %p49 = scmp.eq.s32.totalorder %s15, 0
    %p50 = por %p48, %p49
    %p51 = scmp.ne.s32.totalorder %s37, %s38
    %p52 = scmp.eq.s32.totalorder %s16, 1
    %p53 = por %p51, %p52
    %p55 = scmp.ne.s32.totalorder %s38, %s54
    %p56 = scmp.eq.s32.totalorder %s16, 0
    %p57 = por %p55, %p56
    %s59 = sadd.s32 %s58, 1
    %p62 = scmp.eq.s32.totalorder %s10, 1
    %p63 = scmp.ne.s32.totalorder %s58, %s60
    %p64 = scmp.eq.s32.totalorder %s10, 0
    %p65 = por %p63, %p64
    %p66 = scmp.ne.s32.totalorder %s58, %s60
    %p67 = scmp.eq.s32.totalorder %s15, 1
    %p68 = por %p66, %p67
    %p69 = scmp.ne.s32.totalorder %s60, %s61
    %p70 = scmp.eq.s32.totalorder %s15, 0
    %p71 = por %p69, %p70
    %p72 = scmp.ne.s32.totalorder %s60, %s61
    %p73 = scmp.eq.s32.totalorder %s16, 1
    %p74 = por %p72, %p73
    %p76 = scmp.ne.s32.totalorder %s61, %s75
    %p77 = scmp.eq.s32.totalorder %s16, 0
    %p78 = por %p76, %p77
    %s80 = sadd.s32 %s79, 1
    %p83 = scmp.eq.s32.totalorder %s10, 1
    %p84 = scmp.ne.s32.totalorder %s79, %s81
    %p85 = scmp.eq.s32.totalorder %s10, 0
    %p86 = por %p84, %p85
    %p87 = scmp.ne.s32.totalorder %s79, %s81
    %p88 = scmp.eq.s32.totalorder %s15, 1
    %p89 = por %p87, %p88
    %p90 = scmp.ne.s32.totalorder %s81, %s82
    %p91 = scmp.eq.s32.totalorder %s15, 0
    %p92 = por %p90, %p91
    %p93 = scmp.ne.s32.totalorder %s81, %s82
    %p94 = scmp.eq.s32.totalorder %s16, 1
    %p95 = por %p93, %p94
    %p97 = scmp.ne.s32.totalorder %s82, %s96
    %p98 = scmp.eq.s32.totalorder %s16, 0
    %p99 = por %p97, %p98
    %s100 = ssub.s32 %s17, %s29
    %s101 = ssub.s32 %s18, %s25
    %s102 = sor.u32 %s100, %s101
    %p103 = scmp.eq.s32.totalorder %s102, 0
    %s105 = sadd.s32 %s104, 1
    %s106 = scalar_select %p103, %s104, %s105
    %p109 = pneg %p103
    %p110 = scmp.eq.s32.totalorder %s10, 1
    %p111 = por %p109, %p110
    %p112 = scmp.ne.s32.totalorder %s104, %s107
    %p113 = scmp.eq.s32.totalorder %s10, 0
    %p114 = por %p112, %p113
    %p115 = scmp.ne.s32.totalorder %s104, %s107
    %p116 = scmp.eq.s32.totalorder %s15, 1
    %p117 = por %p115, %p116
    %p118 = scmp.ne.s32.totalorder %s107, %s108
    %p119 = scmp.eq.s32.totalorder %s15, 0
    %p120 = por %p118, %p119
    %p121 = scmp.ne.s32.totalorder %s107, %s108
    %p122 = scmp.eq.s32.totalorder %s16, 1
    %p123 = por %p121, %p122
    %p125 = scmp.ne.s32.totalorder %s108, %s124
    %p126 = scmp.eq.s32.totalorder %s16, 0
    %p127 = por %p125, %p126
    %s128 = ssub.s32 %s17, %s29
    %s129 = ssub.s32 %s18, %s25
    %s130 = sor.u32 %s128, %s129
    %p131 = scmp.eq.s32.totalorder %s130, 0
    %s133 = sadd.s32 %s132, 1
    %s134 = scalar_select %p131, %s132, %s133
    %p137 = pneg %p131
    %p138 = scmp.eq.s32.totalorder %s10, 1
    %p139 = por %p137, %p138
    %p140 = scmp.ne.s32.totalorder %s132, %s135
    %p141 = scmp.eq.s32.totalorder %s10, 0
    %p142 = por %p140, %p141
    %p143 = scmp.ne.s32.totalorder %s132, %s135
    %p144 = scmp.eq.s32.totalorder %s15, 1
    %p145 = por %p143, %p144
    %p146 = scmp.ne.s32.totalorder %s135, %s136
    %p147 = scmp.eq.s32.totalorder %s15, 0
    %p148 = por %p146, %p147
    %p149 = scmp.ne.s32.totalorder %s135, %s136
    %p150 = scmp.eq.s32.totalorder %s16, 1
    %p151 = por %p149, %p150
    %p153 = scmp.ne.s32.totalorder %s136, %s152
    %p154 = scmp.eq.s32.totalorder %s16, 0
    %p155 = por %p153, %p154
    %p156 = scmp.le.s32.totalorder 1, %s10
    %p157 = scmp.lt.s32.totalorder %s10, 3
    %p158 = pnand %p156, %p157
    %p159 = pneg %p158
    // Predicated region
    $region9: #{residual_block.7} parent=5 // pred_check
      _
    $region10: #{residual_block.7} parent=5 // pred_check_branch
      %161 = sbr.rel (%p158) target = $region12
    $region11: #{residual_block.7} parent=5 // pred_region
      %s162 = ssub.s32 %s10, 1
      // Predicated region
      $region13: #{residual_block.7} parent=11 // pred_check
        %p163 = pneg %p71
      $region14: #{residual_block.7} parent=11 // pred_check_branch
        %165 = sbr.rel (%p163) target = $region16
      $region15: #{residual_block.7} parent=11 // pred_region
        _
      $region16: #{residual_block.7} parent=11 // pred_fallthru
        _
      // Predicated region
      $region17: #{residual_block.7} parent=11 // pred_check
        %p166 = pneg %p92
      $region18: #{residual_block.7} parent=11 // pred_check_branch
        %168 = sbr.rel (%p166) target = $region20
      $region19: #{residual_block.7} parent=11 // pred_region
        _
      $region20: #{residual_block.7} parent=11 // pred_fallthru
        _
    $region12: #{residual_block.7} parent=5 // pred_fallthru
      _
    %p169 = scmp.lt.s32.totalorder %s10, 2
    // Predicated region
    $region21: #{residual_block.7} parent=5 // pred_check
      %p170 = pneg %p169
    $region22: #{residual_block.7} parent=5 // pred_check_branch
      %172 = sbr.rel (%p170) target = $region24
    $region23: #{residual_block.7} parent=5 // pred_region
      // Predicated region
      $region25: #{residual_block.7} parent=23 // pred_check
        %p173 = pneg %p44
      $region26: #{residual_block.7} parent=23 // pred_check_branch
        %175 = sbr.rel (%p173) target = $region28
      $region27: #{residual_block.7} parent=23 // pred_region
        %s176 = smul.u32 32, %s18
        %p177 = scmp.lt.s32.totalorder %s17, 1
        %s178 = scalar_select %p177, %s17, 1
        %p179 = scmp.lt.s32.totalorder %s176, 31
        %s180 = scalar_select %p179, %s176, 31
        %s181 = smul.addr %s178, 32
        %s182 = sadd.s32 %s180, %s181
        %s183 = smul.addr %s182, 4
        %s184 = scalar_lea.vmem %s0, %s183
        %s185 = smul.u32 32, %s18
      $region28: #{residual_block.7} parent=23 // pred_fallthru
        _
      // Predicated region
      $region29: #{residual_block.7} parent=23 // pred_check
        %p186 = pneg %p114
      $region30: #{residual_block.7} parent=23 // pred_check_branch
        %188 = sbr.rel (%p186) target = $region32
      $region31: #{residual_block.7} parent=23 // pred_region
        %s189 = smul.u32 32, %s18
        %p190 = scmp.lt.s32.totalorder %s17, 1
        %s191 = scalar_select %p190, %s17, 1
        %p192 = scmp.lt.s32.totalorder %s189, 31
        %s193 = scalar_select %p192, %s189, 31
        %s194 = smul.addr %s191, 32
        %s195 = sadd.s32 %s193, %s194
        %s196 = smul.addr %s195, 8
        %s197 = scalar_lea.vmem %s3, %s196
        %s198 = smul.u32 32, %s18
      $region32: #{residual_block.7} parent=23 // pred_fallthru
        _
    $region24: #{residual_block.7} parent=5 // pred_fallthru
      _
    %p199 = scmp.le.s32.totalorder 1, %s10
    %p200 = scmp.lt.s32.totalorder %s10, 3
    %p201 = pnand %p199, %p200
    %p202 = pneg %p201
    // Predicated region
    $region33: #{residual_block.7} parent=5 // pred_check
      _
    $region34: #{residual_block.7} parent=5 // pred_check_branch
      %204 = sbr.rel (%p201) target = $region36
    $region35: #{residual_block.7} parent=5 // pred_region
      %s205 = ssub.s32 %s10, 1
      %s206 = smul.u32 32, %s20
      %p207 = scmp.lt.s32.totalorder %s19, 1
      %s208 = scalar_select %p207, %s19, 1
      %p209 = scmp.lt.s32.totalorder %s206, 31
      %s210 = scalar_select %p209, %s206, 31
      %s211 = smul.addr %s208, 32
      %s212 = sadd.s32 %s210, %s211
      %s213 = smul.addr %s212, 4
      %s214 = scalar_lea.vmem %s0, %s213
      %p215 = pneg %p50
      %p216 = pneg %p47
      %p217 = pneg %p71
      %p218 = pneg %p68
      %p219 = pneg %p92
      %p220 = pneg %p89
      %s221 = smul.u32 32, %s20
      %p222 = scmp.lt.s32.totalorder %s19, 1
      %s223 = scalar_select %p222, %s19, 1
      %p224 = scmp.lt.s32.totalorder %s221, 31
      %s225 = scalar_select %p224, %s221, 31
      %s226 = smul.addr %s223, 32
      %s227 = sadd.s32 %s225, %s226
      %s228 = smul.addr %s227, 8
      %s229 = scalar_lea.vmem %s3, %s228
      %p230 = pneg %p120
      %p231 = pneg %p117
      %p232 = pneg %p148
      %p233 = pneg %p145
      %s234 = smul.u32 32, %s20
      %p235 = scmp.lt.s32.totalorder %s19, 1
      %s236 = scalar_select %p235, %s19, 1
      %p237 = scmp.lt.s32.totalorder %s234, 31
      %s238 = scalar_select %p237, %s234, 31
      %s239 = smul.addr %s236, 32
      %s240 = sadd.s32 %s238, %s239
      %s241 = smul.addr %s240, 8
      %s242 = scalar_lea.vmem %s4, %s241
      %s243 = smul.u32 32, %s20
      %p244 = scmp.lt.s32.totalorder %s19, 1
      %s245 = scalar_select %p244, %s19, 1
      %p246 = scmp.lt.s32.totalorder %s243, 31
      %s247 = scalar_select %p246, %s243, 31
      %s248 = smul.addr %s245, 32
      %s249 = sadd.s32 %s247, %s248
      %s250 = smul.addr %s249, 4
      %s251 = scalar_lea.vmem %s0, %s250
      %s252 = smul.u32 32, %s20
      %s253 = smul.u32 32, %s20
      %p254 = scmp.lt.s32.totalorder %s19, 1
      %s255 = scalar_select %p254, %s19, 1
      %p256 = scmp.lt.s32.totalorder %s253, 31
      %s257 = scalar_select %p256, %s253, 31
      %s258 = smul.addr %s255, 32
      %s259 = sadd.s32 %s257, %s258
      %s260 = smul.addr %s259, 8
      %s261 = scalar_lea.vmem %s3, %s260
      %s262 = smul.u32 32, %s20
      %s263 = smul.u32 32, %s20
      %p264 = scmp.lt.s32.totalorder %s19, 1
      %s265 = scalar_select %p264, %s19, 1
      %p266 = scmp.lt.s32.totalorder %s263, 31
      %s267 = scalar_select %p266, %s263, 31
      %s268 = smul.addr %s265, 32
      %s269 = sadd.s32 %s267, %s268
      %s270 = smul.addr %s269, 8
      %s271 = scalar_lea.vmem %s4, %s270
      %s272 = smul.u32 32, %s20
      %v273 = vld [vmem:[%s251] sm:$0xf]
      %v274 = vld [vmem:[%s251 + $0x4] sm:$0xf]
      %v275 = vld [vmem:[%s251 + $0x8] sm:$0xf]
      %v276 = vld [vmem:[%s251 + $0xc] sm:$0xf]
      %v277 = vld [vmem:[%s251 + $0x10] sm:$0xf]
      %v278 = vld [vmem:[%s251 + $0x14] sm:$0xf]
      %v279 = vld [vmem:[%s251 + $0x18] sm:$0xf]
      %v280 = vld [vmem:[%s251 + $0x1c] sm:$0xf]
      %v281 = vld [vmem:[%s251 + $0x20] sm:$0xf]
      %v282 = vld [vmem:[%s251 + $0x24] sm:$0xf]
      %v283 = vld [vmem:[%s251 + $0x28] sm:$0xf]
      %v284 = vld [vmem:[%s251 + $0x2c] sm:$0xf]
      %v285 = vld [vmem:[%s251 + $0x30] sm:$0xf]
      %v286 = vld [vmem:[%s251 + $0x34] sm:$0xf]
      %v287 = vld [vmem:[%s251 + $0x38] sm:$0xf]
      %v288 = vld [vmem:[%s251 + $0x3c] sm:$0xf]
      %v289 = vld [vmem:[%s251 + $0x40] sm:$0xf]
      %v290 = vld [vmem:[%s251 + $0x44] sm:$0xf]
      %v291 = vld [vmem:[%s251 + $0x48] sm:$0xf]
      %v292 = vld [vmem:[%s251 + $0x4c] sm:$0xf]
      %v293 = vld [vmem:[%s251 + $0x50] sm:$0xf]
      %v294 = vld [vmem:[%s251 + $0x54] sm:$0xf]
      %v295 = vld [vmem:[%s251 + $0x58] sm:$0xf]
      %v296 = vld [vmem:[%s251 + $0x5c] sm:$0xf]
      %v297 = vld [vmem:[%s251 + $0x60] sm:$0xf]
      %v298 = vld [vmem:[%s251 + $0x64] sm:$0xf]
      %v299 = vld [vmem:[%s251 + $0x68] sm:$0xf]
      %v300 = vld [vmem:[%s251 + $0x6c] sm:$0xf]
      %v301 = vld [vmem:[%s251 + $0x70] sm:$0xf]
      %v302 = vld [vmem:[%s251 + $0x74] sm:$0xf]
      %v303 = vld [vmem:[%s251 + $0x78] sm:$0xf]
      %v304 = vld [vmem:[%s251 + $0x7c] sm:$0xf]
      %v305 = vunpack.c.l.bf16 %v273
      %v306 = vunpack.c.l.bf16 %v274
      %v307 = vunpack.c.l.bf16 %v275
      %v308 = vunpack.c.l.bf16 %v276
      %v309 = vunpack.c.l.bf16 %v277
      %v310 = vunpack.c.l.bf16 %v278
      %v311 = vunpack.c.l.bf16 %v279
      %v312 = vunpack.c.l.bf16 %v280
      %v313 = vunpack.c.l.bf16 %v281
      %v314 = vunpack.c.l.bf16 %v282
      %v315 = vunpack.c.l.bf16 %v283
      %v316 = vunpack.c.l.bf16 %v284
      %v317 = vunpack.c.l.bf16 %v285
      %v318 = vunpack.c.l.bf16 %v286
      %v319 = vunpack.c.l.bf16 %v287
      %v320 = vunpack.c.l.bf16 %v288
      %v321 = vunpack.c.l.bf16 %v289
      %v322 = vunpack.c.l.bf16 %v290
      %v323 = vunpack.c.l.bf16 %v291
      %v324 = vunpack.c.l.bf16 %v292
      %v325 = vunpack.c.l.bf16 %v293
      %v326 = vunpack.c.l.bf16 %v294
      %v327 = vunpack.c.l.bf16 %v295
      %v328 = vunpack.c.l.bf16 %v296
      %v329 = vunpack.c.l.bf16 %v297
      %v330 = vunpack.c.l.bf16 %v298
      %v331 = vunpack.c.l.bf16 %v299
      %v332 = vunpack.c.l.bf16 %v300
      %v333 = vunpack.c.l.bf16 %v301
      %v334 = vunpack.c.l.bf16 %v302
      %v335 = vunpack.c.l.bf16 %v303
      %v336 = vunpack.c.l.bf16 %v304
      %v337 = vld [vmem:[%s1] sm:$0x1]
      %v339 = vlaneseq
      %v340 = vshrl.u32 %v339, 7
      %v341 = vsub.s32 0, %v340
      %v342 = vrot.slane %v337, %v341
      %v344 = vmul.f32 %v305, %v342
      %v345 = vmul.f32 %v306, %v342
      %v346 = vmul.f32 %v307, %v342
      %v347 = vmul.f32 %v308, %v342
      %v348 = vmul.f32 %v309, %v342
      %v349 = vmul.f32 %v310, %v342
      %v350 = vmul.f32 %v311, %v342
      %v351 = vmul.f32 %v312, %v342
      %v352 = vmul.f32 %v313, %v342
      %v353 = vmul.f32 %v314, %v342
      %v354 = vmul.f32 %v315, %v342
      %v355 = vmul.f32 %v316, %v342
      %v356 = vmul.f32 %v317, %v342
      %v357 = vmul.f32 %v318, %v342
      %v358 = vmul.f32 %v319, %v342
      %v359 = vmul.f32 %v320, %v342
      %v360 = vmul.f32 %v321, %v342
      %v361 = vmul.f32 %v322, %v342
      %v362 = vmul.f32 %v323, %v342
      %v363 = vmul.f32 %v324, %v342
      %v364 = vmul.f32 %v325, %v342
      %v365 = vmul.f32 %v326, %v342
      %v366 = vmul.f32 %v327, %v342
      %v367 = vmul.f32 %v328, %v342
      %v368 = vmul.f32 %v329, %v342
      %v369 = vmul.f32 %v330, %v342
      %v370 = vmul.f32 %v331, %v342
      %v371 = vmul.f32 %v332, %v342
      %v372 = vmul.f32 %v333, %v342
      %v373 = vmul.f32 %v334, %v342
      %v374 = vmul.f32 %v335, %v342
      %v375 = vmul.f32 %v336, %v342
      %v376 = vld [vmem:[%s2] sm:$0x1]
      %v378 = vlaneseq
      %v379 = vshrl.u32 %v378, 7
      %v380 = vsub.s32 0, %v379
      %v381 = vrot.slane %v376, %v380
      %v383 = vadd.f32 %v344, %v381
      %v384 = vadd.f32 %v345, %v381
      %v385 = vadd.f32 %v346, %v381
      %v386 = vadd.f32 %v347, %v381
      %v387 = vadd.f32 %v348, %v381
      %v388 = vadd.f32 %v349, %v381
      %v389 = vadd.f32 %v350, %v381
      %v390 = vadd.f32 %v351, %v381
      %v391 = vadd.f32 %v352, %v381
      %v392 = vadd.f32 %v353, %v381
      %v393 = vadd.f32 %v354, %v381
      %v394 = vadd.f32 %v355, %v381
      %v395 = vadd.f32 %v356, %v381
      %v396 = vadd.f32 %v357, %v381
      %v397 = vadd.f32 %v358, %v381
      %v398 = vadd.f32 %v359, %v381
      %v399 = vadd.f32 %v360, %v381
      %v400 = vadd.f32 %v361, %v381
      %v401 = vadd.f32 %v362, %v381
      %v402 = vadd.f32 %v363, %v381
      %v403 = vadd.f32 %v364, %v381
      %v404 = vadd.f32 %v365, %v381
      %v405 = vadd.f32 %v366, %v381
      %v406 = vadd.f32 %v367, %v381
      %v407 = vadd.f32 %v368, %v381
      %v408 = vadd.f32 %v369, %v381
      %v409 = vadd.f32 %v370, %v381
      %v410 = vadd.f32 %v371, %v381
      %v411 = vadd.f32 %v372, %v381
      %v412 = vadd.f32 %v373, %v381
      %v413 = vadd.f32 %v374, %v381
      %v414 = vadd.f32 %v375, %v381
      %v415 = vld [vmem:[%s261] sm:$0xff]
      %v416 = vld [vmem:[%s261 + $0x8] sm:$0xff]
      %v417 = vld [vmem:[%s261 + $0x10] sm:$0xff]
      %v418 = vld [vmem:[%s261 + $0x18] sm:$0xff]
      %v419 = vld [vmem:[%s261 + $0x20] sm:$0xff]
      %v420 = vld [vmem:[%s261 + $0x28] sm:$0xff]
      %v421 = vld [vmem:[%s261 + $0x30] sm:$0xff]
      %v422 = vld [vmem:[%s261 + $0x38] sm:$0xff]
      %v423 = vld [vmem:[%s261 + $0x40] sm:$0xff]
      %v424 = vld [vmem:[%s261 + $0x48] sm:$0xff]
      %v425 = vld [vmem:[%s261 + $0x50] sm:$0xff]
      %v426 = vld [vmem:[%s261 + $0x58] sm:$0xff]
      %v427 = vld [vmem:[%s261 + $0x60] sm:$0xff]
      %v428 = vld [vmem:[%s261 + $0x68] sm:$0xff]
      %v429 = vld [vmem:[%s261 + $0x70] sm:$0xff]
      %v430 = vld [vmem:[%s261 + $0x78] sm:$0xff]
      %v431 = vld [vmem:[%s261 + $0x80] sm:$0xff]
      %v432 = vld [vmem:[%s261 + $0x88] sm:$0xff]
      %v433 = vld [vmem:[%s261 + $0x90] sm:$0xff]
      %v434 = vld [vmem:[%s261 + $0x98] sm:$0xff]
      %v435 = vld [vmem:[%s261 + $0xa0] sm:$0xff]
      %v436 = vld [vmem:[%s261 + $0xa8] sm:$0xff]
      %v437 = vld [vmem:[%s261 + $0xb0] sm:$0xff]
      %v438 = vld [vmem:[%s261 + $0xb8] sm:$0xff]
      %v439 = vld [vmem:[%s261 + $0xc0] sm:$0xff]
      %v440 = vld [vmem:[%s261 + $0xc8] sm:$0xff]
      %v441 = vld [vmem:[%s261 + $0xd0] sm:$0xff]
      %v442 = vld [vmem:[%s261 + $0xd8] sm:$0xff]
      %v443 = vld [vmem:[%s261 + $0xe0] sm:$0xff]
      %v444 = vld [vmem:[%s261 + $0xe8] sm:$0xff]
      %v445 = vld [vmem:[%s261 + $0xf0] sm:$0xff]
      %v446 = vld [vmem:[%s261 + $0xf8] sm:$0xff]
      %v447 = vadd.f32 %v383, %v415
      %v448 = vadd.f32 %v384, %v416
      %v449 = vadd.f32 %v385, %v417
      %v450 = vadd.f32 %v386, %v418
      %v451 = vadd.f32 %v387, %v419
      %v452 = vadd.f32 %v388, %v420
      %v453 = vadd.f32 %v389, %v421
      %v454 = vadd.f32 %v390, %v422
      %v455 = vadd.f32 %v391, %v423
      %v456 = vadd.f32 %v392, %v424
      %v457 = vadd.f32 %v393, %v425
      %v458 = vadd.f32 %v394, %v426
      %v459 = vadd.f32 %v395, %v427
      %v460 = vadd.f32 %v396, %v428
      %v461 = vadd.f32 %v397, %v429
      %v462 = vadd.f32 %v398, %v430
      %v463 = vadd.f32 %v399, %v431
      %v464 = vadd.f32 %v400, %v432
      %v465 = vadd.f32 %v401, %v433
      %v466 = vadd.f32 %v402, %v434
      %v467 = vadd.f32 %v403, %v435
      %v468 = vadd.f32 %v404, %v436
      %v469 = vadd.f32 %v405, %v437
      %v470 = vadd.f32 %v406, %v438
      %v471 = vadd.f32 %v407, %v439
      %v472 = vadd.f32 %v408, %v440
      %v473 = vadd.f32 %v409, %v441
      %v474 = vadd.f32 %v410, %v442
      %v475 = vadd.f32 %v411, %v443
      %v476 = vadd.f32 %v412, %v444
      %v477 = vadd.f32 %v413, %v445
      %v478 = vadd.f32 %v414, %v446
      %v479 = vmax.f32 %v447, 0.0
      %v480 = vmax.f32 %v448, 0.0
      %v481 = vmax.f32 %v449, 0.0
      %v482 = vmax.f32 %v450, 0.0
      %v483 = vmax.f32 %v451, 0.0
      %v484 = vmax.f32 %v452, 0.0
      %v485 = vmax.f32 %v453, 0.0
      %v486 = vmax.f32 %v454, 0.0
      %v487 = vmax.f32 %v455, 0.0
      %v488 = vmax.f32 %v456, 0.0
      %v489 = vmax.f32 %v457, 0.0
      %v490 = vmax.f32 %v458, 0.0
      %v491 = vmax.f32 %v459, 0.0
      %v492 = vmax.f32 %v460, 0.0
      %v493 = vmax.f32 %v461, 0.0
      %v494 = vmax.f32 %v462, 0.0
      %v495 = vmax.f32 %v463, 0.0
      %v496 = vmax.f32 %v464, 0.0
      %v497 = vmax.f32 %v465, 0.0
      %v498 = vmax.f32 %v466, 0.0
      %v499 = vmax.f32 %v467, 0.0
      %v500 = vmax.f32 %v468, 0.0
      %v501 = vmax.f32 %v469, 0.0
      %v502 = vmax.f32 %v470, 0.0
      %v503 = vmax.f32 %v471, 0.0
      %v504 = vmax.f32 %v472, 0.0
      %v505 = vmax.f32 %v473, 0.0
      %v506 = vmax.f32 %v474, 0.0
      %v507 = vmax.f32 %v475, 0.0
      %v508 = vmax.f32 %v476, 0.0
      %v509 = vmax.f32 %v477, 0.0
      %v510 = vmax.f32 %v478, 0.0
      %511 = vst [vmem:[%s271] sm:$0xff] %v479
      %512 = vst [vmem:[%s271 + $0x8] sm:$0xff] %v480
      %513 = vst [vmem:[%s271 + $0x10] sm:$0xff] %v481
      %514 = vst [vmem:[%s271 + $0x18] sm:$0xff] %v482
      %515 = vst [vmem:[%s271 + $0x20] sm:$0xff] %v483
      %516 = vst [vmem:[%s271 + $0x28] sm:$0xff] %v484
      %517 = vst [vmem:[%s271 + $0x30] sm:$0xff] %v485
      %518 = vst [vmem:[%s271 + $0x38] sm:$0xff] %v486
      %519 = vst [vmem:[%s271 + $0x40] sm:$0xff] %v487
      %520 = vst [vmem:[%s271 + $0x48] sm:$0xff] %v488
      %521 = vst [vmem:[%s271 + $0x50] sm:$0xff] %v489
      %522 = vst [vmem:[%s271 + $0x58] sm:$0xff] %v490
      %523 = vst [vmem:[%s271 + $0x60] sm:$0xff] %v491
      %524 = vst [vmem:[%s271 + $0x68] sm:$0xff] %v492
      %525 = vst [vmem:[%s271 + $0x70] sm:$0xff] %v493
      %526 = vst [vmem:[%s271 + $0x78] sm:$0xff] %v494
      %527 = vst [vmem:[%s271 + $0x80] sm:$0xff] %v495
      %528 = vst [vmem:[%s271 + $0x88] sm:$0xff] %v496
      %529 = vst [vmem:[%s271 + $0x90] sm:$0xff] %v497
      %530 = vst [vmem:[%s271 + $0x98] sm:$0xff] %v498
      %531 = vst [vmem:[%s271 + $0xa0] sm:$0xff] %v499
      %532 = vst [vmem:[%s271 + $0xa8] sm:$0xff] %v500
      %533 = vst [vmem:[%s271 + $0xb0] sm:$0xff] %v501
      %534 = vst [vmem:[%s271 + $0xb8] sm:$0xff] %v502
      %535 = vst [vmem:[%s271 + $0xc0] sm:$0xff] %v503
      %536 = vst [vmem:[%s271 + $0xc8] sm:$0xff] %v504
      %537 = vst [vmem:[%s271 + $0xd0] sm:$0xff] %v505
      %538 = vst [vmem:[%s271 + $0xd8] sm:$0xff] %v506
      %539 = vst [vmem:[%s271 + $0xe0] sm:$0xff] %v507
      %540 = vst [vmem:[%s271 + $0xe8] sm:$0xff] %v508
      %541 = vst [vmem:[%s271 + $0xf0] sm:$0xff] %v509
      %542 = vst [vmem:[%s271 + $0xf8] sm:$0xff] %v510
      %s543 = smul.u32 32, %s20
      %p544 = scmp.lt.s32.totalorder %s19, 1
      %s545 = scalar_select %p544, %s19, 1
      %p546 = scmp.lt.s32.totalorder %s543, 31
      %s547 = scalar_select %p546, %s543, 31
      %s548 = smul.addr %s545, 32
      %s549 = sadd.s32 %s547, %s548
      %s550 = smul.addr %s549, 8
      %s551 = scalar_lea.vmem %s4, %s550
      // Predicated region
      $region37: #{residual_block.7} parent=35 // pred_check
        %p552 = pneg %p145
      $region38: #{residual_block.7} parent=35 // pred_check_branch
        %554 = sbr.rel (%p552) target = $region40
      $region39: #{residual_block.7} parent=35 // pred_region
        %s555 = smul.u32 32, %s20
      $region40: #{residual_block.7} parent=35 // pred_fallthru
        _
    $region36: #{residual_block.7} parent=5 // pred_fallthru
      _
    %p556 = scmp.le.s32.totalorder 2, %s10
    // Predicated region
    $region41: #{residual_block.7} parent=5 // pred_check
      %p557 = pneg %p556
    $region42: #{residual_block.7} parent=5 // pred_check_branch
      %559 = sbr.rel (%p557) target = $region44
    $region43: #{residual_block.7} parent=5 // pred_region
      %s560 = ssub.s32 %s10, 2
      // Predicated region
      $region45: #{residual_block.7} parent=43 // pred_check
        %p561 = pneg %p151
      $region46: #{residual_block.7} parent=43 // pred_check_branch
        %563 = sbr.rel (%p561) target = $region48
      $region47: #{residual_block.7} parent=43 // pred_region
        %s564 = smul.u32 32, %s22
        %p565 = scmp.lt.s32.totalorder %s21, 1
        %s566 = scalar_select %p565, %s21, 1
        %p567 = scmp.lt.s32.totalorder %s564, 31
        %s568 = scalar_select %p567, %s564, 31
        %s569 = smul.addr %s566, 32
        %s570 = sadd.s32 %s568, %s569
        %s571 = smul.addr %s570, 8
        %s572 = scalar_lea.vmem %s4, %s571
      $region48: #{residual_block.7} parent=43 // pred_fallthru
        _
    $region44: #{residual_block.7} parent=5 // pred_fallthru
      _
  $region6: #{residual_block.7} parent=0 // loop_footer
    %s14 = sadd.s32 1, %s10
  $region7: #{residual_block.7} parent=0 // loop_footer_branch
    %9 = sbr.rel target = $region3
  $region8: #{residual_block.7} parent=0 // loop_exit
    _

// kernel: residual_block.6
$region0: #{residual_block.6}
  #allocation0 [shape = 'u32[]', space=smem, size = 0x4, offset = 0x4, fixed_abs, tag = 'smem constant byte address 0x4 - core index']
  #allocation1 [shape = 'u32[144,128]{1,0:T(1,128)}', space=vmem, size = 0x12000, scoped, tag = 'internal scratch']
  %s0 = inlined_call_operand.vmem [shape: bf16[2,256,128], index: 0, kind: input, shape index: {}]
  %s1 = inlined_call_operand.vmem [shape: f32[1,128], index: 1, kind: input, shape index: {}]
  %s2 = inlined_call_operand.vmem [shape: f32[1,128], index: 2, kind: input, shape index: {}]
  %s3 = inlined_call_operand.vmem [shape: bf16[128,128], index: 3, kind: input, shape index: {}]
  %s4 = inlined_call_operand.vmem [shape: bf16[2,256,128], index: 4, kind: output, shape index: {0}]
  %s5 = inlined_call_operand.vmem [shape: f32[2,1,8,128], index: 5, kind: output, shape index: {1}]
  %6 = xla_tuple %s4, %s5
  %s7 = sld [smem:[#allocation0]]
  $region57: #{residual_block.6} parent=0
    _
  %s9 = ssub.s32 1, %s7
  %s10 = scalar_select 0, %s9, %s7
  loop: start=0, step=1, limit=4
  $region2: #{residual_block.6} parent=0 // loop_pre_header
    _
  $region3: #{residual_block.6} parent=0 // loop_header
    %s12 = sphi 0, %s16
    %p13 = scmp.ge.s32.totalorder %s12, 4
    %s19 = sphi 0, %s31
    %s20 = sphi 0, %s27
    %s21 = sphi 0, %s19
    %s22 = sphi 0, %s20
    %s23 = sphi 0, %s21
    %s24 = sphi 0, %s22
    %s36 = sphi 0, %s38
    %s39 = sphi 0, %s36
    %s40 = sphi 0, %s39
    %s56 = sphi 0, %s40
    %s60 = sphi 0, %s60
    %s62 = sphi 0, %s60
    %s63 = sphi 0, %s62
    %s77 = sphi 0, %s63
    %s81 = sphi 0, %s81
    %s83 = sphi 0, %s81
    %s84 = sphi 0, %s83
    %s98 = sphi 0, %s84
    %s102 = sphi 0, %s102
    %s104 = sphi 0, %s102
    %s105 = sphi 0, %s104
    %s119 = sphi 0, %s105
    %s127 = sphi 0, %s129
    %s130 = sphi 0, %s127
    %s131 = sphi 0, %s130
    %s147 = sphi 0, %s131
    %s155 = sphi 0, %s157
    %s158 = sphi 0, %s155
    %s159 = sphi 0, %s158
    %s175 = sphi 0, %s159
  $region4: #{residual_block.6} parent=0 // loop_header_branch
    %15 = sbr.rel (%p13) target = $region8
  $region5: #{residual_block.6} parent=0 // loop_body
    %s17 = ssub.s32 %s12, 1
    %s18 = ssub.s32 %s12, 2
    %s25 = sadd.s32 1, %s20
    %p26 = scmp.ge.s32.totalorder %s25, 1
    %s27 = scalar_select %p26, 0, %s25
    %s28 = sadd.s32 1, %s19
    %s29 = scalar_select %p26, %s28, %s19
    %p30 = scmp.ge.s32.totalorder %s29, 2
    %s31 = scalar_select %p30, 0, %s29
    %s32 = ssub.s32 %s19, %s31
    %s33 = ssub.s32 %s20, %s27
    %s34 = sor.u32 %s32, %s33
    %p35 = scmp.eq.s32.totalorder %s34, 0
    %s37 = sadd.s32 %s36, 1
    %s38 = scalar_select %p35, %s36, %s37
    %p41 = pneg %p35
    %p42 = scmp.eq.s32.totalorder %s12, 1
    %p43 = por %p41, %p42
    %p44 = scmp.ne.s32.totalorder %s36, %s39
    %p45 = scmp.eq.s32.totalorder %s12, 0
    %p46 = por %p44, %p45
    %p47 = scmp.ne.s32.totalorder %s36, %s39
    %p48 = scmp.eq.s32.totalorder %s17, 1
    %p49 = por %p47, %p48
    %p50 = scmp.ne.s32.totalorder %s39, %s40
    %p51 = scmp.eq.s32.totalorder %s17, 0
    %p52 = por %p50, %p51
    %p53 = scmp.ne.s32.totalorder %s39, %s40
    %p54 = scmp.eq.s32.totalorder %s18, 1
    %p55 = por %p53, %p54
    %p57 = scmp.ne.s32.totalorder %s40, %s56
    %p58 = scmp.eq.s32.totalorder %s18, 0
    %p59 = por %p57, %p58
    %s61 = sadd.s32 %s60, 1
    %p64 = scmp.eq.s32.totalorder %s12, 1
    %p65 = scmp.ne.s32.totalorder %s60, %s62
    %p66 = scmp.eq.s32.totalorder %s12, 0
    %p67 = por %p65, %p66
    %p68 = scmp.ne.s32.totalorder %s60, %s62
    %p69 = scmp.eq.s32.totalorder %s17, 1
    %p70 = por %p68, %p69
    %p71 = scmp.ne.s32.totalorder %s62, %s63
    %p72 = scmp.eq.s32.totalorder %s17, 0
    %p73 = por %p71, %p72
    %p74 = scmp.ne.s32.totalorder %s62, %s63
    %p75 = scmp.eq.s32.totalorder %s18, 1
    %p76 = por %p74, %p75
    %p78 = scmp.ne.s32.totalorder %s63, %s77
    %p79 = scmp.eq.s32.totalorder %s18, 0
    %p80 = por %p78, %p79
    %s82 = sadd.s32 %s81, 1
    %p85 = scmp.eq.s32.totalorder %s12, 1
    %p86 = scmp.ne.s32.totalorder %s81, %s83
    %p87 = scmp.eq.s32.totalorder %s12, 0
    %p88 = por %p86, %p87
    %p89 = scmp.ne.s32.totalorder %s81, %s83
    %p90 = scmp.eq.s32.totalorder %s17, 1
    %p91 = por %p89, %p90
    %p92 = scmp.ne.s32.totalorder %s83, %s84
    %p93 = scmp.eq.s32.totalorder %s17, 0
    %p94 = por %p92, %p93
    %p95 = scmp.ne.s32.totalorder %s83, %s84
    %p96 = scmp.eq.s32.totalorder %s18, 1
    %p97 = por %p95, %p96
    %p99 = scmp.ne.s32.totalorder %s84, %s98
    %p100 = scmp.eq.s32.totalorder %s18, 0
    %p101 = por %p99, %p100
    %s103 = sadd.s32 %s102, 1
    %p106 = scmp.eq.s32.totalorder %s12, 1
    %p107 = scmp.ne.s32.totalorder %s102, %s104
    %p108 = scmp.eq.s32.totalorder %s12, 0
    %p109 = por %p107, %p108
    %p110 = scmp.ne.s32.totalorder %s102, %s104
    %p111 = scmp.eq.s32.totalorder %s17, 1
    %p112 = por %p110, %p111
    %p113 = scmp.ne.s32.totalorder %s104, %s105
    %p114 = scmp.eq.s32.totalorder %s17, 0
    %p115 = por %p113, %p114
    %p116 = scmp.ne.s32.totalorder %s104, %s105
    %p117 = scmp.eq.s32.totalorder %s18, 1
    %p118 = por %p116, %p117
    %p120 = scmp.ne.s32.totalorder %s105, %s119
    %p121 = scmp.eq.s32.totalorder %s18, 0
    %p122 = por %p120, %p121
    %s123 = ssub.s32 %s19, %s31
    %s124 = ssub.s32 %s20, %s27
    %s125 = sor.u32 %s123, %s124
    %p126 = scmp.eq.s32.totalorder %s125, 0
    %s128 = sadd.s32 %s127, 1
    %s129 = scalar_select %p126, %s127, %s128
    %p132 = pneg %p126
    %p133 = scmp.eq.s32.totalorder %s12, 1
    %p134 = por %p132, %p133
    %p135 = scmp.ne.s32.totalorder %s127, %s130
    %p136 = scmp.eq.s32.totalorder %s12, 0
    %p137 = por %p135, %p136
    %p138 = scmp.ne.s32.totalorder %s127, %s130
    %p139 = scmp.eq.s32.totalorder %s17, 1
    %p140 = por %p138, %p139
    %p141 = scmp.ne.s32.totalorder %s130, %s131
    %p142 = scmp.eq.s32.totalorder %s17, 0
    %p143 = por %p141, %p142
    %p144 = scmp.ne.s32.totalorder %s130, %s131
    %p145 = scmp.eq.s32.totalorder %s18, 1
    %p146 = por %p144, %p145
    %p148 = scmp.ne.s32.totalorder %s131, %s147
    %p149 = scmp.eq.s32.totalorder %s18, 0
    %p150 = por %p148, %p149
    %s151 = ssub.s32 %s19, %s31
    %s152 = ssub.s32 %s20, %s27
    %s153 = sor.u32 %s151, %s152
    %p154 = scmp.eq.s32.totalorder %s153, 0
    %s156 = sadd.s32 %s155, 1
    %s157 = scalar_select %p154, %s155, %s156
    %p160 = pneg %p154
    %p161 = scmp.eq.s32.totalorder %s12, 1
    %p162 = por %p160, %p161
    %p163 = scmp.ne.s32.totalorder %s155, %s158
    %p164 = scmp.eq.s32.totalorder %s12, 0
    %p165 = por %p163, %p164
    %p166 = scmp.ne.s32.totalorder %s155, %s158
    %p167 = scmp.eq.s32.totalorder %s17, 1
    %p168 = por %p166, %p167
    %p169 = scmp.ne.s32.totalorder %s158, %s159
    %p170 = scmp.eq.s32.totalorder %s17, 0
    %p171 = por %p169, %p170
    %p172 = scmp.ne.s32.totalorder %s158, %s159
    %p173 = scmp.eq.s32.totalorder %s18, 1
    %p174 = por %p172, %p173
    %p176 = scmp.ne.s32.totalorder %s159, %s175
    %p177 = scmp.eq.s32.totalorder %s18, 0
    %p178 = por %p176, %p177
    %p179 = scmp.le.s32.totalorder 1, %s12
    %p180 = scmp.lt.s32.totalorder %s12, 3
    %p181 = pnand %p179, %p180
    %p182 = pneg %p181
    // Predicated region
    $region9: #{residual_block.6} parent=5 // pred_check
      _
    $region10: #{residual_block.6} parent=5 // pred_check_branch
      %184 = sbr.rel (%p181) target = $region12
    $region11: #{residual_block.6} parent=5 // pred_region
      %s185 = ssub.s32 %s12, 1
      // Predicated region
      $region13: #{residual_block.6} parent=11 // pred_check
        %p186 = pneg %p73
      $region14: #{residual_block.6} parent=11 // pred_check_branch
        %188 = sbr.rel (%p186) target = $region16
      $region15: #{residual_block.6} parent=11 // pred_region
        _
      $region16: #{residual_block.6} parent=11 // pred_fallthru
        _
      // Predicated region
      $region17: #{residual_block.6} parent=11 // pred_check
        %p189 = pneg %p94
      $region18: #{residual_block.6} parent=11 // pred_check_branch
        %191 = sbr.rel (%p189) target = $region20
      $region19: #{residual_block.6} parent=11 // pred_region
        _
      $region20: #{residual_block.6} parent=11 // pred_fallthru
        _
      // Predicated region
      $region21: #{residual_block.6} parent=11 // pred_check
        %p192 = pneg %p115
      $region22: #{residual_block.6} parent=11 // pred_check_branch
        %194 = sbr.rel (%p192) target = $region24
      $region23: #{residual_block.6} parent=11 // pred_region
        _
      $region24: #{residual_block.6} parent=11 // pred_fallthru
        _
    $region12: #{residual_block.6} parent=5 // pred_fallthru
      _
    %p195 = scmp.lt.s32.totalorder %s12, 2
    // Predicated region
    $region25: #{residual_block.6} parent=5 // pred_check
      %p196 = pneg %p195
    $region26: #{residual_block.6} parent=5 // pred_check_branch
      %198 = sbr.rel (%p196) target = $region28
    $region27: #{residual_block.6} parent=5 // pred_region
      // Predicated region
      $region29: #{residual_block.6} parent=27 // pred_check
        %p199 = pneg %p46
      $region30: #{residual_block.6} parent=27 // pred_check_branch
        %201 = sbr.rel (%p199) target = $region32
      $region31: #{residual_block.6} parent=27 // pred_region
        %s202 = smul.u32 32, %s20
        %p203 = scmp.lt.s32.totalorder %s19, 1
        %s204 = scalar_select %p203, %s19, 1
        %p205 = scmp.lt.s32.totalorder %s202, 31
        %s206 = scalar_select %p205, %s202, 31
        %s207 = smul.addr %s204, 32
        %s208 = sadd.s32 %s206, %s207
        %s209 = smul.addr %s208, 4
        %s210 = scalar_lea.vmem %s0, %s209
        %s211 = smul.u32 32, %s20
      $region32: #{residual_block.6} parent=27 // pred_fallthru
        _
    $region28: #{residual_block.6} parent=5 // pred_fallthru
      _
    %p212 = scmp.le.s32.totalorder 1, %s12
    %p213 = scmp.lt.s32.totalorder %s12, 3
    %p214 = pnand %p212, %p213
    %p215 = pneg %p214
    // Predicated region
    $region33: #{residual_block.6} parent=5 // pred_check
      _
    $region34: #{residual_block.6} parent=5 // pred_check_branch
      %217 = sbr.rel (%p214) target = $region36
    $region35: #{residual_block.6} parent=5 // pred_region
      %s218 = ssub.s32 %s12, 1
      %s219 = smul.u32 32, %s22
      %p220 = scmp.lt.s32.totalorder %s21, 1
      %s221 = scalar_select %p220, %s21, 1
      %p222 = scmp.lt.s32.totalorder %s219, 31
      %s223 = scalar_select %p222, %s219, 31
      %s224 = smul.addr %s221, 32
      %s225 = sadd.s32 %s223, %s224
      %s226 = smul.addr %s225, 4
      %s227 = scalar_lea.vmem %s0, %s226
      %p228 = pneg %p52
      %p229 = pneg %p49
      %p230 = pneg %p73
      %p231 = pneg %p70
      %p232 = pneg %p94
      %p233 = pneg %p91
      %p234 = pneg %p115
      %p235 = pneg %p112
      %p236 = pneg %p143
      %p237 = pneg %p140
      %s238 = smul.u32 32, %s22
      %p239 = scmp.lt.s32.totalorder %s21, 1
      %s240 = scalar_select %p239, %s21, 1
      %p241 = scmp.lt.s32.totalorder %s238, 31
      %s242 = scalar_select %p241, %s238, 31
      %s243 = smul.addr %s240, 32
      %s244 = sadd.s32 %s242, %s243
      %s245 = smul.addr %s244, 4
      %s246 = scalar_lea.vmem %s4, %s245
      %p247 = pneg %p171
      %p248 = pneg %p168
      %p249 = scmp.lt.s32.totalorder %s21, 1
      %s250 = scalar_select %p249, %s21, 1
      %p251 = scmp.lt.s32.totalorder %s22, 0
      %s252 = scalar_select %p251, %s22, 0
      %s253 = sadd.s32 %s252, %s250
      %s254 = smul.addr %s253, 8
      %s255 = scalar_lea.vmem %s5, %s254
      %s256 = smul.u32 32, %s22
      %p257 = scmp.lt.s32.totalorder %s21, 1
      %s258 = scalar_select %p257, %s21, 1
      %p259 = scmp.lt.s32.totalorder %s256, 31
      %s260 = scalar_select %p259, %s256, 31
      %s261 = smul.addr %s258, 32
      %s262 = sadd.s32 %s260, %s261
      %s263 = smul.addr %s262, 4
      %s264 = scalar_lea.vmem %s0, %s263
      %s265 = smul.u32 32, %s22
      %s266 = smul.u32 32, %s22
      %p267 = scmp.lt.s32.totalorder %s21, 1
      %s268 = scalar_select %p267, %s21, 1
      %p269 = scmp.lt.s32.totalorder %s266, 31
      %s270 = scalar_select %p269, %s266, 31
      %s271 = smul.addr %s268, 32
      %s272 = sadd.s32 %s270, %s271
      %s273 = smul.addr %s272, 4
      %s274 = scalar_lea.vmem %s4, %s273
      %s275 = smul.u32 32, %s22
      %p276 = scmp.lt.s32.totalorder %s21, 1
      %s277 = scalar_select %p276, %s21, 1
      %p278 = scmp.lt.s32.totalorder %s22, 0
      %s279 = scalar_select %p278, %s22, 0
      %s280 = sadd.s32 %s279, %s277
      %s281 = smul.addr %s280, 8
      %s282 = scalar_lea.vmem %s5, %s281
      %v284 = vld [vmem:[%s264] sm:$0xf]
      %v285 = vld [vmem:[%s264 + $0x4] sm:$0xf]
      %v286 = vld [vmem:[%s264 + $0x8] sm:$0xf]
      %v287 = vld [vmem:[%s264 + $0xc] sm:$0xf]
      %v288 = vld [vmem:[%s264 + $0x10] sm:$0xf]
      %v289 = vld [vmem:[%s264 + $0x14] sm:$0xf]
      %v290 = vld [vmem:[%s264 + $0x18] sm:$0xf]
      %v291 = vld [vmem:[%s264 + $0x1c] sm:$0xf]
      %v292 = vld [vmem:[%s264 + $0x20] sm:$0xf]
      %v293 = vld [vmem:[%s264 + $0x24] sm:$0xf]
      %v294 = vld [vmem:[%s264 + $0x28] sm:$0xf]
      %v295 = vld [vmem:[%s264 + $0x2c] sm:$0xf]
      %v296 = vld [vmem:[%s264 + $0x30] sm:$0xf]
      %v297 = vld [vmem:[%s264 + $0x34] sm:$0xf]
      %v298 = vld [vmem:[%s264 + $0x38] sm:$0xf]
      %v299 = vld [vmem:[%s264 + $0x3c] sm:$0xf]
      %v300 = vld [vmem:[%s264 + $0x40] sm:$0xf]
      %v301 = vld [vmem:[%s264 + $0x44] sm:$0xf]
      %v302 = vld [vmem:[%s264 + $0x48] sm:$0xf]
      %v303 = vld [vmem:[%s264 + $0x4c] sm:$0xf]
      %v304 = vld [vmem:[%s264 + $0x50] sm:$0xf]
      %v305 = vld [vmem:[%s264 + $0x54] sm:$0xf]
      %v306 = vld [vmem:[%s264 + $0x58] sm:$0xf]
      %v307 = vld [vmem:[%s264 + $0x5c] sm:$0xf]
      %v308 = vld [vmem:[%s264 + $0x60] sm:$0xf]
      %v309 = vld [vmem:[%s264 + $0x64] sm:$0xf]
      %v310 = vld [vmem:[%s264 + $0x68] sm:$0xf]
      %v311 = vld [vmem:[%s264 + $0x6c] sm:$0xf]
      %v312 = vld [vmem:[%s264 + $0x70] sm:$0xf]
      %v313 = vld [vmem:[%s264 + $0x74] sm:$0xf]
      %v314 = vld [vmem:[%s264 + $0x78] sm:$0xf]
      %v315 = vld [vmem:[%s264 + $0x7c] sm:$0xf]
      %v316 = vunpack.c.l.bf16 %v284
      %v317 = vunpack.c.l.bf16 %v285
      %v318 = vunpack.c.l.bf16 %v286
      %v319 = vunpack.c.l.bf16 %v287
      %v320 = vunpack.c.l.bf16 %v288
      %v321 = vunpack.c.l.bf16 %v289
      %v322 = vunpack.c.l.bf16 %v290
      %v323 = vunpack.c.l.bf16 %v291
      %v324 = vunpack.c.l.bf16 %v292
      %v325 = vunpack.c.l.bf16 %v293
      %v326 = vunpack.c.l.bf16 %v294
      %v327 = vunpack.c.l.bf16 %v295
      %v328 = vunpack.c.l.bf16 %v296
      %v329 = vunpack.c.l.bf16 %v297
      %v330 = vunpack.c.l.bf16 %v298
      %v331 = vunpack.c.l.bf16 %v299
      %v332 = vunpack.c.l.bf16 %v300
      %v333 = vunpack.c.l.bf16 %v301
      %v334 = vunpack.c.l.bf16 %v302
      %v335 = vunpack.c.l.bf16 %v303
      %v336 = vunpack.c.l.bf16 %v304
      %v337 = vunpack.c.l.bf16 %v305
      %v338 = vunpack.c.l.bf16 %v306
      %v339 = vunpack.c.l.bf16 %v307
      %v340 = vunpack.c.l.bf16 %v308
      %v341 = vunpack.c.l.bf16 %v309
      %v342 = vunpack.c.l.bf16 %v310
      %v343 = vunpack.c.l.bf16 %v311
      %v344 = vunpack.c.l.bf16 %v312
      %v345 = vunpack.c.l.bf16 %v313
      %v346 = vunpack.c.l.bf16 %v314
      %v347 = vunpack.c.l.bf16 %v315
      %v348 = vld [vmem:[%s1] sm:$0x1]
      %v350 = vlaneseq
      %v351 = vshrl.u32 %v350, 7
      %v352 = vsub.s32 0, %v351
      %v353 = vrot.slane %v348, %v352
      %v355 = vmul.f32 %v316, %v353
      %v356 = vmul.f32 %v317, %v353
      %v357 = vmul.f32 %v318, %v353
      %v358 = vmul.f32 %v319, %v353
      %v359 = vmul.f32 %v320, %v353
      %v360 = vmul.f32 %v321, %v353
      %v361 = vmul.f32 %v322, %v353
      %v362 = vmul.f32 %v323, %v353
      %v363 = vmul.f32 %v324, %v353
      %v364 = vmul.f32 %v325, %v353
      %v365 = vmul.f32 %v326, %v353
      %v366 = vmul.f32 %v327, %v353
      %v367 = vmul.f32 %v328, %v353
      %v368 = vmul.f32 %v329, %v353
      %v369 = vmul.f32 %v330, %v353
      %v370 = vmul.f32 %v331, %v353
      %v371 = vmul.f32 %v332, %v353
      %v372 = vmul.f32 %v333, %v353
      %v373 = vmul.f32 %v334, %v353
      %v374 = vmul.f32 %v335, %v353
      %v375 = vmul.f32 %v336, %v353
      %v376 = vmul.f32 %v337, %v353
      %v377 = vmul.f32 %v338, %v353
      %v378 = vmul.f32 %v339, %v353
      %v379 = vmul.f32 %v340, %v353
      %v380 = vmul.f32 %v341, %v353
      %v381 = vmul.f32 %v342, %v353
      %v382 = vmul.f32 %v343, %v353
      %v383 = vmul.f32 %v344, %v353
      %v384 = vmul.f32 %v345, %v353
      %v385 = vmul.f32 %v346, %v353
      %v386 = vmul.f32 %v347, %v353
      %v387 = vld [vmem:[%s2] sm:$0x1]
      %v389 = vlaneseq
      %v390 = vshrl.u32 %v389, 7
      %v391 = vsub.s32 0, %v390
      %v392 = vrot.slane %v387, %v391
      %v394 = vadd.f32 %v355, %v392
      %v395 = vadd.f32 %v356, %v392
      %v396 = vadd.f32 %v357, %v392
      %v397 = vadd.f32 %v358, %v392
      %v398 = vadd.f32 %v359, %v392
      %v399 = vadd.f32 %v360, %v392
      %v400 = vadd.f32 %v361, %v392
      %v401 = vadd.f32 %v362, %v392
      %v402 = vadd.f32 %v363, %v392
      %v403 = vadd.f32 %v364, %v392
      %v404 = vadd.f32 %v365, %v392
      %v405 = vadd.f32 %v366, %v392
      %v406 = vadd.f32 %v367, %v392
      %v407 = vadd.f32 %v368, %v392
      %v408 = vadd.f32 %v369, %v392
      %v409 = vadd.f32 %v370, %v392
      %v410 = vadd.f32 %v371, %v392
      %v411 = vadd.f32 %v372, %v392
      %v412 = vadd.f32 %v373, %v392
      %v413 = vadd.f32 %v374, %v392
      %v414 = vadd.f32 %v375, %v392
      %v415 = vadd.f32 %v376, %v392
      %v416 = vadd.f32 %v377, %v392
      %v417 = vadd.f32 %v378, %v392
      %v418 = vadd.f32 %v379, %v392
      %v419 = vadd.f32 %v380, %v392
      %v420 = vadd.f32 %v381, %v392
      %v421 = vadd.f32 %v382, %v392
      %v422 = vadd.f32 %v383, %v392
      %v423 = vadd.f32 %v384, %v392
      %v424 = vadd.f32 %v385, %v392
      %v425 = vadd.f32 %v386, %v392
      %v426 = vmax.f32 %v394, 0.0
      %v427 = vmax.f32 %v395, 0.0
      %v428 = vmax.f32 %v396, 0.0
      %v429 = vmax.f32 %v397, 0.0
      %v430 = vmax.f32 %v398, 0.0
      %v431 = vmax.f32 %v399, 0.0
      %v432 = vmax.f32 %v400, 0.0
      %v433 = vmax.f32 %v401, 0.0
      %v434 = vmax.f32 %v402, 0.0
      %v435 = vmax.f32 %v403, 0.0
      %v436 = vmax.f32 %v404, 0.0
      %v437 = vmax.f32 %v405, 0.0
      %v438 = vmax.f32 %v406, 0.0
      %v439 = vmax.f32 %v407, 0.0
      %v440 = vmax.f32 %v408, 0.0
      %v441 = vmax.f32 %v409, 0.0
      %v442 = vmax.f32 %v410, 0.0
      %v443 = vmax.f32 %v411, 0.0
      %v444 = vmax.f32 %v412, 0.0
      %v445 = vmax.f32 %v413, 0.0
      %v446 = vmax.f32 %v414, 0.0
      %v447 = vmax.f32 %v415, 0.0
      %v448 = vmax.f32 %v416, 0.0
      %v449 = vmax.f32 %v417, 0.0
      %v450 = vmax.f32 %v418, 0.0
      %v451 = vmax.f32 %v419, 0.0
      %v452 = vmax.f32 %v420, 0.0
      %v453 = vmax.f32 %v421, 0.0
      %v454 = vmax.f32 %v422, 0.0
      %v455 = vmax.f32 %v423, 0.0
      %v456 = vmax.f32 %v424, 0.0
      %v457 = vmax.f32 %v425, 0.0
      %v458 = vpack.c.bf16 %v427, %v426
      %v459 = vpack.c.bf16 %v429, %v428
      %v460 = vpack.c.bf16 %v431, %v430
      %v461 = vpack.c.bf16 %v433, %v432
      %v462 = vpack.c.bf16 %v435, %v434
      %v463 = vpack.c.bf16 %v437, %v436
      %v464 = vpack.c.bf16 %v439, %v438
      %v465 = vpack.c.bf16 %v441, %v440
      %v466 = vpack.c.bf16 %v443, %v442
      %v467 = vpack.c.bf16 %v445, %v444
      %v468 = vpack.c.bf16 %v447, %v446
      %v469 = vpack.c.bf16 %v449, %v448
      %v470 = vpack.c.bf16 %v451, %v450
      %v471 = vpack.c.bf16 %v453, %v452
      %v472 = vpack.c.bf16 %v455, %v454
      %v473 = vpack.c.bf16 %v457, %v456
      %v474 = vld [vmem:[%s3] sm:$0xf]
      %v475 = vld [vmem:[%s3 + $0x4] sm:$0xf]
      %v476 = vld [vmem:[%s3 + $0x8] sm:$0xf]
      %v477 = vld [vmem:[%s3 + $0xc] sm:$0xf]
      %v478 = vld [vmem:[%s3 + $0x10] sm:$0xf]
      %v479 = vld [vmem:[%s3 + $0x14] sm:$0xf]
      %v480 = vld [vmem:[%s3 + $0x18] sm:$0xf]
      %v481 = vld [vmem:[%s3 + $0x1c] sm:$0xf]
      %v482 = vld [vmem:[%s3 + $0x20] sm:$0xf]
      %v483 = vld [vmem:[%s3 + $0x24] sm:$0xf]
      %v484 = vld [vmem:[%s3 + $0x28] sm:$0xf]
      %v485 = vld [vmem:[%s3 + $0x2c] sm:$0xf]
      %v486 = vld [vmem:[%s3 + $0x30] sm:$0xf]
      %v487 = vld [vmem:[%s3 + $0x34] sm:$0xf]
      %v488 = vld [vmem:[%s3 + $0x38] sm:$0xf]
      %v489 = vld [vmem:[%s3 + $0x3c] sm:$0xf]
      %v506 = vunpack.c.l.b16 %v474
      %v507 = vunpack.c.l.b16 %v475
      %v508 = vunpack.c.l.b16 %v476
      %v509 = vunpack.c.l.b16 %v477
      %v510 = vunpack.c.l.b16 %v478
      %v511 = vunpack.c.l.b16 %v479
      %v512 = vunpack.c.l.b16 %v480
      %v513 = vunpack.c.l.b16 %v481
      %v514 = vunpack.c.l.b16 %v482
      %v515 = vunpack.c.l.b16 %v483
      %v516 = vunpack.c.l.b16 %v484
      %v517 = vunpack.c.l.b16 %v485
      %v518 = vunpack.c.l.b16 %v486
      %v519 = vunpack.c.l.b16 %v487
      %v520 = vunpack.c.l.b16 %v488
      %v521 = vunpack.c.l.b16 %v489
      %v522 = vpack.c.b16 %v507, %v506
      %v523 = vpack.c.b16 %v509, %v508
      %v524 = vpack.c.b16 %v511, %v510
      %v525 = vpack.c.b16 %v513, %v512
      %v526 = vpack.c.b16 %v515, %v514
      %v527 = vpack.c.b16 %v517, %v516
      %v528 = vpack.c.b16 %v519, %v518
      %v529 = vpack.c.b16 %v521, %v520
      %538 = vmatprep.subr.bf16.mxu0 0
      %539 = vmatpush1.bf16.msra.mxu0 %v522
      %540 = vmatprep.subr.bf16.mxu0 0
      %541 = vmatpush1.bf16.msra.mxu0 %v523
      %542 = vmatprep.subr.bf16.mxu0 0
      %543 = vmatpush1.bf16.msra.mxu0 %v524
      %544 = vmatprep.subr.bf16.mxu0 0
      %545 = vmatpush1.bf16.msra.mxu0 %v525
      %546 = vmatprep.subr.bf16.mxu0 0
      %547 = vmatpush1.bf16.msra.mxu0 %v526
      %548 = vmatprep.subr.bf16.mxu0 0
      %549 = vmatpush1.bf16.msra.mxu0 %v527
      %550 = vmatprep.subr.bf16.mxu0 0
      %551 = vmatpush1.bf16.msra.mxu0 %v528
      %552 = vmatprep.subr.bf16.mxu0 0
      %553 = vmatpush1.bf16.msra.mxu0 %v529
      %554 = vmatprep.subr.bf16.mxu0 0
      %555 = vmatpush1.bf16.msra.mxu0 0
      %556 = vmatprep.subr.bf16.mxu0 0
      %557 = vmatpush1.bf16.msra.mxu0 0
      %558 = vmatprep.subr.bf16.mxu0 0
      %559 = vmatpush1.bf16.msra.mxu0 0
      %560 = vmatprep.subr.bf16.mxu0 0
      %561 = vmatpush1.bf16.msra.mxu0 0
      %562 = vmatprep.subr.bf16.mxu0 0
      %563 = vmatpush1.bf16.msra.mxu0 0
      %564 = vmatprep.subr.bf16.mxu0 0
      %565 = vmatpush1.bf16.msra.mxu0 0
      %566 = vmatprep.subr.bf16.mxu0 0
      %567 = vmatpush1.bf16.msra.mxu0 0
      %568 = vmatprep.subr.bf16.mxu0 0
      %569 = vmatpush1.bf16.msra.mxu0 0
      %570 = vmatprep.mubr.bf16.mxu0 0
      %571 = vmatmul.mubr.bf16.gmra.mrb[0].mxu0 %v458
      %v572 = vpop.f32.mrb[0].mxu0
      %v573 = vadd.f32 0.0, %v572
      %v574 = vpop.f32.mrb[0].mxu0
      %v575 = vpop.f32.mrb[0].mxu0
      %v576 = vadd.f32 0.0, %v575
      %v577 = vpop.f32.mrb[0].mxu0
      %578 = vmatprep.mubr.bf16.mxu0 0
      %579 = vmatmul.mubr.bf16.gmra.mrb[0].mxu0 %v459
      %v580 = vpop.f32.mrb[0].mxu0
      %v581 = vadd.f32 0.0, %v580
      %v582 = vpop.f32.mrb[0].mxu0
      %v583 = vpop.f32.mrb[0].mxu0
      %v584 = vadd.f32 0.0, %v583
      %v585 = vpop.f32.mrb[0].mxu0
      %586 = vmatprep.mubr.bf16.mxu0 0
      %587 = vmatmul.mubr.bf16.gmra.mrb[0].mxu0 %v460
      %v588 = vpop.f32.mrb[0].mxu0
      %v589 = vadd.f32 0.0, %v588
      %v590 = vpop.f32.mrb[0].mxu0
      %v591 = vpop.f32.mrb[0].mxu0
      %v592 = vadd.f32 0.0, %v591
      %v593 = vpop.f32.mrb[0].mxu0
      %594 = vmatprep.mubr.bf16.mxu0 0
      %595 = vmatmul.mubr.bf16.gmra.mrb[0].mxu0 %v461
      %v596 = vpop.f32.mrb[0].mxu0
      %v597 = vadd.f32 0.0, %v596
      %v598 = vpop.f32.mrb[0].mxu0
      %v599 = vpop.f32.mrb[0].mxu0
      %v600 = vadd.f32 0.0, %v599
      %v601 = vpop.f32.mrb[0].mxu0
      %602 = vmatprep.mubr.bf16.mxu0 0
      %603 = vmatmul.mubr.bf16.gmra.mrb[0].mxu0 %v462
      %v604 = vpop.f32.mrb[0].mxu0
      %v605 = vadd.f32 0.0, %v604
      %v606 = vpop.f32.mrb[0].mxu0
      %v607 = vpop.f32.mrb[0].mxu0
      %v608 = vadd.f32 0.0, %v607
      %v609 = vpop.f32.mrb[0].mxu0
      %610 = vmatprep.mubr.bf16.mxu0 0
      %611 = vmatmul.mubr.bf16.gmra.mrb[0].mxu0 %v463
      %v612 = vpop.f32.mrb[0].mxu0
      %v613 = vadd.f32 0.0, %v612
      %v614 = vpop.f32.mrb[0].mxu0
      %v615 = vpop.f32.mrb[0].mxu0
      %v616 = vadd.f32 0.0, %v615
      %v617 = vpop.f32.mrb[0].mxu0
      %618 = vmatprep.mubr.bf16.mxu0 0
      %619 = vmatmul.mubr.bf16.gmra.mrb[0].mxu0 %v464
      %v620 = vpop.f32.mrb[0].mxu0
      %v621 = vadd.f32 0.0, %v620
      %v622 = vpop.f32.mrb[0].mxu0
      %v623 = vpop.f32.mrb[0].mxu0
      %v624 = vadd.f32 0.0, %v623
      %v625 = vpop.f32.mrb[0].mxu0
      %626 = vmatprep.mubr.bf16.mxu0 0
      %627 = vmatmul.mubr.bf16.gmra.mrb[0].mxu0 %v465
      %v628 = vpop.f32.mrb[0].mxu0
      %v629 = vadd.f32 0.0, %v628
      %v630 = vpop.f32.mrb[0].mxu0
      %v631 = vpop.f32.mrb[0].mxu0
      %v632 = vadd.f32 0.0, %v631
      %v633 = vpop.f32.mrb[0].mxu0
      %634 = vmatprep.mubr.bf16.mxu0 0
      %635 = vmatmul.mubr.bf16.gmra.mrb[0].mxu0 %v466
      %v636 = vpop.f32.mrb[0].mxu0
      %v637 = vadd.f32 0.0, %v636
      %v638 = vpop.f32.mrb[0].mxu0
      %v639 = vpop.f32.mrb[0].mxu0
      %v640 = vadd.f32 0.0, %v639
      %v641 = vpop.f32.mrb[0].mxu0
      %642 = vmatprep.mubr.bf16.mxu0 0
      %643 = vmatmul.mubr.bf16.gmra.mrb[0].mxu0 %v467
      %v644 = vpop.f32.mrb[0].mxu0
      %v645 = vadd.f32 0.0, %v644
      %v646 = vpop.f32.mrb[0].mxu0
      %v647 = vpop.f32.mrb[0].mxu0
      %v648 = vadd.f32 0.0, %v647
      %v649 = vpop.f32.mrb[0].mxu0
      %650 = vmatprep.mubr.bf16.mxu0 0
      %651 = vmatmul.mubr.bf16.gmra.mrb[0].mxu0 %v468
      %v652 = vpop.f32.mrb[0].mxu0
      %v653 = vadd.f32 0.0, %v652
      %v654 = vpop.f32.mrb[0].mxu0
      %v655 = vpop.f32.mrb[0].mxu0
      %v656 = vadd.f32 0.0, %v655
      %v657 = vpop.f32.mrb[0].mxu0
      %658 = vmatprep.mubr.bf16.mxu0 0
      %659 = vmatmul.mubr.bf16.gmra.mrb[0].mxu0 %v469
      %v660 = vpop.f32.mrb[0].mxu0
      %v661 = vadd.f32 0.0, %v660
      %v662 = vpop.f32.mrb[0].mxu0
      %v663 = vpop.f32.mrb[0].mxu0
      %v664 = vadd.f32 0.0, %v663
      %v665 = vpop.f32.mrb[0].mxu0
      %666 = vmatprep.mubr.bf16.mxu0 0
      %667 = vmatmul.mubr.bf16.gmra.mrb[0].mxu0 %v470
      %v668 = vpop.f32.mrb[0].mxu0
      %v669 = vadd.f32 0.0, %v668
      %v670 = vpop.f32.mrb[0].mxu0
      %v671 = vpop.f32.mrb[0].mxu0
      %v672 = vadd.f32 0.0, %v671
      %v673 = vpop.f32.mrb[0].mxu0
      %674 = vmatprep.mubr.bf16.mxu0 0
      %675 = vmatmul.mubr.bf16.gmra.mrb[0].mxu0 %v471
      %v676 = vpop.f32.mrb[0].mxu0
      %v677 = vadd.f32 0.0, %v676
      %v678 = vpop.f32.mrb[0].mxu0
      %v679 = vpop.f32.mrb[0].mxu0
      %v680 = vadd.f32 0.0, %v679
      %v681 = vpop.f32.mrb[0].mxu0
      %682 = vmatprep.mubr.bf16.mxu0 0
      %683 = vmatmul.mubr.bf16.gmra.mrb[0].mxu0 %v472
      %v684 = vpop.f32.mrb[0].mxu0
      %v685 = vadd.f32 0.0, %v684
      %v686 = vpop.f32.mrb[0].mxu0
      %v687 = vpop.f32.mrb[0].mxu0
      %v688 = vadd.f32 0.0, %v687
      %v689 = vpop.f32.mrb[0].mxu0
      %690 = vmatprep.mubr.bf16.mxu0 0
      %691 = vmatmul.mubr.bf16.gmra.mrb[0].mxu0 %v473
      %v692 = vpop.f32.mrb[0].mxu0
      %v693 = vadd.f32 0.0, %v692
      %v694 = vpop.f32.mrb[0].mxu0
      %v695 = vpop.f32.mrb[0].mxu0
      %v696 = vadd.f32 0.0, %v695
      %v697 = vpop.f32.mrb[0].mxu0
      %698 = vdwg.mxu0
      %v699 = vpack.c.bf16 %v576, %v573
      %v700 = vpack.c.bf16 %v584, %v581
      %v701 = vpack.c.bf16 %v592, %v589
      %v702 = vpack.c.bf16 %v600, %v597
      %v703 = vpack.c.bf16 %v608, %v605
      %v704 = vpack.c.bf16 %v616, %v613
      %v705 = vpack.c.bf16 %v624, %v621
      %v706 = vpack.c.bf16 %v632, %v629
      %v707 = vpack.c.bf16 %v640, %v637
      %v708 = vpack.c.bf16 %v648, %v645
      %v709 = vpack.c.bf16 %v656, %v653
      %v710 = vpack.c.bf16 %v664, %v661
      %v711 = vpack.c.bf16 %v672, %v669
      %v712 = vpack.c.bf16 %v680, %v677
      %v713 = vpack.c.bf16 %v688, %v685
      %v714 = vpack.c.bf16 %v696, %v693
      %v731 = vunpack.c.l.b16 %v699
      %v732 = vunpack.c.h.b16 %v699
      %v733 = vunpack.c.l.b16 %v700
      %v734 = vunpack.c.h.b16 %v700
      %v735 = vunpack.c.l.b16 %v701
      %v736 = vunpack.c.h.b16 %v701
      %v737 = vunpack.c.l.b16 %v702
      %v738 = vunpack.c.h.b16 %v702
      %v739 = vunpack.c.l.b16 %v703
      %v740 = vunpack.c.h.b16 %v703
      %v741 = vunpack.c.l.b16 %v704
      %v742 = vunpack.c.h.b16 %v704
      %v743 = vunpack.c.l.b16 %v705
      %v744 = vunpack.c.h.b16 %v705
      %v745 = vunpack.c.l.b16 %v706
      %v746 = vunpack.c.h.b16 %v706
      %v747 = vunpack.c.l.b16 %v707
      %v748 = vunpack.c.h.b16 %v707
      %v749 = vunpack.c.l.b16 %v708
      %v750 = vunpack.c.h.b16 %v708
      %v751 = vunpack.c.l.b16 %v709
      %v752 = vunpack.c.h.b16 %v709
      %v753 = vunpack.c.l.b16 %v710
      %v754 = vunpack.c.h.b16 %v710
      %v755 = vunpack.c.l.b16 %v711
      %v756 = vunpack.c.h.b16 %v711
      %v757 = vunpack.c.l.b16 %v712
      %v758 = vunpack.c.h.b16 %v712
      %v759 = vunpack.c.l.b16 %v713
      %v760 = vunpack.c.h.b16 %v713
      %v761 = vunpack.c.l.b16 %v714
      %v762 = vunpack.c.h.b16 %v714
      %v763 = vpack.c.b16 %v731, %v731
      %v764 = vpack.c.b16 %v732, %v732
      %v765 = vpack.c.b16 %v733, %v733
      %v766 = vpack.c.b16 %v734, %v734
      %v767 = vpack.c.b16 %v735, %v735
      %v768 = vpack.c.b16 %v736, %v736
      %v769 = vpack.c.b16 %v737, %v737
      %v770 = vpack.c.b16 %v738, %v738
      %v771 = vpack.c.b16 %v739, %v739
      %v772 = vpack.c.b16 %v740, %v740
      %v773 = vpack.c.b16 %v741, %v741
      %v774 = vpack.c.b16 %v742, %v742
      %v775 = vpack.c.b16 %v743, %v743
      %v776 = vpack.c.b16 %v744, %v744
      %v777 = vpack.c.b16 %v745, %v745
      %v778 = vpack.c.b16 %v746, %v746
      %v779 = vpack.c.b16 %v747, %v747
      %v780 = vpack.c.b16 %v748, %v748
      %v781 = vpack.c.b16 %v749, %v749
      %v782 = vpack.c.b16 %v750, %v750
      %v783 = vpack.c.b16 %v751, %v751
      %v784 = vpack.c.b16 %v752, %v752
      %v785 = vpack.c.b16 %v753, %v753
      %v786 = vpack.c.b16 %v754, %v754
      %v787 = vpack.c.b16 %v755, %v755
      %v788 = vpack.c.b16 %v756, %v756
      %v789 = vpack.c.b16 %v757, %v757
      %v790 = vpack.c.b16 %v758, %v758
      %v791 = vpack.c.b16 %v759, %v759
      %v792 = vpack.c.b16 %v760, %v760
      %v793 = vpack.c.b16 %v761, %v761
      %v794 = vpack.c.b16 %v762, %v762
      %827 = vst [vmem:[%s274] sm:$0xf] %v763
      %828 = vst [vmem:[%s274 + $0x4] sm:$0xf] %v764
      %829 = vst [vmem:[%s274 + $0x8] sm:$0xf] %v765
      %830 = vst [vmem:[%s274 + $0xc] sm:$0xf] %v766
      %831 = vst [vmem:[%s274 + $0x10] sm:$0xf] %v767
      %832 = vst [vmem:[%s274 + $0x14] sm:$0xf] %v768
      %833 = vst [vmem:[%s274 + $0x18] sm:$0xf] %v769
      %834 = vst [vmem:[%s274 + $0x1c] sm:$0xf] %v770
      %835 = vst [vmem:[%s274 + $0x20] sm:$0xf] %v771
      %836 = vst [vmem:[%s274 + $0x24] sm:$0xf] %v772
      %837 = vst [vmem:[%s274 + $0x28] sm:$0xf] %v773
      %838 = vst [vmem:[%s274 + $0x2c] sm:$0xf] %v774
      %839 = vst [vmem:[%s274 + $0x30] sm:$0xf] %v775
      %840 = vst [vmem:[%s274 + $0x34] sm:$0xf] %v776
      %841 = vst [vmem:[%s274 + $0x38] sm:$0xf] %v777
      %842 = vst [vmem:[%s274 + $0x3c] sm:$0xf] %v778
      %843 = vst [vmem:[%s274 + $0x40] sm:$0xf] %v779
      %844 = vst [vmem:[%s274 + $0x44] sm:$0xf] %v780
      %845 = vst [vmem:[%s274 + $0x48] sm:$0xf] %v781
      %846 = vst [vmem:[%s274 + $0x4c] sm:$0xf] %v782
      %847 = vst [vmem:[%s274 + $0x50] sm:$0xf] %v783
      %848 = vst [vmem:[%s274 + $0x54] sm:$0xf] %v784
      %849 = vst [vmem:[%s274 + $0x58] sm:$0xf] %v785
      %850 = vst [vmem:[%s274 + $0x5c] sm:$0xf] %v786
      %851 = vst [vmem:[%s274 + $0x60] sm:$0xf] %v787
      %852 = vst [vmem:[%s274 + $0x64] sm:$0xf] %v788
      %853 = vst [vmem:[%s274 + $0x68] sm:$0xf] %v789
      %854 = vst [vmem:[%s274 + $0x6c] sm:$0xf] %v790
      %855 = vst [vmem:[%s274 + $0x70] sm:$0xf] %v791
      %856 = vst [vmem:[%s274 + $0x74] sm:$0xf] %v792
      %857 = vst [vmem:[%s274 + $0x78] sm:$0xf] %v793
      %858 = vst [vmem:[%s274 + $0x7c] sm:$0xf] %v794
      %v859 = vunpack.c.l.bf16 %v699
      %v860 = vunpack.c.h.bf16 %v699
      %v861 = vunpack.c.l.bf16 %v700
      %v862 = vunpack.c.h.bf16 %v700
      %v863 = vunpack.c.l.bf16 %v701
      %v864 = vunpack.c.h.bf16 %v701
      %v865 = vunpack.c.l.bf16 %v702
      %v866 = vunpack.c.h.bf16 %v702
      %v867 = vunpack.c.l.bf16 %v703
      %v868 = vunpack.c.h.bf16 %v703
      %v869 = vunpack.c.l.bf16 %v704
      %v870 = vunpack.c.h.bf16 %v704
      %v871 = vunpack.c.l.bf16 %v705
      %v872 = vunpack.c.h.bf16 %v705
      %v873 = vunpack.c.l.bf16 %v706
      %v874 = vunpack.c.h.bf16 %v706
      %v875 = vunpack.c.l.bf16 %v707
      %v876 = vunpack.c.h.bf16 %v707
      %v877 = vunpack.c.l.bf16 %v708
      %v878 = vunpack.c.h.bf16 %v708
      %v879 = vunpack.c.l.bf16 %v709
      %v880 = vunpack.c.h.bf16 %v709
      %v881 = vunpack.c.l.bf16 %v710
      %v882 = vunpack.c.h.bf16 %v710
      %v883 = vunpack.c.l.bf16 %v711
      %v884 = vunpack.c.h.bf16 %v711
      %v885 = vunpack.c.l.bf16 %v712
      %v886 = vunpack.c.h.bf16 %v712
      %v887 = vunpack.c.l.bf16 %v713
      %v888 = vunpack.c.h.bf16 %v713
      %v889 = vunpack.c.l.bf16 %v714
      %v890 = vunpack.c.h.bf16 %v714
      %v891 = vadd.f32 %v859, %v860
      %v892 = vadd.f32 %v891, %v861
      %v893 = vadd.f32 %v892, %v862
      %v894 = vadd.f32 %v893, %v863
      %v895 = vadd.f32 %v894, %v864
      %v896 = vadd.f32 %v895, %v865
      %v897 = vadd.f32 %v896, %v866
      %v898 = vadd.f32 %v897, %v867
      %v899 = vadd.f32 %v898, %v868
      %v900 = vadd.f32 %v899, %v869
      %v901 = vadd.f32 %v900, %v870
      %v902 = vadd.f32 %v901, %v871
      %v903 = vadd.f32 %v902, %v872
      %v904 = vadd.f32 %v903, %v873
      %v905 = vadd.f32 %v904, %v874
      %v906 = vadd.f32 %v905, %v875
      %v907 = vadd.f32 %v906, %v876
      %v908 = vadd.f32 %v907, %v877
      %v909 = vadd.f32 %v908, %v878
      %v910 = vadd.f32 %v909, %v879
      %v911 = vadd.f32 %v910, %v880
      %v912 = vadd.f32 %v911, %v881
      %v913 = vadd.f32 %v912, %v882
      %v914 = vadd.f32 %v913, %v883
      %v915 = vadd.f32 %v914, %v884
      %v916 = vadd.f32 %v915, %v885
      %v917 = vadd.f32 %v916, %v886
      %v918 = vadd.f32 %v917, %v887
      %v919 = vadd.f32 %v918, %v888
      %v920 = vadd.f32 %v919, %v889
      %v921 = vadd.f32 %v920, %v890
      %v922 = vrot.slane %v921, 4
      %v923 = vadd.f32 %v921, %v922
      %v924 = vrot.slane %v923, 2
      %v925 = vadd.f32 %v923, %v924
      %v926 = vrot.slane %v925, 1
      %v927 = vadd.f32 %v925, %v926
      %v928 = vmul.f32 %v859, %v859
      %v929 = vmul.f32 %v860, %v860
      %v930 = vmul.f32 %v861, %v861
      %v931 = vmul.f32 %v862, %v862
      %v932 = vmul.f32 %v863, %v863
      %v933 = vmul.f32 %v864, %v864
      %v934 = vmul.f32 %v865, %v865
      %v935 = vmul.f32 %v866, %v866
      %v936 = vmul.f32 %v867, %v867
      %v937 = vmul.f32 %v868, %v868
      %v938 = vmul.f32 %v869, %v869
      %v939 = vmul.f32 %v870, %v870
      %v940 = vmul.f32 %v871, %v871
      %v941 = vmul.f32 %v872, %v872
      %v942 = vmul.f32 %v873, %v873
      %v943 = vmul.f32 %v874, %v874
      %v944 = vmul.f32 %v875, %v875
      %v945 = vmul.f32 %v876, %v876
      %v946 = vmul.f32 %v877, %v877
      %v947 = vmul.f32 %v878, %v878
      %v948 = vmul.f32 %v879, %v879
      %v949 = vmul.f32 %v880, %v880
      %v950 = vmul.f32 %v881, %v881
      %v951 = vmul.f32 %v882, %v882
      %v952 = vmul.f32 %v883, %v883
      %v953 = vmul.f32 %v884, %v884
      %v954 = vmul.f32 %v885, %v885
      %v955 = vmul.f32 %v886, %v886
      %v956 = vmul.f32 %v887, %v887
      %v957 = vmul.f32 %v888, %v888
      %v958 = vmul.f32 %v889, %v889
      %v959 = vmul.f32 %v890, %v890
      %v960 = vadd.f32 %v928, %v929
      %v961 = vadd.f32 %v960, %v930
      %v962 = vadd.f32 %v961, %v931
      %v963 = vadd.f32 %v962, %v932
      %v964 = vadd.f32 %v963, %v933
      %v965 = vadd.f32 %v964, %v934
      %v966 = vadd.f32 %v965, %v935
      %v967 = vadd.f32 %v966, %v936
      %v968 = vadd.f32 %v967, %v937
      %v969 = vadd.f32 %v968, %v938
      %v970 = vadd.f32 %v969, %v939
      %v971 = vadd.f32 %v970, %v940
      %v972 = vadd.f32 %v971, %v941
      %v973 = vadd.f32 %v972, %v942
      %v974 = vadd.f32 %v973, %v943
      %v975 = vadd.f32 %v974, %v944
      %v976 = vadd.f32 %v975, %v945
      %v977 = vadd.f32 %v976, %v946
      %v978 = vadd.f32 %v977, %v947
      %v979 = vadd.f32 %v978, %v948
      %v980 = vadd.f32 %v979, %v949
      %v981 = vadd.f32 %v980, %v950
      %v982 = vadd.f32 %v981, %v951
      %v983 = vadd.f32 %v982, %v952
      %v984 = vadd.f32 %v983, %v953
      %v985 = vadd.f32 %v984, %v954
      %v986 = vadd.f32 %v985, %v955
      %v987 = vadd.f32 %v986, %v956
      %v988 = vadd.f32 %v987, %v957
      %v989 = vadd.f32 %v988, %v958
      %v990 = vadd.f32 %v989, %v959
      %v991 = vrot.slane %v990, 4
      %v992 = vadd.f32 %v990, %v991
      %v993 = vrot.slane %v992, 2
      %v994 = vadd.f32 %v992, %v993
      %v995 = vrot.slane %v994, 1
      %v996 = vadd.f32 %v994, %v995
      %vm997 = vcmask 1040384
      %v998 = vsel %vm997, %v927, %v996
      %vm999 = vcmask 1041408
      %v1000 = vsel %vm999, %v998, 0.0
      %1001 = vst [vmem:[%s282] sm:$0xff] %v1000
      %s1002 = smul.u32 32, %s22
      %p1003 = scmp.lt.s32.totalorder %s21, 1
      %s1004 = scalar_select %p1003, %s21, 1
      %p1005 = scmp.lt.s32.totalorder %s1002, 31
      %s1006 = scalar_select %p1005, %s1002, 31
      %s1007 = smul.addr %s1004, 32
      %s1008 = sadd.s32 %s1006, %s1007
      %s1009 = smul.addr %s1008, 4
      %s1010 = scalar_lea.vmem %s4, %s1009
      %p1011 = scmp.lt.s32.totalorder %s21, 1
      %s1012 = scalar_select %p1011, %s21, 1
      %p1013 = scmp.lt.s32.totalorder %s22, 0
      %s1014 = scalar_select %p1013, %s22, 0
      %s1015 = sadd.s32 %s1014, %s1012
      %s1016 = smul.addr %s1015, 8
      %s1017 = scalar_lea.vmem %s5, %s1016
      // Predicated region
      $region37: #{residual_block.6} parent=35 // pred_check
        %p1018 = pneg %p140
      $region38: #{residual_block.6} parent=35 // pred_check_branch
        %1020 = sbr.rel (%p1018) target = $region40
      $region39: #{residual_block.6} parent=35 // pred_region
        %s1021 = smul.u32 32, %s22
      $region40: #{residual_block.6} parent=35 // pred_fallthru
        _
      // Predicated region
      $region41: #{residual_block.6} parent=35 // pred_check
        %p1022 = pneg %p168
      $region42: #{residual_block.6} parent=35 // pred_check_branch
        %1024 = sbr.rel (%p1022) target = $region44
      $region43: #{residual_block.6} parent=35 // pred_region
        _
      $region44: #{residual_block.6} parent=35 // pred_fallthru
        _
    $region36: #{residual_block.6} parent=5 // pred_fallthru
      _
    %p1025 = scmp.le.s32.totalorder 2, %s12
    // Predicated region
    $region45: #{residual_block.6} parent=5 // pred_check
      %p1026 = pneg %p1025
    $region46: #{residual_block.6} parent=5 // pred_check_branch
      %1028 = sbr.rel (%p1026) target = $region48
    $region47: #{residual_block.6} parent=5 // pred_region
      %s1029 = ssub.s32 %s12, 2
      // Predicated region
      $region49: #{residual_block.6} parent=47 // pred_check
        %p1030 = pneg %p146
      $region50: #{residual_block.6} parent=47 // pred_check_branch
        %1032 = sbr.rel (%p1030) target = $region52
      $region51: #{residual_block.6} parent=47 // pred_region
        %s1033 = smul.u32 32, %s24
        %p1034 = scmp.lt.s32.totalorder %s23, 1
        %s1035 = scalar_select %p1034, %s23, 1
        %p1036 = scmp.lt.s32.totalorder %s1033, 31
        %s1037 = scalar_select %p1036, %s1033, 31
        %s1038 = smul.addr %s1035, 32
        %s1039 = sadd.s32 %s1037, %s1038
        %s1040 = smul.addr %s1039, 4
        %s1041 = scalar_lea.vmem %s4, %s1040
      $region52: #{residual_block.6} parent=47 // pred_fallthru
        _
      // Predicated region
      $region53: #{residual_block.6} parent=47 // pred_check
        %p1042 = pneg %p174
      $region54: #{residual_block.6} parent=47 // pred_check_branch
        %1044 = sbr.rel (%p1042) target = $region56
      $region55: #{residual_block.6} parent=47 // pred_region
        %p1045 = scmp.lt.s32.totalorder %s23, 1
        %s1046 = scalar_select %p1045, %s23, 1
        %p1047 = scmp.lt.s32.totalorder %s24, 0
        %s1048 = scalar_select %p1047, %s24, 0
        %s1049 = sadd.s32 %s1048, %s1046
        %s1050 = smul.addr %s1049, 8
        %s1051 = scalar_lea.vmem %s5, %s1050
      $region56: #{residual_block.6} parent=47 // pred_fallthru
        _
    $region48: #{residual_block.6} parent=5 // pred_fallthru
      _
  $region6: #{residual_block.6} parent=0 // loop_footer
    %s16 = sadd.s32 1, %s12
  $region7: #{residual_block.6} parent=0 // loop_footer_branch
    %11 = sbr.rel target = $region3
  $region8: #{residual_block.6} parent=0 // loop_exit
    _

// kernel: residual_block.5
$region0: #{residual_block.5}
  #allocation0 [shape = 'u32[]', space=smem, size = 0x4, offset = 0x4, fixed_abs, tag = 'smem constant byte address 0x4 - core index']
  #allocation1 [shape = 'u32[144,128]{1,0:T(1,128)}', space=vmem, size = 0x12000, scoped, tag = 'internal scratch']
  %s0 = inlined_call_operand.vmem [shape: bf16[2,256,128], index: 0, kind: input, shape index: {}]
  %s1 = inlined_call_operand.vmem [shape: f32[1,128], index: 1, kind: input, shape index: {}]
  %s2 = inlined_call_operand.vmem [shape: f32[1,128], index: 2, kind: input, shape index: {}]
  %s3 = inlined_call_operand.vmem [shape: bf16[9,128,128], index: 3, kind: input, shape index: {}]
  %s4 = inlined_call_operand.vmem [shape: f32[9,256,1], index: 4, kind: input, shape index: {}]
  %s5 = inlined_call_operand.vmem [shape: bf16[2,256,128], index: 5, kind: output, shape index: {0}]
  %s6 = inlined_call_operand.vmem [shape: f32[2,1,8,128], index: 6, kind: output, shape index: {1}]
  %7 = xla_tuple %s5, %s6
  %s8 = sld [smem:[#allocation0]]
  $region61: #{residual_block.5} parent=0
    _
  %s10 = ssub.s32 1, %s8
  %s11 = scalar_select 0, %s10, %s8
  loop: start=0, step=1, limit=4
  $region2: #{residual_block.5} parent=0 // loop_pre_header
    _
  $region3: #{residual_block.5} parent=0 // loop_header
    %s13 = sphi 0, %s17
    %p14 = scmp.ge.s32.totalorder %s13, 4
    %s23 = sphi 0, %s25
    %s26 = sphi 0, %s23
    %s27 = sphi 0, %s26
    %s43 = sphi 0, %s27
    %s47 = sphi 0, %s47
    %s49 = sphi 0, %s47
    %s50 = sphi 0, %s49
    %s64 = sphi 0, %s50
    %s68 = sphi 0, %s68
    %s70 = sphi 0, %s68
    %s71 = sphi 0, %s70
    %s85 = sphi 0, %s71
    %s89 = sphi 0, %s89
    %s91 = sphi 0, %s89
    %s92 = sphi 0, %s91
    %s106 = sphi 0, %s92
    %s110 = sphi 0, %s110
    %s112 = sphi 0, %s110
    %s113 = sphi 0, %s112
    %s127 = sphi 0, %s113
    %s133 = sphi 0, %s135
    %s136 = sphi 0, %s133
    %s137 = sphi 0, %s136
    %s153 = sphi 0, %s137
    %s159 = sphi 0, %s161
    %s162 = sphi 0, %s159
    %s163 = sphi 0, %s162
    %s179 = sphi 0, %s163
  $region4: #{residual_block.5} parent=0 // loop_header_branch
    %16 = sbr.rel (%p14) target = $region8
  $region5: #{residual_block.5} parent=0 // loop_body
    %s18 = ssub.s32 %s13, 1
    %s19 = ssub.s32 %s13, 2
    %s20 = sadd.s32 %s13, 1
    %s21 = ssub.s32 %s13, %s20
    %p22 = scmp.eq.s32.totalorder %s21, 0
    %s24 = sadd.s32 %s23, 1
    %s25 = scalar_select %p22, %s23, %s24
    %p28 = pneg %p22
    %p29 = scmp.eq.s32.totalorder %s13, 1
    %p30 = por %p28, %p29
    %p31 = scmp.ne.s32.totalorder %s23, %s26
    %p32 = scmp.eq.s32.totalorder %s13, 0
    %p33 = por %p31, %p32
    %p34 = scmp.ne.s32.totalorder %s23, %s26
    %p35 = scmp.eq.s32.totalorder %s18, 1
    %p36 = por %p34, %p35
    %p37 = scmp.ne.s32.totalorder %s26, %s27
    %p38 = scmp.eq.s32.totalorder %s18, 0
    %p39 = por %p37, %p38
    %p40 = scmp.ne.s32.totalorder %s26, %s27
    %p41 = scmp.eq.s32.totalorder %s19, 1
    %p42 = por %p40, %p41
    %p44 = scmp.ne.s32.totalorder %s27, %s43
    %p45 = scmp.eq.s32.totalorder %s19, 0
    %p46 = por %p44, %p45
    %s48 = sadd.s32 %s47, 1
    %p51 = scmp.eq.s32.totalorder %s13, 1
    %p52 = scmp.ne.s32.totalorder %s47, %s49
    %p53 = scmp.eq.s32.totalorder %s13, 0
    %p54 = por %p52, %p53
    %p55 = scmp.ne.s32.totalorder %s47, %s49
    %p56 = scmp.eq.s32.totalorder %s18, 1
    %p57 = por %p55, %p56
    %p58 = scmp.ne.s32.totalorder %s49, %s50
    %p59 = scmp.eq.s32.totalorder %s18, 0
    %p60 = por %p58, %p59
    %p61 = scmp.ne.s32.totalorder %s49, %s50
    %p62 = scmp.eq.s32.totalorder %s19, 1
    %p63 = por %p61, %p62
    %p65 = scmp.ne.s32.totalorder %s50, %s64
    %p66 = scmp.eq.s32.totalorder %s19, 0
    %p67 = por %p65, %p66
    %s69 = sadd.s32 %s68, 1
    %p72 = scmp.eq.s32.totalorder %s13, 1
    %p73 = scmp.ne.s32.totalorder %s68, %s70
    %p74 = scmp.eq.s32.totalorder %s13, 0
    %p75 = por %p73, %p74
    %p76 = scmp.ne.s32.totalorder %s68, %s70
    %p77 = scmp.eq.s32.totalorder %s18, 1
    %p78 = por %p76, %p77
    %p79 = scmp.ne.s32.totalorder %s70, %s71
    %p80 = scmp.eq.s32.totalorder %s18, 0
    %p81 = por %p79, %p80
    %p82 = scmp.ne.s32.totalorder %s70, %s71
    %p83 = scmp.eq.s32.totalorder %s19, 1
    %p84 = por %p82, %p83
    %p86 = scmp.ne.s32.totalorder %s71, %s85
    %p87 = scmp.eq.s32.totalorder %s19, 0
    %p88 = por %p86, %p87
    %s90 = sadd.s32 %s89, 1
    %p93 = scmp.eq.s32.totalorder %s13, 1
    %p94 = scmp.ne.s32.totalorder %s89, %s91
    %p95 = scmp.eq.s32.totalorder %s13, 0
    %p96 = por %p94, %p95
    %p97 = scmp.ne.s32.totalorder %s89, %s91
    %p98 = scmp.eq.s32.totalorder %s18, 1
    %p99 = por %p97, %p98
    %p100 = scmp.ne.s32.totalorder %s91, %s92
    %p101 = scmp.eq.s32.totalorder %s18, 0
    %p102 = por %p100, %p101
    %p103 = scmp.ne.s32.totalorder %s91, %s92
    %p104 = scmp.eq.s32.totalorder %s19, 1
    %p105 = por %p103, %p104
    %p107 = scmp.ne.s32.totalorder %s92, %s106
    %p108 = scmp.eq.s32.totalorder %s19, 0
    %p109 = por %p107, %p108
    %s111 = sadd.s32 %s110, 1
    %p114 = scmp.eq.s32.totalorder %s13, 1
    %p115 = scmp.ne.s32.totalorder %s110, %s112
    %p116 = scmp.eq.s32.totalorder %s13, 0
    %p117 = por %p115, %p116
    %p118 = scmp.ne.s32.totalorder %s110, %s112
    %p119 = scmp.eq.s32.totalorder %s18, 1
    %p120 = por %p118, %p119
    %p121 = scmp.ne.s32.totalorder %s112, %s113
    %p122 = scmp.eq.s32.totalorder %s18, 0
    %p123 = por %p121, %p122
    %p124 = scmp.ne.s32.totalorder %s112, %s113
    %p125 = scmp.eq.s32.totalorder %s19, 1
    %p126 = por %p124, %p125
    %p128 = scmp.ne.s32.totalorder %s113, %s127
    %p129 = scmp.eq.s32.totalorder %s19, 0
    %p130 = por %p128, %p129
    %s131 = ssub.s32 %s13, %s20
    %p132 = scmp.eq.s32.totalorder %s131, 0
    %s134 = sadd.s32 %s133, 1
    %s135 = scalar_select %p132, %s133, %s134
    %p138 = pneg %p132
    %p139 = scmp.eq.s32.totalorder %s13, 1
    %p140 = por %p138, %p139
    %p141 = scmp.ne.s32.totalorder %s133, %s136
    %p142 = scmp.eq.s32.totalorder %s13, 0
    %p143 = por %p141, %p142
    %p144 = scmp.ne.s32.totalorder %s133, %s136
    %p145 = scmp.eq.s32.totalorder %s18, 1
    %p146 = por %p144, %p145
    %p147 = scmp.ne.s32.totalorder %s136, %s137
    %p148 = scmp.eq.s32.totalorder %s18, 0
    %p149 = por %p147, %p148
    %p150 = scmp.ne.s32.totalorder %s136, %s137
    %p151 = scmp.eq.s32.totalorder %s19, 1
    %p152 = por %p150, %p151
    %p154 = scmp.ne.s32.totalorder %s137, %s153
    %p155 = scmp.eq.s32.totalorder %s19, 0
    %p156 = por %p154, %p155
    %s157 = ssub.s32 %s13, %s20
    %p158 = scmp.eq.s32.totalorder %s157, 0
    %s160 = sadd.s32 %s159, 1
    %s161 = scalar_select %p158, %s159, %s160
    %p164 = pneg %p158
    %p165 = scmp.eq.s32.totalorder %s13, 1
    %p166 = por %p164, %p165
    %p167 = scmp.ne.s32.totalorder %s159, %s162
    %p168 = scmp.eq.s32.totalorder %s13, 0
    %p169 = por %p167, %p168
    %p170 = scmp.ne.s32.totalorder %s159, %s162
    %p171 = scmp.eq.s32.totalorder %s18, 1
    %p172 = por %p170, %p171
    %p173 = scmp.ne.s32.totalorder %s162, %s163
    %p174 = scmp.eq.s32.totalorder %s18, 0
    %p175 = por %p173, %p174
    %p176 = scmp.ne.s32.totalorder %s162, %s163
    %p177 = scmp.eq.s32.totalorder %s19, 1
    %p178 = por %p176, %p177
    %p180 = scmp.ne.s32.totalorder %s163, %s179
    %p181 = scmp.eq.s32.totalorder %s19, 0
    %p182 = por %p180, %p181
    %p183 = scmp.le.s32.totalorder 1, %s13
    %p184 = scmp.lt.s32.totalorder %s13, 3
    %p185 = pnand %p183, %p184
    %p186 = pneg %p185
    // Predicated region
    $region9: #{residual_block.5} parent=5 // pred_check
      _
    $region10: #{residual_block.5} parent=5 // pred_check_branch
      %188 = sbr.rel (%p185) target = $region12
    $region11: #{residual_block.5} parent=5 // pred_region
      %s189 = ssub.s32 %s13, 1
      // Predicated region
      $region13: #{residual_block.5} parent=11 // pred_check
        %p190 = pneg %p60
      $region14: #{residual_block.5} parent=11 // pred_check_branch
        %192 = sbr.rel (%p190) target = $region16
      $region15: #{residual_block.5} parent=11 // pred_region
        _
      $region16: #{residual_block.5} parent=11 // pred_fallthru
        _
      // Predicated region
      $region17: #{residual_block.5} parent=11 // pred_check
        %p193 = pneg %p81
      $region18: #{residual_block.5} parent=11 // pred_check_branch
        %195 = sbr.rel (%p193) target = $region20
      $region19: #{residual_block.5} parent=11 // pred_region
        _
      $region20: #{residual_block.5} parent=11 // pred_fallthru
        _
      // Predicated region
      $region21: #{residual_block.5} parent=11 // pred_check
        %p196 = pneg %p102
      $region22: #{residual_block.5} parent=11 // pred_check_branch
        %198 = sbr.rel (%p196) target = $region24
      $region23: #{residual_block.5} parent=11 // pred_region
        _
      $region24: #{residual_block.5} parent=11 // pred_fallthru
        _
      // Predicated region
      $region25: #{residual_block.5} parent=11 // pred_check
        %p199 = pneg %p123
      $region26: #{residual_block.5} parent=11 // pred_check_branch
        %201 = sbr.rel (%p199) target = $region28
      $region27: #{residual_block.5} parent=11 // pred_region
        _
      $region28: #{residual_block.5} parent=11 // pred_fallthru
        _
    $region12: #{residual_block.5} parent=5 // pred_fallthru
      _
    %p202 = scmp.lt.s32.totalorder %s13, 2
    // Predicated region
    $region29: #{residual_block.5} parent=5 // pred_check
      %p203 = pneg %p202
    $region30: #{residual_block.5} parent=5 // pred_check_branch
      %205 = sbr.rel (%p203) target = $region32
    $region31: #{residual_block.5} parent=5 // pred_region
      // Predicated region
      $region33: #{residual_block.5} parent=31 // pred_check
        %p206 = pneg %p33
      $region34: #{residual_block.5} parent=31 // pred_check_branch
        %208 = sbr.rel (%p206) target = $region36
      $region35: #{residual_block.5} parent=31 // pred_region
        %p209 = scmp.lt.s32.totalorder %s13, 1
        %s210 = scalar_select %p209, %s13, 1
        %s211 = smul.addr %s210, 32
        %s212 = smul.addr %s211, 4
        %s213 = scalar_lea.vmem %s0, %s212
      $region36: #{residual_block.5} parent=31 // pred_fallthru
        _
    $region32: #{residual_block.5} parent=5 // pred_fallthru
      _
    %p214 = scmp.le.s32.totalorder 1, %s13
    %p215 = scmp.lt.s32.totalorder %s13, 3
    %p216 = pnand %p214, %p215
    %p217 = pneg %p216
    // Predicated region
    $region37: #{residual_block.5} parent=5 // pred_check
      _
    $region38: #{residual_block.5} parent=5 // pred_check_branch
      %219 = sbr.rel (%p216) target = $region40
    $region39: #{residual_block.5} parent=5 // pred_region
      %s220 = ssub.s32 %s13, 1
      %p221 = scmp.lt.s32.totalorder %s18, 1
      %s222 = scalar_select %p221, %s18, 1
      %s223 = smul.addr %s222, 32
      %s224 = smul.addr %s223, 4
      %s225 = scalar_lea.vmem %s0, %s224
      %p226 = pneg %p39
      %p227 = pneg %p36
      %p228 = pneg %p60
      %p229 = pneg %p57
      %p230 = pneg %p81
      %p231 = pneg %p78
      %p232 = pneg %p102
      %p233 = pneg %p99
      %p234 = pneg %p123
      %p235 = pneg %p120
      %p236 = pneg %p149
      %p237 = pneg %p146
      %p238 = scmp.lt.s32.totalorder %s18, 1
      %s239 = scalar_select %p238, %s18, 1
      %s240 = smul.addr %s239, 32
      %s241 = smul.addr %s240, 4
      %s242 = scalar_lea.vmem %s5, %s241
      %p243 = pneg %p175
      %p244 = pneg %p172
      %p245 = scmp.lt.s32.totalorder %s18, 1
      %s246 = scalar_select %p245, %s18, 1
      %s247 = smul.addr %s246, 8
      %s248 = scalar_lea.vmem %s6, %s247
      %p249 = scmp.lt.s32.totalorder %s18, 1
      %s250 = scalar_select %p249, %s18, 1
      %s251 = smul.addr %s250, 32
      %s252 = smul.addr %s251, 4
      %s253 = scalar_lea.vmem %s0, %s252
      %p254 = scmp.lt.s32.totalorder %s18, 1
      %s255 = scalar_select %p254, %s18, 1
      %s256 = smul.addr %s255, 32
      %s257 = smul.addr %s256, 4
      %s258 = scalar_lea.vmem %s5, %s257
      %p259 = scmp.lt.s32.totalorder %s18, 1
      %s260 = scalar_select %p259, %s18, 1
      %s261 = smul.addr %s260, 8
      %s262 = scalar_lea.vmem %s6, %s261
      %v264 = vld [vmem:[%s253] sm:$0xf]
      %v265 = vld [vmem:[%s253 + $0x4] sm:$0xf]
      %v266 = vld [vmem:[%s253 + $0x8] sm:$0xf]
      %v267 = vld [vmem:[%s253 + $0xc] sm:$0xf]
      %v268 = vld [vmem:[%s253 + $0x10] sm:$0xf]
      %v269 = vld [vmem:[%s253 + $0x14] sm:$0xf]
      %v270 = vld [vmem:[%s253 + $0x18] sm:$0xf]
      %v271 = vld [vmem:[%s253 + $0x1c] sm:$0xf]
      %v272 = vld [vmem:[%s253 + $0x20] sm:$0xf]
      %v273 = vld [vmem:[%s253 + $0x24] sm:$0xf]
      %v274 = vld [vmem:[%s253 + $0x28] sm:$0xf]
      %v275 = vld [vmem:[%s253 + $0x2c] sm:$0xf]
      %v276 = vld [vmem:[%s253 + $0x30] sm:$0xf]
      %v277 = vld [vmem:[%s253 + $0x34] sm:$0xf]
      %v278 = vld [vmem:[%s253 + $0x38] sm:$0xf]
      %v279 = vld [vmem:[%s253 + $0x3c] sm:$0xf]
      %v280 = vld [vmem:[%s253 + $0x40] sm:$0xf]
      %v281 = vld [vmem:[%s253 + $0x44] sm:$0xf]
      %v282 = vld [vmem:[%s253 + $0x48] sm:$0xf]
      %v283 = vld [vmem:[%s253 + $0x4c] sm:$0xf]
      %v284 = vld [vmem:[%s253 + $0x50] sm:$0xf]
      %v285 = vld [vmem:[%s253 + $0x54] sm:$0xf]
      %v286 = vld [vmem:[%s253 + $0x58] sm:$0xf]
      %v287 = vld [vmem:[%s253 + $0x5c] sm:$0xf]
      %v288 = vld [vmem:[%s253 + $0x60] sm:$0xf]
      %v289 = vld [vmem:[%s253 + $0x64] sm:$0xf]
      %v290 = vld [vmem:[%s253 + $0x68] sm:$0xf]
      %v291 = vld [vmem:[%s253 + $0x6c] sm:$0xf]
      %v292 = vld [vmem:[%s253 + $0x70] sm:$0xf]
      %v293 = vld [vmem:[%s253 + $0x74] sm:$0xf]
      %v294 = vld [vmem:[%s253 + $0x78] sm:$0xf]
      %v295 = vld [vmem:[%s253 + $0x7c] sm:$0xf]
      %v296 = vunpack.c.l.bf16 %v264
      %v297 = vunpack.c.l.bf16 %v265
      %v298 = vunpack.c.l.bf16 %v266
      %v299 = vunpack.c.l.bf16 %v267
      %v300 = vunpack.c.l.bf16 %v268
      %v301 = vunpack.c.l.bf16 %v269
      %v302 = vunpack.c.l.bf16 %v270
      %v303 = vunpack.c.l.bf16 %v271
      %v304 = vunpack.c.l.bf16 %v272
      %v305 = vunpack.c.l.bf16 %v273
      %v306 = vunpack.c.l.bf16 %v274
      %v307 = vunpack.c.l.bf16 %v275
      %v308 = vunpack.c.l.bf16 %v276
      %v309 = vunpack.c.l.bf16 %v277
      %v310 = vunpack.c.l.bf16 %v278
      %v311 = vunpack.c.l.bf16 %v279
      %v312 = vunpack.c.l.bf16 %v280
      %v313 = vunpack.c.l.bf16 %v281
      %v314 = vunpack.c.l.bf16 %v282
      %v315 = vunpack.c.l.bf16 %v283
      %v316 = vunpack.c.l.bf16 %v284
      %v317 = vunpack.c.l.bf16 %v285
      %v318 = vunpack.c.l.bf16 %v286
      %v319 = vunpack.c.l.bf16 %v287
      %v320 = vunpack.c.l.bf16 %v288
      %v321 = vunpack.c.l.bf16 %v289
      %v322 = vunpack.c.l.bf16 %v290
      %v323 = vunpack.c.l.bf16 %v291
      %v324 = vunpack.c.l.bf16 %v292
      %v325 = vunpack.c.l.bf16 %v293
      %v326 = vunpack.c.l.bf16 %v294
      %v327 = vunpack.c.l.bf16 %v295
      %v328 = vld [vmem:[%s1] sm:$0x1]
      %v330 = vlaneseq
      %v331 = vshrl.u32 %v330, 7
      %v332 = vsub.s32 0, %v331
      %v333 = vrot.slane %v328, %v332
      %v335 = vmul.f32 %v296, %v333
      %v336 = vmul.f32 %v297, %v333
      %v337 = vmul.f32 %v298, %v333
      %v338 = vmul.f32 %v299, %v333
      %v339 = vmul.f32 %v300, %v333
      %v340 = vmul.f32 %v301, %v333
      %v341 = vmul.f32 %v302, %v333
      %v342 = vmul.f32 %v303, %v333
      %v343 = vmul.f32 %v304, %v333
      %v344 = vmul.f32 %v305, %v333
      %v345 = vmul.f32 %v306, %v333
      %v346 = vmul.f32 %v307, %v333
      %v347 = vmul.f32 %v308, %v333
      %v348 = vmul.f32 %v309, %v333
      %v349 = vmul.f32 %v310, %v333
      %v350 = vmul.f32 %v311, %v333
      %v351 = vmul.f32 %v312, %v333
      %v352 = vmul.f32 %v313, %v333
      %v353 = vmul.f32 %v314, %v333
      %v354 = vmul.f32 %v315, %v333
      %v355 = vmul.f32 %v316, %v333
      %v356 = vmul.f32 %v317, %v333
      %v357 = vmul.f32 %v318, %v333
      %v358 = vmul.f32 %v319, %v333
      %v359 = vmul.f32 %v320, %v333
      %v360 = vmul.f32 %v321, %v333
      %v361 = vmul.f32 %v322, %v333
      %v362 = vmul.f32 %v323, %v333
      %v363 = vmul.f32 %v324, %v333
      %v364 = vmul.f32 %v325, %v333
      %v365 = vmul.f32 %v326, %v333
      %v366 = vmul.f32 %v327, %v333
      %v367 = vld [vmem:[%s2] sm:$0x1]
      %v369 = vlaneseq
      %v370 = vshrl.u32 %v369, 7
      %v371 = vsub.s32 0, %v370
      %v372 = vrot.slane %v367, %v371
      %v374 = vadd.f32 %v335, %v372
      %v375 = vadd.f32 %v336, %v372
      %v376 = vadd.f32 %v337, %v372
      %v377 = vadd.f32 %v338, %v372
      %v378 = vadd.f32 %v339, %v372
      %v379 = vadd.f32 %v340, %v372
      %v380 = vadd.f32 %v341, %v372
      %v381 = vadd.f32 %v342, %v372
      %v382 = vadd.f32 %v343, %v372
      %v383 = vadd.f32 %v344, %v372
      %v384 = vadd.f32 %v345, %v372
      %v385 = vadd.f32 %v346, %v372
      %v386 = vadd.f32 %v347, %v372
      %v387 = vadd.f32 %v348, %v372
      %v388 = vadd.f32 %v349, %v372
      %v389 = vadd.f32 %v350, %v372
      %v390 = vadd.f32 %v351, %v372
      %v391 = vadd.f32 %v352, %v372
      %v392 = vadd.f32 %v353, %v372
      %v393 = vadd.f32 %v354, %v372
      %v394 = vadd.f32 %v355, %v372
      %v395 = vadd.f32 %v356, %v372
      %v396 = vadd.f32 %v357, %v372
      %v397 = vadd.f32 %v358, %v372
      %v398 = vadd.f32 %v359, %v372
      %v399 = vadd.f32 %v360, %v372
      %v400 = vadd.f32 %v361, %v372
      %v401 = vadd.f32 %v362, %v372
      %v402 = vadd.f32 %v363, %v372
      %v403 = vadd.f32 %v364, %v372
      %v404 = vadd.f32 %v365, %v372
      %v405 = vadd.f32 %v366, %v372
      %v406 = vmax.f32 %v374, 0.0
      %v407 = vmax.f32 %v375, 0.0
      %v408 = vmax.f32 %v376, 0.0
      %v409 = vmax.f32 %v377, 0.0
      %v410 = vmax.f32 %v378, 0.0
      %v411 = vmax.f32 %v379, 0.0
      %v412 = vmax.f32 %v380, 0.0
      %v413 = vmax.f32 %v381, 0.0
      %v414 = vmax.f32 %v382, 0.0
      %v415 = vmax.f32 %v383, 0.0
      %v416 = vmax.f32 %v384, 0.0
      %v417 = vmax.f32 %v385, 0.0
      %v418 = vmax.f32 %v386, 0.0
      %v419 = vmax.f32 %v387, 0.0
      %v420 = vmax.f32 %v388, 0.0
      %v421 = vmax.f32 %v389, 0.0
      %v422 = vmax.f32 %v390, 0.0
      %v423 = vmax.f32 %v391, 0.0
      %v424 = vmax.f32 %v392, 0.0
      %v425 = vmax.f32 %v393, 0.0
      %v426 = vmax.f32 %v394, 0.0
      %v427 = vmax.f32 %v395, 0.0
      %v428 = vmax.f32 %v396, 0.0
      %v429 = vmax.f32 %v397, 0.0
      %v430 = vmax.f32 %v398, 0.0
      %v431 = vmax.f32 %v399, 0.0
      %v432 = vmax.f32 %v400, 0.0
      %v433 = vmax.f32 %v401, 0.0
      %v434 = vmax.f32 %v402, 0.0
      %v435 = vmax.f32 %v403, 0.0
      %v436 = vmax.f32 %v404, 0.0
      %v437 = vmax.f32 %v405, 0.0
      %v438 = vrot.slane %v406, 7
      %v439 = vrot.slane %v407, 7
      %v440 = vrot.slane %v408, 7
      %v441 = vrot.slane %v409, 7
      %v442 = vrot.slane %v410, 7
      %v443 = vrot.slane %v411, 7
      %v444 = vrot.slane %v412, 7
      %v445 = vrot.slane %v413, 7
      %v446 = vrot.slane %v414, 7
      %v447 = vrot.slane %v415, 7
      %v448 = vrot.slane %v416, 7
      %v449 = vrot.slane %v417, 7
      %v450 = vrot.slane %v418, 7
      %v451 = vrot.slane %v419, 7
      %v452 = vrot.slane %v420, 7
      %v453 = vrot.slane %v421, 7
      %v454 = vrot.slane %v422, 7
      %v455 = vrot.slane %v423, 7
      %v456 = vrot.slane %v424, 7
      %v457 = vrot.slane %v425, 7
      %v458 = vrot.slane %v426, 7
      %v459 = vrot.slane %v427, 7
      %v460 = vrot.slane %v428, 7
      %v461 = vrot.slane %v429, 7
      %v462 = vrot.slane %v430, 7
      %v463 = vrot.slane %v431, 7
      %v464 = vrot.slane %v432, 7
      %v465 = vrot.slane %v433, 7
      %v466 = vrot.slane %v434, 7
      %v467 = vrot.slane %v435, 7
      %v468 = vrot.slane %v436, 7
      %v469 = vrot.slane %v437, 7
      %v470 = vlaneseq
      %v471 = vshrl.u32 %v470, 7
      %vm472 = vcmp.lt.s32.totalorder %v471, 1
      %v473 = vsel %vm472, %v468, %v469
      %v474 = vsel %vm472, %v467, %v468
      %v475 = vsel %vm472, %v466, %v467
      %v476 = vsel %vm472, %v465, %v466
      %v477 = vsel %vm472, %v464, %v465
      %v478 = vsel %vm472, %v463, %v464
      %v479 = vsel %vm472, %v462, %v463
      %v480 = vsel %vm472, %v461, %v462
      %v481 = vsel %vm472, %v460, %v461
      %v482 = vsel %vm472, %v459, %v460
      %v483 = vsel %vm472, %v458, %v459
      %v484 = vsel %vm472, %v457, %v458
      %v485 = vsel %vm472, %v456, %v457
      %v486 = vsel %vm472, %v455, %v456
      %v487 = vsel %vm472, %v454, %v455
      %v488 = vsel %vm472, %v453, %v454
      %v489 = vsel %vm472, %v452, %v453
      %v490 = vsel %vm472, %v451, %v452
      %v491 = vsel %vm472, %v450, %v451
      %v492 = vsel %vm472, %v449, %v450
      %v493 = vsel %vm472, %v448, %v449
      %v494 = vsel %vm472, %v447, %v448
      %v495 = vsel %vm472, %v446, %v447
      %v496 = vsel %vm472, %v445, %v446
      %v497 = vsel %vm472, %v444, %v445
      %v498 = vsel %vm472, %v443, %v444
      %v499 = vsel %vm472, %v442, %v443
      %v500 = vsel %vm472, %v441, %v442
      %v501 = vsel %vm472, %v440, %v441
      %v502 = vsel %vm472, %v439, %v440
      %v503 = vsel %vm472, %v438, %v439
      %v504 = vsel %vm472, %v469, %v438
      %v505 = vld [vmem:[%s4] sm:$0xff]
      %v506 = vld [vmem:[%s4 + $0x8] sm:$0xff]
      %v507 = vld [vmem:[%s4 + $0x10] sm:$0xff]
      %v508 = vld [vmem:[%s4 + $0x18] sm:$0xff]
      %v509 = vld [vmem:[%s4 + $0x20] sm:$0xff]
      %v510 = vld [vmem:[%s4 + $0x28] sm:$0xff]
      %v511 = vld [vmem:[%s4 + $0x30] sm:$0xff]
      %v512 = vld [vmem:[%s4 + $0x38] sm:$0xff]
      %v513 = vld [vmem:[%s4 + $0x40] sm:$0xff]
      %v514 = vld [vmem:[%s4 + $0x48] sm:$0xff]
      %v515 = vld [vmem:[%s4 + $0x50] sm:$0xff]
      %v516 = vld [vmem:[%s4 + $0x58] sm:$0xff]
      %v517 = vld [vmem:[%s4 + $0x60] sm:$0xff]
      %v518 = vld [vmem:[%s4 + $0x68] sm:$0xff]
      %v519 = vld [vmem:[%s4 + $0x70] sm:$0xff]
      %v520 = vld [vmem:[%s4 + $0x78] sm:$0xff]
      %v521 = vld [vmem:[%s4 + $0x80] sm:$0xff]
      %v522 = vld [vmem:[%s4 + $0x88] sm:$0xff]
      %v523 = vld [vmem:[%s4 + $0x90] sm:$0xff]
      %v524 = vld [vmem:[%s4 + $0x98] sm:$0xff]
      %v525 = vld [vmem:[%s4 + $0xa0] sm:$0xff]
      %v526 = vld [vmem:[%s4 + $0xa8] sm:$0xff]
      %v527 = vld [vmem:[%s4 + $0xb0] sm:$0xff]
      %v528 = vld [vmem:[%s4 + $0xb8] sm:$0xff]
      %v529 = vld [vmem:[%s4 + $0xc0] sm:$0xff]
      %v530 = vld [vmem:[%s4 + $0xc8] sm:$0xff]
      %v531 = vld [vmem:[%s4 + $0xd0] sm:$0xff]
      %v532 = vld [vmem:[%s4 + $0xd8] sm:$0xff]
      %v533 = vld [vmem:[%s4 + $0xe0] sm:$0xff]
      %v534 = vld [vmem:[%s4 + $0xe8] sm:$0xff]
      %v535 = vld [vmem:[%s4 + $0xf0] sm:$0xff]
      %v536 = vld [vmem:[%s4 + $0xf8] sm:$0xff]
      %538 = vset.pattern.permute.xlu0 0
      %539 = vperm.xlu0 %538, %v505
      %v540 = vpop.permute.xlu0 %539
      %543 = vset.pattern.permute.xlu0 0
      %544 = vperm.xlu0 %543, %v506
      %v545 = vpop.permute.xlu0 %544
      %548 = vset.pattern.permute.xlu0 0
      %549 = vperm.xlu0 %548, %v507
      %v550 = vpop.permute.xlu0 %549
      %553 = vset.pattern.permute.xlu0 0
      %554 = vperm.xlu0 %553, %v508
      %v555 = vpop.permute.xlu0 %554
      %558 = vset.pattern.permute.xlu0 0
      %559 = vperm.xlu0 %558, %v509
      %v560 = vpop.permute.xlu0 %559
      %563 = vset.pattern.permute.xlu0 0
      %564 = vperm.xlu0 %563, %v510
      %v565 = vpop.permute.xlu0 %564
      %568 = vset.pattern.permute.xlu0 0
      %569 = vperm.xlu0 %568, %v511
      %v570 = vpop.permute.xlu0 %569
      %573 = vset.pattern.permute.xlu0 0
      %574 = vperm.xlu0 %573, %v512
      %v575 = vpop.permute.xlu0 %574
      %578 = vset.pattern.permute.xlu0 0
      %579 = vperm.xlu0 %578, %v513
      %v580 = vpop.permute.xlu0 %579
      %583 = vset.pattern.permute.xlu0 0
      %584 = vperm.xlu0 %583, %v514
      %v585 = vpop.permute.xlu0 %584
      %588 = vset.pattern.permute.xlu0 0
      %589 = vperm.xlu0 %588, %v515
      %v590 = vpop.permute.xlu0 %589
      %593 = vset.pattern.permute.xlu0 0
      %594 = vperm.xlu0 %593, %v516
      %v595 = vpop.permute.xlu0 %594
      %598 = vset.pattern.permute.xlu0 0
      %599 = vperm.xlu0 %598, %v517
      %v600 = vpop.permute.xlu0 %599
      %603 = vset.pattern.permute.xlu0 0
      %604 = vperm.xlu0 %603, %v518
      %v605 = vpop.permute.xlu0 %604
      %608 = vset.pattern.permute.xlu0 0
      %609 = vperm.xlu0 %608, %v519
      %v610 = vpop.permute.xlu0 %609
      %613 = vset.pattern.permute.xlu0 0
      %614 = vperm.xlu0 %613, %v520
      %v615 = vpop.permute.xlu0 %614
      %618 = vset.pattern.permute.xlu0 0
      %619 = vperm.xlu0 %618, %v521
      %v620 = vpop.permute.xlu0 %619
      %623 = vset.pattern.permute.xlu0 0
      %624 = vperm.xlu0 %623, %v522
      %v625 = vpop.permute.xlu0 %624
      %628 = vset.pattern.permute.xlu0 0
      %629 = vperm.xlu0 %628, %v523
      %v630 = vpop.permute.xlu0 %629
      %633 = vset.pattern.permute.xlu0 0
      %634 = vperm.xlu0 %633, %v524
      %v635 = vpop.permute.xlu0 %634
      %638 = vset.pattern.permute.xlu0 0
      %639 = vperm.xlu0 %638, %v525
      %v640 = vpop.permute.xlu0 %639
      %643 = vset.pattern.permute.xlu0 0
      %644 = vperm.xlu0 %643, %v526
      %v645 = vpop.permute.xlu0 %644
      %648 = vset.pattern.permute.xlu0 0
      %649 = vperm.xlu0 %648, %v527
      %v650 = vpop.permute.xlu0 %649
      %653 = vset.pattern.permute.xlu0 0
      %654 = vperm.xlu0 %653, %v528
      %v655 = vpop.permute.xlu0 %654
      %658 = vset.pattern.permute.xlu0 0
      %659 = vperm.xlu0 %658, %v529
      %v660 = vpop.permute.xlu0 %659
      %663 = vset.pattern.permute.xlu0 0
      %664 = vperm.xlu0 %663, %v530
      %v665 = vpop.permute.xlu0 %664
      %668 = vset.pattern.permute.xlu0 0
      %669 = vperm.xlu0 %668, %v531
      %v670 = vpop.permute.xlu0 %669
      %673 = vset.pattern.permute.xlu0 0
      %674 = vperm.xlu0 %673, %v532
      %v675 = vpop.permute.xlu0 %674
      %678 = vset.pattern.permute.xlu0 0
      %679 = vperm.xlu0 %678, %v533
      %v680 = vpop.permute.xlu0 %679
      %683 = vset.pattern.permute.xlu0 0
      %684 = vperm.xlu0 %683, %v534
      %v685 = vpop.permute.xlu0 %684
      %688 = vset.pattern.permute.xlu0 0
      %689 = vperm.xlu0 %688, %v535
      %v690 = vpop.permute.xlu0 %689
      %693 = vset.pattern.permute.xlu0 0
      %694 = vperm.xlu0 %693, %v536
      %v695 = vpop.permute.xlu0 %694
      %v697 = vmul.f32 %v474, %v540
      %v698 = vmul.f32 %v473, %v545
      %v699 = vmul.f32 %v504, %v550
      %v700 = vmul.f32 %v503, %v555
      %v701 = vmul.f32 %v502, %v560
      %v702 = vmul.f32 %v501, %v565
      %v703 = vmul.f32 %v500, %v570
      %v704 = vmul.f32 %v499, %v575
      %v705 = vmul.f32 %v498, %v580
      %v706 = vmul.f32 %v497, %v585
      %v707 = vmul.f32 %v496, %v590
      %v708 = vmul.f32 %v495, %v595
      %v709 = vmul.f32 %v494, %v600
      %v710 = vmul.f32 %v493, %v605
      %v711 = vmul.f32 %v492, %v610
      %v712 = vmul.f32 %v491, %v615
      %v713 = vmul.f32 %v490, %v620
      %v714 = vmul.f32 %v489, %v625
      %v715 = vmul.f32 %v488, %v630
      %v716 = vmul.f32 %v487, %v635
      %v717 = vmul.f32 %v486, %v640
      %v718 = vmul.f32 %v485, %v645
      %v719 = vmul.f32 %v484, %v650
      %v720 = vmul.f32 %v483, %v655
      %v721 = vmul.f32 %v482, %v660
      %v722 = vmul.f32 %v481, %v665
      %v723 = vmul.f32 %v480, %v670
      %v724 = vmul.f32 %v479, %v675
      %v725 = vmul.f32 %v478, %v680
      %v726 = vmul.f32 %v477, %v685
      %v727 = vmul.f32 %v476, %v690
      %v728 = vmul.f32 %v475, %v695
      %v729 = vpack.c.bf16 %v698, %v697
      %v730 = vpack.c.bf16 %v700, %v699
      %v731 = vpack.c.bf16 %v702, %v701
      %v732 = vpack.c.bf16 %v704, %v703
      %v733 = vpack.c.bf16 %v706, %v705
      %v734 = vpack.c.bf16 %v708, %v707
      %v735 = vpack.c.bf16 %v710, %v709
      %v736 = vpack.c.bf16 %v712, %v711
      %v737 = vpack.c.bf16 %v714, %v713
      %v738 = vpack.c.bf16 %v716, %v715
      %v739 = vpack.c.bf16 %v718, %v717
      %v740 = vpack.c.bf16 %v720, %v719
      %v741 = vpack.c.bf16 %v722, %v721
      %v742 = vpack.c.bf16 %v724, %v723
      %v743 = vpack.c.bf16 %v726, %v725
      %v744 = vpack.c.bf16 %v728, %v727
      %v745 = vld [vmem:[%s3] sm:$0xf]
      %v746 = vld [vmem:[%s3 + $0x4] sm:$0xf]
      %v747 = vld [vmem:[%s3 + $0x8] sm:$0xf]
      %v748 = vld [vmem:[%s3 + $0xc] sm:$0xf]
      %v749 = vld [vmem:[%s3 + $0x10] sm:$0xf]
      %v750 = vld [vmem:[%s3 + $0x14] sm:$0xf]
      %v751 = vld [vmem:[%s3 + $0x18] sm:$0xf]
      %v752 = vld [vmem:[%s3 + $0x1c] sm:$0xf]
      %v753 = vld [vmem:[%s3 + $0x20] sm:$0xf]
      %v754 = vld [vmem:[%s3 + $0x24] sm:$0xf]
      %v755 = vld [vmem:[%s3 + $0x28] sm:$0xf]
      %v756 = vld [vmem:[%s3 + $0x2c] sm:$0xf]
      %v757 = vld [vmem:[%s3 + $0x30] sm:$0xf]
      %v758 = vld [vmem:[%s3 + $0x34] sm:$0xf]
      %v759 = vld [vmem:[%s3 + $0x38] sm:$0xf]
      %v760 = vld [vmem:[%s3 + $0x3c] sm:$0xf]
      %s761 = scalar_lea.vmem %s4, 256
      %v762 = vld [vmem:[%s761] sm:$0xff]
      %v763 = vld [vmem:[%s761 + $0x8] sm:$0xff]
      %v764 = vld [vmem:[%s761 + $0x10] sm:$0xff]
      %v765 = vld [vmem:[%s761 + $0x18] sm:$0xff]
      %v766 = vld [vmem:[%s761 + $0x20] sm:$0xff]
      %v767 = vld [vmem:[%s761 + $0x28] sm:$0xff]
      %v768 = vld [vmem:[%s761 + $0x30] sm:$0xff]
      %v769 = vld [vmem:[%s761 + $0x38] sm:$0xff]
      %v770 = vld [vmem:[%s761 + $0x40] sm:$0xff]
      %v771 = vld [vmem:[%s761 + $0x48] sm:$0xff]
      %v772 = vld [vmem:[%s761 + $0x50] sm:$0xff]
      %v773 = vld [vmem:[%s761 + $0x58] sm:$0xff]
      %v774 = vld [vmem:[%s761 + $0x60] sm:$0xff]
      %v775 = vld [vmem:[%s761 + $0x68] sm:$0xff]
      %v776 = vld [vmem:[%s761 + $0x70] sm:$0xff]
      %v777 = vld [vmem:[%s761 + $0x78] sm:$0xff]
      %v778 = vld [vmem:[%s761 + $0x80] sm:$0xff]
      %v779 = vld [vmem:[%s761 + $0x88] sm:$0xff]
      %v780 = vld [vmem:[%s761 + $0x90] sm:$0xff]
      %v781 = vld [vmem:[%s761 + $0x98] sm:$0xff]
      %v782 = vld [vmem:[%s761 + $0xa0] sm:$0xff]
      %v783 = vld [vmem:[%s761 + $0xa8] sm:$0xff]
      %v784 = vld [vmem:[%s761 + $0xb0] sm:$0xff]
      %v785 = vld [vmem:[%s761 + $0xb8] sm:$0xff]
      %v786 = vld [vmem:[%s761 + $0xc0] sm:$0xff]
      %v787 = vld [vmem:[%s761 + $0xc8] sm:$0xff]
      %v788 = vld [vmem:[%s761 + $0xd0] sm:$0xff]
      %v789 = vld [vmem:[%s761 + $0xd8] sm:$0xff]
      %v790 = vld [vmem:[%s761 + $0xe0] sm:$0xff]
      %v791 = vld [vmem:[%s761 + $0xe8] sm:$0xff]
      %v792 = vld [vmem:[%s761 + $0xf0] sm:$0xff]
      %v793 = vld [vmem:[%s761 + $0xf8] sm:$0xff]
      %795 = vset.pattern.permute.xlu0 0
      %796 = vperm.xlu0 %795, %v762
      %v797 = vpop.permute.xlu0 %796
      %800 = vset.pattern.permute.xlu0 0
      %801 = vperm.xlu0 %800, %v763
      %v802 = vpop.permute.xlu0 %801
      %805 = vset.pattern.permute.xlu0 0
      %806 = vperm.xlu0 %805, %v764
      %v807 = vpop.permute.xlu0 %806
      %810 = vset.pattern.permute.xlu0 0
      %811 = vperm.xlu0 %810, %v765
      %v812 = vpop.permute.xlu0 %811
      %815 = vset.pattern.permute.xlu0 0
      %816 = vperm.xlu0 %815, %v766
      %v817 = vpop.permute.xlu0 %816
      %820 = vset.pattern.permute.xlu0 0
      %821 = vperm.xlu0 %820, %v767
      %v822 = vpop.permute.xlu0 %821
      %825 = vset.pattern.permute.xlu0 0
      %826 = vperm.xlu0 %825, %v768
      %v827 = vpop.permute.xlu0 %826
      %830 = vset.pattern.permute.xlu0 0
      %831 = vperm.xlu0 %830, %v769
      %v832 = vpop.permute.xlu0 %831
      %835 = vset.pattern.permute.xlu0 0
      %836 = vperm.xlu0 %835, %v770
      %v837 = vpop.permute.xlu0 %836
      %840 = vset.pattern.permute.xlu0 0
      %841 = vperm.xlu0 %840, %v771
      %v842 = vpop.permute.xlu0 %841
      %845 = vset.pattern.permute.xlu0 0
      %846 = vperm.xlu0 %845, %v772
      %v847 = vpop.permute.xlu0 %846
      %850 = vset.pattern.permute.xlu0 0
      %851 = vperm.xlu0 %850, %v773
      %v852 = vpop.permute.xlu0 %851
      %855 = vset.pattern.permute.xlu0 0
      %856 = vperm.xlu0 %855, %v774
      %v857 = vpop.permute.xlu0 %856
      %860 = vset.pattern.permute.xlu0 0
      %861 = vperm.xlu0 %860, %v775
      %v862 = vpop.permute.xlu0 %861
      %865 = vset.pattern.permute.xlu0 0
      %866 = vperm.xlu0 %865, %v776
      %v867 = vpop.permute.xlu0 %866
      %870 = vset.pattern.permute.xlu0 0
      %871 = vperm.xlu0 %870, %v777
      %v872 = vpop.permute.xlu0 %871
      %875 = vset.pattern.permute.xlu0 0
      %876 = vperm.xlu0 %875, %v778
      %v877 = vpop.permute.xlu0 %876
      %880 = vset.pattern.permute.xlu0 0
      %881 = vperm.xlu0 %880, %v779
      %v882 = vpop.permute.xlu0 %881
      %885 = vset.pattern.permute.xlu0 0
      %886 = vperm.xlu0 %885, %v780
      %v887 = vpop.permute.xlu0 %886
      %890 = vset.pattern.permute.xlu0 0
      %891 = vperm.xlu0 %890, %v781
      %v892 = vpop.permute.xlu0 %891
      %895 = vset.pattern.permute.xlu0 0
      %896 = vperm.xlu0 %895, %v782
      %v897 = vpop.permute.xlu0 %896
      %900 = vset.pattern.permute.xlu0 0
      %901 = vperm.xlu0 %900, %v783
      %v902 = vpop.permute.xlu0 %901
      %905 = vset.pattern.permute.xlu0 0
      %906 = vperm.xlu0 %905, %v784
      %v907 = vpop.permute.xlu0 %906
      %910 = vset.pattern.permute.xlu0 0
      %911 = vperm.xlu0 %910, %v785
      %v912 = vpop.permute.xlu0 %911
      %915 = vset.pattern.permute.xlu0 0
      %916 = vperm.xlu0 %915, %v786
      %v917 = vpop.permute.xlu0 %916
      %920 = vset.pattern.permute.xlu0 0
      %921 = vperm.xlu0 %920, %v787
      %v922 = vpop.permute.xlu0 %921
      %925 = vset.pattern.permute.xlu0 0
      %926 = vperm.xlu0 %925, %v788
      %v927 = vpop.permute.xlu0 %926
      %930 = vset.pattern.permute.xlu0 0
      %931 = vperm.xlu0 %930, %v789
      %v932 = vpop.permute.xlu0 %931
      %935 = vset.pattern.permute.xlu0 0
      %936 = vperm.xlu0 %935, %v790
      %v937 = vpop.permute.xlu0 %936
      %940 = vset.pattern.permute.xlu0 0
      %941 = vperm.xlu0 %940, %v791
      %v942 = vpop.permute.xlu0 %941
      %945 = vset.pattern.permute.xlu0 0
      %946 = vperm.xlu0 %945, %v792
      %v947 = vpop.permute.xlu0 %946
      %950 = vset.pattern.permute.xlu0 0
      %951 = vperm.xlu0 %950, %v793
      %v952 = vpop.permute.xlu0 %951
      %v954 = vmul.f32 %v436, %v797
      %v955 = vmul.f32 %v437, %v802
      %v956 = vmul.f32 %v406, %v807
      %v957 = vmul.f32 %v407, %v812
      %v958 = vmul.f32 %v408, %v817
      %v959 = vmul.f32 %v409, %v822
      %v960 = vmul.f32 %v410, %v827
      %v961 = vmul.f32 %v411, %v832
      %v962 = vmul.f32 %v412, %v837
      %v963 = vmul.f32 %v413, %v842
      %v964 = vmul.f32 %v414, %v847
      %v965 = vmul.f32 %v415, %v852
      %v966 = vmul.f32 %v416, %v857
      %v967 = vmul.f32 %v417, %v862
      %v968 = vmul.f32 %v418, %v867
      %v969 = vmul.f32 %v419, %v872
      %v970 = vmul.f32 %v420, %v877
      %v971 = vmul.f32 %v421, %v882
      %v972 = vmul.f32 %v422, %v887
      %v973 = vmul.f32 %v423, %v892
      %v974 = vmul.f32 %v424, %v897
      %v975 = vmul.f32 %v425, %v902
      %v976 = vmul.f32 %v426, %v907
      %v977 = vmul.f32 %v427, %v912
      %v978 = vmul.f32 %v428, %v917
      %v979 = vmul.f32 %v429, %v922
      %v980 = vmul.f32 %v430, %v927
      %v981 = vmul.f32 %v431, %v932
      %v982 = vmul.f32 %v432, %v937
      %v983 = vmul.f32 %v433, %v942
      %v984 = vmul.f32 %v434, %v947
      %v985 = vmul.f32 %v435, %v952
      %v986 = vpack.c.bf16 %v955, %v954
      %v987 = vpack.c.bf16 %v957, %v956
      %v988 = vpack.c.bf16 %v959, %v958
      %v989 = vpack.c.bf16 %v961, %v960
      %v990 = vpack.c.bf16 %v963, %v962
      %v991 = vpack.c.bf16 %v965, %v964
      %v992 = vpack.c.bf16 %v967, %v966
      %v993 = vpack.c.bf16 %v969, %v968
      %v994 = vpack.c.bf16 %v971, %v970
      %v995 = vpack.c.bf16 %v973, %v972
      %v996 = vpack.c.bf16 %v975, %v974
      %v997 = vpack.c.bf16 %v977, %v976
      %v998 = vpack.c.bf16 %v979, %v978
      %v999 = vpack.c.bf16 %v981, %v980
      %v1000 = vpack.c.bf16 %v983, %v982
      %v1001 = vpack.c.bf16 %v985, %v984
      %s1002 = scalar_lea.vmem %s3, 64
      %v1003 = vld [vmem:[%s1002] sm:$0xf]
      %v1004 = vld [vmem:[%s1002 + $0x4] sm:$0xf]
      %v1005 = vld [vmem:[%s1002 + $0x8] sm:$0xf]
      %v1006 = vld [vmem:[%s1002 + $0xc] sm:$0xf]
      %v1007 = vld [vmem:[%s1002 + $0x10] sm:$0xf]
      %v1008 = vld [vmem:[%s1002 + $0x14] sm:$0xf]
      %v1009 = vld [vmem:[%s1002 + $0x18] sm:$0xf]
      %v1010 = vld [vmem:[%s1002 + $0x1c] sm:$0xf]
      %v1011 = vld [vmem:[%s1002 + $0x20] sm:$0xf]
      %v1012 = vld [vmem:[%s1002 + $0x24] sm:$0xf]
      %v1013 = vld [vmem:[%s1002 + $0x28] sm:$0xf]
      %v1014 = vld [vmem:[%s1002 + $0x2c] sm:$0xf]
      %v1015 = vld [vmem:[%s1002 + $0x30] sm:$0xf]
      %v1016 = vld [vmem:[%s1002 + $0x34] sm:$0xf]
      %v1017 = vld [vmem:[%s1002 + $0x38] sm:$0xf]
      %v1018 = vld [vmem:[%s1002 + $0x3c] sm:$0xf]
      %v1035 = vunpack.c.l.b16 %v1003
      %v1036 = vunpack.c.l.b16 %v1004
      %v1037 = vunpack.c.l.b16 %v1005
      %v1038 = vunpack.c.l.b16 %v1006
      %v1039 = vunpack.c.l.b16 %v1007
      %v1040 = vunpack.c.l.b16 %v1008
      %v1041 = vunpack.c.l.b16 %v1009
      %v1042 = vunpack.c.l.b16 %v1010
      %v1043 = vunpack.c.l.b16 %v1011
      %v1044 = vunpack.c.l.b16 %v1012
      %v1045 = vunpack.c.l.b16 %v1013
      %v1046 = vunpack.c.l.b16 %v1014
      %v1047 = vunpack.c.l.b16 %v1015
      %v1048 = vunpack.c.l.b16 %v1016
      %v1049 = vunpack.c.l.b16 %v1017
      %v1050 = vunpack.c.l.b16 %v1018
      %v1051 = vpack.c.b16 %v1036, %v1035
      %v1052 = vpack.c.b16 %v1038, %v1037
      %v1053 = vpack.c.b16 %v1040, %v1039
      %v1054 = vpack.c.b16 %v1042, %v1041
      %v1055 = vpack.c.b16 %v1044, %v1043
      %v1056 = vpack.c.b16 %v1046, %v1045
      %v1057 = vpack.c.b16 %v1048, %v1047
      %v1058 = vpack.c.b16 %v1050, %v1049
      %1067 = vmatprep.subr.bf16.mxu0 0
      %1068 = vmatpush1.bf16.msra.mxu0 %v1051
      %1069 = vmatprep.subr.bf16.mxu0 0
      %1070 = vmatpush1.bf16.msra.mxu0 %v1052
      %1071 = vmatprep.subr.bf16.mxu0 0
      %1072 = vmatpush1.bf16.msra.mxu0 %v1053
      %1073 = vmatprep.subr.bf16.mxu0 0
      %1074 = vmatpush1.bf16.msra.mxu0 %v1054
      %1075 = vmatprep.subr.bf16.mxu0 0
      %1076 = vmatpush1.bf16.msra.mxu0 %v1055
      %1077 = vmatprep.subr.bf16.mxu0 0
      %1078 = vmatpush1.bf16.msra.mxu0 %v1056
      %1079 = vmatprep.subr.bf16.mxu0 0
      %1080 = vmatpush1.bf16.msra.mxu0 %v1057
      %1081 = vmatprep.subr.bf16.mxu0 0
      %1082 = vmatpush1.bf16.msra.mxu0 %v1058
      %1083 = vmatprep.subr.bf16.mxu0 0
      %1084 = vmatpush1.bf16.msra.mxu0 0
      %1085 = vmatprep.subr.bf16.mxu0 0
      %1086 = vmatpush1.bf16.msra.mxu0 0
      %1087 = vmatprep.subr.bf16.mxu0 0
      %1088 = vmatpush1.bf16.msra.mxu0 0
      %1089 = vmatprep.subr.bf16.mxu0 0
      %1090 = vmatpush1.bf16.msra.mxu0 0
      %1091 = vmatprep.subr.bf16.mxu0 0
      %1092 = vmatpush1.bf16.msra.mxu0 0
      %1093 = vmatprep.subr.bf16.mxu0 0
      %1094 = vmatpush1.bf16.msra.mxu0 0
      %1095 = vmatprep.subr.bf16.mxu0 0
      %1096 = vmatpush1.bf16.msra.mxu0 0
      %1097 = vmatprep.subr.bf16.mxu0 0
      %1098 = vmatpush1.bf16.msra.mxu0 0
      %1099 = vmatprep.mubr.bf16.mxu0 0
      %1100 = vmatmul.mubr.bf16.gmra.mrb[0].mxu0 %v986
      %v1101 = vpop.f32.mrb[0].mxu0
      %v1102 = vadd.f32 0.0, %v1101
      %v1103 = vpop.f32.mrb[0].mxu0
      %v1104 = vpop.f32.mrb[0].mxu0
      %v1105 = vadd.f32 0.0, %v1104
      %v1106 = vpop.f32.mrb[0].mxu0
      %1107 = vmatprep.mubr.bf16.mxu0 0
      %1108 = vmatmul.mubr.bf16.gmra.mrb[0].mxu0 %v987
      %v1109 = vpop.f32.mrb[0].mxu0
      %v1110 = vadd.f32 0.0, %v1109
      %v1111 = vpop.f32.mrb[0].mxu0
      %v1112 = vpop.f32.mrb[0].mxu0
      %v1113 = vadd.f32 0.0, %v1112
      %v1114 = vpop.f32.mrb[0].mxu0
      %1115 = vmatprep.mubr.bf16.mxu0 0
      %1116 = vmatmul.mubr.bf16.gmra.mrb[0].mxu0 %v988
      %v1117 = vpop.f32.mrb[0].mxu0
      %v1118 = vadd.f32 0.0, %v1117
      %v1119 = vpop.f32.mrb[0].mxu0
      %v1120 = vpop.f32.mrb[0].mxu0
      %v1121 = vadd.f32 0.0, %v1120
      %v1122 = vpop.f32.mrb[0].mxu0
      %1123 = vmatprep.mubr.bf16.mxu0 0
      %1124 = vmatmul.mubr.bf16.gmra.mrb[0].mxu0 %v989
      %v1125 = vpop.f32.mrb[0].mxu0
      %v1126 = vadd.f32 0.0, %v1125
      %v1127 = vpop.f32.mrb[0].mxu0
      %v1128 = vpop.f32.mrb[0].mxu0
      %v1129 = vadd.f32 0.0, %v1128
      %v1130 = vpop.f32.mrb[0].mxu0
      %1131 = vmatprep.mubr.bf16.mxu0 0
      %1132 = vmatmul.mubr.bf16.gmra.mrb[0].mxu0 %v990
      %v1133 = vpop.f32.mrb[0].mxu0
      %v1134 = vadd.f32 0.0, %v1133
      %v1135 = vpop.f32.mrb[0].mxu0
      %v1136 = vpop.f32.mrb[0].mxu0
      %v1137 = vadd.f32 0.0, %v1136
      %v1138 = vpop.f32.mrb[0].mxu0
      %1139 = vmatprep.mubr.bf16.mxu0 0
      %1140 = vmatmul.mubr.bf16.gmra.mrb[0].mxu0 %v991
      %v1141 = vpop.f32.mrb[0].mxu0
      %v1142 = vadd.f32 0.0, %v1141
      %v1143 = vpop.f32.mrb[0].mxu0
      %v1144 = vpop.f32.mrb[0].mxu0
      %v1145 = vadd.f32 0.0, %v1144
      %v1146 = vpop.f32.mrb[0].mxu0
      %1147 = vmatprep.mubr.bf16.mxu0 0
      %1148 = vmatmul.mubr.bf16.gmra.mrb[0].mxu0 %v992
      %v1149 = vpop.f32.mrb[0].mxu0
      %v1150 = vadd.f32 0.0, %v1149
      %v1151 = vpop.f32.mrb[0].mxu0
      %v1152 = vpop.f32.mrb[0].mxu0
      %v1153 = vadd.f32 0.0, %v1152
      %v1154 = vpop.f32.mrb[0].mxu0
      %1155 = vmatprep.mubr.bf16.mxu0 0
      %1156 = vmatmul.mubr.bf16.gmra.mrb[0].mxu0 %v993
      %v1157 = vpop.f32.mrb[0].mxu0
      %v1158 = vadd.f32 0.0, %v1157
      %v1159 = vpop.f32.mrb[0].mxu0
      %v1160 = vpop.f32.mrb[0].mxu0
      %v1161 = vadd.f32 0.0, %v1160
      %v1162 = vpop.f32.mrb[0].mxu0
      %1163 = vmatprep.mubr.bf16.mxu0 0
      %1164 = vmatmul.mubr.bf16.gmra.mrb[0].mxu0 %v994
      %v1165 = vpop.f32.mrb[0].mxu0
      %v1166 = vadd.f32 0.0, %v1165
      %v1167 = vpop.f32.mrb[0].mxu0
      %v1168 = vpop.f32.mrb[0].mxu0
      %v1169 = vadd.f32 0.0, %v1168
      %v1170 = vpop.f32.mrb[0].mxu0
      %1171 = vmatprep.mubr.bf16.mxu0 0
      %1172 = vmatmul.mubr.bf16.gmra.mrb[0].mxu0 %v995
      %v1173 = vpop.f32.mrb[0].mxu0
      %v1174 = vadd.f32 0.0, %v1173
      %v1175 = vpop.f32.mrb[0].mxu0
      %v1176 = vpop.f32.mrb[0].mxu0
      %v1177 = vadd.f32 0.0, %v1176
      %v1178 = vpop.f32.mrb[0].mxu0
      %1179 = vmatprep.mubr.bf16.mxu0 0
      %1180 = vmatmul.mubr.bf16.gmra.mrb[0].mxu0 %v996
      %v1181 = vpop.f32.mrb[0].mxu0
      %v1182 = vadd.f32 0.0, %v1181
      %v1183 = vpop.f32.mrb[0].mxu0
      %v1184 = vpop.f32.mrb[0].mxu0
      %v1185 = vadd.f32 0.0, %v1184
      %v1186 = vpop.f32.mrb[0].mxu0
      %1187 = vmatprep.mubr.bf16.mxu0 0
      %1188 = vmatmul.mubr.bf16.gmra.mrb[0].mxu0 %v997
      %v1189 = vpop.f32.mrb[0].mxu0
      %v1190 = vadd.f32 0.0, %v1189
      %v1191 = vpop.f32.mrb[0].mxu0
      %v1192 = vpop.f32.mrb[0].mxu0
      %v1193 = vadd.f32 0.0, %v1192
      %v1194 = vpop.f32.mrb[0].mxu0
      %1195 = vmatprep.mubr.bf16.mxu0 0
      %1196 = vmatmul.mubr.bf16.gmra.mrb[0].mxu0 %v998
      %v1197 = vpop.f32.mrb[0].mxu0
      %v1198 = vadd.f32 0.0, %v1197
      %v1199 = vpop.f32.mrb[0].mxu0
      %v1200 = vpop.f32.mrb[0].mxu0
      %v1201 = vadd.f32 0.0, %v1200
      %v1202 = vpop.f32.mrb[0].mxu0
      %1203 = vmatprep.mubr.bf16.mxu0 0
      %1204 = vmatmul.mubr.bf16.gmra.mrb[0].mxu0 %v999
      %v1205 = vpop.f32.mrb[0].mxu0
      %v1206 = vadd.f32 0.0, %v1205
      %v1207 = vpop.f32.mrb[0].mxu0
      %v1208 = vpop.f32.mrb[0].mxu0
      %v1209 = vadd.f32 0.0, %v1208
      %v1210 = vpop.f32.mrb[0].mxu0
      %1211 = vmatprep.mubr.bf16.mxu0 0
      %1212 = vmatmul.mubr.bf16.gmra.mrb[0].mxu0 %v1000
      %v1213 = vpop.f32.mrb[0].mxu0
      %v1214 = vadd.f32 0.0, %v1213
      %v1215 = vpop.f32.mrb[0].mxu0
      %v1216 = vpop.f32.mrb[0].mxu0
      %v1217 = vadd.f32 0.0, %v1216
      %v1218 = vpop.f32.mrb[0].mxu0
      %1219 = vmatprep.mubr.bf16.mxu0 0
      %1220 = vmatmul.mubr.bf16.gmra.mrb[0].mxu0 %v1001
      %v1221 = vpop.f32.mrb[0].mxu0
      %v1222 = vadd.f32 0.0, %v1221
      %v1223 = vpop.f32.mrb[0].mxu0
      %v1224 = vpop.f32.mrb[0].mxu0
      %v1225 = vadd.f32 0.0, %v1224
      %v1226 = vpop.f32.mrb[0].mxu0
      %1227 = vdwg.mxu0
      %v1244 = vunpack.c.l.b16 %v745
      %v1245 = vunpack.c.l.b16 %v746
      %v1246 = vunpack.c.l.b16 %v747
      %v1247 = vunpack.c.l.b16 %v748
      %v1248 = vunpack.c.l.b16 %v749
      %v1249 = vunpack.c.l.b16 %v750
      %v1250 = vunpack.c.l.b16 %v751
      %v1251 = vunpack.c.l.b16 %v752
      %v1252 = vunpack.c.l.b16 %v753
      %v1253 = vunpack.c.l.b16 %v754
      %v1254 = vunpack.c.l.b16 %v755
      %v1255 = vunpack.c.l.b16 %v756
      %v1256 = vunpack.c.l.b16 %v757
      %v1257 = vunpack.c.l.b16 %v758
      %v1258 = vunpack.c.l.b16 %v759
      %v1259 = vunpack.c.l.b16 %v760
      %v1260 = vpack.c.b16 %v1245, %v1244
      %v1261 = vpack.c.b16 %v1247, %v1246
      %v1262 = vpack.c.b16 %v1249, %v1248
      %v1263 = vpack.c.b16 %v1251, %v1250
      %v1264 = vpack.c.b16 %v1253, %v1252
      %v1265 = vpack.c.b16 %v1255, %v1254
      %v1266 = vpack.c.b16 %v1257, %v1256
      %v1267 = vpack.c.b16 %v1259, %v1258
      %1276 = vmatprep.subr.bf16.mxu0 0
      %1277 = vmatpush1.bf16.msra.mxu0 %v1260
      %1278 = vmatprep.subr.bf16.mxu0 0
      %1279 = vmatpush1.bf16.msra.mxu0 %v1261
      %1280 = vmatprep.subr.bf16.mxu0 0
      %1281 = vmatpush1.bf16.msra.mxu0 %v1262
      %1282 = vmatprep.subr.bf16.mxu0 0
      %1283 = vmatpush1.bf16.msra.mxu0 %v1263
      %1284 = vmatprep.subr.bf16.mxu0 0
      %1285 = vmatpush1.bf16.msra.mxu0 %v1264
      %1286 = vmatprep.subr.bf16.mxu0 0
      %1287 = vmatpush1.bf16.msra.mxu0 %v1265
      %1288 = vmatprep.subr.bf16.mxu0 0
      %1289 = vmatpush1.bf16.msra.mxu0 %v1266
      %1290 = vmatprep.subr.bf16.mxu0 0
      %1291 = vmatpush1.bf16.msra.mxu0 %v1267
      %1292 = vmatprep.subr.bf16.mxu0 0
      %1293 = vmatpush1.bf16.msra.mxu0 0
      %1294 = vmatprep.subr.bf16.mxu0 0
      %1295 = vmatpush1.bf16.msra.mxu0 0
      %1296 = vmatprep.subr.bf16.mxu0 0
      %1297 = vmatpush1.bf16.msra.mxu0 0
      %1298 = vmatprep.subr.bf16.mxu0 0
      %1299 = vmatpush1.bf16.msra.mxu0 0
      %1300 = vmatprep.subr.bf16.mxu0 0
      %1301 = vmatpush1.bf16.msra.mxu0 0
      %1302 = vmatprep.subr.bf16.mxu0 0
      %1303 = vmatpush1.bf16.msra.mxu0 0
      %1304 = vmatprep.subr.bf16.mxu0 0
      %1305 = vmatpush1.bf16.msra.mxu0 0
      %1306 = vmatprep.subr.bf16.mxu0 0
      %1307 = vmatpush1.bf16.msra.mxu0 0
      %1308 = vmatprep.mubr.bf16.mxu0 0
      %1309 = vmatmul.mubr.bf16.gmra.mrb[0].mxu0 %v729
      %v1310 = vpop.f32.mrb[0].mxu0
      %v1311 = vadd.f32 %v1102, %v1310
      %v1312 = vpop.f32.mrb[0].mxu0
      %v1313 = vpop.f32.mrb[0].mxu0
      %v1314 = vadd.f32 %v1105, %v1313
      %v1315 = vpop.f32.mrb[0].mxu0
      %1316 = vmatprep.mubr.bf16.mxu0 0
      %1317 = vmatmul.mubr.bf16.gmra.mrb[0].mxu0 %v730
      %v1318 = vpop.f32.mrb[0].mxu0
      %v1319 = vadd.f32 %v1110, %v1318
      %v1320 = vpop.f32.mrb[0].mxu0
      %v1321 = vpop.f32.mrb[0].mxu0
      %v1322 = vadd.f32 %v1113, %v1321
      %v1323 = vpop.f32.mrb[0].mxu0
      %1324 = vmatprep.mubr.bf16.mxu0 0
      %1325 = vmatmul.mubr.bf16.gmra.mrb[0].mxu0 %v731
      %v1326 = vpop.f32.mrb[0].mxu0
      %v1327 = vadd.f32 %v1118, %v1326
      %v1328 = vpop.f32.mrb[0].mxu0
      %v1329 = vpop.f32.mrb[0].mxu0
      %v1330 = vadd.f32 %v1121, %v1329
      %v1331 = vpop.f32.mrb[0].mxu0
      %1332 = vmatprep.mubr.bf16.mxu0 0
      %1333 = vmatmul.mubr.bf16.gmra.mrb[0].mxu0 %v732
      %v1334 = vpop.f32.mrb[0].mxu0
      %v1335 = vadd.f32 %v1126, %v1334
      %v1336 = vpop.f32.mrb[0].mxu0
      %v1337 = vpop.f32.mrb[0].mxu0
      %v1338 = vadd.f32 %v1129, %v1337
      %v1339 = vpop.f32.mrb[0].mxu0
      %1340 = vmatprep.mubr.bf16.mxu0 0
      %1341 = vmatmul.mubr.bf16.gmra.mrb[0].mxu0 %v733
      %v1342 = vpop.f32.mrb[0].mxu0
      %v1343 = vadd.f32 %v1134, %v1342
      %v1344 = vpop.f32.mrb[0].mxu0
      %v1345 = vpop.f32.mrb[0].mxu0
      %v1346 = vadd.f32 %v1137, %v1345
      %v1347 = vpop.f32.mrb[0].mxu0
      %1348 = vmatprep.mubr.bf16.mxu0 0
      %1349 = vmatmul.mubr.bf16.gmra.mrb[0].mxu0 %v734
      %v1350 = vpop.f32.mrb[0].mxu0
      %v1351 = vadd.f32 %v1142, %v1350
      %v1352 = vpop.f32.mrb[0].mxu0
      %v1353 = vpop.f32.mrb[0].mxu0
      %v1354 = vadd.f32 %v1145, %v1353
      %v1355 = vpop.f32.mrb[0].mxu0
      %1356 = vmatprep.mubr.bf16.mxu0 0
      %1357 = vmatmul.mubr.bf16.gmra.mrb[0].mxu0 %v735
      %v1358 = vpop.f32.mrb[0].mxu0
      %v1359 = vadd.f32 %v1150, %v1358
      %v1360 = vpop.f32.mrb[0].mxu0
      %v1361 = vpop.f32.mrb[0].mxu0
      %v1362 = vadd.f32 %v1153, %v1361
      %v1363 = vpop.f32.mrb[0].mxu0
      %1364 = vmatprep.mubr.bf16.mxu0 0
      %1365 = vmatmul.mubr.bf16.gmra.mrb[0].mxu0 %v736
      %v1366 = vpop.f32.mrb[0].mxu0
      %v1367 = vadd.f32 %v1158, %v1366
      %v1368 = vpop.f32.mrb[0].mxu0
      %v1369 = vpop.f32.mrb[0].mxu0
      %v1370 = vadd.f32 %v1161, %v1369
      %v1371 = vpop.f32.mrb[0].mxu0
      %1372 = vmatprep.mubr.bf16.mxu0 0
      %1373 = vmatmul.mubr.bf16.gmra.mrb[0].mxu0 %v737
      %v1374 = vpop.f32.mrb[0].mxu0
      %v1375 = vadd.f32 %v1166, %v1374
      %v1376 = vpop.f32.mrb[0].mxu0
      %v1377 = vpop.f32.mrb[0].mxu0
      %v1378 = vadd.f32 %v1169, %v1377
      %v1379 = vpop.f32.mrb[0].mxu0
      %1380 = vmatprep.mubr.bf16.mxu0 0
      %1381 = vmatmul.mubr.bf16.gmra.mrb[0].mxu0 %v738
      %v1382 = vpop.f32.mrb[0].mxu0
      %v1383 = vadd.f32 %v1174, %v1382
      %v1384 = vpop.f32.mrb[0].mxu0
      %v1385 = vpop.f32.mrb[0].mxu0
      %v1386 = vadd.f32 %v1177, %v1385
      %v1387 = vpop.f32.mrb[0].mxu0
      %1388 = vmatprep.mubr.bf16.mxu0 0
      %1389 = vmatmul.mubr.bf16.gmra.mrb[0].mxu0 %v739
      %v1390 = vpop.f32.mrb[0].mxu0
      %v1391 = vadd.f32 %v1182, %v1390
      %v1392 = vpop.f32.mrb[0].mxu0
      %v1393 = vpop.f32.mrb[0].mxu0
      %v1394 = vadd.f32 %v1185, %v1393
      %v1395 = vpop.f32.mrb[0].mxu0
      %1396 = vmatprep.mubr.bf16.mxu0 0
      %1397 = vmatmul.mubr.bf16.gmra.mrb[0].mxu0 %v740
      %v1398 = vpop.f32.mrb[0].mxu0
      %v1399 = vadd.f32 %v1190, %v1398
      %v1400 = vpop.f32.mrb[0].mxu0
      %v1401 = vpop.f32.mrb[0].mxu0
      %v1402 = vadd.f32 %v1193, %v1401
      %v1403 = vpop.f32.mrb[0].mxu0
      %1404 = vmatprep.mubr.bf16.mxu0 0
      %1405 = vmatmul.mubr.bf16.gmra.mrb[0].mxu0 %v741
      %v1406 = vpop.f32.mrb[0].mxu0
      %v1407 = vadd.f32 %v1198, %v1406
      %v1408 = vpop.f32.mrb[0].mxu0
      %v1409 = vpop.f32.mrb[0].mxu0
      %v1410 = vadd.f32 %v1201, %v1409
      %v1411 = vpop.f32.mrb[0].mxu0
      %1412 = vmatprep.mubr.bf16.mxu0 0
      %1413 = vmatmul.mubr.bf16.gmra.mrb[0].mxu0 %v742
      %v1414 = vpop.f32.mrb[0].mxu0
      %v1415 = vadd.f32 %v1206, %v1414
      %v1416 = vpop.f32.mrb[0].mxu0
      %v1417 = vpop.f32.mrb[0].mxu0
      %v1418 = vadd.f32 %v1209, %v1417
      %v1419 = vpop.f32.mrb[0].mxu0
      %1420 = vmatprep.mubr.bf16.mxu0 0
      %1421 = vmatmul.mubr.bf16.gmra.mrb[0].mxu0 %v743
      %v1422 = vpop.f32.mrb[0].mxu0
      %v1423 = vadd.f32 %v1214, %v1422
      %v1424 = vpop.f32.mrb[0].mxu0
      %v1425 = vpop.f32.mrb[0].mxu0
      %v1426 = vadd.f32 %v1217, %v1425
      %v1427 = vpop.f32.mrb[0].mxu0
      %1428 = vmatprep.mubr.bf16.mxu0 0
      %1429 = vmatmul.mubr.bf16.gmra.mrb[0].mxu0 %v744
      %v1430 = vpop.f32.mrb[0].mxu0
      %v1431 = vadd.f32 %v1222, %v1430
      %v1432 = vpop.f32.mrb[0].mxu0
      %v1433 = vpop.f32.mrb[0].mxu0
      %v1434 = vadd.f32 %v1225, %v1433
      %v1435 = vpop.f32.mrb[0].mxu0
      %1436 = vdwg.mxu0
      %v1437 = vrot.slane %v406, 1
      %v1438 = vrot.slane %v407, 1
      %v1439 = vrot.slane %v408, 1
      %v1440 = vrot.slane %v409, 1
      %v1441 = vrot.slane %v410, 1
      %v1442 = vrot.slane %v411, 1
      %v1443 = vrot.slane %v412, 1
      %v1444 = vrot.slane %v413, 1
      %v1445 = vrot.slane %v414, 1
      %v1446 = vrot.slane %v415, 1
      %v1447 = vrot.slane %v416, 1
      %v1448 = vrot.slane %v417, 1
      %v1449 = vrot.slane %v418, 1
      %v1450 = vrot.slane %v419, 1
      %v1451 = vrot.slane %v420, 1
      %v1452 = vrot.slane %v421, 1
      %v1453 = vrot.slane %v422, 1
      %v1454 = vrot.slane %v423, 1
      %v1455 = vrot.slane %v424, 1
      %v1456 = vrot.slane %v425, 1
      %v1457 = vrot.slane %v426, 1
      %v1458 = vrot.slane %v427, 1
      %v1459 = vrot.slane %v428, 1
      %v1460 = vrot.slane %v429, 1
      %v1461 = vrot.slane %v430, 1
      %v1462 = vrot.slane %v431, 1
      %v1463 = vrot.slane %v432, 1
      %v1464 = vrot.slane %v433, 1
      %v1465 = vrot.slane %v434, 1
      %v1466 = vrot.slane %v435, 1
      %v1467 = vrot.slane %v436, 1
      %v1468 = vrot.slane %v437, 1
      %vm1469 = vcmp.lt.s32.totalorder %v471, 7
      %v1470 = vsel %vm1469, %v1467, %v1468
      %v1471 = vsel %vm1469, %v1466, %v1467
      %v1472 = vsel %vm1469, %v1465, %v1466
      %v1473 = vsel %vm1469, %v1464, %v1465
      %v1474 = vsel %vm1469, %v1463, %v1464
      %v1475 = vsel %vm1469, %v1462, %v1463
      %v1476 = vsel %vm1469, %v1461, %v1462
      %v1477 = vsel %vm1469, %v1460, %v1461
      %v1478 = vsel %vm1469, %v1459, %v1460
      %v1479 = vsel %vm1469, %v1458, %v1459
      %v1480 = vsel %vm1469, %v1457, %v1458
      %v1481 = vsel %vm1469, %v1456, %v1457
      %v1482 = vsel %vm1469, %v1455, %v1456
      %v1483 = vsel %vm1469, %v1454, %v1455
      %v1484 = vsel %vm1469, %v1453, %v1454
      %v1485 = vsel %vm1469, %v1452, %v1453
      %v1486 = vsel %vm1469, %v1451, %v1452
      %v1487 = vsel %vm1469, %v1450, %v1451
      %v1488 = vsel %vm1469, %v1449, %v1450
      %v1489 = vsel %vm1469, %v1448, %v1449
      %v1490 = vsel %vm1469, %v1447, %v1448
      %v1491 = vsel %vm1469, %v1446, %v1447
      %v1492 = vsel %vm1469, %v1445, %v1446
      %v1493 = vsel %vm1469, %v1444, %v1445
      %v1494 = vsel %vm1469, %v1443, %v1444
      %v1495 = vsel %vm1469, %v1442, %v1443
      %v1496 = vsel %vm1469, %v1441, %v1442
      %v1497 = vsel %vm1469, %v1440, %v1441
      %v1498 = vsel %vm1469, %v1439, %v1440
      %v1499 = vsel %vm1469, %v1438, %v1439
      %v1500 = vsel %vm1469, %v1437, %v1438
      %v1501 = vsel %vm1469, %v1468, %v1437
      %s1502 = scalar_lea.vmem %s4, 512
      %v1503 = vld [vmem:[%s1502] sm:$0xff]
      %v1504 = vld [vmem:[%s1502 + $0x8] sm:$0xff]
      %v1505 = vld [vmem:[%s1502 + $0x10] sm:$0xff]
      %v1506 = vld [vmem:[%s1502 + $0x18] sm:$0xff]
      %v1507 = vld [vmem:[%s1502 + $0x20] sm:$0xff]
      %v1508 = vld [vmem:[%s1502 + $0x28] sm:$0xff]
      %v1509 = vld [vmem:[%s1502 + $0x30] sm:$0xff]
      %v1510 = vld [vmem:[%s1502 + $0x38] sm:$0xff]
      %v1511 = vld [vmem:[%s1502 + $0x40] sm:$0xff]
      %v1512 = vld [vmem:[%s1502 + $0x48] sm:$0xff]
      %v1513 = vld [vmem:[%s1502 + $0x50] sm:$0xff]
      %v1514 = vld [vmem:[%s1502 + $0x58] sm:$0xff]
      %v1515 = vld [vmem:[%s1502 + $0x60] sm:$0xff]
      %v1516 = vld [vmem:[%s1502 + $0x68] sm:$0xff]
      %v1517 = vld [vmem:[%s1502 + $0x70] sm:$0xff]
      %v1518 = vld [vmem:[%s1502 + $0x78] sm:$0xff]
      %v1519 = vld [vmem:[%s1502 + $0x80] sm:$0xff]
      %v1520 = vld [vmem:[%s1502 + $0x88] sm:$0xff]
      %v1521 = vld [vmem:[%s1502 + $0x90] sm:$0xff]
      %v1522 = vld [vmem:[%s1502 + $0x98] sm:$0xff]
      %v1523 = vld [vmem:[%s1502 + $0xa0] sm:$0xff]
      %v1524 = vld [vmem:[%s1502 + $0xa8] sm:$0xff]
      %v1525 = vld [vmem:[%s1502 + $0xb0] sm:$0xff]
      %v1526 = vld [vmem:[%s1502 + $0xb8] sm:$0xff]
      %v1527 = vld [vmem:[%s1502 + $0xc0] sm:$0xff]
      %v1528 = vld [vmem:[%s1502 + $0xc8] sm:$0xff]
      %v1529 = vld [vmem:[%s1502 + $0xd0] sm:$0xff]
      %v1530 = vld [vmem:[%s1502 + $0xd8] sm:$0xff]
      %v1531 = vld [vmem:[%s1502 + $0xe0] sm:$0xff]
      %v1532 = vld [vmem:[%s1502 + $0xe8] sm:$0xff]
      %v1533 = vld [vmem:[%s1502 + $0xf0] sm:$0xff]
      %v1534 = vld [vmem:[%s1502 + $0xf8] sm:$0xff]
      %1536 = vset.pattern.permute.xlu0 0
      %1537 = vperm.xlu0 %1536, %v1503
      %v1538 = vpop.permute.xlu0 %1537
      %1541 = vset.pattern.permute.xlu0 0
      %1542 = vperm.xlu0 %1541, %v1504
      %v1543 = vpop.permute.xlu0 %1542
      %1546 = vset.pattern.permute.xlu0 0
      %1547 = vperm.xlu0 %1546, %v1505
      %v1548 = vpop.permute.xlu0 %1547
      %1551 = vset.pattern.permute.xlu0 0
      %1552 = vperm.xlu0 %1551, %v1506
      %v1553 = vpop.permute.xlu0 %1552
      %1556 = vset.pattern.permute.xlu0 0
      %1557 = vperm.xlu0 %1556, %v1507
      %v1558 = vpop.permute.xlu0 %1557
      %1561 = vset.pattern.permute.xlu0 0
      %1562 = vperm.xlu0 %1561, %v1508
      %v1563 = vpop.permute.xlu0 %1562
      %1566 = vset.pattern.permute.xlu0 0
      %1567 = vperm.xlu0 %1566, %v1509
      %v1568 = vpop.permute.xlu0 %1567
      %1571 = vset.pattern.permute.xlu0 0
      %1572 = vperm.xlu0 %1571, %v1510
      %v1573 = vpop.permute.xlu0 %1572
      %1576 = vset.pattern.permute.xlu0 0
      %1577 = vperm.xlu0 %1576, %v1511
      %v1578 = vpop.permute.xlu0 %1577
      %1581 = vset.pattern.permute.xlu0 0
      %1582 = vperm.xlu0 %1581, %v1512
      %v1583 = vpop.permute.xlu0 %1582
      %1586 = vset.pattern.permute.xlu0 0
      %1587 = vperm.xlu0 %1586, %v1513
      %v1588 = vpop.permute.xlu0 %1587
      %1591 = vset.pattern.permute.xlu0 0
      %1592 = vperm.xlu0 %1591, %v1514
      %v1593 = vpop.permute.xlu0 %1592
      %1596 = vset.pattern.permute.xlu0 0
      %1597 = vperm.xlu0 %1596, %v1515
      %v1598 = vpop.permute.xlu0 %1597
      %1601 = vset.pattern.permute.xlu0 0
      %1602 = vperm.xlu0 %1601, %v1516
      %v1603 = vpop.permute.xlu0 %1602
      %1606 = vset.pattern.permute.xlu0 0
      %1607 = vperm.xlu0 %1606, %v1517
      %v1608 = vpop.permute.xlu0 %1607
      %1611 = vset.pattern.permute.xlu0 0
      %1612 = vperm.xlu0 %1611, %v1518
      %v1613 = vpop.permute.xlu0 %1612
      %1616 = vset.pattern.permute.xlu0 0
      %1617 = vperm.xlu0 %1616, %v1519
      %v1618 = vpop.permute.xlu0 %1617
      %1621 = vset.pattern.permute.xlu0 0
      %1622 = vperm.xlu0 %1621, %v1520
      %v1623 = vpop.permute.xlu0 %1622
      %1626 = vset.pattern.permute.xlu0 0
      %1627 = vperm.xlu0 %1626, %v1521
      %v1628 = vpop.permute.xlu0 %1627
      %1631 = vset.pattern.permute.xlu0 0
      %1632 = vperm.xlu0 %1631, %v1522
      %v1633 = vpop.permute.xlu0 %1632
      %1636 = vset.pattern.permute.xlu0 0
      %1637 = vperm.xlu0 %1636, %v1523
      %v1638 = vpop.permute.xlu0 %1637
      %1641 = vset.pattern.permute.xlu0 0
      %1642 = vperm.xlu0 %1641, %v1524
      %v1643 = vpop.permute.xlu0 %1642
      %1646 = vset.pattern.permute.xlu0 0
      %1647 = vperm.xlu0 %1646, %v1525
      %v1648 = vpop.permute.xlu0 %1647
      %1651 = vset.pattern.permute.xlu0 0
      %1652 = vperm.xlu0 %1651, %v1526
      %v1653 = vpop.permute.xlu0 %1652
      %1656 = vset.pattern.permute.xlu0 0
      %1657 = vperm.xlu0 %1656, %v1527
      %v1658 = vpop.permute.xlu0 %1657
      %1661 = vset.pattern.permute.xlu0 0
      %1662 = vperm.xlu0 %1661, %v1528
      %v1663 = vpop.permute.xlu0 %1662
      %1666 = vset.pattern.permute.xlu0 0
      %1667 = vperm.xlu0 %1666, %v1529
      %v1668 = vpop.permute.xlu0 %1667
      %1671 = vset.pattern.permute.xlu0 0
      %1672 = vperm.xlu0 %1671, %v1530
      %v1673 = vpop.permute.xlu0 %1672
      %1676 = vset.pattern.permute.xlu0 0
      %1677 = vperm.xlu0 %1676, %v1531
      %v1678 = vpop.permute.xlu0 %1677
      %1681 = vset.pattern.permute.xlu0 0
      %1682 = vperm.xlu0 %1681, %v1532
      %v1683 = vpop.permute.xlu0 %1682
      %1686 = vset.pattern.permute.xlu0 0
      %1687 = vperm.xlu0 %1686, %v1533
      %v1688 = vpop.permute.xlu0 %1687
      %1691 = vset.pattern.permute.xlu0 0
      %1692 = vperm.xlu0 %1691, %v1534
      %v1693 = vpop.permute.xlu0 %1692
      %v1695 = vmul.f32 %v1470, %v1538
      %v1696 = vmul.f32 %v1501, %v1543
      %v1697 = vmul.f32 %v1500, %v1548
      %v1698 = vmul.f32 %v1499, %v1553
      %v1699 = vmul.f32 %v1498, %v1558
      %v1700 = vmul.f32 %v1497, %v1563
      %v1701 = vmul.f32 %v1496, %v1568
      %v1702 = vmul.f32 %v1495, %v1573
      %v1703 = vmul.f32 %v1494, %v1578
      %v1704 = vmul.f32 %v1493, %v1583
      %v1705 = vmul.f32 %v1492, %v1588
      %v1706 = vmul.f32 %v1491, %v1593
      %v1707 = vmul.f32 %v1490, %v1598
      %v1708 = vmul.f32 %v1489, %v1603
      %v1709 = vmul.f32 %v1488, %v1608
      %v1710 = vmul.f32 %v1487, %v1613
      %v1711 = vmul.f32 %v1486, %v1618
      %v1712 = vmul.f32 %v1485, %v1623
      %v1713 = vmul.f32 %v1484, %v1628
      %v1714 = vmul.f32 %v1483, %v1633
      %v1715 = vmul.f32 %v1482, %v1638
      %v1716 = vmul.f32 %v1481, %v1643
      %v1717 = vmul.f32 %v1480, %v1648
      %v1718 = vmul.f32 %v1479, %v1653
      %v1719 = vmul.f32 %v1478, %v1658
      %v1720 = vmul.f32 %v1477, %v1663
      %v1721 = vmul.f32 %v1476, %v1668
      %v1722 = vmul.f32 %v1475, %v1673
      %v1723 = vmul.f32 %v1474, %v1678
      %v1724 = vmul.f32 %v1473, %v1683
      %v1725 = vmul.f32 %v1472, %v1688
      %v1726 = vmul.f32 %v1471, %v1693
      %v1727 = vpack.c.bf16 %v1696, %v1695
      %v1728 = vpack.c.bf16 %v1698, %v1697
      %v1729 = vpack.c.bf16 %v1700, %v1699
      %v1730 = vpack.c.bf16 %v1702, %v1701
      %v1731 = vpack.c.bf16 %v1704, %v1703
      %v1732 = vpack.c.bf16 %v1706, %v1705
      %v1733 = vpack.c.bf16 %v1708, %v1707
      %v1734 = vpack.c.bf16 %v1710, %v1709
      %v1735 = vpack.c.bf16 %v1712, %v1711
      %v1736 = vpack.c.bf16 %v1714, %v1713
      %v1737 = vpack.c.bf16 %v1716, %v1715
      %v1738 = vpack.c.bf16 %v1718, %v1717
      %v1739 = vpack.c.bf16 %v1720, %v1719
      %v1740 = vpack.c.bf16 %v1722, %v1721
      %v1741 = vpack.c.bf16 %v1724, %v1723
      %v1742 = vpack.c.bf16 %v1726, %v1725
      %s1743 = scalar_lea.vmem %s3, 128
      %v1744 = vld [vmem:[%s1743] sm:$0xf]
      %v1745 = vld [vmem:[%s1743 + $0x4] sm:$0xf]
      %v1746 = vld [vmem:[%s1743 + $0x8] sm:$0xf]
      %v1747 = vld [vmem:[%s1743 + $0xc] sm:$0xf]
      %v1748 = vld [vmem:[%s1743 + $0x10] sm:$0xf]
      %v1749 = vld [vmem:[%s1743 + $0x14] sm:$0xf]
      %v1750 = vld [vmem:[%s1743 + $0x18] sm:$0xf]
      %v1751 = vld [vmem:[%s1743 + $0x1c] sm:$0xf]
      %v1752 = vld [vmem:[%s1743 + $0x20] sm:$0xf]
      %v1753 = vld [vmem:[%s1743 + $0x24] sm:$0xf]
      %v1754 = vld [vmem:[%s1743 + $0x28] sm:$0xf]
      %v1755 = vld [vmem:[%s1743 + $0x2c] sm:$0xf]
      %v1756 = vld [vmem:[%s1743 + $0x30] sm:$0xf]
      %v1757 = vld [vmem:[%s1743 + $0x34] sm:$0xf]
      %v1758 = vld [vmem:[%s1743 + $0x38] sm:$0xf]
      %v1759 = vld [vmem:[%s1743 + $0x3c] sm:$0xf]
      %v1776 = vunpack.c.l.b16 %v1744
      %v1777 = vunpack.c.l.b16 %v1745
      %v1778 = vunpack.c.l.b16 %v1746
      %v1779 = vunpack.c.l.b16 %v1747
      %v1780 = vunpack.c.l.b16 %v1748
      %v1781 = vunpack.c.l.b16 %v1749
      %v1782 = vunpack.c.l.b16 %v1750
      %v1783 = vunpack.c.l.b16 %v1751
      %v1784 = vunpack.c.l.b16 %v1752
      %v1785 = vunpack.c.l.b16 %v1753
      %v1786 = vunpack.c.l.b16 %v1754
      %v1787 = vunpack.c.l.b16 %v1755
      %v1788 = vunpack.c.l.b16 %v1756
      %v1789 = vunpack.c.l.b16 %v1757
      %v1790 = vunpack.c.l.b16 %v1758
      %v1791 = vunpack.c.l.b16 %v1759
      %v1792 = vpack.c.b16 %v1777, %v1776
      %v1793 = vpack.c.b16 %v1779, %v1778
      %v1794 = vpack.c.b16 %v1781, %v1780
      %v1795 = vpack.c.b16 %v1783, %v1782
      %v1796 = vpack.c.b16 %v1785, %v1784
      %v1797 = vpack.c.b16 %v1787, %v1786
      %v1798 = vpack.c.b16 %v1789, %v1788
      %v1799 = vpack.c.b16 %v1791, %v1790
      %1808 = vmatprep.subr.bf16.mxu0 0
      %1809 = vmatpush1.bf16.msra.mxu0 %v1792
      %1810 = vmatprep.subr.bf16.mxu0 0
      %1811 = vmatpush1.bf16.msra.mxu0 %v1793
      %1812 = vmatprep.subr.bf16.mxu0 0
      %1813 = vmatpush1.bf16.msra.mxu0 %v1794
      %1814 = vmatprep.subr.bf16.mxu0 0
      %1815 = vmatpush1.bf16.msra.mxu0 %v1795
      %1816 = vmatprep.subr.bf16.mxu0 0
      %1817 = vmatpush1.bf16.msra.mxu0 %v1796
      %1818 = vmatprep.subr.bf16.mxu0 0
      %1819 = vmatpush1.bf16.msra.mxu0 %v1797
      %1820 = vmatprep.subr.bf16.mxu0 0
      %1821 = vmatpush1.bf16.msra.mxu0 %v1798
      %1822 = vmatprep.subr.bf16.mxu0 0
      %1823 = vmatpush1.bf16.msra.mxu0 %v1799
      %1824 = vmatprep.subr.bf16.mxu0 0
      %1825 = vmatpush1.bf16.msra.mxu0 0
      %1826 = vmatprep.subr.bf16.mxu0 0
      %1827 = vmatpush1.bf16.msra.mxu0 0
      %1828 = vmatprep.subr.bf16.mxu0 0
      %1829 = vmatpush1.bf16.msra.mxu0 0
      %1830 = vmatprep.subr.bf16.mxu0 0
      %1831 = vmatpush1.bf16.msra.mxu0 0
      %1832 = vmatprep.subr.bf16.mxu0 0
      %1833 = vmatpush1.bf16.msra.mxu0 0
      %1834 = vmatprep.subr.bf16.mxu0 0
      %1835 = vmatpush1.bf16.msra.mxu0 0
      %1836 = vmatprep.subr.bf16.mxu0 0
      %1837 = vmatpush1.bf16.msra.mxu0 0
      %1838 = vmatprep.subr.bf16.mxu0 0
      %1839 = vmatpush1.bf16.msra.mxu0 0
      %1840 = vmatprep.mubr.bf16.mxu0 0
      %1841 = vmatmul.mubr.bf16.gmra.mrb[0].mxu0 %v1727
      %v1842 = vpop.f32.mrb[0].mxu0
      %v1843 = vadd.f32 0.0, %v1842
      %v1844 = vpop.f32.mrb[0].mxu0
      %v1845 = vpop.f32.mrb[0].mxu0
      %v1846 = vadd.f32 0.0, %v1845
      %v1847 = vpop.f32.mrb[0].mxu0
      %1848 = vmatprep.mubr.bf16.mxu0 0
      %1849 = vmatmul.mubr.bf16.gmra.mrb[0].mxu0 %v1728
      %v1850 = vpop.f32.mrb[0].mxu0
      %v1851 = vadd.f32 0.0, %v1850
      %v1852 = vpop.f32.mrb[0].mxu0
      %v1853 = vpop.f32.mrb[0].mxu0
      %v1854 = vadd.f32 0.0, %v1853
      %v1855 = vpop.f32.mrb[0].mxu0
      %1856 = vmatprep.mubr.bf16.mxu0 0
      %1857 = vmatmul.mubr.bf16.gmra.mrb[0].mxu0 %v1729
      %v1858 = vpop.f32.mrb[0].mxu0
      %v1859 = vadd.f32 0.0, %v1858
      %v1860 = vpop.f32.mrb[0].mxu0
      %v1861 = vpop.f32.mrb[0].mxu0
      %v1862 = vadd.f32 0.0, %v1861
      %v1863 = vpop.f32.mrb[0].mxu0
      %1864 = vmatprep.mubr.bf16.mxu0 0
      %1865 = vmatmul.mubr.bf16.gmra.mrb[0].mxu0 %v1730
      %v1866 = vpop.f32.mrb[0].mxu0
      %v1867 = vadd.f32 0.0, %v1866
      %v1868 = vpop.f32.mrb[0].mxu0
      %v1869 = vpop.f32.mrb[0].mxu0
      %v1870 = vadd.f32 0.0, %v1869
      %v1871 = vpop.f32.mrb[0].mxu0
      %1872 = vmatprep.mubr.bf16.mxu0 0
      %1873 = vmatmul.mubr.bf16.gmra.mrb[0].mxu0 %v1731
      %v1874 = vpop.f32.mrb[0].mxu0
      %v1875 = vadd.f32 0.0, %v1874
      %v1876 = vpop.f32.mrb[0].mxu0
      %v1877 = vpop.f32.mrb[0].mxu0
      %v1878 = vadd.f32 0.0, %v1877
      %v1879 = vpop.f32.mrb[0].mxu0
      %1880 = vmatprep.mubr.bf16.mxu0 0
      %1881 = vmatmul.mubr.bf16.gmra.mrb[0].mxu0 %v1732
      %v1882 = vpop.f32.mrb[0].mxu0
      %v1883 = vadd.f32 0.0, %v1882
      %v1884 = vpop.f32.mrb[0].mxu0
      %v1885 = vpop.f32.mrb[0].mxu0
      %v1886 = vadd.f32 0.0, %v1885
      %v1887 = vpop.f32.mrb[0].mxu0
      %1888 = vmatprep.mubr.bf16.mxu0 0
      %1889 = vmatmul.mubr.bf16.gmra.mrb[0].mxu0 %v1733
      %v1890 = vpop.f32.mrb[0].mxu0
      %v1891 = vadd.f32 0.0, %v1890
      %v1892 = vpop.f32.mrb[0].mxu0
      %v1893 = vpop.f32.mrb[0].mxu0
      %v1894 = vadd.f32 0.0, %v1893
      %v1895 = vpop.f32.mrb[0].mxu0
      %1896 = vmatprep.mubr.bf16.mxu0 0
      %1897 = vmatmul.mubr.bf16.gmra.mrb[0].mxu0 %v1734
      %v1898 = vpop.f32.mrb[0].mxu0
      %v1899 = vadd.f32 0.0, %v1898
      %v1900 = vpop.f32.mrb[0].mxu0
      %v1901 = vpop.f32.mrb[0].mxu0
      %v1902 = vadd.f32 0.0, %v1901
      %v1903 = vpop.f32.mrb[0].mxu0
      %1904 = vmatprep.mubr.bf16.mxu0 0
      %1905 = vmatmul.mubr.bf16.gmra.mrb[0].mxu0 %v1735
      %v1906 = vpop.f32.mrb[0].mxu0
      %v1907 = vadd.f32 0.0, %v1906
      %v1908 = vpop.f32.mrb[0].mxu0
      %v1909 = vpop.f32.mrb[0].mxu0
      %v1910 = vadd.f32 0.0, %v1909
      %v1911 = vpop.f32.mrb[0].mxu0
      %1912 = vmatprep.mubr.bf16.mxu0 0
      %1913 = vmatmul.mubr.bf16.gmra.mrb[0].mxu0 %v1736
      %v1914 = vpop.f32.mrb[0].mxu0
      %v1915 = vadd.f32 0.0, %v1914
      %v1916 = vpop.f32.mrb[0].mxu0
      %v1917 = vpop.f32.mrb[0].mxu0
      %v1918 = vadd.f32 0.0, %v1917
      %v1919 = vpop.f32.mrb[0].mxu0
      %1920 = vmatprep.mubr.bf16.mxu0 0
      %1921 = vmatmul.mubr.bf16.gmra.mrb[0].mxu0 %v1737
      %v1922 = vpop.f32.mrb[0].mxu0
      %v1923 = vadd.f32 0.0, %v1922
      %v1924 = vpop.f32.mrb[0].mxu0
      %v1925 = vpop.f32.mrb[0].mxu0
      %v1926 = vadd.f32 0.0, %v1925
      %v1927 = vpop.f32.mrb[0].mxu0
      %1928 = vmatprep.mubr.bf16.mxu0 0
      %1929 = vmatmul.mubr.bf16.gmra.mrb[0].mxu0 %v1738
      %v1930 = vpop.f32.mrb[0].mxu0
      %v1931 = vadd.f32 0.0, %v1930
      %v1932 = vpop.f32.mrb[0].mxu0
      %v1933 = vpop.f32.mrb[0].mxu0
      %v1934 = vadd.f32 0.0, %v1933
      %v1935 = vpop.f32.mrb[0].mxu0
      %1936 = vmatprep.mubr.bf16.mxu0 0
      %1937 = vmatmul.mubr.bf16.gmra.mrb[0].mxu0 %v1739
      %v1938 = vpop.f32.mrb[0].mxu0
      %v1939 = vadd.f32 0.0, %v1938
      %v1940 = vpop.f32.mrb[0].mxu0
      %v1941 = vpop.f32.mrb[0].mxu0
      %v1942 = vadd.f32 0.0, %v1941
      %v1943 = vpop.f32.mrb[0].mxu0
      %1944 = vmatprep.mubr.bf16.mxu0 0
      %1945 = vmatmul.mubr.bf16.gmra.mrb[0].mxu0 %v1740
      %v1946 = vpop.f32.mrb[0].mxu0
      %v1947 = vadd.f32 0.0, %v1946
      %v1948 = vpop.f32.mrb[0].mxu0
      %v1949 = vpop.f32.mrb[0].mxu0
      %v1950 = vadd.f32 0.0, %v1949
      %v1951 = vpop.f32.mrb[0].mxu0
      %1952 = vmatprep.mubr.bf16.mxu0 0
      %1953 = vmatmul.mubr.bf16.gmra.mrb[0].mxu0 %v1741
      %v1954 = vpop.f32.mrb[0].mxu0
      %v1955 = vadd.f32 0.0, %v1954
      %v1956 = vpop.f32.mrb[0].mxu0
      %v1957 = vpop.f32.mrb[0].mxu0
      %v1958 = vadd.f32 0.0, %v1957
      %v1959 = vpop.f32.mrb[0].mxu0
      %1960 = vmatprep.mubr.bf16.mxu0 0
      %1961 = vmatmul.mubr.bf16.gmra.mrb[0].mxu0 %v1742
      %v1962 = vpop.f32.mrb[0].mxu0
      %v1963 = vadd.f32 0.0, %v1962
      %v1964 = vpop.f32.mrb[0].mxu0
      %v1965 = vpop.f32.mrb[0].mxu0
      %v1966 = vadd.f32 0.0, %v1965
      %v1967 = vpop.f32.mrb[0].mxu0
      %1968 = vdwg.mxu0
      %v1969 = vadd.f32 %v1311, %v1843
      %v1970 = vadd.f32 %v1314, %v1846
      %v1971 = vadd.f32 %v1319, %v1851
      %v1972 = vadd.f32 %v1322, %v1854
      %v1973 = vadd.f32 %v1327, %v1859
      %v1974 = vadd.f32 %v1330, %v1862
      %v1975 = vadd.f32 %v1335, %v1867
      %v1976 = vadd.f32 %v1338, %v1870
      %v1977 = vadd.f32 %v1343, %v1875
      %v1978 = vadd.f32 %v1346, %v1878
      %v1979 = vadd.f32 %v1351, %v1883
      %v1980 = vadd.f32 %v1354, %v1886
      %v1981 = vadd.f32 %v1359, %v1891
      %v1982 = vadd.f32 %v1362, %v1894
      %v1983 = vadd.f32 %v1367, %v1899
      %v1984 = vadd.f32 %v1370, %v1902
      %v1985 = vadd.f32 %v1375, %v1907
      %v1986 = vadd.f32 %v1378, %v1910
      %v1987 = vadd.f32 %v1383, %v1915
      %v1988 = vadd.f32 %v1386, %v1918
      %v1989 = vadd.f32 %v1391, %v1923
      %v1990 = vadd.f32 %v1394, %v1926
      %v1991 = vadd.f32 %v1399, %v1931
      %v1992 = vadd.f32 %v1402, %v1934
      %v1993 = vadd.f32 %v1407, %v1939
      %v1994 = vadd.f32 %v1410, %v1942
      %v1995 = vadd.f32 %v1415, %v1947
      %v1996 = vadd.f32 %v1418, %v1950
      %v1997 = vadd.f32 %v1423, %v1955
      %v1998 = vadd.f32 %v1426, %v1958
      %v1999 = vadd.f32 %v1431, %v1963
      %v2000 = vadd.f32 %v1434, %v1966
      %s2001 = scalar_lea.vmem %s4, 768
      %v2002 = vld [vmem:[%s2001] sm:$0xff]
      %v2003 = vld [vmem:[%s2001 + $0x8] sm:$0xff]
      %v2004 = vld [vmem:[%s2001 + $0x10] sm:$0xff]
      %v2005 = vld [vmem:[%s2001 + $0x18] sm:$0xff]
      %v2006 = vld [vmem:[%s2001 + $0x20] sm:$0xff]
      %v2007 = vld [vmem:[%s2001 + $0x28] sm:$0xff]
      %v2008 = vld [vmem:[%s2001 + $0x30] sm:$0xff]
      %v2009 = vld [vmem:[%s2001 + $0x38] sm:$0xff]
      %v2010 = vld [vmem:[%s2001 + $0x40] sm:$0xff]
      %v2011 = vld [vmem:[%s2001 + $0x48] sm:$0xff]
      %v2012 = vld [vmem:[%s2001 + $0x50] sm:$0xff]
      %v2013 = vld [vmem:[%s2001 + $0x58] sm:$0xff]
      %v2014 = vld [vmem:[%s2001 + $0x60] sm:$0xff]
      %v2015 = vld [vmem:[%s2001 + $0x68] sm:$0xff]
      %v2016 = vld [vmem:[%s2001 + $0x70] sm:$0xff]
      %v2017 = vld [vmem:[%s2001 + $0x78] sm:$0xff]
      %v2018 = vld [vmem:[%s2001 + $0x80] sm:$0xff]
      %v2019 = vld [vmem:[%s2001 + $0x88] sm:$0xff]
      %v2020 = vld [vmem:[%s2001 + $0x90] sm:$0xff]
      %v2021 = vld [vmem:[%s2001 + $0x98] sm:$0xff]
      %v2022 = vld [vmem:[%s2001 + $0xa0] sm:$0xff]
      %v2023 = vld [vmem:[%s2001 + $0xa8] sm:$0xff]
      %v2024 = vld [vmem:[%s2001 + $0xb0] sm:$0xff]
      %v2025 = vld [vmem:[%s2001 + $0xb8] sm:$0xff]
      %v2026 = vld [vmem:[%s2001 + $0xc0] sm:$0xff]
      %v2027 = vld [vmem:[%s2001 + $0xc8] sm:$0xff]
      %v2028 = vld [vmem:[%s2001 + $0xd0] sm:$0xff]
      %v2029 = vld [vmem:[%s2001 + $0xd8] sm:$0xff]
      %v2030 = vld [vmem:[%s2001 + $0xe0] sm:$0xff]
      %v2031 = vld [vmem:[%s2001 + $0xe8] sm:$0xff]
      %v2032 = vld [vmem:[%s2001 + $0xf0] sm:$0xff]
      %v2033 = vld [vmem:[%s2001 + $0xf8] sm:$0xff]
      %2035 = vset.pattern.permute.xlu0 0
      %2036 = vperm.xlu0 %2035, %v2002
      %v2037 = vpop.permute.xlu0 %2036
      %2040 = vset.pattern.permute.xlu0 0
      %2041 = vperm.xlu0 %2040, %v2003
      %v2042 = vpop.permute.xlu0 %2041
      %2045 = vset.pattern.permute.xlu0 0
      %2046 = vperm.xlu0 %2045, %v2004
      %v2047 = vpop.permute.xlu0 %2046
      %2050 = vset.pattern.permute.xlu0 0
      %2051 = vperm.xlu0 %2050, %v2005
      %v2052 = vpop.permute.xlu0 %2051
      %2055 = vset.pattern.permute.xlu0 0
      %2056 = vperm.xlu0 %2055, %v2006
      %v2057 = vpop.permute.xlu0 %2056
      %2060 = vset.pattern.permute.xlu0 0
      %2061 = vperm.xlu0 %2060, %v2007
      %v2062 = vpop.permute.xlu0 %2061
      %2065 = vset.pattern.permute.xlu0 0
      %2066 = vperm.xlu0 %2065, %v2008
      %v2067 = vpop.permute.xlu0 %2066
      %2070 = vset.pattern.permute.xlu0 0
      %2071 = vperm.xlu0 %2070, %v2009
      %v2072 = vpop.permute.xlu0 %2071
      %2075 = vset.pattern.permute.xlu0 0
      %2076 = vperm.xlu0 %2075, %v2010
      %v2077 = vpop.permute.xlu0 %2076
      %2080 = vset.pattern.permute.xlu0 0
      %2081 = vperm.xlu0 %2080, %v2011
      %v2082 = vpop.permute.xlu0 %2081
      %2085 = vset.pattern.permute.xlu0 0
      %2086 = vperm.xlu0 %2085, %v2012
      %v2087 = vpop.permute.xlu0 %2086
      %2090 = vset.pattern.permute.xlu0 0
      %2091 = vperm.xlu0 %2090, %v2013
      %v2092 = vpop.permute.xlu0 %2091
      %2095 = vset.pattern.permute.xlu0 0
      %2096 = vperm.xlu0 %2095, %v2014
      %v2097 = vpop.permute.xlu0 %2096
      %2100 = vset.pattern.permute.xlu0 0
      %2101 = vperm.xlu0 %2100, %v2015
      %v2102 = vpop.permute.xlu0 %2101
      %2105 = vset.pattern.permute.xlu0 0
      %2106 = vperm.xlu0 %2105, %v2016
      %v2107 = vpop.permute.xlu0 %2106
      %2110 = vset.pattern.permute.xlu0 0
      %2111 = vperm.xlu0 %2110, %v2017
      %v2112 = vpop.permute.xlu0 %2111
      %2115 = vset.pattern.permute.xlu0 0
      %2116 = vperm.xlu0 %2115, %v2018
      %v2117 = vpop.permute.xlu0 %2116
      %2120 = vset.pattern.permute.xlu0 0
      %2121 = vperm.xlu0 %2120, %v2019
      %v2122 = vpop.permute.xlu0 %2121
      %2125 = vset.pattern.permute.xlu0 0
      %2126 = vperm.xlu0 %2125, %v2020
      %v2127 = vpop.permute.xlu0 %2126
      %2130 = vset.pattern.permute.xlu0 0
      %2131 = vperm.xlu0 %2130, %v2021
      %v2132 = vpop.permute.xlu0 %2131
      %2135 = vset.pattern.permute.xlu0 0
      %2136 = vperm.xlu0 %2135, %v2022
      %v2137 = vpop.permute.xlu0 %2136
      %2140 = vset.pattern.permute.xlu0 0
      %2141 = vperm.xlu0 %2140, %v2023
      %v2142 = vpop.permute.xlu0 %2141
      %2145 = vset.pattern.permute.xlu0 0
      %2146 = vperm.xlu0 %2145, %v2024
      %v2147 = vpop.permute.xlu0 %2146
      %2150 = vset.pattern.permute.xlu0 0
      %2151 = vperm.xlu0 %2150, %v2025
      %v2152 = vpop.permute.xlu0 %2151
      %2155 = vset.pattern.permute.xlu0 0
      %2156 = vperm.xlu0 %2155, %v2026
      %v2157 = vpop.permute.xlu0 %2156
      %2160 = vset.pattern.permute.xlu0 0
      %2161 = vperm.xlu0 %2160, %v2027
      %v2162 = vpop.permute.xlu0 %2161
      %2165 = vset.pattern.permute.xlu0 0
      %2166 = vperm.xlu0 %2165, %v2028
      %v2167 = vpop.permute.xlu0 %2166
      %2170 = vset.pattern.permute.xlu0 0
      %2171 = vperm.xlu0 %2170, %v2029
      %v2172 = vpop.permute.xlu0 %2171
      %2175 = vset.pattern.permute.xlu0 0
      %2176 = vperm.xlu0 %2175, %v2030
      %v2177 = vpop.permute.xlu0 %2176
      %2180 = vset.pattern.permute.xlu0 0
      %2181 = vperm.xlu0 %2180, %v2031
      %v2182 = vpop.permute.xlu0 %2181
      %2185 = vset.pattern.permute.xlu0 0
      %2186 = vperm.xlu0 %2185, %v2032
      %v2187 = vpop.permute.xlu0 %2186
      %2190 = vset.pattern.permute.xlu0 0
      %2191 = vperm.xlu0 %2190, %v2033
      %v2192 = vpop.permute.xlu0 %2191
      %v2194 = vmul.f32 %v504, %v2037
      %v2195 = vmul.f32 %v503, %v2042
      %v2196 = vmul.f32 %v502, %v2047
      %v2197 = vmul.f32 %v501, %v2052
      %v2198 = vmul.f32 %v500, %v2057
      %v2199 = vmul.f32 %v499, %v2062
      %v2200 = vmul.f32 %v498, %v2067
      %v2201 = vmul.f32 %v497, %v2072
      %v2202 = vmul.f32 %v496, %v2077
      %v2203 = vmul.f32 %v495, %v2082
      %v2204 = vmul.f32 %v494, %v2087
      %v2205 = vmul.f32 %v493, %v2092
      %v2206 = vmul.f32 %v492, %v2097
      %v2207 = vmul.f32 %v491, %v2102
      %v2208 = vmul.f32 %v490, %v2107
      %v2209 = vmul.f32 %v489, %v2112
      %v2210 = vmul.f32 %v488, %v2117
      %v2211 = vmul.f32 %v487, %v2122
      %v2212 = vmul.f32 %v486, %v2127
      %v2213 = vmul.f32 %v485, %v2132
      %v2214 = vmul.f32 %v484, %v2137
      %v2215 = vmul.f32 %v483, %v2142
      %v2216 = vmul.f32 %v482, %v2147
      %v2217 = vmul.f32 %v481, %v2152
      %v2218 = vmul.f32 %v480, %v2157
      %v2219 = vmul.f32 %v479, %v2162
      %v2220 = vmul.f32 %v478, %v2167
      %v2221 = vmul.f32 %v477, %v2172
      %v2222 = vmul.f32 %v476, %v2177
      %v2223 = vmul.f32 %v475, %v2182
      %v2224 = vmul.f32 %v474, %v2187
      %v2225 = vmul.f32 %v473, %v2192
      %v2226 = vpack.c.bf16 %v2195, %v2194
      %v2227 = vpack.c.bf16 %v2197, %v2196
      %v2228 = vpack.c.bf16 %v2199, %v2198
      %v2229 = vpack.c.bf16 %v2201, %v2200
      %v2230 = vpack.c.bf16 %v2203, %v2202
      %v2231 = vpack.c.bf16 %v2205, %v2204
      %v2232 = vpack.c.bf16 %v2207, %v2206
      %v2233 = vpack.c.bf16 %v2209, %v2208
      %v2234 = vpack.c.bf16 %v2211, %v2210
      %v2235 = vpack.c.bf16 %v2213, %v2212
      %v2236 = vpack.c.bf16 %v2215, %v2214
      %v2237 = vpack.c.bf16 %v2217, %v2216
      %v2238 = vpack.c.bf16 %v2219, %v2218
      %v2239 = vpack.c.bf16 %v2221, %v2220
      %v2240 = vpack.c.bf16 %v2223, %v2222
      %v2241 = vpack.c.bf16 %v2225, %v2224
      %s2242 = scalar_lea.vmem %s3, 192
      %v2243 = vld [vmem:[%s2242] sm:$0xf]
      %v2244 = vld [vmem:[%s2242 + $0x4] sm:$0xf]
      %v2245 = vld [vmem:[%s2242 + $0x8] sm:$0xf]
      %v2246 = vld [vmem:[%s2242 + $0xc] sm:$0xf]
      %v2247 = vld [vmem:[%s2242 + $0x10] sm:$0xf]
      %v2248 = vld [vmem:[%s2242 + $0x14] sm:$0xf]
      %v2249 = vld [vmem:[%s2242 + $0x18] sm:$0xf]
      %v2250 = vld [vmem:[%s2242 + $0x1c] sm:$0xf]
      %v2251 = vld [vmem:[%s2242 + $0x20] sm:$0xf]
      %v2252 = vld [vmem:[%s2242 + $0x24] sm:$0xf]
      %v2253 = vld [vmem:[%s2242 + $0x28] sm:$0xf]
      %v2254 = vld [vmem:[%s2242 + $0x2c] sm:$0xf]
      %v2255 = vld [vmem:[%s2242 + $0x30] sm:$0xf]
      %v2256 = vld [vmem:[%s2242 + $0x34] sm:$0xf]
      %v2257 = vld [vmem:[%s2242 + $0x38] sm:$0xf]
      %v2258 = vld [vmem:[%s2242 + $0x3c] sm:$0xf]
      %v2275 = vunpack.c.l.b16 %v2243
      %v2276 = vunpack.c.l.b16 %v2244
      %v2277 = vunpack.c.l.b16 %v2245
      %v2278 = vunpack.c.l.b16 %v2246
      %v2279 = vunpack.c.l.b16 %v2247
      %v2280 = vunpack.c.l.b16 %v2248
      %v2281 = vunpack.c.l.b16 %v2249
      %v2282 = vunpack.c.l.b16 %v2250
      %v2283 = vunpack.c.l.b16 %v2251
      %v2284 = vunpack.c.l.b16 %v2252
      %v2285 = vunpack.c.l.b16 %v2253
      %v2286 = vunpack.c.l.b16 %v2254
      %v2287 = vunpack.c.l.b16 %v2255
      %v2288 = vunpack.c.l.b16 %v2256
      %v2289 = vunpack.c.l.b16 %v2257
      %v2290 = vunpack.c.l.b16 %v2258
      %v2291 = vpack.c.b16 %v2276, %v2275
      %v2292 = vpack.c.b16 %v2278, %v2277
      %v2293 = vpack.c.b16 %v2280, %v2279
      %v2294 = vpack.c.b16 %v2282, %v2281
      %v2295 = vpack.c.b16 %v2284, %v2283
      %v2296 = vpack.c.b16 %v2286, %v2285
      %v2297 = vpack.c.b16 %v2288, %v2287
      %v2298 = vpack.c.b16 %v2290, %v2289
      %2307 = vmatprep.subr.bf16.mxu0 0
      %2308 = vmatpush1.bf16.msra.mxu0 %v2291
      %2309 = vmatprep.subr.bf16.mxu0 0
      %2310 = vmatpush1.bf16.msra.mxu0 %v2292
      %2311 = vmatprep.subr.bf16.mxu0 0
      %2312 = vmatpush1.bf16.msra.mxu0 %v2293
      %2313 = vmatprep.subr.bf16.mxu0 0
      %2314 = vmatpush1.bf16.msra.mxu0 %v2294
      %2315 = vmatprep.subr.bf16.mxu0 0
      %2316 = vmatpush1.bf16.msra.mxu0 %v2295
      %2317 = vmatprep.subr.bf16.mxu0 0
      %2318 = vmatpush1.bf16.msra.mxu0 %v2296
      %2319 = vmatprep.subr.bf16.mxu0 0
      %2320 = vmatpush1.bf16.msra.mxu0 %v2297
      %2321 = vmatprep.subr.bf16.mxu0 0
      %2322 = vmatpush1.bf16.msra.mxu0 %v2298
      %2323 = vmatprep.subr.bf16.mxu0 0
      %2324 = vmatpush1.bf16.msra.mxu0 0
      %2325 = vmatprep.subr.bf16.mxu0 0
      %2326 = vmatpush1.bf16.msra.mxu0 0
      %2327 = vmatprep.subr.bf16.mxu0 0
      %2328 = vmatpush1.bf16.msra.mxu0 0
      %2329 = vmatprep.subr.bf16.mxu0 0
      %2330 = vmatpush1.bf16.msra.mxu0 0
      %2331 = vmatprep.subr.bf16.mxu0 0
      %2332 = vmatpush1.bf16.msra.mxu0 0
      %2333 = vmatprep.subr.bf16.mxu0 0
      %2334 = vmatpush1.bf16.msra.mxu0 0
      %2335 = vmatprep.subr.bf16.mxu0 0
      %2336 = vmatpush1.bf16.msra.mxu0 0
      %2337 = vmatprep.subr.bf16.mxu0 0
      %2338 = vmatpush1.bf16.msra.mxu0 0
      %2339 = vmatprep.mubr.bf16.mxu0 0
      %2340 = vmatmul.mubr.bf16.gmra.mrb[0].mxu0 %v2226
      %v2341 = vpop.f32.mrb[0].mxu0
      %v2342 = vadd.f32 0.0, %v2341
      %v2343 = vpop.f32.mrb[0].mxu0
      %v2344 = vpop.f32.mrb[0].mxu0
      %v2345 = vadd.f32 0.0, %v2344
      %v2346 = vpop.f32.mrb[0].mxu0
      %2347 = vmatprep.mubr.bf16.mxu0 0
      %2348 = vmatmul.mubr.bf16.gmra.mrb[0].mxu0 %v2227
      %v2349 = vpop.f32.mrb[0].mxu0
      %v2350 = vadd.f32 0.0, %v2349
      %v2351 = vpop.f32.mrb[0].mxu0
      %v2352 = vpop.f32.mrb[0].mxu0
      %v2353 = vadd.f32 0.0, %v2352
      %v2354 = vpop.f32.mrb[0].mxu0
      %2355 = vmatprep.mubr.bf16.mxu0 0
      %2356 = vmatmul.mubr.bf16.gmra.mrb[0].mxu0 %v2228
      %v2357 = vpop.f32.mrb[0].mxu0
      %v2358 = vadd.f32 0.0, %v2357
      %v2359 = vpop.f32.mrb[0].mxu0
      %v2360 = vpop.f32.mrb[0].mxu0
      %v2361 = vadd.f32 0.0, %v2360
      %v2362 = vpop.f32.mrb[0].mxu0
      %2363 = vmatprep.mubr.bf16.mxu0 0
      %2364 = vmatmul.mubr.bf16.gmra.mrb[0].mxu0 %v2229
      %v2365 = vpop.f32.mrb[0].mxu0
      %v2366 = vadd.f32 0.0, %v2365
      %v2367 = vpop.f32.mrb[0].mxu0
      %v2368 = vpop.f32.mrb[0].mxu0
      %v2369 = vadd.f32 0.0, %v2368
      %v2370 = vpop.f32.mrb[0].mxu0
      %2371 = vmatprep.mubr.bf16.mxu0 0
      %2372 = vmatmul.mubr.bf16.gmra.mrb[0].mxu0 %v2230
      %v2373 = vpop.f32.mrb[0].mxu0
      %v2374 = vadd.f32 0.0, %v2373
      %v2375 = vpop.f32.mrb[0].mxu0
      %v2376 = vpop.f32.mrb[0].mxu0
      %v2377 = vadd.f32 0.0, %v2376
      %v2378 = vpop.f32.mrb[0].mxu0
      %2379 = vmatprep.mubr.bf16.mxu0 0
      %2380 = vmatmul.mubr.bf16.gmra.mrb[0].mxu0 %v2231
      %v2381 = vpop.f32.mrb[0].mxu0
      %v2382 = vadd.f32 0.0, %v2381
      %v2383 = vpop.f32.mrb[0].mxu0
      %v2384 = vpop.f32.mrb[0].mxu0
      %v2385 = vadd.f32 0.0, %v2384
      %v2386 = vpop.f32.mrb[0].mxu0
      %2387 = vmatprep.mubr.bf16.mxu0 0
      %2388 = vmatmul.mubr.bf16.gmra.mrb[0].mxu0 %v2232
      %v2389 = vpop.f32.mrb[0].mxu0
      %v2390 = vadd.f32 0.0, %v2389
      %v2391 = vpop.f32.mrb[0].mxu0
      %v2392 = vpop.f32.mrb[0].mxu0
      %v2393 = vadd.f32 0.0, %v2392
      %v2394 = vpop.f32.mrb[0].mxu0
      %2395 = vmatprep.mubr.bf16.mxu0 0
      %2396 = vmatmul.mubr.bf16.gmra.mrb[0].mxu0 %v2233
      %v2397 = vpop.f32.mrb[0].mxu0
      %v2398 = vadd.f32 0.0, %v2397
      %v2399 = vpop.f32.mrb[0].mxu0
      %v2400 = vpop.f32.mrb[0].mxu0
      %v2401 = vadd.f32 0.0, %v2400
      %v2402 = vpop.f32.mrb[0].mxu0
      %2403 = vmatprep.mubr.bf16.mxu0 0
      %2404 = vmatmul.mubr.bf16.gmra.mrb[0].mxu0 %v2234
      %v2405 = vpop.f32.mrb[0].mxu0
      %v2406 = vadd.f32 0.0, %v2405
      %v2407 = vpop.f32.mrb[0].mxu0
      %v2408 = vpop.f32.mrb[0].mxu0
      %v2409 = vadd.f32 0.0, %v2408
      %v2410 = vpop.f32.mrb[0].mxu0
      %2411 = vmatprep.mubr.bf16.mxu0 0
      %2412 = vmatmul.mubr.bf16.gmra.mrb[0].mxu0 %v2235
      %v2413 = vpop.f32.mrb[0].mxu0
      %v2414 = vadd.f32 0.0, %v2413
      %v2415 = vpop.f32.mrb[0].mxu0
      %v2416 = vpop.f32.mrb[0].mxu0
      %v2417 = vadd.f32 0.0, %v2416
      %v2418 = vpop.f32.mrb[0].mxu0
      %2419 = vmatprep.mubr.bf16.mxu0 0
      %2420 = vmatmul.mubr.bf16.gmra.mrb[0].mxu0 %v2236
      %v2421 = vpop.f32.mrb[0].mxu0
      %v2422 = vadd.f32 0.0, %v2421
      %v2423 = vpop.f32.mrb[0].mxu0
      %v2424 = vpop.f32.mrb[0].mxu0
      %v2425 = vadd.f32 0.0, %v2424
      %v2426 = vpop.f32.mrb[0].mxu0
      %2427 = vmatprep.mubr.bf16.mxu0 0
      %2428 = vmatmul.mubr.bf16.gmra.mrb[0].mxu0 %v2237
      %v2429 = vpop.f32.mrb[0].mxu0
      %v2430 = vadd.f32 0.0, %v2429
      %v2431 = vpop.f32.mrb[0].mxu0
      %v2432 = vpop.f32.mrb[0].mxu0
      %v2433 = vadd.f32 0.0, %v2432
      %v2434 = vpop.f32.mrb[0].mxu0
      %2435 = vmatprep.mubr.bf16.mxu0 0
      %2436 = vmatmul.mubr.bf16.gmra.mrb[0].mxu0 %v2238
      %v2437 = vpop.f32.mrb[0].mxu0
      %v2438 = vadd.f32 0.0, %v2437
      %v2439 = vpop.f32.mrb[0].mxu0
      %v2440 = vpop.f32.mrb[0].mxu0
      %v2441 = vadd.f32 0.0, %v2440
      %v2442 = vpop.f32.mrb[0].mxu0
      %2443 = vmatprep.mubr.bf16.mxu0 0
      %2444 = vmatmul.mubr.bf16.gmra.mrb[0].mxu0 %v2239
      %v2445 = vpop.f32.mrb[0].mxu0
      %v2446 = vadd.f32 0.0, %v2445
      %v2447 = vpop.f32.mrb[0].mxu0
      %v2448 = vpop.f32.mrb[0].mxu0
      %v2449 = vadd.f32 0.0, %v2448
      %v2450 = vpop.f32.mrb[0].mxu0
      %2451 = vmatprep.mubr.bf16.mxu0 0
      %2452 = vmatmul.mubr.bf16.gmra.mrb[0].mxu0 %v2240
      %v2453 = vpop.f32.mrb[0].mxu0
      %v2454 = vadd.f32 0.0, %v2453
      %v2455 = vpop.f32.mrb[0].mxu0
      %v2456 = vpop.f32.mrb[0].mxu0
      %v2457 = vadd.f32 0.0, %v2456
      %v2458 = vpop.f32.mrb[0].mxu0
      %2459 = vmatprep.mubr.bf16.mxu0 0
      %2460 = vmatmul.mubr.bf16.gmra.mrb[0].mxu0 %v2241
      %v2461 = vpop.f32.mrb[0].mxu0
      %v2462 = vadd.f32 0.0, %v2461
      %v2463 = vpop.f32.mrb[0].mxu0
      %v2464 = vpop.f32.mrb[0].mxu0
      %v2465 = vadd.f32 0.0, %v2464
      %v2466 = vpop.f32.mrb[0].mxu0
      %2467 = vdwg.mxu0
      %v2468 = vadd.f32 %v1969, %v2342
      %v2469 = vadd.f32 %v1970, %v2345
      %v2470 = vadd.f32 %v1971, %v2350
      %v2471 = vadd.f32 %v1972, %v2353
      %v2472 = vadd.f32 %v1973, %v2358
      %v2473 = vadd.f32 %v1974, %v2361
      %v2474 = vadd.f32 %v1975, %v2366
      %v2475 = vadd.f32 %v1976, %v2369
      %v2476 = vadd.f32 %v1977, %v2374
      %v2477 = vadd.f32 %v1978, %v2377
      %v2478 = vadd.f32 %v1979, %v2382
      %v2479 = vadd.f32 %v1980, %v2385
      %v2480 = vadd.f32 %v1981, %v2390
      %v2481 = vadd.f32 %v1982, %v2393
      %v2482 = vadd.f32 %v1983, %v2398
      %v2483 = vadd.f32 %v1984, %v2401
      %v2484 = vadd.f32 %v1985, %v2406
      %v2485 = vadd.f32 %v1986, %v2409
      %v2486 = vadd.f32 %v1987, %v2414
      %v2487 = vadd.f32 %v1988, %v2417
      %v2488 = vadd.f32 %v1989, %v2422
      %v2489 = vadd.f32 %v1990, %v2425
      %v2490 = vadd.f32 %v1991, %v2430
      %v2491 = vadd.f32 %v1992, %v2433
      %v2492 = vadd.f32 %v1993, %v2438
      %v2493 = vadd.f32 %v1994, %v2441
      %v2494 = vadd.f32 %v1995, %v2446
      %v2495 = vadd.f32 %v1996, %v2449
      %v2496 = vadd.f32 %v1997, %v2454
      %v2497 = vadd.f32 %v1998, %v2457
      %v2498 = vadd.f32 %v1999, %v2462
      %v2499 = vadd.f32 %v2000, %v2465
      %s2500 = scalar_lea.vmem %s4, 1024
      %v2501 = vld [vmem:[%s2500] sm:$0xff]
      %v2502 = vld [vmem:[%s2500 + $0x8] sm:$0xff]
      %v2503 = vld [vmem:[%s2500 + $0x10] sm:$0xff]
      %v2504 = vld [vmem:[%s2500 + $0x18] sm:$0xff]
      %v2505 = vld [vmem:[%s2500 + $0x20] sm:$0xff]
      %v2506 = vld [vmem:[%s2500 + $0x28] sm:$0xff]
      %v2507 = vld [vmem:[%s2500 + $0x30] sm:$0xff]
      %v2508 = vld [vmem:[%s2500 + $0x38] sm:$0xff]
      %v2509 = vld [vmem:[%s2500 + $0x40] sm:$0xff]
      %v2510 = vld [vmem:[%s2500 + $0x48] sm:$0xff]
      %v2511 = vld [vmem:[%s2500 + $0x50] sm:$0xff]
      %v2512 = vld [vmem:[%s2500 + $0x58] sm:$0xff]
      %v2513 = vld [vmem:[%s2500 + $0x60] sm:$0xff]
      %v2514 = vld [vmem:[%s2500 + $0x68] sm:$0xff]
      %v2515 = vld [vmem:[%s2500 + $0x70] sm:$0xff]
      %v2516 = vld [vmem:[%s2500 + $0x78] sm:$0xff]
      %v2517 = vld [vmem:[%s2500 + $0x80] sm:$0xff]
      %v2518 = vld [vmem:[%s2500 + $0x88] sm:$0xff]
      %v2519 = vld [vmem:[%s2500 + $0x90] sm:$0xff]
      %v2520 = vld [vmem:[%s2500 + $0x98] sm:$0xff]
      %v2521 = vld [vmem:[%s2500 + $0xa0] sm:$0xff]
      %v2522 = vld [vmem:[%s2500 + $0xa8] sm:$0xff]
      %v2523 = vld [vmem:[%s2500 + $0xb0] sm:$0xff]
      %v2524 = vld [vmem:[%s2500 + $0xb8] sm:$0xff]
      %v2525 = vld [vmem:[%s2500 + $0xc0] sm:$0xff]
      %v2526 = vld [vmem:[%s2500 + $0xc8] sm:$0xff]
      %v2527 = vld [vmem:[%s2500 + $0xd0] sm:$0xff]
      %v2528 = vld [vmem:[%s2500 + $0xd8] sm:$0xff]
      %v2529 = vld [vmem:[%s2500 + $0xe0] sm:$0xff]
      %v2530 = vld [vmem:[%s2500 + $0xe8] sm:$0xff]
      %v2531 = vld [vmem:[%s2500 + $0xf0] sm:$0xff]
      %v2532 = vld [vmem:[%s2500 + $0xf8] sm:$0xff]
      %2534 = vset.pattern.permute.xlu0 0
      %2535 = vperm.xlu0 %2534, %v2501
      %v2536 = vpop.permute.xlu0 %2535
      %2539 = vset.pattern.permute.xlu0 0
      %2540 = vperm.xlu0 %2539, %v2502
      %v2541 = vpop.permute.xlu0 %2540
      %2544 = vset.pattern.permute.xlu0 0
      %2545 = vperm.xlu0 %2544, %v2503
      %v2546 = vpop.permute.xlu0 %2545
      %2549 = vset.pattern.permute.xlu0 0
      %2550 = vperm.xlu0 %2549, %v2504
      %v2551 = vpop.permute.xlu0 %2550
      %2554 = vset.pattern.permute.xlu0 0
      %2555 = vperm.xlu0 %2554, %v2505
      %v2556 = vpop.permute.xlu0 %2555
      %2559 = vset.pattern.permute.xlu0 0
      %2560 = vperm.xlu0 %2559, %v2506
      %v2561 = vpop.permute.xlu0 %2560
      %2564 = vset.pattern.permute.xlu0 0
      %2565 = vperm.xlu0 %2564, %v2507
      %v2566 = vpop.permute.xlu0 %2565
      %2569 = vset.pattern.permute.xlu0 0
      %2570 = vperm.xlu0 %2569, %v2508
      %v2571 = vpop.permute.xlu0 %2570
      %2574 = vset.pattern.permute.xlu0 0
      %2575 = vperm.xlu0 %2574, %v2509
      %v2576 = vpop.permute.xlu0 %2575
      %2579 = vset.pattern.permute.xlu0 0
      %2580 = vperm.xlu0 %2579, %v2510
      %v2581 = vpop.permute.xlu0 %2580
      %2584 = vset.pattern.permute.xlu0 0
      %2585 = vperm.xlu0 %2584, %v2511
      %v2586 = vpop.permute.xlu0 %2585
      %2589 = vset.pattern.permute.xlu0 0
      %2590 = vperm.xlu0 %2589, %v2512
      %v2591 = vpop.permute.xlu0 %2590
      %2594 = vset.pattern.permute.xlu0 0
      %2595 = vperm.xlu0 %2594, %v2513
      %v2596 = vpop.permute.xlu0 %2595
      %2599 = vset.pattern.permute.xlu0 0
      %2600 = vperm.xlu0 %2599, %v2514
      %v2601 = vpop.permute.xlu0 %2600
      %2604 = vset.pattern.permute.xlu0 0
      %2605 = vperm.xlu0 %2604, %v2515
      %v2606 = vpop.permute.xlu0 %2605
      %2609 = vset.pattern.permute.xlu0 0
      %2610 = vperm.xlu0 %2609, %v2516
      %v2611 = vpop.permute.xlu0 %2610
      %2614 = vset.pattern.permute.xlu0 0
      %2615 = vperm.xlu0 %2614, %v2517
      %v2616 = vpop.permute.xlu0 %2615
      %2619 = vset.pattern.permute.xlu0 0
      %2620 = vperm.xlu0 %2619, %v2518
      %v2621 = vpop.permute.xlu0 %2620
      %2624 = vset.pattern.permute.xlu0 0
      %2625 = vperm.xlu0 %2624, %v2519
      %v2626 = vpop.permute.xlu0 %2625
      %2629 = vset.pattern.permute.xlu0 0
      %2630 = vperm.xlu0 %2629, %v2520
      %v2631 = vpop.permute.xlu0 %2630
      %2634 = vset.pattern.permute.xlu0 0
      %2635 = vperm.xlu0 %2634, %v2521
      %v2636 = vpop.permute.xlu0 %2635
      %2639 = vset.pattern.permute.xlu0 0
      %2640 = vperm.xlu0 %2639, %v2522
      %v2641 = vpop.permute.xlu0 %2640
      %2644 = vset.pattern.permute.xlu0 0
      %2645 = vperm.xlu0 %2644, %v2523
      %v2646 = vpop.permute.xlu0 %2645
      %2649 = vset.pattern.permute.xlu0 0
      %2650 = vperm.xlu0 %2649, %v2524
      %v2651 = vpop.permute.xlu0 %2650
      %2654 = vset.pattern.permute.xlu0 0
      %2655 = vperm.xlu0 %2654, %v2525
      %v2656 = vpop.permute.xlu0 %2655
      %2659 = vset.pattern.permute.xlu0 0
      %2660 = vperm.xlu0 %2659, %v2526
      %v2661 = vpop.permute.xlu0 %2660
      %2664 = vset.pattern.permute.xlu0 0
      %2665 = vperm.xlu0 %2664, %v2527
      %v2666 = vpop.permute.xlu0 %2665
      %2669 = vset.pattern.permute.xlu0 0
      %2670 = vperm.xlu0 %2669, %v2528
      %v2671 = vpop.permute.xlu0 %2670
      %2674 = vset.pattern.permute.xlu0 0
      %2675 = vperm.xlu0 %2674, %v2529
      %v2676 = vpop.permute.xlu0 %2675
      %2679 = vset.pattern.permute.xlu0 0
      %2680 = vperm.xlu0 %2679, %v2530
      %v2681 = vpop.permute.xlu0 %2680
      %2684 = vset.pattern.permute.xlu0 0
      %2685 = vperm.xlu0 %2684, %v2531
      %v2686 = vpop.permute.xlu0 %2685
      %2689 = vset.pattern.permute.xlu0 0
      %2690 = vperm.xlu0 %2689, %v2532
      %v2691 = vpop.permute.xlu0 %2690
      %v2693 = vmul.f32 %v406, %v2536
      %v2694 = vmul.f32 %v407, %v2541
      %v2695 = vmul.f32 %v408, %v2546
      %v2696 = vmul.f32 %v409, %v2551
      %v2697 = vmul.f32 %v410, %v2556
      %v2698 = vmul.f32 %v411, %v2561
      %v2699 = vmul.f32 %v412, %v2566
      %v2700 = vmul.f32 %v413, %v2571
      %v2701 = vmul.f32 %v414, %v2576
      %v2702 = vmul.f32 %v415, %v2581
      %v2703 = vmul.f32 %v416, %v2586
      %v2704 = vmul.f32 %v417, %v2591
      %v2705 = vmul.f32 %v418, %v2596
      %v2706 = vmul.f32 %v419, %v2601
      %v2707 = vmul.f32 %v420, %v2606
      %v2708 = vmul.f32 %v421, %v2611
      %v2709 = vmul.f32 %v422, %v2616
      %v2710 = vmul.f32 %v423, %v2621
      %v2711 = vmul.f32 %v424, %v2626
      %v2712 = vmul.f32 %v425, %v2631
      %v2713 = vmul.f32 %v426, %v2636
      %v2714 = vmul.f32 %v427, %v2641
      %v2715 = vmul.f32 %v428, %v2646
      %v2716 = vmul.f32 %v429, %v2651
      %v2717 = vmul.f32 %v430, %v2656
      %v2718 = vmul.f32 %v431, %v2661
      %v2719 = vmul.f32 %v432, %v2666
      %v2720 = vmul.f32 %v433, %v2671
      %v2721 = vmul.f32 %v434, %v2676
      %v2722 = vmul.f32 %v435, %v2681
      %v2723 = vmul.f32 %v436, %v2686
      %v2724 = vmul.f32 %v437, %v2691
      %v2725 = vpack.c.bf16 %v2694, %v2693
      %v2726 = vpack.c.bf16 %v2696, %v2695
      %v2727 = vpack.c.bf16 %v2698, %v2697
      %v2728 = vpack.c.bf16 %v2700, %v2699
      %v2729 = vpack.c.bf16 %v2702, %v2701
      %v2730 = vpack.c.bf16 %v2704, %v2703
      %v2731 = vpack.c.bf16 %v2706, %v2705
      %v2732 = vpack.c.bf16 %v2708, %v2707
      %v2733 = vpack.c.bf16 %v2710, %v2709
      %v2734 = vpack.c.bf16 %v2712, %v2711
      %v2735 = vpack.c.bf16 %v2714, %v2713
      %v2736 = vpack.c.bf16 %v2716, %v2715
      %v2737 = vpack.c.bf16 %v2718, %v2717
      %v2738 = vpack.c.bf16 %v2720, %v2719
      %v2739 = vpack.c.bf16 %v2722, %v2721
      %v2740 = vpack.c.bf16 %v2724, %v2723
      %s2741 = scalar_lea.vmem %s3, 256
      %v2742 = vld [vmem:[%s2741] sm:$0xf]
      %v2743 = vld [vmem:[%s2741 + $0x4] sm:$0xf]
      %v2744 = vld [vmem:[%s2741 + $0x8] sm:$0xf]
      %v2745 = vld [vmem:[%s2741 + $0xc] sm:$0xf]
      %v2746 = vld [vmem:[%s2741 + $0x10] sm:$0xf]
      %v2747 = vld [vmem:[%s2741 + $0x14] sm:$0xf]
      %v2748 = vld [vmem:[%s2741 + $0x18] sm:$0xf]
      %v2749 = vld [vmem:[%s2741 + $0x1c] sm:$0xf]
      %v2750 = vld [vmem:[%s2741 + $0x20] sm:$0xf]
      %v2751 = vld [vmem:[%s2741 + $0x24] sm:$0xf]
      %v2752 = vld [vmem:[%s2741 + $0x28] sm:$0xf]
      %v2753 = vld [vmem:[%s2741 + $0x2c] sm:$0xf]
      %v2754 = vld [vmem:[%s2741 + $0x30] sm:$0xf]
      %v2755 = vld [vmem:[%s2741 + $0x34] sm:$0xf]
      %v2756 = vld [vmem:[%s2741 + $0x38] sm:$0xf]
      %v2757 = vld [vmem:[%s2741 + $0x3c] sm:$0xf]
      %v2774 = vunpack.c.l.b16 %v2742
      %v2775 = vunpack.c.l.b16 %v2743
      %v2776 = vunpack.c.l.b16 %v2744
      %v2777 = vunpack.c.l.b16 %v2745
      %v2778 = vunpack.c.l.b16 %v2746
      %v2779 = vunpack.c.l.b16 %v2747
      %v2780 = vunpack.c.l.b16 %v2748
      %v2781 = vunpack.c.l.b16 %v2749
      %v2782 = vunpack.c.l.b16 %v2750
      %v2783 = vunpack.c.l.b16 %v2751
      %v2784 = vunpack.c.l.b16 %v2752
      %v2785 = vunpack.c.l.b16 %v2753
      %v2786 = vunpack.c.l.b16 %v2754
      %v2787 = vunpack.c.l.b16 %v2755
      %v2788 = vunpack.c.l.b16 %v2756
      %v2789 = vunpack.c.l.b16 %v2757
      %v2790 = vpack.c.b16 %v2775, %v2774
      %v2791 = vpack.c.b16 %v2777, %v2776
      %v2792 = vpack.c.b16 %v2779, %v2778
      %v2793 = vpack.c.b16 %v2781, %v2780
      %v2794 = vpack.c.b16 %v2783, %v2782
      %v2795 = vpack.c.b16 %v2785, %v2784
      %v2796 = vpack.c.b16 %v2787, %v2786
      %v2797 = vpack.c.b16 %v2789, %v2788
      %2806 = vmatprep.subr.bf16.mxu0 0
      %2807 = vmatpush1.bf16.msra.mxu0 %v2790
      %2808 = vmatprep.subr.bf16.mxu0 0
      %2809 = vmatpush1.bf16.msra.mxu0 %v2791
      %2810 = vmatprep.subr.bf16.mxu0 0
      %2811 = vmatpush1.bf16.msra.mxu0 %v2792
      %2812 = vmatprep.subr.bf16.mxu0 0
      %2813 = vmatpush1.bf16.msra.mxu0 %v2793
      %2814 = vmatprep.subr.bf16.mxu0 0
      %2815 = vmatpush1.bf16.msra.mxu0 %v2794
      %2816 = vmatprep.subr.bf16.mxu0 0
      %2817 = vmatpush1.bf16.msra.mxu0 %v2795
      %2818 = vmatprep.subr.bf16.mxu0 0
      %2819 = vmatpush1.bf16.msra.mxu0 %v2796
      %2820 = vmatprep.subr.bf16.mxu0 0
      %2821 = vmatpush1.bf16.msra.mxu0 %v2797
      %2822 = vmatprep.subr.bf16.mxu0 0
      %2823 = vmatpush1.bf16.msra.mxu0 0
      %2824 = vmatprep.subr.bf16.mxu0 0
      %2825 = vmatpush1.bf16.msra.mxu0 0
      %2826 = vmatprep.subr.bf16.mxu0 0
      %2827 = vmatpush1.bf16.msra.mxu0 0
      %2828 = vmatprep.subr.bf16.mxu0 0
      %2829 = vmatpush1.bf16.msra.mxu0 0
      %2830 = vmatprep.subr.bf16.mxu0 0
      %2831 = vmatpush1.bf16.msra.mxu0 0
      %2832 = vmatprep.subr.bf16.mxu0 0
      %2833 = vmatpush1.bf16.msra.mxu0 0
      %2834 = vmatprep.subr.bf16.mxu0 0
      %2835 = vmatpush1.bf16.msra.mxu0 0
      %2836 = vmatprep.subr.bf16.mxu0 0
      %2837 = vmatpush1.bf16.msra.mxu0 0
      %2838 = vmatprep.mubr.bf16.mxu0 0
      %2839 = vmatmul.mubr.bf16.gmra.mrb[0].mxu0 %v2725
      %v2840 = vpop.f32.mrb[0].mxu0
      %v2841 = vadd.f32 0.0, %v2840
      %v2842 = vpop.f32.mrb[0].mxu0
      %v2843 = vpop.f32.mrb[0].mxu0
      %v2844 = vadd.f32 0.0, %v2843
      %v2845 = vpop.f32.mrb[0].mxu0
      %2846 = vmatprep.mubr.bf16.mxu0 0
      %2847 = vmatmul.mubr.bf16.gmra.mrb[0].mxu0 %v2726
      %v2848 = vpop.f32.mrb[0].mxu0
      %v2849 = vadd.f32 0.0, %v2848
      %v2850 = vpop.f32.mrb[0].mxu0
      %v2851 = vpop.f32.mrb[0].mxu0
      %v2852 = vadd.f32 0.0, %v2851
      %v2853 = vpop.f32.mrb[0].mxu0
      %2854 = vmatprep.mubr.bf16.mxu0 0
      %2855 = vmatmul.mubr.bf16.gmra.mrb[0].mxu0 %v2727
      %v2856 = vpop.f32.mrb[0].mxu0
      %v2857 = vadd.f32 0.0, %v2856
      %v2858 = vpop.f32.mrb[0].mxu0
      %v2859 = vpop.f32.mrb[0].mxu0
      %v2860 = vadd.f32 0.0, %v2859
      %v2861 = vpop.f32.mrb[0].mxu0
      %2862 = vmatprep.mubr.bf16.mxu0 0
      %2863 = vmatmul.mubr.bf16.gmra.mrb[0].mxu0 %v2728
      %v2864 = vpop.f32.mrb[0].mxu0
      %v2865 = vadd.f32 0.0, %v2864
      %v2866 = vpop.f32.mrb[0].mxu0
      %v2867 = vpop.f32.mrb[0].mxu0
      %v2868 = vadd.f32 0.0, %v2867
      %v2869 = vpop.f32.mrb[0].mxu0
      %2870 = vmatprep.mubr.bf16.mxu0 0
      %2871 = vmatmul.mubr.bf16.gmra.mrb[0].mxu0 %v2729
      %v2872 = vpop.f32.mrb[0].mxu0
      %v2873 = vadd.f32 0.0, %v2872
      %v2874 = vpop.f32.mrb[0].mxu0
      %v2875 = vpop.f32.mrb[0].mxu0
      %v2876 = vadd.f32 0.0, %v2875
      %v2877 = vpop.f32.mrb[0].mxu0
      %2878 = vmatprep.mubr.bf16.mxu0 0
      %2879 = vmatmul.mubr.bf16.gmra.mrb[0].mxu0 %v2730
      %v2880 = vpop.f32.mrb[0].mxu0
      %v2881 = vadd.f32 0.0, %v2880
      %v2882 = vpop.f32.mrb[0].mxu0
      %v2883 = vpop.f32.mrb[0].mxu0
      %v2884 = vadd.f32 0.0, %v2883
      %v2885 = vpop.f32.mrb[0].mxu0
      %2886 = vmatprep.mubr.bf16.mxu0 0
      %2887 = vmatmul.mubr.bf16.gmra.mrb[0].mxu0 %v2731
      %v2888 = vpop.f32.mrb[0].mxu0
      %v2889 = vadd.f32 0.0, %v2888
      %v2890 = vpop.f32.mrb[0].mxu0
      %v2891 = vpop.f32.mrb[0].mxu0
      %v2892 = vadd.f32 0.0, %v2891
      %v2893 = vpop.f32.mrb[0].mxu0
      %2894 = vmatprep.mubr.bf16.mxu0 0
      %2895 = vmatmul.mubr.bf16.gmra.mrb[0].mxu0 %v2732
      %v2896 = vpop.f32.mrb[0].mxu0
      %v2897 = vadd.f32 0.0, %v2896
      %v2898 = vpop.f32.mrb[0].mxu0
      %v2899 = vpop.f32.mrb[0].mxu0
      %v2900 = vadd.f32 0.0, %v2899
      %v2901 = vpop.f32.mrb[0].mxu0
      %2902 = vmatprep.mubr.bf16.mxu0 0
      %2903 = vmatmul.mubr.bf16.gmra.mrb[0].mxu0 %v2733
      %v2904 = vpop.f32.mrb[0].mxu0
      %v2905 = vadd.f32 0.0, %v2904
      %v2906 = vpop.f32.mrb[0].mxu0
      %v2907 = vpop.f32.mrb[0].mxu0
      %v2908 = vadd.f32 0.0, %v2907
      %v2909 = vpop.f32.mrb[0].mxu0
      %2910 = vmatprep.mubr.bf16.mxu0 0
      %2911 = vmatmul.mubr.bf16.gmra.mrb[0].mxu0 %v2734
      %v2912 = vpop.f32.mrb[0].mxu0
      %v2913 = vadd.f32 0.0, %v2912
      %v2914 = vpop.f32.mrb[0].mxu0
      %v2915 = vpop.f32.mrb[0].mxu0
      %v2916 = vadd.f32 0.0, %v2915
      %v2917 = vpop.f32.mrb[0].mxu0
      %2918 = vmatprep.mubr.bf16.mxu0 0
      %2919 = vmatmul.mubr.bf16.gmra.mrb[0].mxu0 %v2735
      %v2920 = vpop.f32.mrb[0].mxu0
      %v2921 = vadd.f32 0.0, %v2920
      %v2922 = vpop.f32.mrb[0].mxu0
      %v2923 = vpop.f32.mrb[0].mxu0
      %v2924 = vadd.f32 0.0, %v2923
      %v2925 = vpop.f32.mrb[0].mxu0
      %2926 = vmatprep.mubr.bf16.mxu0 0
      %2927 = vmatmul.mubr.bf16.gmra.mrb[0].mxu0 %v2736
      %v2928 = vpop.f32.mrb[0].mxu0
      %v2929 = vadd.f32 0.0, %v2928
      %v2930 = vpop.f32.mrb[0].mxu0
      %v2931 = vpop.f32.mrb[0].mxu0
      %v2932 = vadd.f32 0.0, %v2931
      %v2933 = vpop.f32.mrb[0].mxu0
      %2934 = vmatprep.mubr.bf16.mxu0 0
      %2935 = vmatmul.mubr.bf16.gmra.mrb[0].mxu0 %v2737
      %v2936 = vpop.f32.mrb[0].mxu0
      %v2937 = vadd.f32 0.0, %v2936
      %v2938 = vpop.f32.mrb[0].mxu0
      %v2939 = vpop.f32.mrb[0].mxu0
      %v2940 = vadd.f32 0.0, %v2939
      %v2941 = vpop.f32.mrb[0].mxu0
      %2942 = vmatprep.mubr.bf16.mxu0 0
      %2943 = vmatmul.mubr.bf16.gmra.mrb[0].mxu0 %v2738
      %v2944 = vpop.f32.mrb[0].mxu0
      %v2945 = vadd.f32 0.0, %v2944
      %v2946 = vpop.f32.mrb[0].mxu0
      %v2947 = vpop.f32.mrb[0].mxu0
      %v2948 = vadd.f32 0.0, %v2947
      %v2949 = vpop.f32.mrb[0].mxu0
      %2950 = vmatprep.mubr.bf16.mxu0 0
      %2951 = vmatmul.mubr.bf16.gmra.mrb[0].mxu0 %v2739
      %v2952 = vpop.f32.mrb[0].mxu0
      %v2953 = vadd.f32 0.0, %v2952
      %v2954 = vpop.f32.mrb[0].mxu0
      %v2955 = vpop.f32.mrb[0].mxu0
      %v2956 = vadd.f32 0.0, %v2955
      %v2957 = vpop.f32.mrb[0].mxu0
      %2958 = vmatprep.mubr.bf16.mxu0 0
      %2959 = vmatmul.mubr.bf16.gmra.mrb[0].mxu0 %v2740
      %v2960 = vpop.f32.mrb[0].mxu0
      %v2961 = vadd.f32 0.0, %v2960
      %v2962 = vpop.f32.mrb[0].mxu0
      %v2963 = vpop.f32.mrb[0].mxu0
      %v2964 = vadd.f32 0.0, %v2963
      %v2965 = vpop.f32.mrb[0].mxu0
      %2966 = vdwg.mxu0
      %v2967 = vadd.f32 %v2468, %v2841
      %v2968 = vadd.f32 %v2469, %v2844
      %v2969 = vadd.f32 %v2470, %v2849
      %v2970 = vadd.f32 %v2471, %v2852
      %v2971 = vadd.f32 %v2472, %v2857
      %v2972 = vadd.f32 %v2473, %v2860
      %v2973 = vadd.f32 %v2474, %v2865
      %v2974 = vadd.f32 %v2475, %v2868
      %v2975 = vadd.f32 %v2476, %v2873
      %v2976 = vadd.f32 %v2477, %v2876
      %v2977 = vadd.f32 %v2478, %v2881
      %v2978 = vadd.f32 %v2479, %v2884
      %v2979 = vadd.f32 %v2480, %v2889
      %v2980 = vadd.f32 %v2481, %v2892
      %v2981 = vadd.f32 %v2482, %v2897
      %v2982 = vadd.f32 %v2483, %v2900
      %v2983 = vadd.f32 %v2484, %v2905
      %v2984 = vadd.f32 %v2485, %v2908
      %v2985 = vadd.f32 %v2486, %v2913
      %v2986 = vadd.f32 %v2487, %v2916
      %v2987 = vadd.f32 %v2488, %v2921
      %v2988 = vadd.f32 %v2489, %v2924
      %v2989 = vadd.f32 %v2490, %v2929
      %v2990 = vadd.f32 %v2491, %v2932
      %v2991 = vadd.f32 %v2492, %v2937
      %v2992 = vadd.f32 %v2493, %v2940
      %v2993 = vadd.f32 %v2494, %v2945
      %v2994 = vadd.f32 %v2495, %v2948
      %v2995 = vadd.f32 %v2496, %v2953
      %v2996 = vadd.f32 %v2497, %v2956
      %v2997 = vadd.f32 %v2498, %v2961
      %v2998 = vadd.f32 %v2499, %v2964
      %s2999 = scalar_lea.vmem %s4, 1280
      %v3000 = vld [vmem:[%s2999] sm:$0xff]
      %v3001 = vld [vmem:[%s2999 + $0x8] sm:$0xff]
      %v3002 = vld [vmem:[%s2999 + $0x10] sm:$0xff]
      %v3003 = vld [vmem:[%s2999 + $0x18] sm:$0xff]
      %v3004 = vld [vmem:[%s2999 + $0x20] sm:$0xff]
      %v3005 = vld [vmem:[%s2999 + $0x28] sm:$0xff]
      %v3006 = vld [vmem:[%s2999 + $0x30] sm:$0xff]
      %v3007 = vld [vmem:[%s2999 + $0x38] sm:$0xff]
      %v3008 = vld [vmem:[%s2999 + $0x40] sm:$0xff]
      %v3009 = vld [vmem:[%s2999 + $0x48] sm:$0xff]
      %v3010 = vld [vmem:[%s2999 + $0x50] sm:$0xff]
      %v3011 = vld [vmem:[%s2999 + $0x58] sm:$0xff]
      %v3012 = vld [vmem:[%s2999 + $0x60] sm:$0xff]
      %v3013 = vld [vmem:[%s2999 + $0x68] sm:$0xff]
      %v3014 = vld [vmem:[%s2999 + $0x70] sm:$0xff]
      %v3015 = vld [vmem:[%s2999 + $0x78] sm:$0xff]
      %v3016 = vld [vmem:[%s2999 + $0x80] sm:$0xff]
      %v3017 = vld [vmem:[%s2999 + $0x88] sm:$0xff]
      %v3018 = vld [vmem:[%s2999 + $0x90] sm:$0xff]
      %v3019 = vld [vmem:[%s2999 + $0x98] sm:$0xff]
      %v3020 = vld [vmem:[%s2999 + $0xa0] sm:$0xff]
      %v3021 = vld [vmem:[%s2999 + $0xa8] sm:$0xff]
      %v3022 = vld [vmem:[%s2999 + $0xb0] sm:$0xff]
      %v3023 = vld [vmem:[%s2999 + $0xb8] sm:$0xff]
      %v3024 = vld [vmem:[%s2999 + $0xc0] sm:$0xff]
      %v3025 = vld [vmem:[%s2999 + $0xc8] sm:$0xff]
      %v3026 = vld [vmem:[%s2999 + $0xd0] sm:$0xff]
      %v3027 = vld [vmem:[%s2999 + $0xd8] sm:$0xff]
      %v3028 = vld [vmem:[%s2999 + $0xe0] sm:$0xff]
      %v3029 = vld [vmem:[%s2999 + $0xe8] sm:$0xff]
      %v3030 = vld [vmem:[%s2999 + $0xf0] sm:$0xff]
      %v3031 = vld [vmem:[%s2999 + $0xf8] sm:$0xff]
      %3033 = vset.pattern.permute.xlu0 0
      %3034 = vperm.xlu0 %3033, %v3000
      %v3035 = vpop.permute.xlu0 %3034
      %3038 = vset.pattern.permute.xlu0 0
      %3039 = vperm.xlu0 %3038, %v3001
      %v3040 = vpop.permute.xlu0 %3039
      %3043 = vset.pattern.permute.xlu0 0
      %3044 = vperm.xlu0 %3043, %v3002
      %v3045 = vpop.permute.xlu0 %3044
      %3048 = vset.pattern.permute.xlu0 0
      %3049 = vperm.xlu0 %3048, %v3003
      %v3050 = vpop.permute.xlu0 %3049
      %3053 = vset.pattern.permute.xlu0 0
      %3054 = vperm.xlu0 %3053, %v3004
      %v3055 = vpop.permute.xlu0 %3054
      %3058 = vset.pattern.permute.xlu0 0
      %3059 = vperm.xlu0 %3058, %v3005
      %v3060 = vpop.permute.xlu0 %3059
      %3063 = vset.pattern.permute.xlu0 0
      %3064 = vperm.xlu0 %3063, %v3006
      %v3065 = vpop.permute.xlu0 %3064
      %3068 = vset.pattern.permute.xlu0 0
      %3069 = vperm.xlu0 %3068, %v3007
      %v3070 = vpop.permute.xlu0 %3069
      %3073 = vset.pattern.permute.xlu0 0
      %3074 = vperm.xlu0 %3073, %v3008
      %v3075 = vpop.permute.xlu0 %3074
      %3078 = vset.pattern.permute.xlu0 0
      %3079 = vperm.xlu0 %3078, %v3009
      %v3080 = vpop.permute.xlu0 %3079
      %3083 = vset.pattern.permute.xlu0 0
      %3084 = vperm.xlu0 %3083, %v3010
      %v3085 = vpop.permute.xlu0 %3084
      %3088 = vset.pattern.permute.xlu0 0
      %3089 = vperm.xlu0 %3088, %v3011
      %v3090 = vpop.permute.xlu0 %3089
      %3093 = vset.pattern.permute.xlu0 0
      %3094 = vperm.xlu0 %3093, %v3012
      %v3095 = vpop.permute.xlu0 %3094
      %3098 = vset.pattern.permute.xlu0 0
      %3099 = vperm.xlu0 %3098, %v3013
      %v3100 = vpop.permute.xlu0 %3099
      %3103 = vset.pattern.permute.xlu0 0
      %3104 = vperm.xlu0 %3103, %v3014
      %v3105 = vpop.permute.xlu0 %3104
      %3108 = vset.pattern.permute.xlu0 0
      %3109 = vperm.xlu0 %3108, %v3015
      %v3110 = vpop.permute.xlu0 %3109
      %3113 = vset.pattern.permute.xlu0 0
      %3114 = vperm.xlu0 %3113, %v3016
      %v3115 = vpop.permute.xlu0 %3114
      %3118 = vset.pattern.permute.xlu0 0
      %3119 = vperm.xlu0 %3118, %v3017
      %v3120 = vpop.permute.xlu0 %3119
      %3123 = vset.pattern.permute.xlu0 0
      %3124 = vperm.xlu0 %3123, %v3018
      %v3125 = vpop.permute.xlu0 %3124
      %3128 = vset.pattern.permute.xlu0 0
      %3129 = vperm.xlu0 %3128, %v3019
      %v3130 = vpop.permute.xlu0 %3129
      %3133 = vset.pattern.permute.xlu0 0
      %3134 = vperm.xlu0 %3133, %v3020
      %v3135 = vpop.permute.xlu0 %3134
      %3138 = vset.pattern.permute.xlu0 0
      %3139 = vperm.xlu0 %3138, %v3021
      %v3140 = vpop.permute.xlu0 %3139
      %3143 = vset.pattern.permute.xlu0 0
      %3144 = vperm.xlu0 %3143, %v3022
      %v3145 = vpop.permute.xlu0 %3144
      %3148 = vset.pattern.permute.xlu0 0
      %3149 = vperm.xlu0 %3148, %v3023
      %v3150 = vpop.permute.xlu0 %3149
      %3153 = vset.pattern.permute.xlu0 0
      %3154 = vperm.xlu0 %3153, %v3024
      %v3155 = vpop.permute.xlu0 %3154
      %3158 = vset.pattern.permute.xlu0 0
      %3159 = vperm.xlu0 %3158, %v3025
      %v3160 = vpop.permute.xlu0 %3159
      %3163 = vset.pattern.permute.xlu0 0
      %3164 = vperm.xlu0 %3163, %v3026
      %v3165 = vpop.permute.xlu0 %3164
      %3168 = vset.pattern.permute.xlu0 0
      %3169 = vperm.xlu0 %3168, %v3027
      %v3170 = vpop.permute.xlu0 %3169
      %3173 = vset.pattern.permute.xlu0 0
      %3174 = vperm.xlu0 %3173, %v3028
      %v3175 = vpop.permute.xlu0 %3174
      %3178 = vset.pattern.permute.xlu0 0
      %3179 = vperm.xlu0 %3178, %v3029
      %v3180 = vpop.permute.xlu0 %3179
      %3183 = vset.pattern.permute.xlu0 0
      %3184 = vperm.xlu0 %3183, %v3030
      %v3185 = vpop.permute.xlu0 %3184
      %3188 = vset.pattern.permute.xlu0 0
      %3189 = vperm.xlu0 %3188, %v3031
      %v3190 = vpop.permute.xlu0 %3189
      %v3192 = vmul.f32 %v1500, %v3035
      %v3193 = vmul.f32 %v1499, %v3040
      %v3194 = vmul.f32 %v1498, %v3045
      %v3195 = vmul.f32 %v1497, %v3050
      %v3196 = vmul.f32 %v1496, %v3055
      %v3197 = vmul.f32 %v1495, %v3060
      %v3198 = vmul.f32 %v1494, %v3065
      %v3199 = vmul.f32 %v1493, %v3070
      %v3200 = vmul.f32 %v1492, %v3075
      %v3201 = vmul.f32 %v1491, %v3080
      %v3202 = vmul.f32 %v1490, %v3085
      %v3203 = vmul.f32 %v1489, %v3090
      %v3204 = vmul.f32 %v1488, %v3095
      %v3205 = vmul.f32 %v1487, %v3100
      %v3206 = vmul.f32 %v1486, %v3105
      %v3207 = vmul.f32 %v1485, %v3110
      %v3208 = vmul.f32 %v1484, %v3115
      %v3209 = vmul.f32 %v1483, %v3120
      %v3210 = vmul.f32 %v1482, %v3125
      %v3211 = vmul.f32 %v1481, %v3130
      %v3212 = vmul.f32 %v1480, %v3135
      %v3213 = vmul.f32 %v1479, %v3140
      %v3214 = vmul.f32 %v1478, %v3145
      %v3215 = vmul.f32 %v1477, %v3150
      %v3216 = vmul.f32 %v1476, %v3155
      %v3217 = vmul.f32 %v1475, %v3160
      %v3218 = vmul.f32 %v1474, %v3165
      %v3219 = vmul.f32 %v1473, %v3170
      %v3220 = vmul.f32 %v1472, %v3175
      %v3221 = vmul.f32 %v1471, %v3180
      %v3222 = vmul.f32 %v1470, %v3185
      %v3223 = vmul.f32 %v1501, %v3190
      %v3224 = vpack.c.bf16 %v3193, %v3192
      %v3225 = vpack.c.bf16 %v3195, %v3194
      %v3226 = vpack.c.bf16 %v3197, %v3196
      %v3227 = vpack.c.bf16 %v3199, %v3198
      %v3228 = vpack.c.bf16 %v3201, %v3200
      %v3229 = vpack.c.bf16 %v3203, %v3202
      %v3230 = vpack.c.bf16 %v3205, %v3204
      %v3231 = vpack.c.bf16 %v3207, %v3206
      %v3232 = vpack.c.bf16 %v3209, %v3208
      %v3233 = vpack.c.bf16 %v3211, %v3210
      %v3234 = vpack.c.bf16 %v3213, %v3212
      %v3235 = vpack.c.bf16 %v3215, %v3214
      %v3236 = vpack.c.bf16 %v3217, %v3216
      %v3237 = vpack.c.bf16 %v3219, %v3218
      %v3238 = vpack.c.bf16 %v3221, %v3220
      %v3239 = vpack.c.bf16 %v3223, %v3222
      %s3240 = scalar_lea.vmem %s3, 320
      %v3241 = vld [vmem:[%s3240] sm:$0xf]
      %v3242 = vld [vmem:[%s3240 + $0x4] sm:$0xf]
      %v3243 = vld [vmem:[%s3240 + $0x8] sm:$0xf]
      %v3244 = vld [vmem:[%s3240 + $0xc] sm:$0xf]
      %v3245 = vld [vmem:[%s3240 + $0x10] sm:$0xf]
      %v3246 = vld [vmem:[%s3240 + $0x14] sm:$0xf]
      %v3247 = vld [vmem:[%s3240 + $0x18] sm:$0xf]
      %v3248 = vld [vmem:[%s3240 + $0x1c] sm:$0xf]
      %v3249 = vld [vmem:[%s3240 + $0x20] sm:$0xf]
      %v3250 = vld [vmem:[%s3240 + $0x24] sm:$0xf]
      %v3251 = vld [vmem:[%s3240 + $0x28] sm:$0xf]
      %v3252 = vld [vmem:[%s3240 + $0x2c] sm:$0xf]
      %v3253 = vld [vmem:[%s3240 + $0x30] sm:$0xf]
      %v3254 = vld [vmem:[%s3240 + $0x34] sm:$0xf]
      %v3255 = vld [vmem:[%s3240 + $0x38] sm:$0xf]
      %v3256 = vld [vmem:[%s3240 + $0x3c] sm:$0xf]
      %v3273 = vunpack.c.l.b16 %v3241
      %v3274 = vunpack.c.l.b16 %v3242
      %v3275 = vunpack.c.l.b16 %v3243
      %v3276 = vunpack.c.l.b16 %v3244
      %v3277 = vunpack.c.l.b16 %v3245
      %v3278 = vunpack.c.l.b16 %v3246
      %v3279 = vunpack.c.l.b16 %v3247
      %v3280 = vunpack.c.l.b16 %v3248
      %v3281 = vunpack.c.l.b16 %v3249
      %v3282 = vunpack.c.l.b16 %v3250
      %v3283 = vunpack.c.l.b16 %v3251
      %v3284 = vunpack.c.l.b16 %v3252
      %v3285 = vunpack.c.l.b16 %v3253
      %v3286 = vunpack.c.l.b16 %v3254
      %v3287 = vunpack.c.l.b16 %v3255
      %v3288 = vunpack.c.l.b16 %v3256
      %v3289 = vpack.c.b16 %v3274, %v3273
      %v3290 = vpack.c.b16 %v3276, %v3275
      %v3291 = vpack.c.b16 %v3278, %v3277
      %v3292 = vpack.c.b16 %v3280, %v3279
      %v3293 = vpack.c.b16 %v3282, %v3281
      %v3294 = vpack.c.b16 %v3284, %v3283
      %v3295 = vpack.c.b16 %v3286, %v3285
      %v3296 = vpack.c.b16 %v3288, %v3287
      %3305 = vmatprep.subr.bf16.mxu0 0
      %3306 = vmatpush1.bf16.msra.mxu0 %v3289
      %3307 = vmatprep.subr.bf16.mxu0 0
      %3308 = vmatpush1.bf16.msra.mxu0 %v3290
      %3309 = vmatprep.subr.bf16.mxu0 0
      %3310 = vmatpush1.bf16.msra.mxu0 %v3291
      %3311 = vmatprep.subr.bf16.mxu0 0
      %3312 = vmatpush1.bf16.msra.mxu0 %v3292
      %3313 = vmatprep.subr.bf16.mxu0 0
      %3314 = vmatpush1.bf16.msra.mxu0 %v3293
      %3315 = vmatprep.subr.bf16.mxu0 0
      %3316 = vmatpush1.bf16.msra.mxu0 %v3294
      %3317 = vmatprep.subr.bf16.mxu0 0
      %3318 = vmatpush1.bf16.msra.mxu0 %v3295
      %3319 = vmatprep.subr.bf16.mxu0 0
      %3320 = vmatpush1.bf16.msra.mxu0 %v3296
      %3321 = vmatprep.subr.bf16.mxu0 0
      %3322 = vmatpush1.bf16.msra.mxu0 0
      %3323 = vmatprep.subr.bf16.mxu0 0
      %3324 = vmatpush1.bf16.msra.mxu0 0
      %3325 = vmatprep.subr.bf16.mxu0 0
      %3326 = vmatpush1.bf16.msra.mxu0 0
      %3327 = vmatprep.subr.bf16.mxu0 0
      %3328 = vmatpush1.bf16.msra.mxu0 0
      %3329 = vmatprep.subr.bf16.mxu0 0
      %3330 = vmatpush1.bf16.msra.mxu0 0
      %3331 = vmatprep.subr.bf16.mxu0 0
      %3332 = vmatpush1.bf16.msra.mxu0 0
      %3333 = vmatprep.subr.bf16.mxu0 0
      %3334 = vmatpush1.bf16.msra.mxu0 0
      %3335 = vmatprep.subr.bf16.mxu0 0
      %3336 = vmatpush1.bf16.msra.mxu0 0
      %3337 = vmatprep.mubr.bf16.mxu0 0
      %3338 = vmatmul.mubr.bf16.gmra.mrb[0].mxu0 %v3224
      %v3339 = vpop.f32.mrb[0].mxu0
      %v3340 = vadd.f32 0.0, %v3339
      %v3341 = vpop.f32.mrb[0].mxu0
      %v3342 = vpop.f32.mrb[0].mxu0
      %v3343 = vadd.f32 0.0, %v3342
      %v3344 = vpop.f32.mrb[0].mxu0
      %3345 = vmatprep.mubr.bf16.mxu0 0
      %3346 = vmatmul.mubr.bf16.gmra.mrb[0].mxu0 %v3225
      %v3347 = vpop.f32.mrb[0].mxu0
      %v3348 = vadd.f32 0.0, %v3347
      %v3349 = vpop.f32.mrb[0].mxu0
      %v3350 = vpop.f32.mrb[0].mxu0
      %v3351 = vadd.f32 0.0, %v3350
      %v3352 = vpop.f32.mrb[0].mxu0
      %3353 = vmatprep.mubr.bf16.mxu0 0
      %3354 = vmatmul.mubr.bf16.gmra.mrb[0].mxu0 %v3226
      %v3355 = vpop.f32.mrb[0].mxu0
      %v3356 = vadd.f32 0.0, %v3355
      %v3357 = vpop.f32.mrb[0].mxu0
      %v3358 = vpop.f32.mrb[0].mxu0
      %v3359 = vadd.f32 0.0, %v3358
      %v3360 = vpop.f32.mrb[0].mxu0
      %3361 = vmatprep.mubr.bf16.mxu0 0
      %3362 = vmatmul.mubr.bf16.gmra.mrb[0].mxu0 %v3227
      %v3363 = vpop.f32.mrb[0].mxu0
      %v3364 = vadd.f32 0.0, %v3363
      %v3365 = vpop.f32.mrb[0].mxu0
      %v3366 = vpop.f32.mrb[0].mxu0
      %v3367 = vadd.f32 0.0, %v3366
      %v3368 = vpop.f32.mrb[0].mxu0
      %3369 = vmatprep.mubr.bf16.mxu0 0
      %3370 = vmatmul.mubr.bf16.gmra.mrb[0].mxu0 %v3228
      %v3371 = vpop.f32.mrb[0].mxu0
      %v3372 = vadd.f32 0.0, %v3371
      %v3373 = vpop.f32.mrb[0].mxu0
      %v3374 = vpop.f32.mrb[0].mxu0
      %v3375 = vadd.f32 0.0, %v3374
      %v3376 = vpop.f32.mrb[0].mxu0
      %3377 = vmatprep.mubr.bf16.mxu0 0
      %3378 = vmatmul.mubr.bf16.gmra.mrb[0].mxu0 %v3229
      %v3379 = vpop.f32.mrb[0].mxu0
      %v3380 = vadd.f32 0.0, %v3379
      %v3381 = vpop.f32.mrb[0].mxu0
      %v3382 = vpop.f32.mrb[0].mxu0
      %v3383 = vadd.f32 0.0, %v3382
      %v3384 = vpop.f32.mrb[0].mxu0
      %3385 = vmatprep.mubr.bf16.mxu0 0
      %3386 = vmatmul.mubr.bf16.gmra.mrb[0].mxu0 %v3230
      %v3387 = vpop.f32.mrb[0].mxu0
      %v3388 = vadd.f32 0.0, %v3387
      %v3389 = vpop.f32.mrb[0].mxu0
      %v3390 = vpop.f32.mrb[0].mxu0
      %v3391 = vadd.f32 0.0, %v3390
      %v3392 = vpop.f32.mrb[0].mxu0
      %3393 = vmatprep.mubr.bf16.mxu0 0
      %3394 = vmatmul.mubr.bf16.gmra.mrb[0].mxu0 %v3231
      %v3395 = vpop.f32.mrb[0].mxu0
      %v3396 = vadd.f32 0.0, %v3395
      %v3397 = vpop.f32.mrb[0].mxu0
      %v3398 = vpop.f32.mrb[0].mxu0
      %v3399 = vadd.f32 0.0, %v3398
      %v3400 = vpop.f32.mrb[0].mxu0
      %3401 = vmatprep.mubr.bf16.mxu0 0
      %3402 = vmatmul.mubr.bf16.gmra.mrb[0].mxu0 %v3232
      %v3403 = vpop.f32.mrb[0].mxu0
      %v3404 = vadd.f32 0.0, %v3403
      %v3405 = vpop.f32.mrb[0].mxu0
      %v3406 = vpop.f32.mrb[0].mxu0
      %v3407 = vadd.f32 0.0, %v3406
      %v3408 = vpop.f32.mrb[0].mxu0
      %3409 = vmatprep.mubr.bf16.mxu0 0
      %3410 = vmatmul.mubr.bf16.gmra.mrb[0].mxu0 %v3233
      %v3411 = vpop.f32.mrb[0].mxu0
      %v3412 = vadd.f32 0.0, %v3411
      %v3413 = vpop.f32.mrb[0].mxu0
      %v3414 = vpop.f32.mrb[0].mxu0
      %v3415 = vadd.f32 0.0, %v3414
      %v3416 = vpop.f32.mrb[0].mxu0
      %3417 = vmatprep.mubr.bf16.mxu0 0
      %3418 = vmatmul.mubr.bf16.gmra.mrb[0].mxu0 %v3234
      %v3419 = vpop.f32.mrb[0].mxu0
      %v3420 = vadd.f32 0.0, %v3419
      %v3421 = vpop.f32.mrb[0].mxu0
      %v3422 = vpop.f32.mrb[0].mxu0
      %v3423 = vadd.f32 0.0, %v3422
      %v3424 = vpop.f32.mrb[0].mxu0
      %3425 = vmatprep.mubr.bf16.mxu0 0
      %3426 = vmatmul.mubr.bf16.gmra.mrb[0].mxu0 %v3235
      %v3427 = vpop.f32.mrb[0].mxu0
      %v3428 = vadd.f32 0.0, %v3427
      %v3429 = vpop.f32.mrb[0].mxu0
      %v3430 = vpop.f32.mrb[0].mxu0
      %v3431 = vadd.f32 0.0, %v3430
      %v3432 = vpop.f32.mrb[0].mxu0
      %3433 = vmatprep.mubr.bf16.mxu0 0
      %3434 = vmatmul.mubr.bf16.gmra.mrb[0].mxu0 %v3236
      %v3435 = vpop.f32.mrb[0].mxu0
      %v3436 = vadd.f32 0.0, %v3435
      %v3437 = vpop.f32.mrb[0].mxu0
      %v3438 = vpop.f32.mrb[0].mxu0
      %v3439 = vadd.f32 0.0, %v3438
      %v3440 = vpop.f32.mrb[0].mxu0
      %3441 = vmatprep.mubr.bf16.mxu0 0
      %3442 = vmatmul.mubr.bf16.gmra.mrb[0].mxu0 %v3237
      %v3443 = vpop.f32.mrb[0].mxu0
      %v3444 = vadd.f32 0.0, %v3443
      %v3445 = vpop.f32.mrb[0].mxu0
      %v3446 = vpop.f32.mrb[0].mxu0
      %v3447 = vadd.f32 0.0, %v3446
      %v3448 = vpop.f32.mrb[0].mxu0
      %3449 = vmatprep.mubr.bf16.mxu0 0
      %3450 = vmatmul.mubr.bf16.gmra.mrb[0].mxu0 %v3238
      %v3451 = vpop.f32.mrb[0].mxu0
      %v3452 = vadd.f32 0.0, %v3451
      %v3453 = vpop.f32.mrb[0].mxu0
      %v3454 = vpop.f32.mrb[0].mxu0
      %v3455 = vadd.f32 0.0, %v3454
      %v3456 = vpop.f32.mrb[0].mxu0
      %3457 = vmatprep.mubr.bf16.mxu0 0
      %3458 = vmatmul.mubr.bf16.gmra.mrb[0].mxu0 %v3239
      %v3459 = vpop.f32.mrb[0].mxu0
      %v3460 = vadd.f32 0.0, %v3459
      %v3461 = vpop.f32.mrb[0].mxu0
      %v3462 = vpop.f32.mrb[0].mxu0
      %v3463 = vadd.f32 0.0, %v3462
      %v3464 = vpop.f32.mrb[0].mxu0
      %3465 = vdwg.mxu0
      %v3466 = vadd.f32 %v2967, %v3340
      %v3467 = vadd.f32 %v2968, %v3343
      %v3468 = vadd.f32 %v2969, %v3348
      %v3469 = vadd.f32 %v2970, %v3351
      %v3470 = vadd.f32 %v2971, %v3356
      %v3471 = vadd.f32 %v2972, %v3359
      %v3472 = vadd.f32 %v2973, %v3364
      %v3473 = vadd.f32 %v2974, %v3367
      %v3474 = vadd.f32 %v2975, %v3372
      %v3475 = vadd.f32 %v2976, %v3375
      %v3476 = vadd.f32 %v2977, %v3380
      %v3477 = vadd.f32 %v2978, %v3383
      %v3478 = vadd.f32 %v2979, %v3388
      %v3479 = vadd.f32 %v2980, %v3391
      %v3480 = vadd.f32 %v2981, %v3396
      %v3481 = vadd.f32 %v2982, %v3399
      %v3482 = vadd.f32 %v2983, %v3404
      %v3483 = vadd.f32 %v2984, %v3407
      %v3484 = vadd.f32 %v2985, %v3412
      %v3485 = vadd.f32 %v2986, %v3415
      %v3486 = vadd.f32 %v2987, %v3420
      %v3487 = vadd.f32 %v2988, %v3423
      %v3488 = vadd.f32 %v2989, %v3428
      %v3489 = vadd.f32 %v2990, %v3431
      %v3490 = vadd.f32 %v2991, %v3436
      %v3491 = vadd.f32 %v2992, %v3439
      %v3492 = vadd.f32 %v2993, %v3444
      %v3493 = vadd.f32 %v2994, %v3447
      %v3494 = vadd.f32 %v2995, %v3452
      %v3495 = vadd.f32 %v2996, %v3455
      %v3496 = vadd.f32 %v2997, %v3460
      %v3497 = vadd.f32 %v2998, %v3463
      %s3498 = scalar_lea.vmem %s4, 1536
      %v3499 = vld [vmem:[%s3498] sm:$0xff]
      %v3500 = vld [vmem:[%s3498 + $0x8] sm:$0xff]
      %v3501 = vld [vmem:[%s3498 + $0x10] sm:$0xff]
      %v3502 = vld [vmem:[%s3498 + $0x18] sm:$0xff]
      %v3503 = vld [vmem:[%s3498 + $0x20] sm:$0xff]
      %v3504 = vld [vmem:[%s3498 + $0x28] sm:$0xff]
      %v3505 = vld [vmem:[%s3498 + $0x30] sm:$0xff]
      %v3506 = vld [vmem:[%s3498 + $0x38] sm:$0xff]
      %v3507 = vld [vmem:[%s3498 + $0x40] sm:$0xff]
      %v3508 = vld [vmem:[%s3498 + $0x48] sm:$0xff]
      %v3509 = vld [vmem:[%s3498 + $0x50] sm:$0xff]
      %v3510 = vld [vmem:[%s3498 + $0x58] sm:$0xff]
      %v3511 = vld [vmem:[%s3498 + $0x60] sm:$0xff]
      %v3512 = vld [vmem:[%s3498 + $0x68] sm:$0xff]
      %v3513 = vld [vmem:[%s3498 + $0x70] sm:$0xff]
      %v3514 = vld [vmem:[%s3498 + $0x78] sm:$0xff]
      %v3515 = vld [vmem:[%s3498 + $0x80] sm:$0xff]
      %v3516 = vld [vmem:[%s3498 + $0x88] sm:$0xff]
      %v3517 = vld [vmem:[%s3498 + $0x90] sm:$0xff]
      %v3518 = vld [vmem:[%s3498 + $0x98] sm:$0xff]
      %v3519 = vld [vmem:[%s3498 + $0xa0] sm:$0xff]
      %v3520 = vld [vmem:[%s3498 + $0xa8] sm:$0xff]
      %v3521 = vld [vmem:[%s3498 + $0xb0] sm:$0xff]
      %v3522 = vld [vmem:[%s3498 + $0xb8] sm:$0xff]
      %v3523 = vld [vmem:[%s3498 + $0xc0] sm:$0xff]
      %v3524 = vld [vmem:[%s3498 + $0xc8] sm:$0xff]
      %v3525 = vld [vmem:[%s3498 + $0xd0] sm:$0xff]
      %v3526 = vld [vmem:[%s3498 + $0xd8] sm:$0xff]
      %v3527 = vld [vmem:[%s3498 + $0xe0] sm:$0xff]
      %v3528 = vld [vmem:[%s3498 + $0xe8] sm:$0xff]
      %v3529 = vld [vmem:[%s3498 + $0xf0] sm:$0xff]
      %v3530 = vld [vmem:[%s3498 + $0xf8] sm:$0xff]
      %3532 = vset.pattern.permute.xlu0 0
      %3533 = vperm.xlu0 %3532, %v3499
      %v3534 = vpop.permute.xlu0 %3533
      %3537 = vset.pattern.permute.xlu0 0
      %3538 = vperm.xlu0 %3537, %v3500
      %v3539 = vpop.permute.xlu0 %3538
      %3542 = vset.pattern.permute.xlu0 0
      %3543 = vperm.xlu0 %3542, %v3501
      %v3544 = vpop.permute.xlu0 %3543
      %3547 = vset.pattern.permute.xlu0 0
      %3548 = vperm.xlu0 %3547, %v3502
      %v3549 = vpop.permute.xlu0 %3548
      %3552 = vset.pattern.permute.xlu0 0
      %3553 = vperm.xlu0 %3552, %v3503
      %v3554 = vpop.permute.xlu0 %3553
      %3557 = vset.pattern.permute.xlu0 0
      %3558 = vperm.xlu0 %3557, %v3504
      %v3559 = vpop.permute.xlu0 %3558
      %3562 = vset.pattern.permute.xlu0 0
      %3563 = vperm.xlu0 %3562, %v3505
      %v3564 = vpop.permute.xlu0 %3563
      %3567 = vset.pattern.permute.xlu0 0
      %3568 = vperm.xlu0 %3567, %v3506
      %v3569 = vpop.permute.xlu0 %3568
      %3572 = vset.pattern.permute.xlu0 0
      %3573 = vperm.xlu0 %3572, %v3507
      %v3574 = vpop.permute.xlu0 %3573
      %3577 = vset.pattern.permute.xlu0 0
      %3578 = vperm.xlu0 %3577, %v3508
      %v3579 = vpop.permute.xlu0 %3578
      %3582 = vset.pattern.permute.xlu0 0
      %3583 = vperm.xlu0 %3582, %v3509
      %v3584 = vpop.permute.xlu0 %3583
      %3587 = vset.pattern.permute.xlu0 0
      %3588 = vperm.xlu0 %3587, %v3510
      %v3589 = vpop.permute.xlu0 %3588
      %3592 = vset.pattern.permute.xlu0 0
      %3593 = vperm.xlu0 %3592, %v3511
      %v3594 = vpop.permute.xlu0 %3593
      %3597 = vset.pattern.permute.xlu0 0
      %3598 = vperm.xlu0 %3597, %v3512
      %v3599 = vpop.permute.xlu0 %3598
      %3602 = vset.pattern.permute.xlu0 0
      %3603 = vperm.xlu0 %3602, %v3513
      %v3604 = vpop.permute.xlu0 %3603
      %3607 = vset.pattern.permute.xlu0 0
      %3608 = vperm.xlu0 %3607, %v3514
      %v3609 = vpop.permute.xlu0 %3608
      %3612 = vset.pattern.permute.xlu0 0
      %3613 = vperm.xlu0 %3612, %v3515
      %v3614 = vpop.permute.xlu0 %3613
      %3617 = vset.pattern.permute.xlu0 0
      %3618 = vperm.xlu0 %3617, %v3516
      %v3619 = vpop.permute.xlu0 %3618
      %3622 = vset.pattern.permute.xlu0 0
      %3623 = vperm.xlu0 %3622, %v3517
      %v3624 = vpop.permute.xlu0 %3623
      %3627 = vset.pattern.permute.xlu0 0
      %3628 = vperm.xlu0 %3627, %v3518
      %v3629 = vpop.permute.xlu0 %3628
      %3632 = vset.pattern.permute.xlu0 0
      %3633 = vperm.xlu0 %3632, %v3519
      %v3634 = vpop.permute.xlu0 %3633
      %3637 = vset.pattern.permute.xlu0 0
      %3638 = vperm.xlu0 %3637, %v3520
      %v3639 = vpop.permute.xlu0 %3638
      %3642 = vset.pattern.permute.xlu0 0
      %3643 = vperm.xlu0 %3642, %v3521
      %v3644 = vpop.permute.xlu0 %3643
      %3647 = vset.pattern.permute.xlu0 0
      %3648 = vperm.xlu0 %3647, %v3522
      %v3649 = vpop.permute.xlu0 %3648
      %3652 = vset.pattern.permute.xlu0 0
      %3653 = vperm.xlu0 %3652, %v3523
      %v3654 = vpop.permute.xlu0 %3653
      %3657 = vset.pattern.permute.xlu0 0
      %3658 = vperm.xlu0 %3657, %v3524
      %v3659 = vpop.permute.xlu0 %3658
      %3662 = vset.pattern.permute.xlu0 0
      %3663 = vperm.xlu0 %3662, %v3525
      %v3664 = vpop.permute.xlu0 %3663
      %3667 = vset.pattern.permute.xlu0 0
      %3668 = vperm.xlu0 %3667, %v3526
      %v3669 = vpop.permute.xlu0 %3668
      %3672 = vset.pattern.permute.xlu0 0
      %3673 = vperm.xlu0 %3672, %v3527
      %v3674 = vpop.permute.xlu0 %3673
      %3677 = vset.pattern.permute.xlu0 0
      %3678 = vperm.xlu0 %3677, %v3528
      %v3679 = vpop.permute.xlu0 %3678
      %3682 = vset.pattern.permute.xlu0 0
      %3683 = vperm.xlu0 %3682, %v3529
      %v3684 = vpop.permute.xlu0 %3683
      %3687 = vset.pattern.permute.xlu0 0
      %3688 = vperm.xlu0 %3687, %v3530
      %v3689 = vpop.permute.xlu0 %3688
      %v3691 = vmul.f32 %v502, %v3534
      %v3692 = vmul.f32 %v501, %v3539
      %v3693 = vmul.f32 %v500, %v3544
      %v3694 = vmul.f32 %v499, %v3549
      %v3695 = vmul.f32 %v498, %v3554
      %v3696 = vmul.f32 %v497, %v3559
      %v3697 = vmul.f32 %v496, %v3564
      %v3698 = vmul.f32 %v495, %v3569
      %v3699 = vmul.f32 %v494, %v3574
      %v3700 = vmul.f32 %v493, %v3579
      %v3701 = vmul.f32 %v492, %v3584
      %v3702 = vmul.f32 %v491, %v3589
      %v3703 = vmul.f32 %v490, %v3594
      %v3704 = vmul.f32 %v489, %v3599
      %v3705 = vmul.f32 %v488, %v3604
      %v3706 = vmul.f32 %v487, %v3609
      %v3707 = vmul.f32 %v486, %v3614
      %v3708 = vmul.f32 %v485, %v3619
      %v3709 = vmul.f32 %v484, %v3624
      %v3710 = vmul.f32 %v483, %v3629
      %v3711 = vmul.f32 %v482, %v3634
      %v3712 = vmul.f32 %v481, %v3639
      %v3713 = vmul.f32 %v480, %v3644
      %v3714 = vmul.f32 %v479, %v3649
      %v3715 = vmul.f32 %v478, %v3654
      %v3716 = vmul.f32 %v477, %v3659
      %v3717 = vmul.f32 %v476, %v3664
      %v3718 = vmul.f32 %v475, %v3669
      %v3719 = vmul.f32 %v474, %v3674
      %v3720 = vmul.f32 %v473, %v3679
      %v3721 = vmul.f32 %v504, %v3684
      %v3722 = vmul.f32 %v503, %v3689
      %v3723 = vpack.c.bf16 %v3692, %v3691
      %v3724 = vpack.c.bf16 %v3694, %v3693
      %v3725 = vpack.c.bf16 %v3696, %v3695
      %v3726 = vpack.c.bf16 %v3698, %v3697
      %v3727 = vpack.c.bf16 %v3700, %v3699
      %v3728 = vpack.c.bf16 %v3702, %v3701
      %v3729 = vpack.c.bf16 %v3704, %v3703
      %v3730 = vpack.c.bf16 %v3706, %v3705
      %v3731 = vpack.c.bf16 %v3708, %v3707
      %v3732 = vpack.c.bf16 %v3710, %v3709
      %v3733 = vpack.c.bf16 %v3712, %v3711
      %v3734 = vpack.c.bf16 %v3714, %v3713
      %v3735 = vpack.c.bf16 %v3716, %v3715
      %v3736 = vpack.c.bf16 %v3718, %v3717
      %v3737 = vpack.c.bf16 %v3720, %v3719
      %v3738 = vpack.c.bf16 %v3722, %v3721
      %s3739 = scalar_lea.vmem %s3, 384
      %v3740 = vld [vmem:[%s3739] sm:$0xf]
      %v3741 = vld [vmem:[%s3739 + $0x4] sm:$0xf]
      %v3742 = vld [vmem:[%s3739 + $0x8] sm:$0xf]
      %v3743 = vld [vmem:[%s3739 + $0xc] sm:$0xf]
      %v3744 = vld [vmem:[%s3739 + $0x10] sm:$0xf]
      %v3745 = vld [vmem:[%s3739 + $0x14] sm:$0xf]
      %v3746 = vld [vmem:[%s3739 + $0x18] sm:$0xf]
      %v3747 = vld [vmem:[%s3739 + $0x1c] sm:$0xf]
      %v3748 = vld [vmem:[%s3739 + $0x20] sm:$0xf]
      %v3749 = vld [vmem:[%s3739 + $0x24] sm:$0xf]
      %v3750 = vld [vmem:[%s3739 + $0x28] sm:$0xf]
      %v3751 = vld [vmem:[%s3739 + $0x2c] sm:$0xf]
      %v3752 = vld [vmem:[%s3739 + $0x30] sm:$0xf]
      %v3753 = vld [vmem:[%s3739 + $0x34] sm:$0xf]
      %v3754 = vld [vmem:[%s3739 + $0x38] sm:$0xf]
      %v3755 = vld [vmem:[%s3739 + $0x3c] sm:$0xf]
      %v3772 = vunpack.c.l.b16 %v3740
      %v3773 = vunpack.c.l.b16 %v3741
      %v3774 = vunpack.c.l.b16 %v3742
      %v3775 = vunpack.c.l.b16 %v3743
      %v3776 = vunpack.c.l.b16 %v3744
      %v3777 = vunpack.c.l.b16 %v3745
      %v3778 = vunpack.c.l.b16 %v3746
      %v3779 = vunpack.c.l.b16 %v3747
      %v3780 = vunpack.c.l.b16 %v3748
      %v3781 = vunpack.c.l.b16 %v3749
      %v3782 = vunpack.c.l.b16 %v3750
      %v3783 = vunpack.c.l.b16 %v3751
      %v3784 = vunpack.c.l.b16 %v3752
      %v3785 = vunpack.c.l.b16 %v3753
      %v3786 = vunpack.c.l.b16 %v3754
      %v3787 = vunpack.c.l.b16 %v3755
      %v3788 = vpack.c.b16 %v3773, %v3772
      %v3789 = vpack.c.b16 %v3775, %v3774
      %v3790 = vpack.c.b16 %v3777, %v3776
      %v3791 = vpack.c.b16 %v3779, %v3778
      %v3792 = vpack.c.b16 %v3781, %v3780
      %v3793 = vpack.c.b16 %v3783, %v3782
      %v3794 = vpack.c.b16 %v3785, %v3784
      %v3795 = vpack.c.b16 %v3787, %v3786
      %3804 = vmatprep.subr.bf16.mxu0 0
      %3805 = vmatpush1.bf16.msra.mxu0 %v3788
      %3806 = vmatprep.subr.bf16.mxu0 0
      %3807 = vmatpush1.bf16.msra.mxu0 %v3789
      %3808 = vmatprep.subr.bf16.mxu0 0
      %3809 = vmatpush1.bf16.msra.mxu0 %v3790
      %3810 = vmatprep.subr.bf16.mxu0 0
      %3811 = vmatpush1.bf16.msra.mxu0 %v3791
      %3812 = vmatprep.subr.bf16.mxu0 0
      %3813 = vmatpush1.bf16.msra.mxu0 %v3792
      %3814 = vmatprep.subr.bf16.mxu0 0
      %3815 = vmatpush1.bf16.msra.mxu0 %v3793
      %3816 = vmatprep.subr.bf16.mxu0 0
      %3817 = vmatpush1.bf16.msra.mxu0 %v3794
      %3818 = vmatprep.subr.bf16.mxu0 0
      %3819 = vmatpush1.bf16.msra.mxu0 %v3795
      %3820 = vmatprep.subr.bf16.mxu0 0
      %3821 = vmatpush1.bf16.msra.mxu0 0
      %3822 = vmatprep.subr.bf16.mxu0 0
      %3823 = vmatpush1.bf16.msra.mxu0 0
      %3824 = vmatprep.subr.bf16.mxu0 0
      %3825 = vmatpush1.bf16.msra.mxu0 0
      %3826 = vmatprep.subr.bf16.mxu0 0
      %3827 = vmatpush1.bf16.msra.mxu0 0
      %3828 = vmatprep.subr.bf16.mxu0 0
      %3829 = vmatpush1.bf16.msra.mxu0 0
      %3830 = vmatprep.subr.bf16.mxu0 0
      %3831 = vmatpush1.bf16.msra.mxu0 0
      %3832 = vmatprep.subr.bf16.mxu0 0
      %3833 = vmatpush1.bf16.msra.mxu0 0
      %3834 = vmatprep.subr.bf16.mxu0 0
      %3835 = vmatpush1.bf16.msra.mxu0 0
      %3836 = vmatprep.mubr.bf16.mxu0 0
      %3837 = vmatmul.mubr.bf16.gmra.mrb[0].mxu0 %v3723
      %v3838 = vpop.f32.mrb[0].mxu0
      %v3839 = vadd.f32 0.0, %v3838
      %v3840 = vpop.f32.mrb[0].mxu0
      %v3841 = vpop.f32.mrb[0].mxu0
      %v3842 = vadd.f32 0.0, %v3841
      %v3843 = vpop.f32.mrb[0].mxu0
      %3844 = vmatprep.mubr.bf16.mxu0 0
      %3845 = vmatmul.mubr.bf16.gmra.mrb[0].mxu0 %v3724
      %v3846 = vpop.f32.mrb[0].mxu0
      %v3847 = vadd.f32 0.0, %v3846
      %v3848 = vpop.f32.mrb[0].mxu0
      %v3849 = vpop.f32.mrb[0].mxu0
      %v3850 = vadd.f32 0.0, %v3849
      %v3851 = vpop.f32.mrb[0].mxu0
      %3852 = vmatprep.mubr.bf16.mxu0 0
      %3853 = vmatmul.mubr.bf16.gmra.mrb[0].mxu0 %v3725
      %v3854 = vpop.f32.mrb[0].mxu0
      %v3855 = vadd.f32 0.0, %v3854
      %v3856 = vpop.f32.mrb[0].mxu0
      %v3857 = vpop.f32.mrb[0].mxu0
      %v3858 = vadd.f32 0.0, %v3857
      %v3859 = vpop.f32.mrb[0].mxu0
      %3860 = vmatprep.mubr.bf16.mxu0 0
      %3861 = vmatmul.mubr.bf16.gmra.mrb[0].mxu0 %v3726
      %v3862 = vpop.f32.mrb[0].mxu0
      %v3863 = vadd.f32 0.0, %v3862
      %v3864 = vpop.f32.mrb[0].mxu0
      %v3865 = vpop.f32.mrb[0].mxu0
      %v3866 = vadd.f32 0.0, %v3865
      %v3867 = vpop.f32.mrb[0].mxu0
      %3868 = vmatprep.mubr.bf16.mxu0 0
      %3869 = vmatmul.mubr.bf16.gmra.mrb[0].mxu0 %v3727
      %v3870 = vpop.f32.mrb[0].mxu0
      %v3871 = vadd.f32 0.0, %v3870
      %v3872 = vpop.f32.mrb[0].mxu0
      %v3873 = vpop.f32.mrb[0].mxu0
      %v3874 = vadd.f32 0.0, %v3873
      %v3875 = vpop.f32.mrb[0].mxu0
      %3876 = vmatprep.mubr.bf16.mxu0 0
      %3877 = vmatmul.mubr.bf16.gmra.mrb[0].mxu0 %v3728
      %v3878 = vpop.f32.mrb[0].mxu0
      %v3879 = vadd.f32 0.0, %v3878
      %v3880 = vpop.f32.mrb[0].mxu0
      %v3881 = vpop.f32.mrb[0].mxu0
      %v3882 = vadd.f32 0.0, %v3881
      %v3883 = vpop.f32.mrb[0].mxu0
      %3884 = vmatprep.mubr.bf16.mxu0 0
      %3885 = vmatmul.mubr.bf16.gmra.mrb[0].mxu0 %v3729
      %v3886 = vpop.f32.mrb[0].mxu0
      %v3887 = vadd.f32 0.0, %v3886
      %v3888 = vpop.f32.mrb[0].mxu0
      %v3889 = vpop.f32.mrb[0].mxu0
      %v3890 = vadd.f32 0.0, %v3889
      %v3891 = vpop.f32.mrb[0].mxu0
      %3892 = vmatprep.mubr.bf16.mxu0 0
      %3893 = vmatmul.mubr.bf16.gmra.mrb[0].mxu0 %v3730
      %v3894 = vpop.f32.mrb[0].mxu0
      %v3895 = vadd.f32 0.0, %v3894
      %v3896 = vpop.f32.mrb[0].mxu0
      %v3897 = vpop.f32.mrb[0].mxu0
      %v3898 = vadd.f32 0.0, %v3897
      %v3899 = vpop.f32.mrb[0].mxu0
      %3900 = vmatprep.mubr.bf16.mxu0 0
      %3901 = vmatmul.mubr.bf16.gmra.mrb[0].mxu0 %v3731
      %v3902 = vpop.f32.mrb[0].mxu0
      %v3903 = vadd.f32 0.0, %v3902
      %v3904 = vpop.f32.mrb[0].mxu0
      %v3905 = vpop.f32.mrb[0].mxu0
      %v3906 = vadd.f32 0.0, %v3905
      %v3907 = vpop.f32.mrb[0].mxu0
      %3908 = vmatprep.mubr.bf16.mxu0 0
      %3909 = vmatmul.mubr.bf16.gmra.mrb[0].mxu0 %v3732
      %v3910 = vpop.f32.mrb[0].mxu0
      %v3911 = vadd.f32 0.0, %v3910
      %v3912 = vpop.f32.mrb[0].mxu0
      %v3913 = vpop.f32.mrb[0].mxu0
      %v3914 = vadd.f32 0.0, %v3913
      %v3915 = vpop.f32.mrb[0].mxu0
      %3916 = vmatprep.mubr.bf16.mxu0 0
      %3917 = vmatmul.mubr.bf16.gmra.mrb[0].mxu0 %v3733
      %v3918 = vpop.f32.mrb[0].mxu0
      %v3919 = vadd.f32 0.0, %v3918
      %v3920 = vpop.f32.mrb[0].mxu0
      %v3921 = vpop.f32.mrb[0].mxu0
      %v3922 = vadd.f32 0.0, %v3921
      %v3923 = vpop.f32.mrb[0].mxu0
      %3924 = vmatprep.mubr.bf16.mxu0 0
      %3925 = vmatmul.mubr.bf16.gmra.mrb[0].mxu0 %v3734
      %v3926 = vpop.f32.mrb[0].mxu0
      %v3927 = vadd.f32 0.0, %v3926
      %v3928 = vpop.f32.mrb[0].mxu0
      %v3929 = vpop.f32.mrb[0].mxu0
      %v3930 = vadd.f32 0.0, %v3929
      %v3931 = vpop.f32.mrb[0].mxu0
      %3932 = vmatprep.mubr.bf16.mxu0 0
      %3933 = vmatmul.mubr.bf16.gmra.mrb[0].mxu0 %v3735
      %v3934 = vpop.f32.mrb[0].mxu0
      %v3935 = vadd.f32 0.0, %v3934
      %v3936 = vpop.f32.mrb[0].mxu0
      %v3937 = vpop.f32.mrb[0].mxu0
      %v3938 = vadd.f32 0.0, %v3937
      %v3939 = vpop.f32.mrb[0].mxu0
      %3940 = vmatprep.mubr.bf16.mxu0 0
      %3941 = vmatmul.mubr.bf16.gmra.mrb[0].mxu0 %v3736
      %v3942 = vpop.f32.mrb[0].mxu0
      %v3943 = vadd.f32 0.0, %v3942
      %v3944 = vpop.f32.mrb[0].mxu0
      %v3945 = vpop.f32.mrb[0].mxu0
      %v3946 = vadd.f32 0.0, %v3945
      %v3947 = vpop.f32.mrb[0].mxu0
      %3948 = vmatprep.mubr.bf16.mxu0 0
      %3949 = vmatmul.mubr.bf16.gmra.mrb[0].mxu0 %v3737
      %v3950 = vpop.f32.mrb[0].mxu0
      %v3951 = vadd.f32 0.0, %v3950
      %v3952 = vpop.f32.mrb[0].mxu0
      %v3953 = vpop.f32.mrb[0].mxu0
      %v3954 = vadd.f32 0.0, %v3953
      %v3955 = vpop.f32.mrb[0].mxu0
      %3956 = vmatprep.mubr.bf16.mxu0 0
      %3957 = vmatmul.mubr.bf16.gmra.mrb[0].mxu0 %v3738
      %v3958 = vpop.f32.mrb[0].mxu0
      %v3959 = vadd.f32 0.0, %v3958
      %v3960 = vpop.f32.mrb[0].mxu0
      %v3961 = vpop.f32.mrb[0].mxu0
      %v3962 = vadd.f32 0.0, %v3961
      %v3963 = vpop.f32.mrb[0].mxu0
      %3964 = vdwg.mxu0
      %v3965 = vadd.f32 %v3466, %v3839
      %v3966 = vadd.f32 %v3467, %v3842
      %v3967 = vadd.f32 %v3468, %v3847
      %v3968 = vadd.f32 %v3469, %v3850
      %v3969 = vadd.f32 %v3470, %v3855
      %v3970 = vadd.f32 %v3471, %v3858
      %v3971 = vadd.f32 %v3472, %v3863
      %v3972 = vadd.f32 %v3473, %v3866
      %v3973 = vadd.f32 %v3474, %v3871
      %v3974 = vadd.f32 %v3475, %v3874
      %v3975 = vadd.f32 %v3476, %v3879
      %v3976 = vadd.f32 %v3477, %v3882
      %v3977 = vadd.f32 %v3478, %v3887
      %v3978 = vadd.f32 %v3479, %v3890
      %v3979 = vadd.f32 %v3480, %v3895
      %v3980 = vadd.f32 %v3481, %v3898
      %v3981 = vadd.f32 %v3482, %v3903
      %v3982 = vadd.f32 %v3483, %v3906
      %v3983 = vadd.f32 %v3484, %v3911
      %v3984 = vadd.f32 %v3485, %v3914
      %v3985 = vadd.f32 %v3486, %v3919
      %v3986 = vadd.f32 %v3487, %v3922
      %v3987 = vadd.f32 %v3488, %v3927
      %v3988 = vadd.f32 %v3489, %v3930
      %v3989 = vadd.f32 %v3490, %v3935
      %v3990 = vadd.f32 %v3491, %v3938
      %v3991 = vadd.f32 %v3492, %v3943
      %v3992 = vadd.f32 %v3493, %v3946
      %v3993 = vadd.f32 %v3494, %v3951
      %v3994 = vadd.f32 %v3495, %v3954
      %v3995 = vadd.f32 %v3496, %v3959
      %v3996 = vadd.f32 %v3497, %v3962
      %s3997 = scalar_lea.vmem %s4, 1792
      %v3998 = vld [vmem:[%s3997] sm:$0xff]
      %v3999 = vld [vmem:[%s3997 + $0x8] sm:$0xff]
      %v4000 = vld [vmem:[%s3997 + $0x10] sm:$0xff]
      %v4001 = vld [vmem:[%s3997 + $0x18] sm:$0xff]
      %v4002 = vld [vmem:[%s3997 + $0x20] sm:$0xff]
      %v4003 = vld [vmem:[%s3997 + $0x28] sm:$0xff]
      %v4004 = vld [vmem:[%s3997 + $0x30] sm:$0xff]
      %v4005 = vld [vmem:[%s3997 + $0x38] sm:$0xff]
      %v4006 = vld [vmem:[%s3997 + $0x40] sm:$0xff]
      %v4007 = vld [vmem:[%s3997 + $0x48] sm:$0xff]
      %v4008 = vld [vmem:[%s3997 + $0x50] sm:$0xff]
      %v4009 = vld [vmem:[%s3997 + $0x58] sm:$0xff]
      %v4010 = vld [vmem:[%s3997 + $0x60] sm:$0xff]
      %v4011 = vld [vmem:[%s3997 + $0x68] sm:$0xff]
      %v4012 = vld [vmem:[%s3997 + $0x70] sm:$0xff]
      %v4013 = vld [vmem:[%s3997 + $0x78] sm:$0xff]
      %v4014 = vld [vmem:[%s3997 + $0x80] sm:$0xff]
      %v4015 = vld [vmem:[%s3997 + $0x88] sm:$0xff]
      %v4016 = vld [vmem:[%s3997 + $0x90] sm:$0xff]
      %v4017 = vld [vmem:[%s3997 + $0x98] sm:$0xff]
      %v4018 = vld [vmem:[%s3997 + $0xa0] sm:$0xff]
      %v4019 = vld [vmem:[%s3997 + $0xa8] sm:$0xff]
      %v4020 = vld [vmem:[%s3997 + $0xb0] sm:$0xff]
      %v4021 = vld [vmem:[%s3997 + $0xb8] sm:$0xff]
      %v4022 = vld [vmem:[%s3997 + $0xc0] sm:$0xff]
      %v4023 = vld [vmem:[%s3997 + $0xc8] sm:$0xff]
      %v4024 = vld [vmem:[%s3997 + $0xd0] sm:$0xff]
      %v4025 = vld [vmem:[%s3997 + $0xd8] sm:$0xff]
      %v4026 = vld [vmem:[%s3997 + $0xe0] sm:$0xff]
      %v4027 = vld [vmem:[%s3997 + $0xe8] sm:$0xff]
      %v4028 = vld [vmem:[%s3997 + $0xf0] sm:$0xff]
      %v4029 = vld [vmem:[%s3997 + $0xf8] sm:$0xff]
      %4031 = vset.pattern.permute.xlu0 0
      %4032 = vperm.xlu0 %4031, %v3998
      %v4033 = vpop.permute.xlu0 %4032
      %4036 = vset.pattern.permute.xlu0 0
      %4037 = vperm.xlu0 %4036, %v3999
      %v4038 = vpop.permute.xlu0 %4037
      %4041 = vset.pattern.permute.xlu0 0
      %4042 = vperm.xlu0 %4041, %v4000
      %v4043 = vpop.permute.xlu0 %4042
      %4046 = vset.pattern.permute.xlu0 0
      %4047 = vperm.xlu0 %4046, %v4001
      %v4048 = vpop.permute.xlu0 %4047
      %4051 = vset.pattern.permute.xlu0 0
      %4052 = vperm.xlu0 %4051, %v4002
      %v4053 = vpop.permute.xlu0 %4052
      %4056 = vset.pattern.permute.xlu0 0
      %4057 = vperm.xlu0 %4056, %v4003
      %v4058 = vpop.permute.xlu0 %4057
      %4061 = vset.pattern.permute.xlu0 0
      %4062 = vperm.xlu0 %4061, %v4004
      %v4063 = vpop.permute.xlu0 %4062
      %4066 = vset.pattern.permute.xlu0 0
      %4067 = vperm.xlu0 %4066, %v4005
      %v4068 = vpop.permute.xlu0 %4067
      %4071 = vset.pattern.permute.xlu0 0
      %4072 = vperm.xlu0 %4071, %v4006
      %v4073 = vpop.permute.xlu0 %4072
      %4076 = vset.pattern.permute.xlu0 0
      %4077 = vperm.xlu0 %4076, %v4007
      %v4078 = vpop.permute.xlu0 %4077
      %4081 = vset.pattern.permute.xlu0 0
      %4082 = vperm.xlu0 %4081, %v4008
      %v4083 = vpop.permute.xlu0 %4082
      %4086 = vset.pattern.permute.xlu0 0
      %4087 = vperm.xlu0 %4086, %v4009
      %v4088 = vpop.permute.xlu0 %4087
      %4091 = vset.pattern.permute.xlu0 0
      %4092 = vperm.xlu0 %4091, %v4010
      %v4093 = vpop.permute.xlu0 %4092
      %4096 = vset.pattern.permute.xlu0 0
      %4097 = vperm.xlu0 %4096, %v4011
      %v4098 = vpop.permute.xlu0 %4097
      %4101 = vset.pattern.permute.xlu0 0
      %4102 = vperm.xlu0 %4101, %v4012
      %v4103 = vpop.permute.xlu0 %4102
      %4106 = vset.pattern.permute.xlu0 0
      %4107 = vperm.xlu0 %4106, %v4013
      %v4108 = vpop.permute.xlu0 %4107
      %4111 = vset.pattern.permute.xlu0 0
      %4112 = vperm.xlu0 %4111, %v4014
      %v4113 = vpop.permute.xlu0 %4112
      %4116 = vset.pattern.permute.xlu0 0
      %4117 = vperm.xlu0 %4116, %v4015
      %v4118 = vpop.permute.xlu0 %4117
      %4121 = vset.pattern.permute.xlu0 0
      %4122 = vperm.xlu0 %4121, %v4016
      %v4123 = vpop.permute.xlu0 %4122
      %4126 = vset.pattern.permute.xlu0 0
      %4127 = vperm.xlu0 %4126, %v4017
      %v4128 = vpop.permute.xlu0 %4127
      %4131 = vset.pattern.permute.xlu0 0
      %4132 = vperm.xlu0 %4131, %v4018
      %v4133 = vpop.permute.xlu0 %4132
      %4136 = vset.pattern.permute.xlu0 0
      %4137 = vperm.xlu0 %4136, %v4019
      %v4138 = vpop.permute.xlu0 %4137
      %4141 = vset.pattern.permute.xlu0 0
      %4142 = vperm.xlu0 %4141, %v4020
      %v4143 = vpop.permute.xlu0 %4142
      %4146 = vset.pattern.permute.xlu0 0
      %4147 = vperm.xlu0 %4146, %v4021
      %v4148 = vpop.permute.xlu0 %4147
      %4151 = vset.pattern.permute.xlu0 0
      %4152 = vperm.xlu0 %4151, %v4022
      %v4153 = vpop.permute.xlu0 %4152
      %4156 = vset.pattern.permute.xlu0 0
      %4157 = vperm.xlu0 %4156, %v4023
      %v4158 = vpop.permute.xlu0 %4157
      %4161 = vset.pattern.permute.xlu0 0
      %4162 = vperm.xlu0 %4161, %v4024
      %v4163 = vpop.permute.xlu0 %4162
      %4166 = vset.pattern.permute.xlu0 0
      %4167 = vperm.xlu0 %4166, %v4025
      %v4168 = vpop.permute.xlu0 %4167
      %4171 = vset.pattern.permute.xlu0 0
      %4172 = vperm.xlu0 %4171, %v4026
      %v4173 = vpop.permute.xlu0 %4172
      %4176 = vset.pattern.permute.xlu0 0
      %4177 = vperm.xlu0 %4176, %v4027
      %v4178 = vpop.permute.xlu0 %4177
      %4181 = vset.pattern.permute.xlu0 0
      %4182 = vperm.xlu0 %4181, %v4028
      %v4183 = vpop.permute.xlu0 %4182
      %4186 = vset.pattern.permute.xlu0 0
      %4187 = vperm.xlu0 %4186, %v4029
      %v4188 = vpop.permute.xlu0 %4187
      %v4190 = vmul.f32 %v408, %v4033
      %v4191 = vmul.f32 %v409, %v4038
      %v4192 = vmul.f32 %v410, %v4043
      %v4193 = vmul.f32 %v411, %v4048
      %v4194 = vmul.f32 %v412, %v4053
      %v4195 = vmul.f32 %v413, %v4058
      %v4196 = vmul.f32 %v414, %v4063
      %v4197 = vmul.f32 %v415, %v4068
      %v4198 = vmul.f32 %v416, %v4073
      %v4199 = vmul.f32 %v417, %v4078
      %v4200 = vmul.f32 %v418, %v4083
      %v4201 = vmul.f32 %v419, %v4088
      %v4202 = vmul.f32 %v420, %v4093
      %v4203 = vmul.f32 %v421, %v4098
      %v4204 = vmul.f32 %v422, %v4103
      %v4205 = vmul.f32 %v423, %v4108
      %v4206 = vmul.f32 %v424, %v4113
      %v4207 = vmul.f32 %v425, %v4118
      %v4208 = vmul.f32 %v426, %v4123
      %v4209 = vmul.f32 %v427, %v4128
      %v4210 = vmul.f32 %v428, %v4133
      %v4211 = vmul.f32 %v429, %v4138
      %v4212 = vmul.f32 %v430, %v4143
      %v4213 = vmul.f32 %v431, %v4148
      %v4214 = vmul.f32 %v432, %v4153
      %v4215 = vmul.f32 %v433, %v4158
      %v4216 = vmul.f32 %v434, %v4163
      %v4217 = vmul.f32 %v435, %v4168
      %v4218 = vmul.f32 %v436, %v4173
      %v4219 = vmul.f32 %v437, %v4178
      %v4220 = vmul.f32 %v406, %v4183
      %v4221 = vmul.f32 %v407, %v4188
      %v4222 = vpack.c.bf16 %v4191, %v4190
      %v4223 = vpack.c.bf16 %v4193, %v4192
      %v4224 = vpack.c.bf16 %v4195, %v4194
      %v4225 = vpack.c.bf16 %v4197, %v4196
      %v4226 = vpack.c.bf16 %v4199, %v4198
      %v4227 = vpack.c.bf16 %v4201, %v4200
      %v4228 = vpack.c.bf16 %v4203, %v4202
      %v4229 = vpack.c.bf16 %v4205, %v4204
      %v4230 = vpack.c.bf16 %v4207, %v4206
      %v4231 = vpack.c.bf16 %v4209, %v4208
      %v4232 = vpack.c.bf16 %v4211, %v4210
      %v4233 = vpack.c.bf16 %v4213, %v4212
      %v4234 = vpack.c.bf16 %v4215, %v4214
      %v4235 = vpack.c.bf16 %v4217, %v4216
      %v4236 = vpack.c.bf16 %v4219, %v4218
      %v4237 = vpack.c.bf16 %v4221, %v4220
      %s4238 = scalar_lea.vmem %s3, 448
      %v4239 = vld [vmem:[%s4238] sm:$0xf]
      %v4240 = vld [vmem:[%s4238 + $0x4] sm:$0xf]
      %v4241 = vld [vmem:[%s4238 + $0x8] sm:$0xf]
      %v4242 = vld [vmem:[%s4238 + $0xc] sm:$0xf]
      %v4243 = vld [vmem:[%s4238 + $0x10] sm:$0xf]
      %v4244 = vld [vmem:[%s4238 + $0x14] sm:$0xf]
      %v4245 = vld [vmem:[%s4238 + $0x18] sm:$0xf]
      %v4246 = vld [vmem:[%s4238 + $0x1c] sm:$0xf]
      %v4247 = vld [vmem:[%s4238 + $0x20] sm:$0xf]
      %v4248 = vld [vmem:[%s4238 + $0x24] sm:$0xf]
      %v4249 = vld [vmem:[%s4238 + $0x28] sm:$0xf]
      %v4250 = vld [vmem:[%s4238 + $0x2c] sm:$0xf]
      %v4251 = vld [vmem:[%s4238 + $0x30] sm:$0xf]
      %v4252 = vld [vmem:[%s4238 + $0x34] sm:$0xf]
      %v4253 = vld [vmem:[%s4238 + $0x38] sm:$0xf]
      %v4254 = vld [vmem:[%s4238 + $0x3c] sm:$0xf]
      %v4271 = vunpack.c.l.b16 %v4239
      %v4272 = vunpack.c.l.b16 %v4240
      %v4273 = vunpack.c.l.b16 %v4241
      %v4274 = vunpack.c.l.b16 %v4242
      %v4275 = vunpack.c.l.b16 %v4243
      %v4276 = vunpack.c.l.b16 %v4244
      %v4277 = vunpack.c.l.b16 %v4245
      %v4278 = vunpack.c.l.b16 %v4246
      %v4279 = vunpack.c.l.b16 %v4247
      %v4280 = vunpack.c.l.b16 %v4248
      %v4281 = vunpack.c.l.b16 %v4249
      %v4282 = vunpack.c.l.b16 %v4250
      %v4283 = vunpack.c.l.b16 %v4251
      %v4284 = vunpack.c.l.b16 %v4252
      %v4285 = vunpack.c.l.b16 %v4253
      %v4286 = vunpack.c.l.b16 %v4254
      %v4287 = vpack.c.b16 %v4272, %v4271
      %v4288 = vpack.c.b16 %v4274, %v4273
      %v4289 = vpack.c.b16 %v4276, %v4275
      %v4290 = vpack.c.b16 %v4278, %v4277
      %v4291 = vpack.c.b16 %v4280, %v4279
      %v4292 = vpack.c.b16 %v4282, %v4281
      %v4293 = vpack.c.b16 %v4284, %v4283
      %v4294 = vpack.c.b16 %v4286, %v4285
      %4303 = vmatprep.subr.bf16.mxu0 0
      %4304 = vmatpush1.bf16.msra.mxu0 %v4287
      %4305 = vmatprep.subr.bf16.mxu0 0
      %4306 = vmatpush1.bf16.msra.mxu0 %v4288
      %4307 = vmatprep.subr.bf16.mxu0 0
      %4308 = vmatpush1.bf16.msra.mxu0 %v4289
      %4309 = vmatprep.subr.bf16.mxu0 0
      %4310 = vmatpush1.bf16.msra.mxu0 %v4290
      %4311 = vmatprep.subr.bf16.mxu0 0
      %4312 = vmatpush1.bf16.msra.mxu0 %v4291
      %4313 = vmatprep.subr.bf16.mxu0 0
      %4314 = vmatpush1.bf16.msra.mxu0 %v4292
      %4315 = vmatprep.subr.bf16.mxu0 0
      %4316 = vmatpush1.bf16.msra.mxu0 %v4293
      %4317 = vmatprep.subr.bf16.mxu0 0
      %4318 = vmatpush1.bf16.msra.mxu0 %v4294
      %4319 = vmatprep.subr.bf16.mxu0 0
      %4320 = vmatpush1.bf16.msra.mxu0 0
      %4321 = vmatprep.subr.bf16.mxu0 0
      %4322 = vmatpush1.bf16.msra.mxu0 0
      %4323 = vmatprep.subr.bf16.mxu0 0
      %4324 = vmatpush1.bf16.msra.mxu0 0
      %4325 = vmatprep.subr.bf16.mxu0 0
      %4326 = vmatpush1.bf16.msra.mxu0 0
      %4327 = vmatprep.subr.bf16.mxu0 0
      %4328 = vmatpush1.bf16.msra.mxu0 0
      %4329 = vmatprep.subr.bf16.mxu0 0
      %4330 = vmatpush1.bf16.msra.mxu0 0
      %4331 = vmatprep.subr.bf16.mxu0 0
      %4332 = vmatpush1.bf16.msra.mxu0 0
      %4333 = vmatprep.subr.bf16.mxu0 0
      %4334 = vmatpush1.bf16.msra.mxu0 0
      %4335 = vmatprep.mubr.bf16.mxu0 0
      %4336 = vmatmul.mubr.bf16.gmra.mrb[0].mxu0 %v4222
      %v4337 = vpop.f32.mrb[0].mxu0
      %v4338 = vadd.f32 0.0, %v4337
      %v4339 = vpop.f32.mrb[0].mxu0
      %v4340 = vpop.f32.mrb[0].mxu0
      %v4341 = vadd.f32 0.0, %v4340
      %v4342 = vpop.f32.mrb[0].mxu0
      %4343 = vmatprep.mubr.bf16.mxu0 0
      %4344 = vmatmul.mubr.bf16.gmra.mrb[0].mxu0 %v4223
      %v4345 = vpop.f32.mrb[0].mxu0
      %v4346 = vadd.f32 0.0, %v4345
      %v4347 = vpop.f32.mrb[0].mxu0
      %v4348 = vpop.f32.mrb[0].mxu0
      %v4349 = vadd.f32 0.0, %v4348
      %v4350 = vpop.f32.mrb[0].mxu0
      %4351 = vmatprep.mubr.bf16.mxu0 0
      %4352 = vmatmul.mubr.bf16.gmra.mrb[0].mxu0 %v4224
      %v4353 = vpop.f32.mrb[0].mxu0
      %v4354 = vadd.f32 0.0, %v4353
      %v4355 = vpop.f32.mrb[0].mxu0
      %v4356 = vpop.f32.mrb[0].mxu0
      %v4357 = vadd.f32 0.0, %v4356
      %v4358 = vpop.f32.mrb[0].mxu0
      %4359 = vmatprep.mubr.bf16.mxu0 0
      %4360 = vmatmul.mubr.bf16.gmra.mrb[0].mxu0 %v4225
      %v4361 = vpop.f32.mrb[0].mxu0
      %v4362 = vadd.f32 0.0, %v4361
      %v4363 = vpop.f32.mrb[0].mxu0
      %v4364 = vpop.f32.mrb[0].mxu0
      %v4365 = vadd.f32 0.0, %v4364
      %v4366 = vpop.f32.mrb[0].mxu0
      %4367 = vmatprep.mubr.bf16.mxu0 0
      %4368 = vmatmul.mubr.bf16.gmra.mrb[0].mxu0 %v4226
      %v4369 = vpop.f32.mrb[0].mxu0
      %v4370 = vadd.f32 0.0, %v4369
      %v4371 = vpop.f32.mrb[0].mxu0
      %v4372 = vpop.f32.mrb[0].mxu0
      %v4373 = vadd.f32 0.0, %v4372
      %v4374 = vpop.f32.mrb[0].mxu0
      %4375 = vmatprep.mubr.bf16.mxu0 0
      %4376 = vmatmul.mubr.bf16.gmra.mrb[0].mxu0 %v4227
      %v4377 = vpop.f32.mrb[0].mxu0
      %v4378 = vadd.f32 0.0, %v4377
      %v4379 = vpop.f32.mrb[0].mxu0
      %v4380 = vpop.f32.mrb[0].mxu0
      %v4381 = vadd.f32 0.0, %v4380
      %v4382 = vpop.f32.mrb[0].mxu0
      %4383 = vmatprep.mubr.bf16.mxu0 0
      %4384 = vmatmul.mubr.bf16.gmra.mrb[0].mxu0 %v4228
      %v4385 = vpop.f32.mrb[0].mxu0
      %v4386 = vadd.f32 0.0, %v4385
      %v4387 = vpop.f32.mrb[0].mxu0
      %v4388 = vpop.f32.mrb[0].mxu0
      %v4389 = vadd.f32 0.0, %v4388
      %v4390 = vpop.f32.mrb[0].mxu0
      %4391 = vmatprep.mubr.bf16.mxu0 0
      %4392 = vmatmul.mubr.bf16.gmra.mrb[0].mxu0 %v4229
      %v4393 = vpop.f32.mrb[0].mxu0
      %v4394 = vadd.f32 0.0, %v4393
      %v4395 = vpop.f32.mrb[0].mxu0
      %v4396 = vpop.f32.mrb[0].mxu0
      %v4397 = vadd.f32 0.0, %v4396
      %v4398 = vpop.f32.mrb[0].mxu0
      %4399 = vmatprep.mubr.bf16.mxu0 0
      %4400 = vmatmul.mubr.bf16.gmra.mrb[0].mxu0 %v4230
      %v4401 = vpop.f32.mrb[0].mxu0
      %v4402 = vadd.f32 0.0, %v4401
      %v4403 = vpop.f32.mrb[0].mxu0
      %v4404 = vpop.f32.mrb[0].mxu0
      %v4405 = vadd.f32 0.0, %v4404
      %v4406 = vpop.f32.mrb[0].mxu0
      %4407 = vmatprep.mubr.bf16.mxu0 0
      %4408 = vmatmul.mubr.bf16.gmra.mrb[0].mxu0 %v4231
      %v4409 = vpop.f32.mrb[0].mxu0
      %v4410 = vadd.f32 0.0, %v4409
      %v4411 = vpop.f32.mrb[0].mxu0
      %v4412 = vpop.f32.mrb[0].mxu0
      %v4413 = vadd.f32 0.0, %v4412
      %v4414 = vpop.f32.mrb[0].mxu0
      %4415 = vmatprep.mubr.bf16.mxu0 0
      %4416 = vmatmul.mubr.bf16.gmra.mrb[0].mxu0 %v4232
      %v4417 = vpop.f32.mrb[0].mxu0
      %v4418 = vadd.f32 0.0, %v4417
      %v4419 = vpop.f32.mrb[0].mxu0
      %v4420 = vpop.f32.mrb[0].mxu0
      %v4421 = vadd.f32 0.0, %v4420
      %v4422 = vpop.f32.mrb[0].mxu0
      %4423 = vmatprep.mubr.bf16.mxu0 0
      %4424 = vmatmul.mubr.bf16.gmra.mrb[0].mxu0 %v4233
      %v4425 = vpop.f32.mrb[0].mxu0
      %v4426 = vadd.f32 0.0, %v4425
      %v4427 = vpop.f32.mrb[0].mxu0
      %v4428 = vpop.f32.mrb[0].mxu0
      %v4429 = vadd.f32 0.0, %v4428
      %v4430 = vpop.f32.mrb[0].mxu0
      %4431 = vmatprep.mubr.bf16.mxu0 0
      %4432 = vmatmul.mubr.bf16.gmra.mrb[0].mxu0 %v4234
      %v4433 = vpop.f32.mrb[0].mxu0
      %v4434 = vadd.f32 0.0, %v4433
      %v4435 = vpop.f32.mrb[0].mxu0
      %v4436 = vpop.f32.mrb[0].mxu0
      %v4437 = vadd.f32 0.0, %v4436
      %v4438 = vpop.f32.mrb[0].mxu0
      %4439 = vmatprep.mubr.bf16.mxu0 0
      %4440 = vmatmul.mubr.bf16.gmra.mrb[0].mxu0 %v4235
      %v4441 = vpop.f32.mrb[0].mxu0
      %v4442 = vadd.f32 0.0, %v4441
      %v4443 = vpop.f32.mrb[0].mxu0
      %v4444 = vpop.f32.mrb[0].mxu0
      %v4445 = vadd.f32 0.0, %v4444
      %v4446 = vpop.f32.mrb[0].mxu0
      %4447 = vmatprep.mubr.bf16.mxu0 0
      %4448 = vmatmul.mubr.bf16.gmra.mrb[0].mxu0 %v4236
      %v4449 = vpop.f32.mrb[0].mxu0
      %v4450 = vadd.f32 0.0, %v4449
      %v4451 = vpop.f32.mrb[0].mxu0
      %v4452 = vpop.f32.mrb[0].mxu0
      %v4453 = vadd.f32 0.0, %v4452
      %v4454 = vpop.f32.mrb[0].mxu0
      %4455 = vmatprep.mubr.bf16.mxu0 0
      %4456 = vmatmul.mubr.bf16.gmra.mrb[0].mxu0 %v4237
      %v4457 = vpop.f32.mrb[0].mxu0
      %v4458 = vadd.f32 0.0, %v4457
      %v4459 = vpop.f32.mrb[0].mxu0
      %v4460 = vpop.f32.mrb[0].mxu0
      %v4461 = vadd.f32 0.0, %v4460
      %v4462 = vpop.f32.mrb[0].mxu0
      %4463 = vdwg.mxu0
      %v4464 = vadd.f32 %v3965, %v4338
      %v4465 = vadd.f32 %v3966, %v4341
      %v4466 = vadd.f32 %v3967, %v4346
      %v4467 = vadd.f32 %v3968, %v4349
      %v4468 = vadd.f32 %v3969, %v4354
      %v4469 = vadd.f32 %v3970, %v4357
      %v4470 = vadd.f32 %v3971, %v4362
      %v4471 = vadd.f32 %v3972, %v4365
      %v4472 = vadd.f32 %v3973, %v4370
      %v4473 = vadd.f32 %v3974, %v4373
      %v4474 = vadd.f32 %v3975, %v4378
      %v4475 = vadd.f32 %v3976, %v4381
      %v4476 = vadd.f32 %v3977, %v4386
      %v4477 = vadd.f32 %v3978, %v4389
      %v4478 = vadd.f32 %v3979, %v4394
      %v4479 = vadd.f32 %v3980, %v4397
      %v4480 = vadd.f32 %v3981, %v4402
      %v4481 = vadd.f32 %v3982, %v4405
      %v4482 = vadd.f32 %v3983, %v4410
      %v4483 = vadd.f32 %v3984, %v4413
      %v4484 = vadd.f32 %v3985, %v4418
      %v4485 = vadd.f32 %v3986, %v4421
      %v4486 = vadd.f32 %v3987, %v4426
      %v4487 = vadd.f32 %v3988, %v4429
      %v4488 = vadd.f32 %v3989, %v4434
      %v4489 = vadd.f32 %v3990, %v4437
      %v4490 = vadd.f32 %v3991, %v4442
      %v4491 = vadd.f32 %v3992, %v4445
      %v4492 = vadd.f32 %v3993, %v4450
      %v4493 = vadd.f32 %v3994, %v4453
      %v4494 = vadd.f32 %v3995, %v4458
      %v4495 = vadd.f32 %v3996, %v4461
      %s4496 = scalar_lea.vmem %s4, 2048
      %v4497 = vld [vmem:[%s4496] sm:$0xff]
      %v4498 = vld [vmem:[%s4496 + $0x8] sm:$0xff]
      %v4499 = vld [vmem:[%s4496 + $0x10] sm:$0xff]
      %v4500 = vld [vmem:[%s4496 + $0x18] sm:$0xff]
      %v4501 = vld [vmem:[%s4496 + $0x20] sm:$0xff]
      %v4502 = vld [vmem:[%s4496 + $0x28] sm:$0xff]
      %v4503 = vld [vmem:[%s4496 + $0x30] sm:$0xff]
      %v4504 = vld [vmem:[%s4496 + $0x38] sm:$0xff]
      %v4505 = vld [vmem:[%s4496 + $0x40] sm:$0xff]
      %v4506 = vld [vmem:[%s4496 + $0x48] sm:$0xff]
      %v4507 = vld [vmem:[%s4496 + $0x50] sm:$0xff]
      %v4508 = vld [vmem:[%s4496 + $0x58] sm:$0xff]
      %v4509 = vld [vmem:[%s4496 + $0x60] sm:$0xff]
      %v4510 = vld [vmem:[%s4496 + $0x68] sm:$0xff]
      %v4511 = vld [vmem:[%s4496 + $0x70] sm:$0xff]
      %v4512 = vld [vmem:[%s4496 + $0x78] sm:$0xff]
      %v4513 = vld [vmem:[%s4496 + $0x80] sm:$0xff]
      %v4514 = vld [vmem:[%s4496 + $0x88] sm:$0xff]
      %v4515 = vld [vmem:[%s4496 + $0x90] sm:$0xff]
      %v4516 = vld [vmem:[%s4496 + $0x98] sm:$0xff]
      %v4517 = vld [vmem:[%s4496 + $0xa0] sm:$0xff]
      %v4518 = vld [vmem:[%s4496 + $0xa8] sm:$0xff]
      %v4519 = vld [vmem:[%s4496 + $0xb0] sm:$0xff]
      %v4520 = vld [vmem:[%s4496 + $0xb8] sm:$0xff]
      %v4521 = vld [vmem:[%s4496 + $0xc0] sm:$0xff]
      %v4522 = vld [vmem:[%s4496 + $0xc8] sm:$0xff]
      %v4523 = vld [vmem:[%s4496 + $0xd0] sm:$0xff]
      %v4524 = vld [vmem:[%s4496 + $0xd8] sm:$0xff]
      %v4525 = vld [vmem:[%s4496 + $0xe0] sm:$0xff]
      %v4526 = vld [vmem:[%s4496 + $0xe8] sm:$0xff]
      %v4527 = vld [vmem:[%s4496 + $0xf0] sm:$0xff]
      %v4528 = vld [vmem:[%s4496 + $0xf8] sm:$0xff]
      %4530 = vset.pattern.permute.xlu0 0
      %4531 = vperm.xlu0 %4530, %v4497
      %v4532 = vpop.permute.xlu0 %4531
      %4535 = vset.pattern.permute.xlu0 0
      %4536 = vperm.xlu0 %4535, %v4498
      %v4537 = vpop.permute.xlu0 %4536
      %4540 = vset.pattern.permute.xlu0 0
      %4541 = vperm.xlu0 %4540, %v4499
      %v4542 = vpop.permute.xlu0 %4541
      %4545 = vset.pattern.permute.xlu0 0
      %4546 = vperm.xlu0 %4545, %v4500
      %v4547 = vpop.permute.xlu0 %4546
      %4550 = vset.pattern.permute.xlu0 0
      %4551 = vperm.xlu0 %4550, %v4501
      %v4552 = vpop.permute.xlu0 %4551
      %4555 = vset.pattern.permute.xlu0 0
      %4556 = vperm.xlu0 %4555, %v4502
      %v4557 = vpop.permute.xlu0 %4556
      %4560 = vset.pattern.permute.xlu0 0
      %4561 = vperm.xlu0 %4560, %v4503
      %v4562 = vpop.permute.xlu0 %4561
      %4565 = vset.pattern.permute.xlu0 0
      %4566 = vperm.xlu0 %4565, %v4504
      %v4567 = vpop.permute.xlu0 %4566
      %4570 = vset.pattern.permute.xlu0 0
      %4571 = vperm.xlu0 %4570, %v4505
      %v4572 = vpop.permute.xlu0 %4571
      %4575 = vset.pattern.permute.xlu0 0
      %4576 = vperm.xlu0 %4575, %v4506
      %v4577 = vpop.permute.xlu0 %4576
      %4580 = vset.pattern.permute.xlu0 0
      %4581 = vperm.xlu0 %4580, %v4507
      %v4582 = vpop.permute.xlu0 %4581
      %4585 = vset.pattern.permute.xlu0 0
      %4586 = vperm.xlu0 %4585, %v4508
      %v4587 = vpop.permute.xlu0 %4586
      %4590 = vset.pattern.permute.xlu0 0
      %4591 = vperm.xlu0 %4590, %v4509
      %v4592 = vpop.permute.xlu0 %4591
      %4595 = vset.pattern.permute.xlu0 0
      %4596 = vperm.xlu0 %4595, %v4510
      %v4597 = vpop.permute.xlu0 %4596
      %4600 = vset.pattern.permute.xlu0 0
      %4601 = vperm.xlu0 %4600, %v4511
      %v4602 = vpop.permute.xlu0 %4601
      %4605 = vset.pattern.permute.xlu0 0
      %4606 = vperm.xlu0 %4605, %v4512
      %v4607 = vpop.permute.xlu0 %4606
      %4610 = vset.pattern.permute.xlu0 0
      %4611 = vperm.xlu0 %4610, %v4513
      %v4612 = vpop.permute.xlu0 %4611
      %4615 = vset.pattern.permute.xlu0 0
      %4616 = vperm.xlu0 %4615, %v4514
      %v4617 = vpop.permute.xlu0 %4616
      %4620 = vset.pattern.permute.xlu0 0
      %4621 = vperm.xlu0 %4620, %v4515
      %v4622 = vpop.permute.xlu0 %4621
      %4625 = vset.pattern.permute.xlu0 0
      %4626 = vperm.xlu0 %4625, %v4516
      %v4627 = vpop.permute.xlu0 %4626
      %4630 = vset.pattern.permute.xlu0 0
      %4631 = vperm.xlu0 %4630, %v4517
      %v4632 = vpop.permute.xlu0 %4631
      %4635 = vset.pattern.permute.xlu0 0
      %4636 = vperm.xlu0 %4635, %v4518
      %v4637 = vpop.permute.xlu0 %4636
      %4640 = vset.pattern.permute.xlu0 0
      %4641 = vperm.xlu0 %4640, %v4519
      %v4642 = vpop.permute.xlu0 %4641
      %4645 = vset.pattern.permute.xlu0 0
      %4646 = vperm.xlu0 %4645, %v4520
      %v4647 = vpop.permute.xlu0 %4646
      %4650 = vset.pattern.permute.xlu0 0
      %4651 = vperm.xlu0 %4650, %v4521
      %v4652 = vpop.permute.xlu0 %4651
      %4655 = vset.pattern.permute.xlu0 0
      %4656 = vperm.xlu0 %4655, %v4522
      %v4657 = vpop.permute.xlu0 %4656
      %4660 = vset.pattern.permute.xlu0 0
      %4661 = vperm.xlu0 %4660, %v4523
      %v4662 = vpop.permute.xlu0 %4661
      %4665 = vset.pattern.permute.xlu0 0
      %4666 = vperm.xlu0 %4665, %v4524
      %v4667 = vpop.permute.xlu0 %4666
      %4670 = vset.pattern.permute.xlu0 0
      %4671 = vperm.xlu0 %4670, %v4525
      %v4672 = vpop.permute.xlu0 %4671
      %4675 = vset.pattern.permute.xlu0 0
      %4676 = vperm.xlu0 %4675, %v4526
      %v4677 = vpop.permute.xlu0 %4676
      %4680 = vset.pattern.permute.xlu0 0
      %4681 = vperm.xlu0 %4680, %v4527
      %v4682 = vpop.permute.xlu0 %4681
      %4685 = vset.pattern.permute.xlu0 0
      %4686 = vperm.xlu0 %4685, %v4528
      %v4687 = vpop.permute.xlu0 %4686
      %v4689 = vmul.f32 %v1498, %v4532
      %v4690 = vmul.f32 %v1497, %v4537
      %v4691 = vmul.f32 %v1496, %v4542
      %v4692 = vmul.f32 %v1495, %v4547
      %v4693 = vmul.f32 %v1494, %v4552
      %v4694 = vmul.f32 %v1493, %v4557
      %v4695 = vmul.f32 %v1492, %v4562
      %v4696 = vmul.f32 %v1491, %v4567
      %v4697 = vmul.f32 %v1490, %v4572
      %v4698 = vmul.f32 %v1489, %v4577
      %v4699 = vmul.f32 %v1488, %v4582
      %v4700 = vmul.f32 %v1487, %v4587
      %v4701 = vmul.f32 %v1486, %v4592
      %v4702 = vmul.f32 %v1485, %v4597
      %v4703 = vmul.f32 %v1484, %v4602
      %v4704 = vmul.f32 %v1483, %v4607
      %v4705 = vmul.f32 %v1482, %v4612
      %v4706 = vmul.f32 %v1481, %v4617
      %v4707 = vmul.f32 %v1480, %v4622
      %v4708 = vmul.f32 %v1479, %v4627
      %v4709 = vmul.f32 %v1478, %v4632
      %v4710 = vmul.f32 %v1477, %v4637
      %v4711 = vmul.f32 %v1476, %v4642
      %v4712 = vmul.f32 %v1475, %v4647
      %v4713 = vmul.f32 %v1474, %v4652
      %v4714 = vmul.f32 %v1473, %v4657
      %v4715 = vmul.f32 %v1472, %v4662
      %v4716 = vmul.f32 %v1471, %v4667
      %v4717 = vmul.f32 %v1470, %v4672
      %v4718 = vmul.f32 %v1501, %v4677
      %v4719 = vmul.f32 %v1500, %v4682
      %v4720 = vmul.f32 %v1499, %v4687
      %v4721 = vpack.c.bf16 %v4690, %v4689
      %v4722 = vpack.c.bf16 %v4692, %v4691
      %v4723 = vpack.c.bf16 %v4694, %v4693
      %v4724 = vpack.c.bf16 %v4696, %v4695
      %v4725 = vpack.c.bf16 %v4698, %v4697
      %v4726 = vpack.c.bf16 %v4700, %v4699
      %v4727 = vpack.c.bf16 %v4702, %v4701
      %v4728 = vpack.c.bf16 %v4704, %v4703
      %v4729 = vpack.c.bf16 %v4706, %v4705
      %v4730 = vpack.c.bf16 %v4708, %v4707
      %v4731 = vpack.c.bf16 %v4710, %v4709
      %v4732 = vpack.c.bf16 %v4712, %v4711
      %v4733 = vpack.c.bf16 %v4714, %v4713
      %v4734 = vpack.c.bf16 %v4716, %v4715
      %v4735 = vpack.c.bf16 %v4718, %v4717
      %v4736 = vpack.c.bf16 %v4720, %v4719
      %s4737 = scalar_lea.vmem %s3, 512
      %v4738 = vld [vmem:[%s4737] sm:$0xf]
      %v4739 = vld [vmem:[%s4737 + $0x4] sm:$0xf]
      %v4740 = vld [vmem:[%s4737 + $0x8] sm:$0xf]
      %v4741 = vld [vmem:[%s4737 + $0xc] sm:$0xf]
      %v4742 = vld [vmem:[%s4737 + $0x10] sm:$0xf]
      %v4743 = vld [vmem:[%s4737 + $0x14] sm:$0xf]
      %v4744 = vld [vmem:[%s4737 + $0x18] sm:$0xf]
      %v4745 = vld [vmem:[%s4737 + $0x1c] sm:$0xf]
      %v4746 = vld [vmem:[%s4737 + $0x20] sm:$0xf]
      %v4747 = vld [vmem:[%s4737 + $0x24] sm:$0xf]
      %v4748 = vld [vmem:[%s4737 + $0x28] sm:$0xf]
      %v4749 = vld [vmem:[%s4737 + $0x2c] sm:$0xf]
      %v4750 = vld [vmem:[%s4737 + $0x30] sm:$0xf]
      %v4751 = vld [vmem:[%s4737 + $0x34] sm:$0xf]
      %v4752 = vld [vmem:[%s4737 + $0x38] sm:$0xf]
      %v4753 = vld [vmem:[%s4737 + $0x3c] sm:$0xf]
      %v4770 = vunpack.c.l.b16 %v4738
      %v4771 = vunpack.c.l.b16 %v4739
      %v4772 = vunpack.c.l.b16 %v4740
      %v4773 = vunpack.c.l.b16 %v4741
      %v4774 = vunpack.c.l.b16 %v4742
      %v4775 = vunpack.c.l.b16 %v4743
      %v4776 = vunpack.c.l.b16 %v4744
      %v4777 = vunpack.c.l.b16 %v4745
      %v4778 = vunpack.c.l.b16 %v4746
      %v4779 = vunpack.c.l.b16 %v4747
      %v4780 = vunpack.c.l.b16 %v4748
      %v4781 = vunpack.c.l.b16 %v4749
      %v4782 = vunpack.c.l.b16 %v4750
      %v4783 = vunpack.c.l.b16 %v4751
      %v4784 = vunpack.c.l.b16 %v4752
      %v4785 = vunpack.c.l.b16 %v4753
      %v4786 = vpack.c.b16 %v4771, %v4770
      %v4787 = vpack.c.b16 %v4773, %v4772
      %v4788 = vpack.c.b16 %v4775, %v4774
      %v4789 = vpack.c.b16 %v4777, %v4776
      %v4790 = vpack.c.b16 %v4779, %v4778
      %v4791 = vpack.c.b16 %v4781, %v4780
      %v4792 = vpack.c.b16 %v4783, %v4782
      %v4793 = vpack.c.b16 %v4785, %v4784
      %4802 = vmatprep.subr.bf16.mxu0 0
      %4803 = vmatpush1.bf16.msra.mxu0 %v4786
      %4804 = vmatprep.subr.bf16.mxu0 0
      %4805 = vmatpush1.bf16.msra.mxu0 %v4787
      %4806 = vmatprep.subr.bf16.mxu0 0
      %4807 = vmatpush1.bf16.msra.mxu0 %v4788
      %4808 = vmatprep.subr.bf16.mxu0 0
      %4809 = vmatpush1.bf16.msra.mxu0 %v4789
      %4810 = vmatprep.subr.bf16.mxu0 0
      %4811 = vmatpush1.bf16.msra.mxu0 %v4790
      %4812 = vmatprep.subr.bf16.mxu0 0
      %4813 = vmatpush1.bf16.msra.mxu0 %v4791
      %4814 = vmatprep.subr.bf16.mxu0 0
      %4815 = vmatpush1.bf16.msra.mxu0 %v4792
      %4816 = vmatprep.subr.bf16.mxu0 0
      %4817 = vmatpush1.bf16.msra.mxu0 %v4793
      %4818 = vmatprep.subr.bf16.mxu0 0
      %4819 = vmatpush1.bf16.msra.mxu0 0
      %4820 = vmatprep.subr.bf16.mxu0 0
      %4821 = vmatpush1.bf16.msra.mxu0 0
      %4822 = vmatprep.subr.bf16.mxu0 0
      %4823 = vmatpush1.bf16.msra.mxu0 0
      %4824 = vmatprep.subr.bf16.mxu0 0
      %4825 = vmatpush1.bf16.msra.mxu0 0
      %4826 = vmatprep.subr.bf16.mxu0 0
      %4827 = vmatpush1.bf16.msra.mxu0 0
      %4828 = vmatprep.subr.bf16.mxu0 0
      %4829 = vmatpush1.bf16.msra.mxu0 0
      %4830 = vmatprep.subr.bf16.mxu0 0
      %4831 = vmatpush1.bf16.msra.mxu0 0
      %4832 = vmatprep.subr.bf16.mxu0 0
      %4833 = vmatpush1.bf16.msra.mxu0 0
      %4834 = vmatprep.mubr.bf16.mxu0 0
      %4835 = vmatmul.mubr.bf16.gmra.mrb[0].mxu0 %v4721
      %v4836 = vpop.f32.mrb[0].mxu0
      %v4837 = vadd.f32 0.0, %v4836
      %v4838 = vpop.f32.mrb[0].mxu0
      %v4839 = vpop.f32.mrb[0].mxu0
      %v4840 = vadd.f32 0.0, %v4839
      %v4841 = vpop.f32.mrb[0].mxu0
      %4842 = vmatprep.mubr.bf16.mxu0 0
      %4843 = vmatmul.mubr.bf16.gmra.mrb[0].mxu0 %v4722
      %v4844 = vpop.f32.mrb[0].mxu0
      %v4845 = vadd.f32 0.0, %v4844
      %v4846 = vpop.f32.mrb[0].mxu0
      %v4847 = vpop.f32.mrb[0].mxu0
      %v4848 = vadd.f32 0.0, %v4847
      %v4849 = vpop.f32.mrb[0].mxu0
      %4850 = vmatprep.mubr.bf16.mxu0 0
      %4851 = vmatmul.mubr.bf16.gmra.mrb[0].mxu0 %v4723
      %v4852 = vpop.f32.mrb[0].mxu0
      %v4853 = vadd.f32 0.0, %v4852
      %v4854 = vpop.f32.mrb[0].mxu0
      %v4855 = vpop.f32.mrb[0].mxu0
      %v4856 = vadd.f32 0.0, %v4855
      %v4857 = vpop.f32.mrb[0].mxu0
      %4858 = vmatprep.mubr.bf16.mxu0 0
      %4859 = vmatmul.mubr.bf16.gmra.mrb[0].mxu0 %v4724
      %v4860 = vpop.f32.mrb[0].mxu0
      %v4861 = vadd.f32 0.0, %v4860
      %v4862 = vpop.f32.mrb[0].mxu0
      %v4863 = vpop.f32.mrb[0].mxu0
      %v4864 = vadd.f32 0.0, %v4863
      %v4865 = vpop.f32.mrb[0].mxu0
      %4866 = vmatprep.mubr.bf16.mxu0 0
      %4867 = vmatmul.mubr.bf16.gmra.mrb[0].mxu0 %v4725
      %v4868 = vpop.f32.mrb[0].mxu0
      %v4869 = vadd.f32 0.0, %v4868
      %v4870 = vpop.f32.mrb[0].mxu0
      %v4871 = vpop.f32.mrb[0].mxu0
      %v4872 = vadd.f32 0.0, %v4871
      %v4873 = vpop.f32.mrb[0].mxu0
      %4874 = vmatprep.mubr.bf16.mxu0 0
      %4875 = vmatmul.mubr.bf16.gmra.mrb[0].mxu0 %v4726
      %v4876 = vpop.f32.mrb[0].mxu0
      %v4877 = vadd.f32 0.0, %v4876
      %v4878 = vpop.f32.mrb[0].mxu0
      %v4879 = vpop.f32.mrb[0].mxu0
      %v4880 = vadd.f32 0.0, %v4879
      %v4881 = vpop.f32.mrb[0].mxu0
      %4882 = vmatprep.mubr.bf16.mxu0 0
      %4883 = vmatmul.mubr.bf16.gmra.mrb[0].mxu0 %v4727
      %v4884 = vpop.f32.mrb[0].mxu0
      %v4885 = vadd.f32 0.0, %v4884
      %v4886 = vpop.f32.mrb[0].mxu0
      %v4887 = vpop.f32.mrb[0].mxu0
      %v4888 = vadd.f32 0.0, %v4887
      %v4889 = vpop.f32.mrb[0].mxu0
      %4890 = vmatprep.mubr.bf16.mxu0 0
      %4891 = vmatmul.mubr.bf16.gmra.mrb[0].mxu0 %v4728
      %v4892 = vpop.f32.mrb[0].mxu0
      %v4893 = vadd.f32 0.0, %v4892
      %v4894 = vpop.f32.mrb[0].mxu0
      %v4895 = vpop.f32.mrb[0].mxu0
      %v4896 = vadd.f32 0.0, %v4895
      %v4897 = vpop.f32.mrb[0].mxu0
      %4898 = vmatprep.mubr.bf16.mxu0 0
      %4899 = vmatmul.mubr.bf16.gmra.mrb[0].mxu0 %v4729
      %v4900 = vpop.f32.mrb[0].mxu0
      %v4901 = vadd.f32 0.0, %v4900
      %v4902 = vpop.f32.mrb[0].mxu0
      %v4903 = vpop.f32.mrb[0].mxu0
      %v4904 = vadd.f32 0.0, %v4903
      %v4905 = vpop.f32.mrb[0].mxu0
      %4906 = vmatprep.mubr.bf16.mxu0 0
      %4907 = vmatmul.mubr.bf16.gmra.mrb[0].mxu0 %v4730
      %v4908 = vpop.f32.mrb[0].mxu0
      %v4909 = vadd.f32 0.0, %v4908
      %v4910 = vpop.f32.mrb[0].mxu0
      %v4911 = vpop.f32.mrb[0].mxu0
      %v4912 = vadd.f32 0.0, %v4911
      %v4913 = vpop.f32.mrb[0].mxu0
      %4914 = vmatprep.mubr.bf16.mxu0 0
      %4915 = vmatmul.mubr.bf16.gmra.mrb[0].mxu0 %v4731
      %v4916 = vpop.f32.mrb[0].mxu0
      %v4917 = vadd.f32 0.0, %v4916
      %v4918 = vpop.f32.mrb[0].mxu0
      %v4919 = vpop.f32.mrb[0].mxu0
      %v4920 = vadd.f32 0.0, %v4919
      %v4921 = vpop.f32.mrb[0].mxu0
      %4922 = vmatprep.mubr.bf16.mxu0 0
      %4923 = vmatmul.mubr.bf16.gmra.mrb[0].mxu0 %v4732
      %v4924 = vpop.f32.mrb[0].mxu0
      %v4925 = vadd.f32 0.0, %v4924
      %v4926 = vpop.f32.mrb[0].mxu0
      %v4927 = vpop.f32.mrb[0].mxu0
      %v4928 = vadd.f32 0.0, %v4927
      %v4929 = vpop.f32.mrb[0].mxu0
      %4930 = vmatprep.mubr.bf16.mxu0 0
      %4931 = vmatmul.mubr.bf16.gmra.mrb[0].mxu0 %v4733
      %v4932 = vpop.f32.mrb[0].mxu0
      %v4933 = vadd.f32 0.0, %v4932
      %v4934 = vpop.f32.mrb[0].mxu0
      %v4935 = vpop.f32.mrb[0].mxu0
      %v4936 = vadd.f32 0.0, %v4935
      %v4937 = vpop.f32.mrb[0].mxu0
      %4938 = vmatprep.mubr.bf16.mxu0 0
      %4939 = vmatmul.mubr.bf16.gmra.mrb[0].mxu0 %v4734
      %v4940 = vpop.f32.mrb[0].mxu0
      %v4941 = vadd.f32 0.0, %v4940
      %v4942 = vpop.f32.mrb[0].mxu0
      %v4943 = vpop.f32.mrb[0].mxu0
      %v4944 = vadd.f32 0.0, %v4943
      %v4945 = vpop.f32.mrb[0].mxu0
      %4946 = vmatprep.mubr.bf16.mxu0 0
      %4947 = vmatmul.mubr.bf16.gmra.mrb[0].mxu0 %v4735
      %v4948 = vpop.f32.mrb[0].mxu0
      %v4949 = vadd.f32 0.0, %v4948
      %v4950 = vpop.f32.mrb[0].mxu0
      %v4951 = vpop.f32.mrb[0].mxu0
      %v4952 = vadd.f32 0.0, %v4951
      %v4953 = vpop.f32.mrb[0].mxu0
      %4954 = vmatprep.mubr.bf16.mxu0 0
      %4955 = vmatmul.mubr.bf16.gmra.mrb[0].mxu0 %v4736
      %v4956 = vpop.f32.mrb[0].mxu0
      %v4957 = vadd.f32 0.0, %v4956
      %v4958 = vpop.f32.mrb[0].mxu0
      %v4959 = vpop.f32.mrb[0].mxu0
      %v4960 = vadd.f32 0.0, %v4959
      %v4961 = vpop.f32.mrb[0].mxu0
      %4962 = vdwg.mxu0
      %v4963 = vadd.f32 %v4464, %v4837
      %v4964 = vadd.f32 %v4465, %v4840
      %v4965 = vadd.f32 %v4466, %v4845
      %v4966 = vadd.f32 %v4467, %v4848
      %v4967 = vadd.f32 %v4468, %v4853
      %v4968 = vadd.f32 %v4469, %v4856
      %v4969 = vadd.f32 %v4470, %v4861
      %v4970 = vadd.f32 %v4471, %v4864
      %v4971 = vadd.f32 %v4472, %v4869
      %v4972 = vadd.f32 %v4473, %v4872
      %v4973 = vadd.f32 %v4474, %v4877
      %v4974 = vadd.f32 %v4475, %v4880
      %v4975 = vadd.f32 %v4476, %v4885
      %v4976 = vadd.f32 %v4477, %v4888
      %v4977 = vadd.f32 %v4478, %v4893
      %v4978 = vadd.f32 %v4479, %v4896
      %v4979 = vadd.f32 %v4480, %v4901
      %v4980 = vadd.f32 %v4481, %v4904
      %v4981 = vadd.f32 %v4482, %v4909
      %v4982 = vadd.f32 %v4483, %v4912
      %v4983 = vadd.f32 %v4484, %v4917
      %v4984 = vadd.f32 %v4485, %v4920
      %v4985 = vadd.f32 %v4486, %v4925
      %v4986 = vadd.f32 %v4487, %v4928
      %v4987 = vadd.f32 %v4488, %v4933
      %v4988 = vadd.f32 %v4489, %v4936
      %v4989 = vadd.f32 %v4490, %v4941
      %v4990 = vadd.f32 %v4491, %v4944
      %v4991 = vadd.f32 %v4492, %v4949
      %v4992 = vadd.f32 %v4493, %v4952
      %v4993 = vadd.f32 %v4494, %v4957
      %v4994 = vadd.f32 %v4495, %v4960
      %v4995 = vpack.c.bf16 %v4964, %v4963
      %v4996 = vpack.c.bf16 %v4966, %v4965
      %v4997 = vpack.c.bf16 %v4968, %v4967
      %v4998 = vpack.c.bf16 %v4970, %v4969
      %v4999 = vpack.c.bf16 %v4972, %v4971
      %v5000 = vpack.c.bf16 %v4974, %v4973
      %v5001 = vpack.c.bf16 %v4976, %v4975
      %v5002 = vpack.c.bf16 %v4978, %v4977
      %v5003 = vpack.c.bf16 %v4980, %v4979
      %v5004 = vpack.c.bf16 %v4982, %v4981
      %v5005 = vpack.c.bf16 %v4984, %v4983
      %v5006 = vpack.c.bf16 %v4986, %v4985
      %v5007 = vpack.c.bf16 %v4988, %v4987
      %v5008 = vpack.c.bf16 %v4990, %v4989
      %v5009 = vpack.c.bf16 %v4992, %v4991
      %v5010 = vpack.c.bf16 %v4994, %v4993
      %v5027 = vunpack.c.l.b16 %v4995
      %v5028 = vunpack.c.h.b16 %v4995
      %v5029 = vunpack.c.l.b16 %v4996
      %v5030 = vunpack.c.h.b16 %v4996
      %v5031 = vunpack.c.l.b16 %v4997
      %v5032 = vunpack.c.h.b16 %v4997
      %v5033 = vunpack.c.l.b16 %v4998
      %v5034 = vunpack.c.h.b16 %v4998
      %v5035 = vunpack.c.l.b16 %v4999
      %v5036 = vunpack.c.h.b16 %v4999
      %v5037 = vunpack.c.l.b16 %v5000
      %v5038 = vunpack.c.h.b16 %v5000
      %v5039 = vunpack.c.l.b16 %v5001
      %v5040 = vunpack.c.h.b16 %v5001
      %v5041 = vunpack.c.l.b16 %v5002
      %v5042 = vunpack.c.h.b16 %v5002
      %v5043 = vunpack.c.l.b16 %v5003
      %v5044 = vunpack.c.h.b16 %v5003
      %v5045 = vunpack.c.l.b16 %v5004
      %v5046 = vunpack.c.h.b16 %v5004
      %v5047 = vunpack.c.l.b16 %v5005
      %v5048 = vunpack.c.h.b16 %v5005
      %v5049 = vunpack.c.l.b16 %v5006
      %v5050 = vunpack.c.h.b16 %v5006
      %v5051 = vunpack.c.l.b16 %v5007
      %v5052 = vunpack.c.h.b16 %v5007
      %v5053 = vunpack.c.l.b16 %v5008
      %v5054 = vunpack.c.h.b16 %v5008
      %v5055 = vunpack.c.l.b16 %v5009
      %v5056 = vunpack.c.h.b16 %v5009
      %v5057 = vunpack.c.l.b16 %v5010
      %v5058 = vunpack.c.h.b16 %v5010
      %v5059 = vpack.c.b16 %v5027, %v5027
      %v5060 = vpack.c.b16 %v5028, %v5028
      %v5061 = vpack.c.b16 %v5029, %v5029
      %v5062 = vpack.c.b16 %v5030, %v5030
      %v5063 = vpack.c.b16 %v5031, %v5031
      %v5064 = vpack.c.b16 %v5032, %v5032
      %v5065 = vpack.c.b16 %v5033, %v5033
      %v5066 = vpack.c.b16 %v5034, %v5034
      %v5067 = vpack.c.b16 %v5035, %v5035
      %v5068 = vpack.c.b16 %v5036, %v5036
      %v5069 = vpack.c.b16 %v5037, %v5037
      %v5070 = vpack.c.b16 %v5038, %v5038
      %v5071 = vpack.c.b16 %v5039, %v5039
      %v5072 = vpack.c.b16 %v5040, %v5040
      %v5073 = vpack.c.b16 %v5041, %v5041
      %v5074 = vpack.c.b16 %v5042, %v5042
      %v5075 = vpack.c.b16 %v5043, %v5043
      %v5076 = vpack.c.b16 %v5044, %v5044
      %v5077 = vpack.c.b16 %v5045, %v5045
      %v5078 = vpack.c.b16 %v5046, %v5046
      %v5079 = vpack.c.b16 %v5047, %v5047
      %v5080 = vpack.c.b16 %v5048, %v5048
      %v5081 = vpack.c.b16 %v5049, %v5049
      %v5082 = vpack.c.b16 %v5050, %v5050
      %v5083 = vpack.c.b16 %v5051, %v5051
      %v5084 = vpack.c.b16 %v5052, %v5052
      %v5085 = vpack.c.b16 %v5053, %v5053
      %v5086 = vpack.c.b16 %v5054, %v5054
      %v5087 = vpack.c.b16 %v5055, %v5055
      %v5088 = vpack.c.b16 %v5056, %v5056
      %v5089 = vpack.c.b16 %v5057, %v5057
      %v5090 = vpack.c.b16 %v5058, %v5058
      %5123 = vst [vmem:[%s258] sm:$0xf] %v5059
      %5124 = vst [vmem:[%s258 + $0x4] sm:$0xf] %v5060
      %5125 = vst [vmem:[%s258 + $0x8] sm:$0xf] %v5061
      %5126 = vst [vmem:[%s258 + $0xc] sm:$0xf] %v5062
      %5127 = vst [vmem:[%s258 + $0x10] sm:$0xf] %v5063
      %5128 = vst [vmem:[%s258 + $0x14] sm:$0xf] %v5064
      %5129 = vst [vmem:[%s258 + $0x18] sm:$0xf] %v5065
      %5130 = vst [vmem:[%s258 + $0x1c] sm:$0xf] %v5066
      %5131 = vst [vmem:[%s258 + $0x20] sm:$0xf] %v5067
      %5132 = vst [vmem:[%s258 + $0x24] sm:$0xf] %v5068
      %5133 = vst [vmem:[%s258 + $0x28] sm:$0xf] %v5069
      %5134 = vst [vmem:[%s258 + $0x2c] sm:$0xf] %v5070
      %5135 = vst [vmem:[%s258 + $0x30] sm:$0xf] %v5071
      %5136 = vst [vmem:[%s258 + $0x34] sm:$0xf] %v5072
      %5137 = vst [vmem:[%s258 + $0x38] sm:$0xf] %v5073
      %5138 = vst [vmem:[%s258 + $0x3c] sm:$0xf] %v5074
      %5139 = vst [vmem:[%s258 + $0x40] sm:$0xf] %v5075
      %5140 = vst [vmem:[%s258 + $0x44] sm:$0xf] %v5076
      %5141 = vst [vmem:[%s258 + $0x48] sm:$0xf] %v5077
      %5142 = vst [vmem:[%s258 + $0x4c] sm:$0xf] %v5078
      %5143 = vst [vmem:[%s258 + $0x50] sm:$0xf] %v5079
      %5144 = vst [vmem:[%s258 + $0x54] sm:$0xf] %v5080
      %5145 = vst [vmem:[%s258 + $0x58] sm:$0xf] %v5081
      %5146 = vst [vmem:[%s258 + $0x5c] sm:$0xf] %v5082
      %5147 = vst [vmem:[%s258 + $0x60] sm:$0xf] %v5083
      %5148 = vst [vmem:[%s258 + $0x64] sm:$0xf] %v5084
      %5149 = vst [vmem:[%s258 + $0x68] sm:$0xf] %v5085
      %5150 = vst [vmem:[%s258 + $0x6c] sm:$0xf] %v5086
      %5151 = vst [vmem:[%s258 + $0x70] sm:$0xf] %v5087
      %5152 = vst [vmem:[%s258 + $0x74] sm:$0xf] %v5088
      %5153 = vst [vmem:[%s258 + $0x78] sm:$0xf] %v5089
      %5154 = vst [vmem:[%s258 + $0x7c] sm:$0xf] %v5090
      %v5155 = vunpack.c.l.bf16 %v4995
      %v5156 = vunpack.c.h.bf16 %v4995
      %v5157 = vunpack.c.l.bf16 %v4996
      %v5158 = vunpack.c.h.bf16 %v4996
      %v5159 = vunpack.c.l.bf16 %v4997
      %v5160 = vunpack.c.h.bf16 %v4997
      %v5161 = vunpack.c.l.bf16 %v4998
      %v5162 = vunpack.c.h.bf16 %v4998
      %v5163 = vunpack.c.l.bf16 %v4999
      %v5164 = vunpack.c.h.bf16 %v4999
      %v5165 = vunpack.c.l.bf16 %v5000
      %v5166 = vunpack.c.h.bf16 %v5000
      %v5167 = vunpack.c.l.bf16 %v5001
      %v5168 = vunpack.c.h.bf16 %v5001
      %v5169 = vunpack.c.l.bf16 %v5002
      %v5170 = vunpack.c.h.bf16 %v5002
      %v5171 = vunpack.c.l.bf16 %v5003
      %v5172 = vunpack.c.h.bf16 %v5003
      %v5173 = vunpack.c.l.bf16 %v5004
      %v5174 = vunpack.c.h.bf16 %v5004
      %v5175 = vunpack.c.l.bf16 %v5005
      %v5176 = vunpack.c.h.bf16 %v5005
      %v5177 = vunpack.c.l.bf16 %v5006
      %v5178 = vunpack.c.h.bf16 %v5006
      %v5179 = vunpack.c.l.bf16 %v5007
      %v5180 = vunpack.c.h.bf16 %v5007
      %v5181 = vunpack.c.l.bf16 %v5008
      %v5182 = vunpack.c.h.bf16 %v5008
      %v5183 = vunpack.c.l.bf16 %v5009
      %v5184 = vunpack.c.h.bf16 %v5009
      %v5185 = vunpack.c.l.bf16 %v5010
      %v5186 = vunpack.c.h.bf16 %v5010
      %v5187 = vadd.f32 %v5155, %v5156
      %v5188 = vadd.f32 %v5187, %v5157
      %v5189 = vadd.f32 %v5188, %v5158
      %v5190 = vadd.f32 %v5189, %v5159
      %v5191 = vadd.f32 %v5190, %v5160
      %v5192 = vadd.f32 %v5191, %v5161
      %v5193 = vadd.f32 %v5192, %v5162
      %v5194 = vadd.f32 %v5193, %v5163
      %v5195 = vadd.f32 %v5194, %v5164
      %v5196 = vadd.f32 %v5195, %v5165
      %v5197 = vadd.f32 %v5196, %v5166
      %v5198 = vadd.f32 %v5197, %v5167
      %v5199 = vadd.f32 %v5198, %v5168
      %v5200 = vadd.f32 %v5199, %v5169
      %v5201 = vadd.f32 %v5200, %v5170
      %v5202 = vadd.f32 %v5201, %v5171
      %v5203 = vadd.f32 %v5202, %v5172
      %v5204 = vadd.f32 %v5203, %v5173
      %v5205 = vadd.f32 %v5204, %v5174
      %v5206 = vadd.f32 %v5205, %v5175
      %v5207 = vadd.f32 %v5206, %v5176
      %v5208 = vadd.f32 %v5207, %v5177
      %v5209 = vadd.f32 %v5208, %v5178
      %v5210 = vadd.f32 %v5209, %v5179
      %v5211 = vadd.f32 %v5210, %v5180
      %v5212 = vadd.f32 %v5211, %v5181
      %v5213 = vadd.f32 %v5212, %v5182
      %v5214 = vadd.f32 %v5213, %v5183
      %v5215 = vadd.f32 %v5214, %v5184
      %v5216 = vadd.f32 %v5215, %v5185
      %v5217 = vadd.f32 %v5216, %v5186
      %v5218 = vrot.slane %v5217, 4
      %v5219 = vadd.f32 %v5217, %v5218
      %v5220 = vrot.slane %v5219, 2
      %v5221 = vadd.f32 %v5219, %v5220
      %v5222 = vrot.slane %v5221, 1
      %v5223 = vadd.f32 %v5221, %v5222
      %v5224 = vmul.f32 %v5155, %v5155
      %v5225 = vmul.f32 %v5156, %v5156
      %v5226 = vmul.f32 %v5157, %v5157
      %v5227 = vmul.f32 %v5158, %v5158
      %v5228 = vmul.f32 %v5159, %v5159
      %v5229 = vmul.f32 %v5160, %v5160
      %v5230 = vmul.f32 %v5161, %v5161
      %v5231 = vmul.f32 %v5162, %v5162
      %v5232 = vmul.f32 %v5163, %v5163
      %v5233 = vmul.f32 %v5164, %v5164
      %v5234 = vmul.f32 %v5165, %v5165
      %v5235 = vmul.f32 %v5166, %v5166
      %v5236 = vmul.f32 %v5167, %v5167
      %v5237 = vmul.f32 %v5168, %v5168
      %v5238 = vmul.f32 %v5169, %v5169
      %v5239 = vmul.f32 %v5170, %v5170
      %v5240 = vmul.f32 %v5171, %v5171
      %v5241 = vmul.f32 %v5172, %v5172
      %v5242 = vmul.f32 %v5173, %v5173
      %v5243 = vmul.f32 %v5174, %v5174
      %v5244 = vmul.f32 %v5175, %v5175
      %v5245 = vmul.f32 %v5176, %v5176
      %v5246 = vmul.f32 %v5177, %v5177
      %v5247 = vmul.f32 %v5178, %v5178
      %v5248 = vmul.f32 %v5179, %v5179
      %v5249 = vmul.f32 %v5180, %v5180
      %v5250 = vmul.f32 %v5181, %v5181
      %v5251 = vmul.f32 %v5182, %v5182
      %v5252 = vmul.f32 %v5183, %v5183
      %v5253 = vmul.f32 %v5184, %v5184
      %v5254 = vmul.f32 %v5185, %v5185
      %v5255 = vmul.f32 %v5186, %v5186
      %v5256 = vadd.f32 %v5224, %v5225
      %v5257 = vadd.f32 %v5256, %v5226
      %v5258 = vadd.f32 %v5257, %v5227
      %v5259 = vadd.f32 %v5258, %v5228
      %v5260 = vadd.f32 %v5259, %v5229
      %v5261 = vadd.f32 %v5260, %v5230
      %v5262 = vadd.f32 %v5261, %v5231
      %v5263 = vadd.f32 %v5262, %v5232
      %v5264 = vadd.f32 %v5263, %v5233
      %v5265 = vadd.f32 %v5264, %v5234
      %v5266 = vadd.f32 %v5265, %v5235
      %v5267 = vadd.f32 %v5266, %v5236
      %v5268 = vadd.f32 %v5267, %v5237
      %v5269 = vadd.f32 %v5268, %v5238
      %v5270 = vadd.f32 %v5269, %v5239
      %v5271 = vadd.f32 %v5270, %v5240
      %v5272 = vadd.f32 %v5271, %v5241
      %v5273 = vadd.f32 %v5272, %v5242
      %v5274 = vadd.f32 %v5273, %v5243
      %v5275 = vadd.f32 %v5274, %v5244
      %v5276 = vadd.f32 %v5275, %v5245
      %v5277 = vadd.f32 %v5276, %v5246
      %v5278 = vadd.f32 %v5277, %v5247
      %v5279 = vadd.f32 %v5278, %v5248
      %v5280 = vadd.f32 %v5279, %v5249
      %v5281 = vadd.f32 %v5280, %v5250
      %v5282 = vadd.f32 %v5281, %v5251
      %v5283 = vadd.f32 %v5282, %v5252
      %v5284 = vadd.f32 %v5283, %v5253
      %v5285 = vadd.f32 %v5284, %v5254
      %v5286 = vadd.f32 %v5285, %v5255
      %v5287 = vrot.slane %v5286, 4
      %v5288 = vadd.f32 %v5286, %v5287
      %v5289 = vrot.slane %v5288, 2
      %v5290 = vadd.f32 %v5288, %v5289
      %v5291 = vrot.slane %v5290, 1
      %v5292 = vadd.f32 %v5290, %v5291
      %vm5293 = vcmask 1040384
      %v5294 = vsel %vm5293, %v5223, %v5292
      %vm5295 = vcmask 1041408
      %v5296 = vsel %vm5295, %v5294, 0.0
      %5297 = vst [vmem:[%s262] sm:$0xff] %v5296
      %p5298 = scmp.lt.s32.totalorder %s18, 1
      %s5299 = scalar_select %p5298, %s18, 1
      %s5300 = smul.addr %s5299, 32
      %s5301 = smul.addr %s5300, 4
      %s5302 = scalar_lea.vmem %s5, %s5301
      %p5303 = scmp.lt.s32.totalorder %s18, 1
      %s5304 = scalar_select %p5303, %s18, 1
      %s5305 = smul.addr %s5304, 8
      %s5306 = scalar_lea.vmem %s6, %s5305
      // Predicated region
      $region41: #{residual_block.5} parent=39 // pred_check
        %p5307 = pneg %p146
      $region42: #{residual_block.5} parent=39 // pred_check_branch
        %5309 = sbr.rel (%p5307) target = $region44
      $region43: #{residual_block.5} parent=39 // pred_region
        _
      $region44: #{residual_block.5} parent=39 // pred_fallthru
        _
      // Predicated region
      $region45: #{residual_block.5} parent=39 // pred_check
        %p5310 = pneg %p172
      $region46: #{residual_block.5} parent=39 // pred_check_branch
        %5312 = sbr.rel (%p5310) target = $region48
      $region47: #{residual_block.5} parent=39 // pred_region
        _
      $region48: #{residual_block.5} parent=39 // pred_fallthru
        _
    $region40: #{residual_block.5} parent=5 // pred_fallthru
      _
    %p5313 = scmp.le.s32.totalorder 2, %s13
    // Predicated region
    $region49: #{residual_block.5} parent=5 // pred_check
      %p5314 = pneg %p5313
    $region50: #{residual_block.5} parent=5 // pred_check_branch
      %5316 = sbr.rel (%p5314) target = $region52
    $region51: #{residual_block.5} parent=5 // pred_region
      %s5317 = ssub.s32 %s13, 2
      // Predicated region
      $region53: #{residual_block.5} parent=51 // pred_check
        %p5318 = pneg %p152
      $region54: #{residual_block.5} parent=51 // pred_check_branch
        %5320 = sbr.rel (%p5318) target = $region56
      $region55: #{residual_block.5} parent=51 // pred_region
        %p5321 = scmp.lt.s32.totalorder %s19, 1
        %s5322 = scalar_select %p5321, %s19, 1
        %s5323 = smul.addr %s5322, 32
        %s5324 = smul.addr %s5323, 4
        %s5325 = scalar_lea.vmem %s5, %s5324
      $region56: #{residual_block.5} parent=51 // pred_fallthru
        _
      // Predicated region
      $region57: #{residual_block.5} parent=51 // pred_check
        %p5326 = pneg %p178
      $region58: #{residual_block.5} parent=51 // pred_check_branch
        %5328 = sbr.rel (%p5326) target = $region60
      $region59: #{residual_block.5} parent=51 // pred_region
        %p5329 = scmp.lt.s32.totalorder %s19, 1
        %s5330 = scalar_select %p5329, %s19, 1
        %s5331 = smul.addr %s5330, 8
        %s5332 = scalar_lea.vmem %s6, %s5331
      $region60: #{residual_block.5} parent=51 // pred_fallthru
        _
    $region52: #{residual_block.5} parent=5 // pred_fallthru
      _
  $region6: #{residual_block.5} parent=0 // loop_footer
    %s17 = sadd.s32 1, %s13
  $region7: #{residual_block.5} parent=0 // loop_footer_branch
    %12 = sbr.rel target = $region3
  $region8: #{residual_block.5} parent=0 // loop_exit
    _

</llo_original>
